<compile_context>
chip_gen: v7x
topology: tpu7x:2x2x1
jax: 0.10.0
libtpu: 0.0.40
codegen_flags: <defaults>
</compile_context>

<pallas_src>
import jax
import jax.numpy as jnp
from jax.experimental import pallas as pl
from jax.experimental.pallas import tpu as pltpu

# ----- hyperparameters (consistent with the module's __init__) -----
NOISE = 32
ROWS = 4
COLUMNS = 8
HIDDEN = 32
INPUT_SIZE = NOISE // COLUMNS          # 4
I_PAD = 8                              # input size zero-padded to a sublane multiple
STEP = HIDDEN // ROWS                  # 8
LSTM_LAYERS = 1
BIDIRECTIONAL = True
DIRECTIONS = 2 if BIDIRECTIONAL else 1

T = COLUMNS                            # sequence length
# Skipping the backward LSTM direction is only valid while the head reads
# slices entirely inside [0, HIDDEN); keep this invariant explicit.
assert ROWS * STEP == HIDDEN, "head would read reverse-direction LSTM outputs"
assert STEP * COLUMNS == HIDDEN * T // ROWS  # Linear in-features sanity

# Batch lanes per grid step.  Sweep 512-1024; >=256 fills the v6e/v7x MXU N dim.
B_TILE = 512


def ganeraid_kernel(x_ref, h0_ref, c0_ref, wih_ref, whh_ref, b_ref,
                    wbig_ref, bout_ref, out_ref, gx_ref, hcat_ref):
    H = h0_ref.shape[0]
    BT = h0_ref.shape[1]
    n_t = hcat_ref.shape[0] // H       # = T (static)

    # --- hoisted input projection: ONE dense matmul for all time steps (+ bias once) ---
    # (4H, I_PAD) @ (I_PAD, T*BT) -> (4H, T*BT); written to explicit VMEM scratch so the
    # per-step read is an aligned lane-window load.
    gx_ref[...] = (jnp.dot(wih_ref[...], x_ref[...],
                           preferred_element_type=jnp.float32)
                   + b_ref[...])

    whh = whh_ref[...]                                      # (4H, H)
    h = h0_ref[...]                                         # (H, BT)
    c = c0_ref[...]                                         # (H, BT)

    # --- recurrence, statically unrolled (T is small); only h@W_hh on the critical path ---
    for t in range(n_t):
        gates = gx_ref[:, t * BT:(t + 1) * BT] + jnp.dot(
            whh, h, preferred_element_type=jnp.float32)     # (4H, BT)
        # gate row order is (i, f, o, g): one sigmoid over 3H rows, one tanh over H rows.
        sig = jax.nn.sigmoid(gates[:3 * H, :])
        i_g = sig[:H, :]
        f_g = sig[H:2 * H, :]
        o_g = sig[2 * H:3 * H, :]
        g_g = jnp.tanh(gates[3 * H:, :])
        c = f_g * c + i_g * g_g
        h = o_g * jnp.tanh(c)
        hcat_ref[t * H:(t + 1) * H, :] = h                  # sublane-aligned store

    # --- fused output head: one matmul + one tanh + one lane-dense store ---
    out_ref[...] = jnp.tanh(
        jnp.dot(wbig_ref[...], hcat_ref[...], preferred_element_type=jnp.float32)
        + bout_ref[...])


def _reorder_gates(w):
    """torch LSTM gate order (i, f, g, o) -> kernel order (i, f, o, g) along rows."""
    H = HIDDEN
    return jnp.concatenate([w[:H], w[H:2 * H], w[3 * H:4 * H], w[2 * H:3 * H]], axis=0)


def prepare_params(params):
    """One-time weight preprocessing.  Call ONCE outside the per-step forward so the
    reorder / block-assembly HLOs do not re-execute on every generator call."""
    wih_r = _reorder_gates(params["W_ih"])                              # (4H, I)
    wih_r = jnp.pad(wih_r, ((0, 0), (0, I_PAD - INPUT_SIZE)))           # (4H, I_PAD)
    whh_r = _reorder_gates(params["W_hh"])                              # (4H, H)
    b_r = _reorder_gates((params["b_ih"] + params["b_hh"])[:, None])    # (4H, 1)

    # torch Linear weight W_out has shape (C_out=COLUMNS, in=T*STEP); W_out[j, t*STEP+s]
    w_out3 = params["W_out"].reshape(COLUMNS, T, STEP)                  # (Cout, T, STEP)
    blocks = []
    for r in range(ROWS):
        blk = jnp.zeros((COLUMNS, T, HIDDEN), dtype=jnp.float32)
        blk = blk.at[:, :, r * STEP:(r + 1) * STEP].set(w_out3)
        blocks.append(blk.reshape(COLUMNS, T * HIDDEN))
    w_big = jnp.concatenate(blocks, axis=0)                             # (R*C, T*H)
    b_big = jnp.tile(params["b_out"], ROWS)[:, None]                    # (R*C, 1)
    return {"W_ih_r": wih_r, "W_hh_r": whh_r, "b_r": b_r,
            "W_big": w_big, "b_big": b_big}


@jax.jit
def ganeraid_generator_forward(x, h0, c0, prep):
    B = x.shape[0]
    n_tiles = -(-B // B_TILE)
    Bp = n_tiles * B_TILE

    # ---- layout plumbing (batch on lanes) ----
    # x2d[i, bi*T*B_TILE + t*B_TILE + b] = x[bi*B_TILE + b, t, i]; zero-pad i to I_PAD.
    xp = jnp.pad(x.reshape(B, T, INPUT_SIZE),
                 ((0, Bp - B), (0, 0), (0, I_PAD - INPUT_SIZE)))        # (Bp, T, I_PAD)
    x2d = (xp.reshape(n_tiles, B_TILE, T, I_PAD)
             .transpose(3, 0, 2, 1)
             .reshape(I_PAD, n_tiles * T * B_TILE))
    h0_f = jnp.pad(h0[0].T, ((0, 0), (0, Bp - B)))                      # (H, Bp), fwd dir
    c0_f = jnp.pad(c0[0].T, ((0, 0), (0, Bp - B)))

    RC = ROWS * COLUMNS
    out2d = pl.pallas_call(
        ganeraid_kernel,
        out_shape=jax.ShapeDtypeStruct((RC, Bp), jnp.float32),
        grid_spec=pltpu.PrefetchScalarGridSpec(
            num_scalar_prefetch=0,
            grid=(n_tiles,),
            in_specs=[
                pl.BlockSpec((I_PAD, T * B_TILE), lambda bi: (0, bi)),   # x2d
                pl.BlockSpec((HIDDEN, B_TILE), lambda bi: (0, bi)),      # h0
                pl.BlockSpec((HIDDEN, B_TILE), lambda bi: (0, bi)),      # c0
                pl.BlockSpec((4 * HIDDEN, I_PAD), lambda bi: (0, 0)),    # W_ih_r
                pl.BlockSpec((4 * HIDDEN, HIDDEN), lambda bi: (0, 0)),   # W_hh_r
                pl.BlockSpec((4 * HIDDEN, 1), lambda bi: (0, 0)),        # b_r
                pl.BlockSpec((RC, T * HIDDEN), lambda bi: (0, 0)),       # W_big
                pl.BlockSpec((RC, 1), lambda bi: (0, 0)),                # b_big
            ],
            out_specs=pl.BlockSpec((RC, B_TILE), lambda bi: (0, bi)),
            scratch_shapes=[
                pltpu.VMEM((4 * HIDDEN, T * B_TILE), jnp.float32),       # gx
                pltpu.VMEM((T * HIDDEN, B_TILE), jnp.float32),           # hcat
            ],
        ),
        compiler_params=pltpu.CompilerParams(
            dimension_semantics=("parallel",)),
    )(x2d, h0_f, c0_f, prep["W_ih_r"], prep["W_hh_r"], prep["b_r"],
      prep["W_big"], prep["b_big"])

    # lane-dense (R*C, Bp) -> (B, rows, columns)
    return out2d[:, :B].reshape(ROWS, COLUMNS, B).transpose(2, 0, 1)


def init_params(key):
    """Deterministic init matching torch shapes (uniform(-1/sqrt(fan), 1/sqrt(fan)))."""
    keys = jax.random.split(key, 6)
    k_lstm = 1.0 / jnp.sqrt(jnp.float32(HIDDEN))
    k_lin = 1.0 / jnp.sqrt(jnp.float32(STEP * COLUMNS))
    return {
        "W_ih": jax.random.uniform(keys[0], (4 * HIDDEN, INPUT_SIZE),
                                   jnp.float32, -k_lstm, k_lstm),
        "W_hh": jax.random.uniform(keys[1], (4 * HIDDEN, HIDDEN),
                                   jnp.float32, -k_lstm, k_lstm),
        "b_ih": jax.random.uniform(keys[2], (4 * HIDDEN,), jnp.float32, -k_lstm, k_lstm),
        "b_hh": jax.random.uniform(keys[3], (4 * HIDDEN,), jnp.float32, -k_lstm, k_lstm),
        "W_out": jax.random.uniform(keys[4], (COLUMNS, STEP * COLUMNS),
                                    jnp.float32, -k_lin, k_lin),
        "b_out": jax.random.uniform(keys[5], (COLUMNS,), jnp.float32, -k_lin, k_lin),
    }


def reference_forward(x, h0, c0, params):
    """Pure-JAX reference mirroring the torch forward (torch gate order i,f,g,o)."""
    hp = jax.lax.Precision.HIGHEST
    B = x.shape[0]
    xs = x.reshape(B, COLUMNS, INPUT_SIZE)
    h, c = h0[0], c0[0]
    outs = []
    for t in range(COLUMNS):
        g = (jnp.dot(xs[:, t, :], params["W_ih"].T, precision=hp)
             + jnp.dot(h, params["W_hh"].T, precision=hp)
             + params["b_ih"] + params["b_hh"])
        i_g = jax.nn.sigmoid(g[:, :HIDDEN])
        f_g = jax.nn.sigmoid(g[:, HIDDEN:2 * HIDDEN])
        g_g = jnp.tanh(g[:, 2 * HIDDEN:3 * HIDDEN])
        o_g = jax.nn.sigmoid(g[:, 3 * HIDDEN:])
        c = f_g * c + i_g * g_g
        h = o_g * jnp.tanh(c)
        outs.append(h)
    lstm_out = jnp.stack(outs, axis=1)                              # (B, T, H)
    rows_out = []
    for r in range(ROWS):
        flat = lstm_out[:, :, r * STEP:(r + 1) * STEP].reshape(B, -1)
        rows_out.append(jnp.tanh(jnp.dot(flat, params["W_out"].T, precision=hp)
                                 + params["b_out"]))
    return jnp.stack(rows_out, axis=1)                              # (B, rows, columns)


if __name__ == "__main__":
    key = jax.random.PRNGKey(0)
    kp, kx, kh, kc = jax.random.split(key, 4)
    params = init_params(kp)
    prep = prepare_params(params)          # one-time weight prep, hoisted out of forward

    B = 2
    x = jax.random.normal(kx, (B, NOISE), dtype=jnp.float32)
    # torch init_hidden draws randn(layers*dirs, B, H); drawn deterministically here.
    h0 = jax.random.normal(kh, (LSTM_LAYERS * DIRECTIONS, B, HIDDEN), dtype=jnp.float32)
    c0 = jax.random.normal(kc, (LSTM_LAYERS * DIRECTIONS, B, HIDDEN), dtype=jnp.float32)

    out = ganeraid_generator_forward(x, h0, c0, prep)
    out = jax.block_until_ready(out)

    ref = reference_forward(x, h0, c0, params)
    assert out.shape == (B, ROWS, COLUMNS), out.shape
    assert bool(jnp.allclose(out, ref, atol=2e-3, rtol=2e-3)), "kernel/reference mismatch"
    print("KERNEL_OK")
</pallas_src>

<mosaic_0001>
module attributes {stable_mosaic.version = 11 : i64} {
  func.func @ganeraid_kernel(%arg0: i32, %arg1: memref<8x4096xf32, #tpu.memory_space<vmem>>, %arg2: memref<32x512xf32, #tpu.memory_space<vmem>>, %arg3: memref<32x512xf32, #tpu.memory_space<vmem>>, %arg4: memref<128x8xf32, #tpu.memory_space<vmem>>, %arg5: memref<128x32xf32, #tpu.memory_space<vmem>>, %arg6: memref<128x1xf32, #tpu.memory_space<vmem>>, %arg7: memref<32x256xf32, #tpu.memory_space<vmem>>, %arg8: memref<32x1xf32, #tpu.memory_space<vmem>>, %arg9: memref<32x512xf32, #tpu.memory_space<vmem>>, %arg10: memref<128x4096xf32, #tpu.memory_space<vmem>>, %arg11: memref<256x512xf32, #tpu.memory_space<vmem>>) attributes {dimension_semantics = [#tpu.dimension_semantics<parallel>], iteration_bounds = array<i64: 1>, scalar_prefetch = 0 : i64, scratch_operands = 2 : i64, tpu.core_type = #tpu.core_type<tc>, window_params = [{transform_indices = @transform_0, window_bounds = array<i64: 8, 4096>}, {transform_indices = @transform_1, window_bounds = array<i64: 32, 512>}, {transform_indices = @transform_2, window_bounds = array<i64: 32, 512>}, {pipeline_mode = #tpu.pipeline_mode<synchronous>, transform_indices = @transform_3, window_bounds = array<i64: 128, 8>}, {pipeline_mode = #tpu.pipeline_mode<synchronous>, transform_indices = @transform_4, window_bounds = array<i64: 128, 32>}, {pipeline_mode = #tpu.pipeline_mode<synchronous>, transform_indices = @transform_5, window_bounds = array<i64: 128, 1>}, {pipeline_mode = #tpu.pipeline_mode<synchronous>, transform_indices = @transform_6, window_bounds = array<i64: 32, 256>}, {pipeline_mode = #tpu.pipeline_mode<synchronous>, transform_indices = @transform_7, window_bounds = array<i64: 32, 1>}, {transform_indices = @transform_8, window_bounds = array<i64: 32, 512>}]} {
    %c0 = arith.constant 0 : index
    %c0_0 = arith.constant 0 : index
    %0 = vector.load %arg4[%c0, %c0_0] : memref<128x8xf32, #tpu.memory_space<vmem>>, vector<128x8xf32>
    %c0_1 = arith.constant 0 : index
    %c0_2 = arith.constant 0 : index
    %1 = vector.load %arg1[%c0_1, %c0_2] : memref<8x4096xf32, #tpu.memory_space<vmem>>, vector<8x4096xf32>
    %cst = arith.constant dense<0.000000e+00> : vector<128x4096xf32>
    %2 = tpu.matmul %0, %1, %cst {dimension_numbers = #tpu.dot_dimension_numbers<[1], [0], [0], [1], [0, 0, 1, 1], [], []>} : vector<128x8xf32>, vector<8x4096xf32>, vector<128x4096xf32> -> vector<128x4096xf32>
    %c0_3 = arith.constant 0 : index
    %c0_4 = arith.constant 0 : index
    %3 = vector.load %arg6[%c0_3, %c0_4] : memref<128x1xf32, #tpu.memory_space<vmem>>, vector<128x1xf32>
    %4 = vector.broadcast %3 : vector<128x1xf32> to vector<128x4096xf32>
    %5 = arith.addf %2, %4 : vector<128x4096xf32>
    %c0_5 = arith.constant 0 : index
    %c0_6 = arith.constant 0 : index
    %6 = vector.load %arg10[%c0_5, %c0_6] : memref<128x4096xf32, #tpu.memory_space<vmem>>, vector<128x4096xf32>
    tpu.vector_store %arg10[%c0_5, %c0_6], %5 {strides = array<i32>} : memref<128x4096xf32, #tpu.memory_space<vmem>>, vector<128x4096xf32>,
    %c0_7 = arith.constant 0 : index
    %c0_8 = arith.constant 0 : index
    %7 = vector.load %arg5[%c0_7, %c0_8] : memref<128x32xf32, #tpu.memory_space<vmem>>, vector<128x32xf32>
    %c0_9 = arith.constant 0 : index
    %c0_10 = arith.constant 0 : index
    %8 = vector.load %arg2[%c0_9, %c0_10] : memref<32x512xf32, #tpu.memory_space<vmem>>, vector<32x512xf32>
    %c0_11 = arith.constant 0 : index
    %c0_12 = arith.constant 0 : index
    %9 = vector.load %arg3[%c0_11, %c0_12] : memref<32x512xf32, #tpu.memory_space<vmem>>, vector<32x512xf32>
    %c0_13 = arith.constant 0 : index
    %c0_14 = arith.constant 0 : index
    %10 = vector.load %arg10[%c0_13, %c0_14] : memref<128x4096xf32, #tpu.memory_space<vmem>>, vector<128x512xf32>
    %cst_15 = arith.constant dense<0.000000e+00> : vector<128x512xf32>
    %11 = tpu.matmul %7, %8, %cst_15 {dimension_numbers = #tpu.dot_dimension_numbers<[1], [0], [0], [1], [0, 0, 1, 1], [], []>} : vector<128x32xf32>, vector<32x512xf32>, vector<128x512xf32> -> vector<128x512xf32>
    %12 = arith.addf %10, %11 : vector<128x512xf32>
    %13 = vector.extract_strided_slice %12 {offsets = [0, 0], sizes = [96, 512], strides = [1, 1]} : vector<128x512xf32> to vector<96x512xf32>
    %14 = arith.negf %13 : vector<96x512xf32>
    %15 = math.exp %14 : vector<96x512xf32>
    %cst_16 = arith.constant 1.000000e+00 : f32
    %16 = vector.broadcast %cst_16 : f32 to vector<96x512xf32>
    %17 = arith.addf %16, %15 : vector<96x512xf32>
    %18 = arith.divf %16, %17 : vector<96x512xf32>
    %19 = vector.extract_strided_slice %18 {offsets = [0, 0], sizes = [32, 512], strides = [1, 1]} : vector<96x512xf32> to vector<32x512xf32>
    %20 = vector.extract_strided_slice %18 {offsets = [32, 0], sizes = [32, 512], strides = [1, 1]} : vector<96x512xf32> to vector<32x512xf32>
    %21 = vector.extract_strided_slice %18 {offsets = [64, 0], sizes = [32, 512], strides = [1, 1]} : vector<96x512xf32> to vector<32x512xf32>
    %22 = vector.extract_strided_slice %12 {offsets = [96, 0], sizes = [32, 512], strides = [1, 1]} : vector<128x512xf32> to vector<32x512xf32>
    %23 = math.tanh %22 : vector<32x512xf32>
    %24 = arith.mulf %20, %9 : vector<32x512xf32>
    %25 = arith.mulf %19, %23 : vector<32x512xf32>
    %26 = arith.addf %24, %25 : vector<32x512xf32>
    %27 = math.tanh %26 : vector<32x512xf32>
    %28 = arith.mulf %21, %27 : vector<32x512xf32>
    %c0_17 = arith.constant 0 : index
    %c0_18 = arith.constant 0 : index
    %29 = vector.load %arg11[%c0_17, %c0_18] : memref<256x512xf32, #tpu.memory_space<vmem>>, vector<32x512xf32>
    tpu.vector_store %arg11[%c0_17, %c0_18], %28 {strides = array<i32>} : memref<256x512xf32, #tpu.memory_space<vmem>>, vector<32x512xf32>,
    %c0_19 = arith.constant 0 : index
    %c512 = arith.constant 512 : index
    %30 = vector.load %arg10[%c0_19, %c512] : memref<128x4096xf32, #tpu.memory_space<vmem>>, vector<128x512xf32>
    %cst_20 = arith.constant dense<0.000000e+00> : vector<128x512xf32>
    %31 = tpu.matmul %7, %28, %cst_20 {dimension_numbers = #tpu.dot_dimension_numbers<[1], [0], [0], [1], [0, 0, 1, 1], [], []>} : vector<128x32xf32>, vector<32x512xf32>, vector<128x512xf32> -> vector<128x512xf32>
    %32 = arith.addf %30, %31 : vector<128x512xf32>
    %33 = vector.extract_strided_slice %32 {offsets = [0, 0], sizes = [96, 512], strides = [1, 1]} : vector<128x512xf32> to vector<96x512xf32>
    %34 = arith.negf %33 : vector<96x512xf32>
    %35 = math.exp %34 : vector<96x512xf32>
    %cst_21 = arith.constant 1.000000e+00 : f32
    %36 = vector.broadcast %cst_21 : f32 to vector<96x512xf32>
    %37 = arith.addf %36, %35 : vector<96x512xf32>
    %38 = arith.divf %36, %37 : vector<96x512xf32>
    %39 = vector.extract_strided_slice %38 {offsets = [0, 0], sizes = [32, 512], strides = [1, 1]} : vector<96x512xf32> to vector<32x512xf32>
    %40 = vector.extract_strided_slice %38 {offsets = [32, 0], sizes = [32, 512], strides = [1, 1]} : vector<96x512xf32> to vector<32x512xf32>
    %41 = vector.extract_strided_slice %38 {offsets = [64, 0], sizes = [32, 512], strides = [1, 1]} : vector<96x512xf32> to vector<32x512xf32>
    %42 = vector.extract_strided_slice %32 {offsets = [96, 0], sizes = [32, 512], strides = [1, 1]} : vector<128x512xf32> to vector<32x512xf32>
    %43 = math.tanh %42 : vector<32x512xf32>
    %44 = arith.mulf %40, %26 : vector<32x512xf32>
    %45 = arith.mulf %39, %43 : vector<32x512xf32>
    %46 = arith.addf %44, %45 : vector<32x512xf32>
    %47 = math.tanh %46 : vector<32x512xf32>
    %48 = arith.mulf %41, %47 : vector<32x512xf32>
    %c32 = arith.constant 32 : index
    %c0_22 = arith.constant 0 : index
    %49 = vector.load %arg11[%c32, %c0_22] : memref<256x512xf32, #tpu.memory_space<vmem>>, vector<32x512xf32>
    tpu.vector_store %arg11[%c32, %c0_22], %48 {strides = array<i32>} : memref<256x512xf32, #tpu.memory_space<vmem>>, vector<32x512xf32>,
    %c0_23 = arith.constant 0 : index
    %c1024 = arith.constant 1024 : index
    %50 = vector.load %arg10[%c0_23, %c1024] : memref<128x4096xf32, #tpu.memory_space<vmem>>, vector<128x512xf32>
    %cst_24 = arith.constant dense<0.000000e+00> : vector<128x512xf32>
    %51 = tpu.matmul %7, %48, %cst_24 {dimension_numbers = #tpu.dot_dimension_numbers<[1], [0], [0], [1], [0, 0, 1, 1], [], []>} : vector<128x32xf32>, vector<32x512xf32>, vector<128x512xf32> -> vector<128x512xf32>
    %52 = arith.addf %50, %51 : vector<128x512xf32>
    %53 = vector.extract_strided_slice %52 {offsets = [0, 0], sizes = [96, 512], strides = [1, 1]} : vector<128x512xf32> to vector<96x512xf32>
    %54 = arith.negf %53 : vector<96x512xf32>
    %55 = math.exp %54 : vector<96x512xf32>
    %cst_25 = arith.constant 1.000000e+00 : f32
    %56 = vector.broadcast %cst_25 : f32 to vector<96x512xf32>
    %57 = arith.addf %56, %55 : vector<96x512xf32>
    %58 = arith.divf %56, %57 : vector<96x512xf32>
    %59 = vector.extract_strided_slice %58 {offsets = [0, 0], sizes = [32, 512], strides = [1, 1]} : vector<96x512xf32> to vector<32x512xf32>
    %60 = vector.extract_strided_slice %58 {offsets = [32, 0], sizes = [32, 512], strides = [1, 1]} : vector<96x512xf32> to vector<32x512xf32>
    %61 = vector.extract_strided_slice %58 {offsets = [64, 0], sizes = [32, 512], strides = [1, 1]} : vector<96x512xf32> to vector<32x512xf32>
    %62 = vector.extract_strided_slice %52 {offsets = [96, 0], sizes = [32, 512], strides = [1, 1]} : vector<128x512xf32> to vector<32x512xf32>
    %63 = math.tanh %62 : vector<32x512xf32>
    %64 = arith.mulf %60, %46 : vector<32x512xf32>
    %65 = arith.mulf %59, %63 : vector<32x512xf32>
    %66 = arith.addf %64, %65 : vector<32x512xf32>
    %67 = math.tanh %66 : vector<32x512xf32>
    %68 = arith.mulf %61, %67 : vector<32x512xf32>
    %c64 = arith.constant 64 : index
    %c0_26 = arith.constant 0 : index
    %69 = vector.load %arg11[%c64, %c0_26] : memref<256x512xf32, #tpu.memory_space<vmem>>, vector<32x512xf32>
    tpu.vector_store %arg11[%c64, %c0_26], %68 {strides = array<i32>} : memref<256x512xf32, #tpu.memory_space<vmem>>, vector<32x512xf32>,
    %c0_27 = arith.constant 0 : index
    %c1536 = arith.constant 1536 : index
    %70 = vector.load %arg10[%c0_27, %c1536] : memref<128x4096xf32, #tpu.memory_space<vmem>>, vector<128x512xf32>
    %cst_28 = arith.constant dense<0.000000e+00> : vector<128x512xf32>
    %71 = tpu.matmul %7, %68, %cst_28 {dimension_numbers = #tpu.dot_dimension_numbers<[1], [0], [0], [1], [0, 0, 1, 1], [], []>} : vector<128x32xf32>, vector<32x512xf32>, vector<128x512xf32> -> vector<128x512xf32>
    %72 = arith.addf %70, %71 : vector<128x512xf32>
    %73 = vector.extract_strided_slice %72 {offsets = [0, 0], sizes = [96, 512], strides = [1, 1]} : vector<128x512xf32> to vector<96x512xf32>
    %74 = arith.negf %73 : vector<96x512xf32>
    %75 = math.exp %74 : vector<96x512xf32>
    %cst_29 = arith.constant 1.000000e+00 : f32
    %76 = vector.broadcast %cst_29 : f32 to vector<96x512xf32>
    %77 = arith.addf %76, %75 : vector<96x512xf32>
    %78 = arith.divf %76, %77 : vector<96x512xf32>
    %79 = vector.extract_strided_slice %78 {offsets = [0, 0], sizes = [32, 512], strides = [1, 1]} : vector<96x512xf32> to vector<32x512xf32>
    %80 = vector.extract_strided_slice %78 {offsets = [32, 0], sizes = [32, 512], strides = [1, 1]} : vector<96x512xf32> to vector<32x512xf32>
    %81 = vector.extract_strided_slice %78 {offsets = [64, 0], sizes = [32, 512], strides = [1, 1]} : vector<96x512xf32> to vector<32x512xf32>
    %82 = vector.extract_strided_slice %72 {offsets = [96, 0], sizes = [32, 512], strides = [1, 1]} : vector<128x512xf32> to vector<32x512xf32>
    %83 = math.tanh %82 : vector<32x512xf32>
    %84 = arith.mulf %80, %66 : vector<32x512xf32>
    %85 = arith.mulf %79, %83 : vector<32x512xf32>
    %86 = arith.addf %84, %85 : vector<32x512xf32>
    %87 = math.tanh %86 : vector<32x512xf32>
    %88 = arith.mulf %81, %87 : vector<32x512xf32>
    %c96 = arith.constant 96 : index
    %c0_30 = arith.constant 0 : index
    %89 = vector.load %arg11[%c96, %c0_30] : memref<256x512xf32, #tpu.memory_space<vmem>>, vector<32x512xf32>
    tpu.vector_store %arg11[%c96, %c0_30], %88 {strides = array<i32>} : memref<256x512xf32, #tpu.memory_space<vmem>>, vector<32x512xf32>,
    %c0_31 = arith.constant 0 : index
    %c2048 = arith.constant 2048 : index
    %90 = vector.load %arg10[%c0_31, %c2048] : memref<128x4096xf32, #tpu.memory_space<vmem>>, vector<128x512xf32>
    %cst_32 = arith.constant dense<0.000000e+00> : vector<128x512xf32>
    %91 = tpu.matmul %7, %88, %cst_32 {dimension_numbers = #tpu.dot_dimension_numbers<[1], [0], [0], [1], [0, 0, 1, 1], [], []>} : vector<128x32xf32>, vector<32x512xf32>, vector<128x512xf32> -> vector<128x512xf32>
    %92 = arith.addf %90, %91 : vector<128x512xf32>
    %93 = vector.extract_strided_slice %92 {offsets = [0, 0], sizes = [96, 512], strides = [1, 1]} : vector<128x512xf32> to vector<96x512xf32>
    %94 = arith.negf %93 : vector<96x512xf32>
    %95 = math.exp %94 : vector<96x512xf32>
    %cst_33 = arith.constant 1.000000e+00 : f32
    %96 = vector.broadcast %cst_33 : f32 to vector<96x512xf32>
    %97 = arith.addf %96, %95 : vector<96x512xf32>
    %98 = arith.divf %96, %97 : vector<96x512xf32>
    %99 = vector.extract_strided_slice %98 {offsets = [0, 0], sizes = [32, 512], strides = [1, 1]} : vector<96x512xf32> to vector<32x512xf32>
    %100 = vector.extract_strided_slice %98 {offsets = [32, 0], sizes = [32, 512], strides = [1, 1]} : vector<96x512xf32> to vector<32x512xf32>
    %101 = vector.extract_strided_slice %98 {offsets = [64, 0], sizes = [32, 512], strides = [1, 1]} : vector<96x512xf32> to vector<32x512xf32>
    %102 = vector.extract_strided_slice %92 {offsets = [96, 0], sizes = [32, 512], strides = [1, 1]} : vector<128x512xf32> to vector<32x512xf32>
    %103 = math.tanh %102 : vector<32x512xf32>
    %104 = arith.mulf %100, %86 : vector<32x512xf32>
    %105 = arith.mulf %99, %103 : vector<32x512xf32>
    %106 = arith.addf %104, %105 : vector<32x512xf32>
    %107 = math.tanh %106 : vector<32x512xf32>
    %108 = arith.mulf %101, %107 : vector<32x512xf32>
    %c128 = arith.constant 128 : index
    %c0_34 = arith.constant 0 : index
    %109 = vector.load %arg11[%c128, %c0_34] : memref<256x512xf32, #tpu.memory_space<vmem>>, vector<32x512xf32>
    tpu.vector_store %arg11[%c128, %c0_34], %108 {strides = array<i32>} : memref<256x512xf32, #tpu.memory_space<vmem>>, vector<32x512xf32>,
    %c0_35 = arith.constant 0 : index
    %c2560 = arith.constant 2560 : index
    %110 = vector.load %arg10[%c0_35, %c2560] : memref<128x4096xf32, #tpu.memory_space<vmem>>, vector<128x512xf32>
    %cst_36 = arith.constant dense<0.000000e+00> : vector<128x512xf32>
    %111 = tpu.matmul %7, %108, %cst_36 {dimension_numbers = #tpu.dot_dimension_numbers<[1], [0], [0], [1], [0, 0, 1, 1], [], []>} : vector<128x32xf32>, vector<32x512xf32>, vector<128x512xf32> -> vector<128x512xf32>
    %112 = arith.addf %110, %111 : vector<128x512xf32>
    %113 = vector.extract_strided_slice %112 {offsets = [0, 0], sizes = [96, 512], strides = [1, 1]} : vector<128x512xf32> to vector<96x512xf32>
    %114 = arith.negf %113 : vector<96x512xf32>
    %115 = math.exp %114 : vector<96x512xf32>
    %cst_37 = arith.constant 1.000000e+00 : f32
    %116 = vector.broadcast %cst_37 : f32 to vector<96x512xf32>
    %117 = arith.addf %116, %115 : vector<96x512xf32>
    %118 = arith.divf %116, %117 : vector<96x512xf32>
    %119 = vector.extract_strided_slice %118 {offsets = [0, 0], sizes = [32, 512], strides = [1, 1]} : vector<96x512xf32> to vector<32x512xf32>
    %120 = vector.extract_strided_slice %118 {offsets = [32, 0], sizes = [32, 512], strides = [1, 1]} : vector<96x512xf32> to vector<32x512xf32>
    %121 = vector.extract_strided_slice %118 {offsets = [64, 0], sizes = [32, 512], strides = [1, 1]} : vector<96x512xf32> to vector<32x512xf32>
    %122 = vector.extract_strided_slice %112 {offsets = [96, 0], sizes = [32, 512], strides = [1, 1]} : vector<128x512xf32> to vector<32x512xf32>
    %123 = math.tanh %122 : vector<32x512xf32>
    %124 = arith.mulf %120, %106 : vector<32x512xf32>
    %125 = arith.mulf %119, %123 : vector<32x512xf32>
    %126 = arith.addf %124, %125 : vector<32x512xf32>
    %127 = math.tanh %126 : vector<32x512xf32>
    %128 = arith.mulf %121, %127 : vector<32x512xf32>
    %c160 = arith.constant 160 : index
    %c0_38 = arith.constant 0 : index
    %129 = vector.load %arg11[%c160, %c0_38] : memref<256x512xf32, #tpu.memory_space<vmem>>, vector<32x512xf32>
    tpu.vector_store %arg11[%c160, %c0_38], %128 {strides = array<i32>} : memref<256x512xf32, #tpu.memory_space<vmem>>, vector<32x512xf32>,
    %c0_39 = arith.constant 0 : index
    %c3072 = arith.constant 3072 : index
    %130 = vector.load %arg10[%c0_39, %c3072] : memref<128x4096xf32, #tpu.memory_space<vmem>>, vector<128x512xf32>
    %cst_40 = arith.constant dense<0.000000e+00> : vector<128x512xf32>
    %131 = tpu.matmul %7, %128, %cst_40 {dimension_numbers = #tpu.dot_dimension_numbers<[1], [0], [0], [1], [0, 0, 1, 1], [], []>} : vector<128x32xf32>, vector<32x512xf32>, vector<128x512xf32> -> vector<128x512xf32>
    %132 = arith.addf %130, %131 : vector<128x512xf32>
    %133 = vector.extract_strided_slice %132 {offsets = [0, 0], sizes = [96, 512], strides = [1, 1]} : vector<128x512xf32> to vector<96x512xf32>
    %134 = arith.negf %133 : vector<96x512xf32>
    %135 = math.exp %134 : vector<96x512xf32>
    %cst_41 = arith.constant 1.000000e+00 : f32
    %136 = vector.broadcast %cst_41 : f32 to vector<96x512xf32>
    %137 = arith.addf %136, %135 : vector<96x512xf32>
    %138 = arith.divf %136, %137 : vector<96x512xf32>
    %139 = vector.extract_strided_slice %138 {offsets = [0, 0], sizes = [32, 512], strides = [1, 1]} : vector<96x512xf32> to vector<32x512xf32>
    %140 = vector.extract_strided_slice %138 {offsets = [32, 0], sizes = [32, 512], strides = [1, 1]} : vector<96x512xf32> to vector<32x512xf32>
    %141 = vector.extract_strided_slice %138 {offsets = [64, 0], sizes = [32, 512], strides = [1, 1]} : vector<96x512xf32> to vector<32x512xf32>
    %142 = vector.extract_strided_slice %132 {offsets = [96, 0], sizes = [32, 512], strides = [1, 1]} : vector<128x512xf32> to vector<32x512xf32>
    %143 = math.tanh %142 : vector<32x512xf32>
    %144 = arith.mulf %140, %126 : vector<32x512xf32>
    %145 = arith.mulf %139, %143 : vector<32x512xf32>
    %146 = arith.addf %144, %145 : vector<32x512xf32>
    %147 = math.tanh %146 : vector<32x512xf32>
    %148 = arith.mulf %141, %147 : vector<32x512xf32>
    %c192 = arith.constant 192 : index
    %c0_42 = arith.constant 0 : index
    %149 = vector.load %arg11[%c192, %c0_42] : memref<256x512xf32, #tpu.memory_space<vmem>>, vector<32x512xf32>
    tpu.vector_store %arg11[%c192, %c0_42], %148 {strides = array<i32>} : memref<256x512xf32, #tpu.memory_space<vmem>>, vector<32x512xf32>,
    %c0_43 = arith.constant 0 : index
    %c3584 = arith.constant 3584 : index
    %150 = vector.load %arg10[%c0_43, %c3584] : memref<128x4096xf32, #tpu.memory_space<vmem>>, vector<128x512xf32>
    %cst_44 = arith.constant dense<0.000000e+00> : vector<128x512xf32>
    %151 = tpu.matmul %7, %148, %cst_44 {dimension_numbers = #tpu.dot_dimension_numbers<[1], [0], [0], [1], [0, 0, 1, 1], [], []>} : vector<128x32xf32>, vector<32x512xf32>, vector<128x512xf32> -> vector<128x512xf32>
    %152 = arith.addf %150, %151 : vector<128x512xf32>
    %153 = vector.extract_strided_slice %152 {offsets = [0, 0], sizes = [96, 512], strides = [1, 1]} : vector<128x512xf32> to vector<96x512xf32>
    %154 = arith.negf %153 : vector<96x512xf32>
    %155 = math.exp %154 : vector<96x512xf32>
    %cst_45 = arith.constant 1.000000e+00 : f32
    %156 = vector.broadcast %cst_45 : f32 to vector<96x512xf32>
    %157 = arith.addf %156, %155 : vector<96x512xf32>
    %158 = arith.divf %156, %157 : vector<96x512xf32>
    %159 = vector.extract_strided_slice %158 {offsets = [0, 0], sizes = [32, 512], strides = [1, 1]} : vector<96x512xf32> to vector<32x512xf32>
    %160 = vector.extract_strided_slice %158 {offsets = [32, 0], sizes = [32, 512], strides = [1, 1]} : vector<96x512xf32> to vector<32x512xf32>
    %161 = vector.extract_strided_slice %158 {offsets = [64, 0], sizes = [32, 512], strides = [1, 1]} : vector<96x512xf32> to vector<32x512xf32>
    %162 = vector.extract_strided_slice %152 {offsets = [96, 0], sizes = [32, 512], strides = [1, 1]} : vector<128x512xf32> to vector<32x512xf32>
    %163 = math.tanh %162 : vector<32x512xf32>
    %164 = arith.mulf %160, %146 : vector<32x512xf32>
    %165 = arith.mulf %159, %163 : vector<32x512xf32>
    %166 = arith.addf %164, %165 : vector<32x512xf32>
    %167 = math.tanh %166 : vector<32x512xf32>
    %168 = arith.mulf %161, %167 : vector<32x512xf32>
    %c224 = arith.constant 224 : index
    %c0_46 = arith.constant 0 : index
    %169 = vector.load %arg11[%c224, %c0_46] : memref<256x512xf32, #tpu.memory_space<vmem>>, vector<32x512xf32>
    tpu.vector_store %arg11[%c224, %c0_46], %168 {strides = array<i32>} : memref<256x512xf32, #tpu.memory_space<vmem>>, vector<32x512xf32>,
    %c0_47 = arith.constant 0 : index
    %c0_48 = arith.constant 0 : index
    %170 = vector.load %arg7[%c0_47, %c0_48] : memref<32x256xf32, #tpu.memory_space<vmem>>, vector<32x256xf32>
    %c0_49 = arith.constant 0 : index
    %c0_50 = arith.constant 0 : index
    %171 = vector.load %arg11[%c0_49, %c0_50] : memref<256x512xf32, #tpu.memory_space<vmem>>, vector<256x512xf32>
    %cst_51 = arith.constant dense<0.000000e+00> : vector<32x512xf32>
    %172 = tpu.matmul %170, %171, %cst_51 {dimension_numbers = #tpu.dot_dimension_numbers<[1], [0], [0], [1], [0, 0, 1, 1], [], []>} : vector<32x256xf32>, vector<256x512xf32>, vector<32x512xf32> -> vector<32x512xf32>
    %c0_52 = arith.constant 0 : index
    %c0_53 = arith.constant 0 : index
    %173 = vector.load %arg8[%c0_52, %c0_53] : memref<32x1xf32, #tpu.memory_space<vmem>>, vector<32x1xf32>
    %174 = vector.broadcast %173 : vector<32x1xf32> to vector<32x512xf32>
    %175 = arith.addf %172, %174 : vector<32x512xf32>
    %176 = math.tanh %175 : vector<32x512xf32>
    %c0_54 = arith.constant 0 : index
    %c0_55 = arith.constant 0 : index
    %177 = vector.load %arg9[%c0_54, %c0_55] : memref<32x512xf32, #tpu.memory_space<vmem>>, vector<32x512xf32>
    tpu.vector_store %arg9[%c0_54, %c0_55], %176 {strides = array<i32>} : memref<32x512xf32, #tpu.memory_space<vmem>>, vector<32x512xf32>,
    return
  }
  func.func @transform_0(%arg0: i32) -> (i32, i32) {
    %c0_i32 = arith.constant 0 : i32
    %c0_i32_0 = arith.constant 0 : i32
    return %c0_i32, %arg0 : i32, i32
  }
  func.func @transform_1(%arg0: i32) -> (i32, i32) {
    %c0_i32 = arith.constant 0 : i32
    %c0_i32_0 = arith.constant 0 : i32
    return %c0_i32, %arg0 : i32, i32
  }
  func.func @transform_2(%arg0: i32) -> (i32, i32) {
    %c0_i32 = arith.constant 0 : i32
    %c0_i32_0 = arith.constant 0 : i32
    return %c0_i32, %arg0 : i32, i32
  }
  func.func @transform_3(%arg0: i32) -> (i32, i32) {
    %c0_i32 = arith.constant 0 : i32
    %c0_i32_0 = arith.constant 0 : i32
    %c0_i32_1 = arith.constant 0 : i32
    return %c0_i32, %c0_i32_0 : i32, i32
  }
  func.func @transform_4(%arg0: i32) -> (i32, i32) {
    %c0_i32 = arith.constant 0 : i32
    %c0_i32_0 = arith.constant 0 : i32
    %c0_i32_1 = arith.constant 0 : i32
    return %c0_i32, %c0_i32_0 : i32, i32
  }
  func.func @transform_5(%arg0: i32) -> (i32, i32) {
    %c0_i32 = arith.constant 0 : i32
    %c0_i32_0 = arith.constant 0 : i32
    %c0_i32_1 = arith.constant 0 : i32
    return %c0_i32, %c0_i32_0 : i32, i32
  }
  func.func @transform_6(%arg0: i32) -> (i32, i32) {
    %c0_i32 = arith.constant 0 : i32
    %c0_i32_0 = arith.constant 0 : i32
    %c0_i32_1 = arith.constant 0 : i32
    return %c0_i32, %c0_i32_0 : i32, i32
  }
  func.func @transform_7(%arg0: i32) -> (i32, i32) {
    %c0_i32 = arith.constant 0 : i32
    %c0_i32_0 = arith.constant 0 : i32
    %c0_i32_1 = arith.constant 0 : i32
    return %c0_i32, %c0_i32_0 : i32, i32
  }
  func.func @transform_8(%arg0: i32) -> (i32, i32) {
    %c0_i32 = arith.constant 0 : i32
    %c0_i32_0 = arith.constant 0 : i32
    return %c0_i32, %arg0 : i32, i32
  }
}

</mosaic_0001>

<llo_original>
// kernel: ganeraid_generator_forward.1
$region0: #{ganeraid_generator_forward.1}
  #allocation0 [shape = 'u32[]', space=smem, size = 0x4, offset = 0x4, fixed_abs, tag = 'smem constant byte address 0x4 - core index']
  #allocation1 [shape = 'u32[144,128]{1,0:T(1,128)}', space=vmem, size = 0x12000, scoped, tag = 'internal scratch']
  #allocation2 [shape = 'f32[128,4096]{1,0:T(8,128)}', space=vmem, size = 0x200000, scoped, tag = 'scratch operand']
  #allocation3 [shape = 'f32[256,512]{1,0:T(8,128)}', space=vmem, size = 0x80000, scoped, tag = 'scratch operand']
  %s0 = inlined_call_operand.vmem [shape: f32[8,4096], index: 0, kind: input, shape index: {}]
  %s1 = inlined_call_operand.vmem [shape: f32[32,512], index: 1, kind: input, shape index: {}]
  %s2 = inlined_call_operand.vmem [shape: f32[32,512], index: 2, kind: input, shape index: {}]
  %s3 = inlined_call_operand.vmem [shape: f32[128,8], index: 3, kind: input, shape index: {}]
  %s4 = inlined_call_operand.vmem [shape: f32[128,32], index: 4, kind: input, shape index: {}]
  %s5 = inlined_call_operand.vmem [shape: f32[128,1], index: 5, kind: input, shape index: {}]
  %s6 = inlined_call_operand.vmem [shape: f32[32,256], index: 6, kind: input, shape index: {}]
  %s7 = inlined_call_operand.vmem [shape: f32[32,1], index: 7, kind: input, shape index: {}]
  %s8 = inlined_call_operand.vmem [shape: f32[32,512], index: 8, kind: output, shape index: {}]
  %s9 = sld [smem:[#allocation0]]
  $region42: #{ganeraid_generator_forward.1} parent=0
    _
  %s11 = ssub.s32 1, %s9
  %s12 = scalar_select 0, %s11, %s9
  // Predicated region
  $region2: #{ganeraid_generator_forward.1} parent=0 // pred_check
    _
  $region3: #{ganeraid_generator_forward.1} parent=0 // pred_check_branch
    %14 = sbr.rel (0) target = $region5
  $region4: #{ganeraid_generator_forward.1} parent=0 // pred_region
    _
  $region5: #{ganeraid_generator_forward.1} parent=0 // pred_fallthru
    _
  // Predicated region
  $region6: #{ganeraid_generator_forward.1} parent=0 // pred_check
    _
  $region7: #{ganeraid_generator_forward.1} parent=0 // pred_check_branch
    %16 = sbr.rel (0) target = $region9
  $region8: #{ganeraid_generator_forward.1} parent=0 // pred_region
    _
  $region9: #{ganeraid_generator_forward.1} parent=0 // pred_fallthru
    _
  // Predicated region
  $region10: #{ganeraid_generator_forward.1} parent=0 // pred_check
    _
  $region11: #{ganeraid_generator_forward.1} parent=0 // pred_check_branch
    %18 = sbr.rel (0) target = $region13
  $region12: #{ganeraid_generator_forward.1} parent=0 // pred_region
    _
  $region13: #{ganeraid_generator_forward.1} parent=0 // pred_fallthru
    _
  // Predicated region
  $region14: #{ganeraid_generator_forward.1} parent=0 // pred_check
    _
  $region15: #{ganeraid_generator_forward.1} parent=0 // pred_check_branch
    %20 = sbr.rel (0) target = $region17
  $region16: #{ganeraid_generator_forward.1} parent=0 // pred_region
    _
  $region17: #{ganeraid_generator_forward.1} parent=0 // pred_fallthru
    _
  // Predicated region
  $region18: #{ganeraid_generator_forward.1} parent=0 // pred_check
    _
  $region19: #{ganeraid_generator_forward.1} parent=0 // pred_check_branch
    %22 = sbr.rel (0) target = $region21
  $region20: #{ganeraid_generator_forward.1} parent=0 // pred_region
    _
  $region21: #{ganeraid_generator_forward.1} parent=0 // pred_fallthru
    _
  // Predicated region
  $region22: #{ganeraid_generator_forward.1} parent=0 // pred_check
    _
  $region23: #{ganeraid_generator_forward.1} parent=0 // pred_check_branch
    %24 = sbr.rel (0) target = $region25
  $region24: #{ganeraid_generator_forward.1} parent=0 // pred_region
    _
  $region25: #{ganeraid_generator_forward.1} parent=0 // pred_fallthru
    _
  // Predicated region
  $region26: #{ganeraid_generator_forward.1} parent=0 // pred_check
    _
  $region27: #{ganeraid_generator_forward.1} parent=0 // pred_check_branch
    %26 = sbr.rel (0) target = $region29
  $region28: #{ganeraid_generator_forward.1} parent=0 // pred_region
    _
  $region29: #{ganeraid_generator_forward.1} parent=0 // pred_fallthru
    _
  // Predicated region
  $region30: #{ganeraid_generator_forward.1} parent=0 // pred_check
    _
  $region31: #{ganeraid_generator_forward.1} parent=0 // pred_check_branch
    %28 = sbr.rel (0) target = $region33
  $region32: #{ganeraid_generator_forward.1} parent=0 // pred_region
    _
  $region33: #{ganeraid_generator_forward.1} parent=0 // pred_fallthru
    _
  %v29 = vld [vmem:[%s3] sm:$0xff]
  %v30 = vld [vmem:[%s3 + $0x8] sm:$0xff]
  %v31 = vld [vmem:[%s3 + $0x10] sm:$0xff]
  %v32 = vld [vmem:[%s3 + $0x18] sm:$0xff]
  %v33 = vld [vmem:[%s3 + $0x20] sm:$0xff]
  %v34 = vld [vmem:[%s3 + $0x28] sm:$0xff]
  %v35 = vld [vmem:[%s3 + $0x30] sm:$0xff]
  %v36 = vld [vmem:[%s3 + $0x38] sm:$0xff]
  %v37 = vld [vmem:[%s3 + $0x40] sm:$0xff]
  %v38 = vld [vmem:[%s3 + $0x48] sm:$0xff]
  %v39 = vld [vmem:[%s3 + $0x50] sm:$0xff]
  %v40 = vld [vmem:[%s3 + $0x58] sm:$0xff]
  %v41 = vld [vmem:[%s3 + $0x60] sm:$0xff]
  %v42 = vld [vmem:[%s3 + $0x68] sm:$0xff]
  %v43 = vld [vmem:[%s3 + $0x70] sm:$0xff]
  %v44 = vld [vmem:[%s3 + $0x78] sm:$0xff]
  %v45 = vld [vmem:[%s0] sm:$0xff]
  %v46 = vld [vmem:[%s0 + $0x8] sm:$0xff]
  %v47 = vld [vmem:[%s0 + $0x10] sm:$0xff]
  %v48 = vld [vmem:[%s0 + $0x18] sm:$0xff]
  %v49 = vld [vmem:[%s0 + $0x20] sm:$0xff]
  %v50 = vld [vmem:[%s0 + $0x28] sm:$0xff]
  %v51 = vld [vmem:[%s0 + $0x30] sm:$0xff]
  %v52 = vld [vmem:[%s0 + $0x38] sm:$0xff]
  %v53 = vld [vmem:[%s0 + $0x40] sm:$0xff]
  %v54 = vld [vmem:[%s0 + $0x48] sm:$0xff]
  %v55 = vld [vmem:[%s0 + $0x50] sm:$0xff]
  %v56 = vld [vmem:[%s0 + $0x58] sm:$0xff]
  %v57 = vld [vmem:[%s0 + $0x60] sm:$0xff]
  %v58 = vld [vmem:[%s0 + $0x68] sm:$0xff]
  %v59 = vld [vmem:[%s0 + $0x70] sm:$0xff]
  %v60 = vld [vmem:[%s0 + $0x78] sm:$0xff]
  %v61 = vld [vmem:[%s0 + $0x80] sm:$0xff]
  %v62 = vld [vmem:[%s0 + $0x88] sm:$0xff]
  %v63 = vld [vmem:[%s0 + $0x90] sm:$0xff]
  %v64 = vld [vmem:[%s0 + $0x98] sm:$0xff]
  %v65 = vld [vmem:[%s0 + $0xa0] sm:$0xff]
  %v66 = vld [vmem:[%s0 + $0xa8] sm:$0xff]
  %v67 = vld [vmem:[%s0 + $0xb0] sm:$0xff]
  %v68 = vld [vmem:[%s0 + $0xb8] sm:$0xff]
  %v69 = vld [vmem:[%s0 + $0xc0] sm:$0xff]
  %v70 = vld [vmem:[%s0 + $0xc8] sm:$0xff]
  %v71 = vld [vmem:[%s0 + $0xd0] sm:$0xff]
  %v72 = vld [vmem:[%s0 + $0xd8] sm:$0xff]
  %v73 = vld [vmem:[%s0 + $0xe0] sm:$0xff]
  %v74 = vld [vmem:[%s0 + $0xe8] sm:$0xff]
  %v75 = vld [vmem:[%s0 + $0xf0] sm:$0xff]
  %v76 = vld [vmem:[%s0 + $0xf8] sm:$0xff]
  %v77 = vld [vmem:[%s5] sm:$0xff]
  %v78 = vld [vmem:[%s5 + $0x8] sm:$0xff]
  %v79 = vld [vmem:[%s5 + $0x10] sm:$0xff]
  %v80 = vld [vmem:[%s5 + $0x18] sm:$0xff]
  %v81 = vld [vmem:[%s5 + $0x20] sm:$0xff]
  %v82 = vld [vmem:[%s5 + $0x28] sm:$0xff]
  %v83 = vld [vmem:[%s5 + $0x30] sm:$0xff]
  %v84 = vld [vmem:[%s5 + $0x38] sm:$0xff]
  %v85 = vld [vmem:[%s5 + $0x40] sm:$0xff]
  %v86 = vld [vmem:[%s5 + $0x48] sm:$0xff]
  %v87 = vld [vmem:[%s5 + $0x50] sm:$0xff]
  %v88 = vld [vmem:[%s5 + $0x58] sm:$0xff]
  %v89 = vld [vmem:[%s5 + $0x60] sm:$0xff]
  %v90 = vld [vmem:[%s5 + $0x68] sm:$0xff]
  %v91 = vld [vmem:[%s5 + $0x70] sm:$0xff]
  %v92 = vld [vmem:[%s5 + $0x78] sm:$0xff]
  %94 = vset.pattern.permute.xlu0 0
  %95 = vperm.xlu0 %94, %v77
  %v96 = vpop.permute.xlu0 %95
  %99 = vset.pattern.permute.xlu0 0
  %100 = vperm.xlu0 %99, %v78
  %v101 = vpop.permute.xlu0 %100
  %104 = vset.pattern.permute.xlu0 0
  %105 = vperm.xlu0 %104, %v79
  %v106 = vpop.permute.xlu0 %105
  %109 = vset.pattern.permute.xlu0 0
  %110 = vperm.xlu0 %109, %v80
  %v111 = vpop.permute.xlu0 %110
  %114 = vset.pattern.permute.xlu0 0
  %115 = vperm.xlu0 %114, %v81
  %v116 = vpop.permute.xlu0 %115
  %119 = vset.pattern.permute.xlu0 0
  %120 = vperm.xlu0 %119, %v82
  %v121 = vpop.permute.xlu0 %120
  %124 = vset.pattern.permute.xlu0 0
  %125 = vperm.xlu0 %124, %v83
  %v126 = vpop.permute.xlu0 %125
  %129 = vset.pattern.permute.xlu0 0
  %130 = vperm.xlu0 %129, %v84
  %v131 = vpop.permute.xlu0 %130
  %134 = vset.pattern.permute.xlu0 0
  %135 = vperm.xlu0 %134, %v85
  %v136 = vpop.permute.xlu0 %135
  %139 = vset.pattern.permute.xlu0 0
  %140 = vperm.xlu0 %139, %v86
  %v141 = vpop.permute.xlu0 %140
  %144 = vset.pattern.permute.xlu0 0
  %145 = vperm.xlu0 %144, %v87
  %v146 = vpop.permute.xlu0 %145
  %149 = vset.pattern.permute.xlu0 0
  %150 = vperm.xlu0 %149, %v88
  %v151 = vpop.permute.xlu0 %150
  %154 = vset.pattern.permute.xlu0 0
  %155 = vperm.xlu0 %154, %v89
  %v156 = vpop.permute.xlu0 %155
  %159 = vset.pattern.permute.xlu0 0
  %160 = vperm.xlu0 %159, %v90
  %v161 = vpop.permute.xlu0 %160
  %164 = vset.pattern.permute.xlu0 0
  %165 = vperm.xlu0 %164, %v91
  %v166 = vpop.permute.xlu0 %165
  %169 = vset.pattern.permute.xlu0 0
  %170 = vperm.xlu0 %169, %v92
  %v171 = vpop.permute.xlu0 %170
  %vm173 = vcmask 64512
  %v175 = vsel %vm173, %v29, 0
  %v178 = vsel %vm173, %v30, 0
  %v181 = vsel %vm173, %v31, 0
  %v184 = vsel %vm173, %v32, 0
  %v187 = vsel %vm173, %v33, 0
  %v190 = vsel %vm173, %v34, 0
  %v193 = vsel %vm173, %v35, 0
  %v196 = vsel %vm173, %v36, 0
  %v199 = vsel %vm173, %v37, 0
  %v202 = vsel %vm173, %v38, 0
  %v205 = vsel %vm173, %v39, 0
  %v208 = vsel %vm173, %v40, 0
  %v211 = vsel %vm173, %v41, 0
  %v214 = vsel %vm173, %v42, 0
  %v217 = vsel %vm173, %v43, 0
  %v220 = vsel %vm173, %v44, 0
  %222 = vmatprep.subr.mxu0 %v46
  %223 = vmatpush1.msra.mxu0 %v45
  %224 = vmatprep.subr.mxu0 0.0
  %225 = vmatpush1.msra.mxu0 0.0
  %226 = vmatprep.subr.mxu0 0.0
  %227 = vmatpush1.msra.mxu0 0.0
  %228 = vmatprep.subr.mxu0 0.0
  %229 = vmatpush1.msra.mxu0 0.0
  %230 = vmatprep.subr.mxu0 0.0
  %231 = vmatpush1.msra.mxu0 0.0
  %232 = vmatprep.subr.mxu0 0.0
  %233 = vmatpush1.msra.mxu0 0.0
  %234 = vmatprep.subr.mxu0 0.0
  %235 = vmatpush1.msra.mxu0 0.0
  %236 = vmatprep.subr.mxu0 0.0
  %237 = vmatpush1.msra.mxu0 0.0
  %238 = vmatprep.subr.mxu0 0.0
  %239 = vmatpush1.msra.mxu0 0.0
  %240 = vmatprep.subr.mxu0 0.0
  %241 = vmatpush1.msra.mxu0 0.0
  %242 = vmatprep.subr.mxu0 0.0
  %243 = vmatpush1.msra.mxu0 0.0
  %244 = vmatprep.subr.mxu0 0.0
  %245 = vmatpush1.msra.mxu0 0.0
  %246 = vmatprep.subr.mxu0 0.0
  %247 = vmatpush1.msra.mxu0 0.0
  %248 = vmatprep.subr.mxu0 0.0
  %249 = vmatpush1.msra.mxu0 0.0
  %250 = vmatprep.subr.mxu0 0.0
  %251 = vmatpush1.msra.mxu0 0.0
  %252 = vmatprep.subr.mxu0 0.0
  %253 = vmatpush1.msra.mxu0 0.0
  %254 = vmatprep.subr.mxu0 0.0
  %255 = vmatpush1.msra.mxu0 0.0
  %256 = vmatprep.subr.mxu0 0.0
  %257 = vmatpush1.msra.mxu0 0.0
  %258 = vmatprep.subr.mxu0 0.0
  %259 = vmatpush1.msra.mxu0 0.0
  %260 = vmatprep.subr.mxu0 0.0
  %261 = vmatpush1.msra.mxu0 0.0
  %262 = vmatprep.subr.mxu0 0.0
  %263 = vmatpush1.msra.mxu0 0.0
  %264 = vmatprep.subr.mxu0 0.0
  %265 = vmatpush1.msra.mxu0 0.0
  %266 = vmatprep.subr.mxu0 0.0
  %267 = vmatpush1.msra.mxu0 0.0
  %268 = vmatprep.subr.mxu0 0.0
  %269 = vmatpush1.msra.mxu0 0.0
  %270 = vmatprep.subr.mxu0 0.0
  %271 = vmatpush1.msra.mxu0 0.0
  %272 = vmatprep.subr.mxu0 0.0
  %273 = vmatpush1.msra.mxu0 0.0
  %274 = vmatprep.subr.mxu0 0.0
  %275 = vmatpush1.msra.mxu0 0.0
  %276 = vmatprep.subr.mxu0 0.0
  %277 = vmatpush1.msra.mxu0 0.0
  %278 = vmatprep.subr.mxu0 0.0
  %279 = vmatpush1.msra.mxu0 0.0
  %280 = vmatprep.subr.mxu0 0.0
  %281 = vmatpush1.msra.mxu0 0.0
  %282 = vmatprep.subr.mxu0 0.0
  %283 = vmatpush1.msra.mxu0 0.0
  %284 = vmatprep.subr.mxu0 0.0
  %285 = vmatpush1.msra.mxu0 0.0
  %286 = vmatprep.mubr.f32.mxu0 0.0
  %287 = vmatmul.mubr.f32.gmra.mrb[0].mxu0 %v175
  %v288 = vpop.f32.mrb[0].mxu0
  %v289 = vadd.f32 %v96, %v288
  %v290 = vpop.f32.mrb[0].mxu0
  %v291 = vadd.f32 %v96, %v290
  %292 = vmatprep.mubr.f32.mxu0 0.0
  %293 = vmatmul.mubr.f32.gmra.mrb[0].mxu0 %v178
  %v294 = vpop.f32.mrb[0].mxu0
  %v295 = vadd.f32 %v101, %v294
  %v296 = vpop.f32.mrb[0].mxu0
  %v297 = vadd.f32 %v101, %v296
  %298 = vmatprep.mubr.f32.mxu0 0.0
  %299 = vmatmul.mubr.f32.gmra.mrb[0].mxu0 %v181
  %v300 = vpop.f32.mrb[0].mxu0
  %v301 = vadd.f32 %v106, %v300
  %v302 = vpop.f32.mrb[0].mxu0
  %v303 = vadd.f32 %v106, %v302
  %304 = vmatprep.mubr.f32.mxu0 0.0
  %305 = vmatmul.mubr.f32.gmra.mrb[0].mxu0 %v184
  %v306 = vpop.f32.mrb[0].mxu0
  %v307 = vadd.f32 %v111, %v306
  %v308 = vpop.f32.mrb[0].mxu0
  %v309 = vadd.f32 %v111, %v308
  %310 = vmatprep.mubr.f32.mxu0 0.0
  %311 = vmatmul.mubr.f32.gmra.mrb[0].mxu0 %v187
  %v312 = vpop.f32.mrb[0].mxu0
  %v313 = vadd.f32 %v116, %v312
  %v314 = vpop.f32.mrb[0].mxu0
  %v315 = vadd.f32 %v116, %v314
  %316 = vmatprep.mubr.f32.mxu0 0.0
  %317 = vmatmul.mubr.f32.gmra.mrb[0].mxu0 %v190
  %v318 = vpop.f32.mrb[0].mxu0
  %v319 = vadd.f32 %v121, %v318
  %v320 = vpop.f32.mrb[0].mxu0
  %v321 = vadd.f32 %v121, %v320
  %322 = vmatprep.mubr.f32.mxu0 0.0
  %323 = vmatmul.mubr.f32.gmra.mrb[0].mxu0 %v193
  %v324 = vpop.f32.mrb[0].mxu0
  %v325 = vadd.f32 %v126, %v324
  %v326 = vpop.f32.mrb[0].mxu0
  %v327 = vadd.f32 %v126, %v326
  %328 = vmatprep.mubr.f32.mxu0 0.0
  %329 = vmatmul.mubr.f32.gmra.mrb[0].mxu0 %v196
  %v330 = vpop.f32.mrb[0].mxu0
  %v331 = vadd.f32 %v131, %v330
  %v332 = vpop.f32.mrb[0].mxu0
  %v333 = vadd.f32 %v131, %v332
  %334 = vmatprep.mubr.f32.mxu0 0.0
  %335 = vmatmul.mubr.f32.gmra.mrb[0].mxu0 %v199
  %v336 = vpop.f32.mrb[0].mxu0
  %v337 = vadd.f32 %v136, %v336
  %v338 = vpop.f32.mrb[0].mxu0
  %v339 = vadd.f32 %v136, %v338
  %340 = vmatprep.mubr.f32.mxu0 0.0
  %341 = vmatmul.mubr.f32.gmra.mrb[0].mxu0 %v202
  %v342 = vpop.f32.mrb[0].mxu0
  %v343 = vadd.f32 %v141, %v342
  %v344 = vpop.f32.mrb[0].mxu0
  %v345 = vadd.f32 %v141, %v344
  %346 = vmatprep.mubr.f32.mxu0 0.0
  %347 = vmatmul.mubr.f32.gmra.mrb[0].mxu0 %v205
  %v348 = vpop.f32.mrb[0].mxu0
  %v349 = vadd.f32 %v146, %v348
  %v350 = vpop.f32.mrb[0].mxu0
  %v351 = vadd.f32 %v146, %v350
  %352 = vmatprep.mubr.f32.mxu0 0.0
  %353 = vmatmul.mubr.f32.gmra.mrb[0].mxu0 %v208
  %v354 = vpop.f32.mrb[0].mxu0
  %v355 = vadd.f32 %v151, %v354
  %v356 = vpop.f32.mrb[0].mxu0
  %v357 = vadd.f32 %v151, %v356
  %358 = vmatprep.mubr.f32.mxu0 0.0
  %359 = vmatmul.mubr.f32.gmra.mrb[0].mxu0 %v211
  %v360 = vpop.f32.mrb[0].mxu0
  %v361 = vadd.f32 %v156, %v360
  %v362 = vpop.f32.mrb[0].mxu0
  %v363 = vadd.f32 %v156, %v362
  %364 = vmatprep.mubr.f32.mxu0 0.0
  %365 = vmatmul.mubr.f32.gmra.mrb[0].mxu0 %v214
  %v366 = vpop.f32.mrb[0].mxu0
  %v367 = vadd.f32 %v161, %v366
  %v368 = vpop.f32.mrb[0].mxu0
  %v369 = vadd.f32 %v161, %v368
  %370 = vmatprep.mubr.f32.mxu0 0.0
  %371 = vmatmul.mubr.f32.gmra.mrb[0].mxu0 %v217
  %v372 = vpop.f32.mrb[0].mxu0
  %v373 = vadd.f32 %v166, %v372
  %v374 = vpop.f32.mrb[0].mxu0
  %v375 = vadd.f32 %v166, %v374
  %376 = vmatprep.mubr.f32.mxu0 0.0
  %377 = vmatmul.mubr.f32.gmra.mrb[0].mxu0 %v220
  %v378 = vpop.f32.mrb[0].mxu0
  %v379 = vadd.f32 %v171, %v378
  %v380 = vpop.f32.mrb[0].mxu0
  %v381 = vadd.f32 %v171, %v380
  %382 = vdwg.mxu0
  %383 = vmatprep.subr.mxu0 %v48
  %384 = vmatpush1.msra.mxu0 %v47
  %385 = vmatprep.subr.mxu0 0.0
  %386 = vmatpush1.msra.mxu0 0.0
  %387 = vmatprep.subr.mxu0 0.0
  %388 = vmatpush1.msra.mxu0 0.0
  %389 = vmatprep.subr.mxu0 0.0
  %390 = vmatpush1.msra.mxu0 0.0
  %391 = vmatprep.subr.mxu0 0.0
  %392 = vmatpush1.msra.mxu0 0.0
  %393 = vmatprep.subr.mxu0 0.0
  %394 = vmatpush1.msra.mxu0 0.0
  %395 = vmatprep.subr.mxu0 0.0
  %396 = vmatpush1.msra.mxu0 0.0
  %397 = vmatprep.subr.mxu0 0.0
  %398 = vmatpush1.msra.mxu0 0.0
  %399 = vmatprep.subr.mxu0 0.0
  %400 = vmatpush1.msra.mxu0 0.0
  %401 = vmatprep.subr.mxu0 0.0
  %402 = vmatpush1.msra.mxu0 0.0
  %403 = vmatprep.subr.mxu0 0.0
  %404 = vmatpush1.msra.mxu0 0.0
  %405 = vmatprep.subr.mxu0 0.0
  %406 = vmatpush1.msra.mxu0 0.0
  %407 = vmatprep.subr.mxu0 0.0
  %408 = vmatpush1.msra.mxu0 0.0
  %409 = vmatprep.subr.mxu0 0.0
  %410 = vmatpush1.msra.mxu0 0.0
  %411 = vmatprep.subr.mxu0 0.0
  %412 = vmatpush1.msra.mxu0 0.0
  %413 = vmatprep.subr.mxu0 0.0
  %414 = vmatpush1.msra.mxu0 0.0
  %415 = vmatprep.subr.mxu0 0.0
  %416 = vmatpush1.msra.mxu0 0.0
  %417 = vmatprep.subr.mxu0 0.0
  %418 = vmatpush1.msra.mxu0 0.0
  %419 = vmatprep.subr.mxu0 0.0
  %420 = vmatpush1.msra.mxu0 0.0
  %421 = vmatprep.subr.mxu0 0.0
  %422 = vmatpush1.msra.mxu0 0.0
  %423 = vmatprep.subr.mxu0 0.0
  %424 = vmatpush1.msra.mxu0 0.0
  %425 = vmatprep.subr.mxu0 0.0
  %426 = vmatpush1.msra.mxu0 0.0
  %427 = vmatprep.subr.mxu0 0.0
  %428 = vmatpush1.msra.mxu0 0.0
  %429 = vmatprep.subr.mxu0 0.0
  %430 = vmatpush1.msra.mxu0 0.0
  %431 = vmatprep.subr.mxu0 0.0
  %432 = vmatpush1.msra.mxu0 0.0
  %433 = vmatprep.subr.mxu0 0.0
  %434 = vmatpush1.msra.mxu0 0.0
  %435 = vmatprep.subr.mxu0 0.0
  %436 = vmatpush1.msra.mxu0 0.0
  %437 = vmatprep.subr.mxu0 0.0
  %438 = vmatpush1.msra.mxu0 0.0
  %439 = vmatprep.subr.mxu0 0.0
  %440 = vmatpush1.msra.mxu0 0.0
  %441 = vmatprep.subr.mxu0 0.0
  %442 = vmatpush1.msra.mxu0 0.0
  %443 = vmatprep.subr.mxu0 0.0
  %444 = vmatpush1.msra.mxu0 0.0
  %445 = vmatprep.subr.mxu0 0.0
  %446 = vmatpush1.msra.mxu0 0.0
  %447 = vmatprep.mubr.f32.mxu0 0.0
  %448 = vmatmul.mubr.f32.gmra.mrb[0].mxu0 %v175
  %v449 = vpop.f32.mrb[0].mxu0
  %v450 = vadd.f32 %v96, %v449
  %v451 = vpop.f32.mrb[0].mxu0
  %v452 = vadd.f32 %v96, %v451
  %453 = vmatprep.mubr.f32.mxu0 0.0
  %454 = vmatmul.mubr.f32.gmra.mrb[0].mxu0 %v178
  %v455 = vpop.f32.mrb[0].mxu0
  %v456 = vadd.f32 %v101, %v455
  %v457 = vpop.f32.mrb[0].mxu0
  %v458 = vadd.f32 %v101, %v457
  %459 = vmatprep.mubr.f32.mxu0 0.0
  %460 = vmatmul.mubr.f32.gmra.mrb[0].mxu0 %v181
  %v461 = vpop.f32.mrb[0].mxu0
  %v462 = vadd.f32 %v106, %v461
  %v463 = vpop.f32.mrb[0].mxu0
  %v464 = vadd.f32 %v106, %v463
  %465 = vmatprep.mubr.f32.mxu0 0.0
  %466 = vmatmul.mubr.f32.gmra.mrb[0].mxu0 %v184
  %v467 = vpop.f32.mrb[0].mxu0
  %v468 = vadd.f32 %v111, %v467
  %v469 = vpop.f32.mrb[0].mxu0
  %v470 = vadd.f32 %v111, %v469
  %471 = vmatprep.mubr.f32.mxu0 0.0
  %472 = vmatmul.mubr.f32.gmra.mrb[0].mxu0 %v187
  %v473 = vpop.f32.mrb[0].mxu0
  %v474 = vadd.f32 %v116, %v473
  %v475 = vpop.f32.mrb[0].mxu0
  %v476 = vadd.f32 %v116, %v475
  %477 = vmatprep.mubr.f32.mxu0 0.0
  %478 = vmatmul.mubr.f32.gmra.mrb[0].mxu0 %v190
  %v479 = vpop.f32.mrb[0].mxu0
  %v480 = vadd.f32 %v121, %v479
  %v481 = vpop.f32.mrb[0].mxu0
  %v482 = vadd.f32 %v121, %v481
  %483 = vmatprep.mubr.f32.mxu0 0.0
  %484 = vmatmul.mubr.f32.gmra.mrb[0].mxu0 %v193
  %v485 = vpop.f32.mrb[0].mxu0
  %v486 = vadd.f32 %v126, %v485
  %v487 = vpop.f32.mrb[0].mxu0
  %v488 = vadd.f32 %v126, %v487
  %489 = vmatprep.mubr.f32.mxu0 0.0
  %490 = vmatmul.mubr.f32.gmra.mrb[0].mxu0 %v196
  %v491 = vpop.f32.mrb[0].mxu0
  %v492 = vadd.f32 %v131, %v491
  %v493 = vpop.f32.mrb[0].mxu0
  %v494 = vadd.f32 %v131, %v493
  %495 = vmatprep.mubr.f32.mxu0 0.0
  %496 = vmatmul.mubr.f32.gmra.mrb[0].mxu0 %v199
  %v497 = vpop.f32.mrb[0].mxu0
  %v498 = vadd.f32 %v136, %v497
  %v499 = vpop.f32.mrb[0].mxu0
  %v500 = vadd.f32 %v136, %v499
  %501 = vmatprep.mubr.f32.mxu0 0.0
  %502 = vmatmul.mubr.f32.gmra.mrb[0].mxu0 %v202
  %v503 = vpop.f32.mrb[0].mxu0
  %v504 = vadd.f32 %v141, %v503
  %v505 = vpop.f32.mrb[0].mxu0
  %v506 = vadd.f32 %v141, %v505
  %507 = vmatprep.mubr.f32.mxu0 0.0
  %508 = vmatmul.mubr.f32.gmra.mrb[0].mxu0 %v205
  %v509 = vpop.f32.mrb[0].mxu0
  %v510 = vadd.f32 %v146, %v509
  %v511 = vpop.f32.mrb[0].mxu0
  %v512 = vadd.f32 %v146, %v511
  %513 = vmatprep.mubr.f32.mxu0 0.0
  %514 = vmatmul.mubr.f32.gmra.mrb[0].mxu0 %v208
  %v515 = vpop.f32.mrb[0].mxu0
  %v516 = vadd.f32 %v151, %v515
  %v517 = vpop.f32.mrb[0].mxu0
  %v518 = vadd.f32 %v151, %v517
  %519 = vmatprep.mubr.f32.mxu0 0.0
  %520 = vmatmul.mubr.f32.gmra.mrb[0].mxu0 %v211
  %v521 = vpop.f32.mrb[0].mxu0
  %v522 = vadd.f32 %v156, %v521
  %v523 = vpop.f32.mrb[0].mxu0
  %v524 = vadd.f32 %v156, %v523
  %525 = vmatprep.mubr.f32.mxu0 0.0
  %526 = vmatmul.mubr.f32.gmra.mrb[0].mxu0 %v214
  %v527 = vpop.f32.mrb[0].mxu0
  %v528 = vadd.f32 %v161, %v527
  %v529 = vpop.f32.mrb[0].mxu0
  %v530 = vadd.f32 %v161, %v529
  %531 = vmatprep.mubr.f32.mxu0 0.0
  %532 = vmatmul.mubr.f32.gmra.mrb[0].mxu0 %v217
  %v533 = vpop.f32.mrb[0].mxu0
  %v534 = vadd.f32 %v166, %v533
  %v535 = vpop.f32.mrb[0].mxu0
  %v536 = vadd.f32 %v166, %v535
  %537 = vmatprep.mubr.f32.mxu0 0.0
  %538 = vmatmul.mubr.f32.gmra.mrb[0].mxu0 %v220
  %v539 = vpop.f32.mrb[0].mxu0
  %v540 = vadd.f32 %v171, %v539
  %v541 = vpop.f32.mrb[0].mxu0
  %v542 = vadd.f32 %v171, %v541
  %543 = vdwg.mxu0
  %544 = vmatprep.subr.mxu0 %v50
  %545 = vmatpush1.msra.mxu0 %v49
  %546 = vmatprep.subr.mxu0 0.0
  %547 = vmatpush1.msra.mxu0 0.0
  %548 = vmatprep.subr.mxu0 0.0
  %549 = vmatpush1.msra.mxu0 0.0
  %550 = vmatprep.subr.mxu0 0.0
  %551 = vmatpush1.msra.mxu0 0.0
  %552 = vmatprep.subr.mxu0 0.0
  %553 = vmatpush1.msra.mxu0 0.0
  %554 = vmatprep.subr.mxu0 0.0
  %555 = vmatpush1.msra.mxu0 0.0
  %556 = vmatprep.subr.mxu0 0.0
  %557 = vmatpush1.msra.mxu0 0.0
  %558 = vmatprep.subr.mxu0 0.0
  %559 = vmatpush1.msra.mxu0 0.0
  %560 = vmatprep.subr.mxu0 0.0
  %561 = vmatpush1.msra.mxu0 0.0
  %562 = vmatprep.subr.mxu0 0.0
  %563 = vmatpush1.msra.mxu0 0.0
  %564 = vmatprep.subr.mxu0 0.0
  %565 = vmatpush1.msra.mxu0 0.0
  %566 = vmatprep.subr.mxu0 0.0
  %567 = vmatpush1.msra.mxu0 0.0
  %568 = vmatprep.subr.mxu0 0.0
  %569 = vmatpush1.msra.mxu0 0.0
  %570 = vmatprep.subr.mxu0 0.0
  %571 = vmatpush1.msra.mxu0 0.0
  %572 = vmatprep.subr.mxu0 0.0
  %573 = vmatpush1.msra.mxu0 0.0
  %574 = vmatprep.subr.mxu0 0.0
  %575 = vmatpush1.msra.mxu0 0.0
  %576 = vmatprep.subr.mxu0 0.0
  %577 = vmatpush1.msra.mxu0 0.0
  %578 = vmatprep.subr.mxu0 0.0
  %579 = vmatpush1.msra.mxu0 0.0
  %580 = vmatprep.subr.mxu0 0.0
  %581 = vmatpush1.msra.mxu0 0.0
  %582 = vmatprep.subr.mxu0 0.0
  %583 = vmatpush1.msra.mxu0 0.0
  %584 = vmatprep.subr.mxu0 0.0
  %585 = vmatpush1.msra.mxu0 0.0
  %586 = vmatprep.subr.mxu0 0.0
  %587 = vmatpush1.msra.mxu0 0.0
  %588 = vmatprep.subr.mxu0 0.0
  %589 = vmatpush1.msra.mxu0 0.0
  %590 = vmatprep.subr.mxu0 0.0
  %591 = vmatpush1.msra.mxu0 0.0
  %592 = vmatprep.subr.mxu0 0.0
  %593 = vmatpush1.msra.mxu0 0.0
  %594 = vmatprep.subr.mxu0 0.0
  %595 = vmatpush1.msra.mxu0 0.0
  %596 = vmatprep.subr.mxu0 0.0
  %597 = vmatpush1.msra.mxu0 0.0
  %598 = vmatprep.subr.mxu0 0.0
  %599 = vmatpush1.msra.mxu0 0.0
  %600 = vmatprep.subr.mxu0 0.0
  %601 = vmatpush1.msra.mxu0 0.0
  %602 = vmatprep.subr.mxu0 0.0
  %603 = vmatpush1.msra.mxu0 0.0
  %604 = vmatprep.subr.mxu0 0.0
  %605 = vmatpush1.msra.mxu0 0.0
  %606 = vmatprep.subr.mxu0 0.0
  %607 = vmatpush1.msra.mxu0 0.0
  %608 = vmatprep.mubr.f32.mxu0 0.0
  %609 = vmatmul.mubr.f32.gmra.mrb[0].mxu0 %v175
  %v610 = vpop.f32.mrb[0].mxu0
  %v611 = vadd.f32 %v96, %v610
  %v612 = vpop.f32.mrb[0].mxu0
  %v613 = vadd.f32 %v96, %v612
  %614 = vmatprep.mubr.f32.mxu0 0.0
  %615 = vmatmul.mubr.f32.gmra.mrb[0].mxu0 %v178
  %v616 = vpop.f32.mrb[0].mxu0
  %v617 = vadd.f32 %v101, %v616
  %v618 = vpop.f32.mrb[0].mxu0
  %v619 = vadd.f32 %v101, %v618
  %620 = vmatprep.mubr.f32.mxu0 0.0
  %621 = vmatmul.mubr.f32.gmra.mrb[0].mxu0 %v181
  %v622 = vpop.f32.mrb[0].mxu0
  %v623 = vadd.f32 %v106, %v622
  %v624 = vpop.f32.mrb[0].mxu0
  %v625 = vadd.f32 %v106, %v624
  %626 = vmatprep.mubr.f32.mxu0 0.0
  %627 = vmatmul.mubr.f32.gmra.mrb[0].mxu0 %v184
  %v628 = vpop.f32.mrb[0].mxu0
  %v629 = vadd.f32 %v111, %v628
  %v630 = vpop.f32.mrb[0].mxu0
  %v631 = vadd.f32 %v111, %v630
  %632 = vmatprep.mubr.f32.mxu0 0.0
  %633 = vmatmul.mubr.f32.gmra.mrb[0].mxu0 %v187
  %v634 = vpop.f32.mrb[0].mxu0
  %v635 = vadd.f32 %v116, %v634
  %v636 = vpop.f32.mrb[0].mxu0
  %v637 = vadd.f32 %v116, %v636
  %638 = vmatprep.mubr.f32.mxu0 0.0
  %639 = vmatmul.mubr.f32.gmra.mrb[0].mxu0 %v190
  %v640 = vpop.f32.mrb[0].mxu0
  %v641 = vadd.f32 %v121, %v640
  %v642 = vpop.f32.mrb[0].mxu0
  %v643 = vadd.f32 %v121, %v642
  %644 = vmatprep.mubr.f32.mxu0 0.0
  %645 = vmatmul.mubr.f32.gmra.mrb[0].mxu0 %v193
  %v646 = vpop.f32.mrb[0].mxu0
  %v647 = vadd.f32 %v126, %v646
  %v648 = vpop.f32.mrb[0].mxu0
  %v649 = vadd.f32 %v126, %v648
  %650 = vmatprep.mubr.f32.mxu0 0.0
  %651 = vmatmul.mubr.f32.gmra.mrb[0].mxu0 %v196
  %v652 = vpop.f32.mrb[0].mxu0
  %v653 = vadd.f32 %v131, %v652
  %v654 = vpop.f32.mrb[0].mxu0
  %v655 = vadd.f32 %v131, %v654
  %656 = vmatprep.mubr.f32.mxu0 0.0
  %657 = vmatmul.mubr.f32.gmra.mrb[0].mxu0 %v199
  %v658 = vpop.f32.mrb[0].mxu0
  %v659 = vadd.f32 %v136, %v658
  %v660 = vpop.f32.mrb[0].mxu0
  %v661 = vadd.f32 %v136, %v660
  %662 = vmatprep.mubr.f32.mxu0 0.0
  %663 = vmatmul.mubr.f32.gmra.mrb[0].mxu0 %v202
  %v664 = vpop.f32.mrb[0].mxu0
  %v665 = vadd.f32 %v141, %v664
  %v666 = vpop.f32.mrb[0].mxu0
  %v667 = vadd.f32 %v141, %v666
  %668 = vmatprep.mubr.f32.mxu0 0.0
  %669 = vmatmul.mubr.f32.gmra.mrb[0].mxu0 %v205
  %v670 = vpop.f32.mrb[0].mxu0
  %v671 = vadd.f32 %v146, %v670
  %v672 = vpop.f32.mrb[0].mxu0
  %v673 = vadd.f32 %v146, %v672
  %674 = vmatprep.mubr.f32.mxu0 0.0
  %675 = vmatmul.mubr.f32.gmra.mrb[0].mxu0 %v208
  %v676 = vpop.f32.mrb[0].mxu0
  %v677 = vadd.f32 %v151, %v676
  %v678 = vpop.f32.mrb[0].mxu0
  %v679 = vadd.f32 %v151, %v678
  %680 = vmatprep.mubr.f32.mxu0 0.0
  %681 = vmatmul.mubr.f32.gmra.mrb[0].mxu0 %v211
  %v682 = vpop.f32.mrb[0].mxu0
  %v683 = vadd.f32 %v156, %v682
  %v684 = vpop.f32.mrb[0].mxu0
  %v685 = vadd.f32 %v156, %v684
  %686 = vmatprep.mubr.f32.mxu0 0.0
  %687 = vmatmul.mubr.f32.gmra.mrb[0].mxu0 %v214
  %v688 = vpop.f32.mrb[0].mxu0
  %v689 = vadd.f32 %v161, %v688
  %v690 = vpop.f32.mrb[0].mxu0
  %v691 = vadd.f32 %v161, %v690
  %692 = vmatprep.mubr.f32.mxu0 0.0
  %693 = vmatmul.mubr.f32.gmra.mrb[0].mxu0 %v217
  %v694 = vpop.f32.mrb[0].mxu0
  %v695 = vadd.f32 %v166, %v694
  %v696 = vpop.f32.mrb[0].mxu0
  %v697 = vadd.f32 %v166, %v696
  %698 = vmatprep.mubr.f32.mxu0 0.0
  %699 = vmatmul.mubr.f32.gmra.mrb[0].mxu0 %v220
  %v700 = vpop.f32.mrb[0].mxu0
  %v701 = vadd.f32 %v171, %v700
  %v702 = vpop.f32.mrb[0].mxu0
  %v703 = vadd.f32 %v171, %v702
  %704 = vdwg.mxu0
  %705 = vmatprep.subr.mxu0 %v52
  %706 = vmatpush1.msra.mxu0 %v51
  %707 = vmatprep.subr.mxu0 0.0
  %708 = vmatpush1.msra.mxu0 0.0
  %709 = vmatprep.subr.mxu0 0.0
  %710 = vmatpush1.msra.mxu0 0.0
  %711 = vmatprep.subr.mxu0 0.0
  %712 = vmatpush1.msra.mxu0 0.0
  %713 = vmatprep.subr.mxu0 0.0
  %714 = vmatpush1.msra.mxu0 0.0
  %715 = vmatprep.subr.mxu0 0.0
  %716 = vmatpush1.msra.mxu0 0.0
  %717 = vmatprep.subr.mxu0 0.0
  %718 = vmatpush1.msra.mxu0 0.0
  %719 = vmatprep.subr.mxu0 0.0
  %720 = vmatpush1.msra.mxu0 0.0
  %721 = vmatprep.subr.mxu0 0.0
  %722 = vmatpush1.msra.mxu0 0.0
  %723 = vmatprep.subr.mxu0 0.0
  %724 = vmatpush1.msra.mxu0 0.0
  %725 = vmatprep.subr.mxu0 0.0
  %726 = vmatpush1.msra.mxu0 0.0
  %727 = vmatprep.subr.mxu0 0.0
  %728 = vmatpush1.msra.mxu0 0.0
  %729 = vmatprep.subr.mxu0 0.0
  %730 = vmatpush1.msra.mxu0 0.0
  %731 = vmatprep.subr.mxu0 0.0
  %732 = vmatpush1.msra.mxu0 0.0
  %733 = vmatprep.subr.mxu0 0.0
  %734 = vmatpush1.msra.mxu0 0.0
  %735 = vmatprep.subr.mxu0 0.0
  %736 = vmatpush1.msra.mxu0 0.0
  %737 = vmatprep.subr.mxu0 0.0
  %738 = vmatpush1.msra.mxu0 0.0
  %739 = vmatprep.subr.mxu0 0.0
  %740 = vmatpush1.msra.mxu0 0.0
  %741 = vmatprep.subr.mxu0 0.0
  %742 = vmatpush1.msra.mxu0 0.0
  %743 = vmatprep.subr.mxu0 0.0
  %744 = vmatpush1.msra.mxu0 0.0
  %745 = vmatprep.subr.mxu0 0.0
  %746 = vmatpush1.msra.mxu0 0.0
  %747 = vmatprep.subr.mxu0 0.0
  %748 = vmatpush1.msra.mxu0 0.0
  %749 = vmatprep.subr.mxu0 0.0
  %750 = vmatpush1.msra.mxu0 0.0
  %751 = vmatprep.subr.mxu0 0.0
  %752 = vmatpush1.msra.mxu0 0.0
  %753 = vmatprep.subr.mxu0 0.0
  %754 = vmatpush1.msra.mxu0 0.0
  %755 = vmatprep.subr.mxu0 0.0
  %756 = vmatpush1.msra.mxu0 0.0
  %757 = vmatprep.subr.mxu0 0.0
  %758 = vmatpush1.msra.mxu0 0.0
  %759 = vmatprep.subr.mxu0 0.0
  %760 = vmatpush1.msra.mxu0 0.0
  %761 = vmatprep.subr.mxu0 0.0
  %762 = vmatpush1.msra.mxu0 0.0
  %763 = vmatprep.subr.mxu0 0.0
  %764 = vmatpush1.msra.mxu0 0.0
  %765 = vmatprep.subr.mxu0 0.0
  %766 = vmatpush1.msra.mxu0 0.0
  %767 = vmatprep.subr.mxu0 0.0
  %768 = vmatpush1.msra.mxu0 0.0
  %769 = vmatprep.mubr.f32.mxu0 0.0
  %770 = vmatmul.mubr.f32.gmra.mrb[0].mxu0 %v175
  %v771 = vpop.f32.mrb[0].mxu0
  %v772 = vadd.f32 %v96, %v771
  %v773 = vpop.f32.mrb[0].mxu0
  %v774 = vadd.f32 %v96, %v773
  %775 = vmatprep.mubr.f32.mxu0 0.0
  %776 = vmatmul.mubr.f32.gmra.mrb[0].mxu0 %v178
  %v777 = vpop.f32.mrb[0].mxu0
  %v778 = vadd.f32 %v101, %v777
  %v779 = vpop.f32.mrb[0].mxu0
  %v780 = vadd.f32 %v101, %v779
  %781 = vmatprep.mubr.f32.mxu0 0.0
  %782 = vmatmul.mubr.f32.gmra.mrb[0].mxu0 %v181
  %v783 = vpop.f32.mrb[0].mxu0
  %v784 = vadd.f32 %v106, %v783
  %v785 = vpop.f32.mrb[0].mxu0
  %v786 = vadd.f32 %v106, %v785
  %787 = vmatprep.mubr.f32.mxu0 0.0
  %788 = vmatmul.mubr.f32.gmra.mrb[0].mxu0 %v184
  %v789 = vpop.f32.mrb[0].mxu0
  %v790 = vadd.f32 %v111, %v789
  %v791 = vpop.f32.mrb[0].mxu0
  %v792 = vadd.f32 %v111, %v791
  %793 = vmatprep.mubr.f32.mxu0 0.0
  %794 = vmatmul.mubr.f32.gmra.mrb[0].mxu0 %v187
  %v795 = vpop.f32.mrb[0].mxu0
  %v796 = vadd.f32 %v116, %v795
  %v797 = vpop.f32.mrb[0].mxu0
  %v798 = vadd.f32 %v116, %v797
  %799 = vmatprep.mubr.f32.mxu0 0.0
  %800 = vmatmul.mubr.f32.gmra.mrb[0].mxu0 %v190
  %v801 = vpop.f32.mrb[0].mxu0
  %v802 = vadd.f32 %v121, %v801
  %v803 = vpop.f32.mrb[0].mxu0
  %v804 = vadd.f32 %v121, %v803
  %805 = vmatprep.mubr.f32.mxu0 0.0
  %806 = vmatmul.mubr.f32.gmra.mrb[0].mxu0 %v193
  %v807 = vpop.f32.mrb[0].mxu0
  %v808 = vadd.f32 %v126, %v807
  %v809 = vpop.f32.mrb[0].mxu0
  %v810 = vadd.f32 %v126, %v809
  %811 = vmatprep.mubr.f32.mxu0 0.0
  %812 = vmatmul.mubr.f32.gmra.mrb[0].mxu0 %v196
  %v813 = vpop.f32.mrb[0].mxu0
  %v814 = vadd.f32 %v131, %v813
  %v815 = vpop.f32.mrb[0].mxu0
  %v816 = vadd.f32 %v131, %v815
  %817 = vmatprep.mubr.f32.mxu0 0.0
  %818 = vmatmul.mubr.f32.gmra.mrb[0].mxu0 %v199
  %v819 = vpop.f32.mrb[0].mxu0
  %v820 = vadd.f32 %v136, %v819
  %v821 = vpop.f32.mrb[0].mxu0
  %v822 = vadd.f32 %v136, %v821
  %823 = vmatprep.mubr.f32.mxu0 0.0
  %824 = vmatmul.mubr.f32.gmra.mrb[0].mxu0 %v202
  %v825 = vpop.f32.mrb[0].mxu0
  %v826 = vadd.f32 %v141, %v825
  %v827 = vpop.f32.mrb[0].mxu0
  %v828 = vadd.f32 %v141, %v827
  %829 = vmatprep.mubr.f32.mxu0 0.0
  %830 = vmatmul.mubr.f32.gmra.mrb[0].mxu0 %v205
  %v831 = vpop.f32.mrb[0].mxu0
  %v832 = vadd.f32 %v146, %v831
  %v833 = vpop.f32.mrb[0].mxu0
  %v834 = vadd.f32 %v146, %v833
  %835 = vmatprep.mubr.f32.mxu0 0.0
  %836 = vmatmul.mubr.f32.gmra.mrb[0].mxu0 %v208
  %v837 = vpop.f32.mrb[0].mxu0
  %v838 = vadd.f32 %v151, %v837
  %v839 = vpop.f32.mrb[0].mxu0
  %v840 = vadd.f32 %v151, %v839
  %841 = vmatprep.mubr.f32.mxu0 0.0
  %842 = vmatmul.mubr.f32.gmra.mrb[0].mxu0 %v211
  %v843 = vpop.f32.mrb[0].mxu0
  %v844 = vadd.f32 %v156, %v843
  %v845 = vpop.f32.mrb[0].mxu0
  %v846 = vadd.f32 %v156, %v845
  %847 = vmatprep.mubr.f32.mxu0 0.0
  %848 = vmatmul.mubr.f32.gmra.mrb[0].mxu0 %v214
  %v849 = vpop.f32.mrb[0].mxu0
  %v850 = vadd.f32 %v161, %v849
  %v851 = vpop.f32.mrb[0].mxu0
  %v852 = vadd.f32 %v161, %v851
  %853 = vmatprep.mubr.f32.mxu0 0.0
  %854 = vmatmul.mubr.f32.gmra.mrb[0].mxu0 %v217
  %v855 = vpop.f32.mrb[0].mxu0
  %v856 = vadd.f32 %v166, %v855
  %v857 = vpop.f32.mrb[0].mxu0
  %v858 = vadd.f32 %v166, %v857
  %859 = vmatprep.mubr.f32.mxu0 0.0
  %860 = vmatmul.mubr.f32.gmra.mrb[0].mxu0 %v220
  %v861 = vpop.f32.mrb[0].mxu0
  %v862 = vadd.f32 %v171, %v861
  %v863 = vpop.f32.mrb[0].mxu0
  %v864 = vadd.f32 %v171, %v863
  %865 = vdwg.mxu0
  %866 = vmatprep.subr.mxu0 %v54
  %867 = vmatpush1.msra.mxu0 %v53
  %868 = vmatprep.subr.mxu0 0.0
  %869 = vmatpush1.msra.mxu0 0.0
  %870 = vmatprep.subr.mxu0 0.0
  %871 = vmatpush1.msra.mxu0 0.0
  %872 = vmatprep.subr.mxu0 0.0
  %873 = vmatpush1.msra.mxu0 0.0
  %874 = vmatprep.subr.mxu0 0.0
  %875 = vmatpush1.msra.mxu0 0.0
  %876 = vmatprep.subr.mxu0 0.0
  %877 = vmatpush1.msra.mxu0 0.0
  %878 = vmatprep.subr.mxu0 0.0
  %879 = vmatpush1.msra.mxu0 0.0
  %880 = vmatprep.subr.mxu0 0.0
  %881 = vmatpush1.msra.mxu0 0.0
  %882 = vmatprep.subr.mxu0 0.0
  %883 = vmatpush1.msra.mxu0 0.0
  %884 = vmatprep.subr.mxu0 0.0
  %885 = vmatpush1.msra.mxu0 0.0
  %886 = vmatprep.subr.mxu0 0.0
  %887 = vmatpush1.msra.mxu0 0.0
  %888 = vmatprep.subr.mxu0 0.0
  %889 = vmatpush1.msra.mxu0 0.0
  %890 = vmatprep.subr.mxu0 0.0
  %891 = vmatpush1.msra.mxu0 0.0
  %892 = vmatprep.subr.mxu0 0.0
  %893 = vmatpush1.msra.mxu0 0.0
  %894 = vmatprep.subr.mxu0 0.0
  %895 = vmatpush1.msra.mxu0 0.0
  %896 = vmatprep.subr.mxu0 0.0
  %897 = vmatpush1.msra.mxu0 0.0
  %898 = vmatprep.subr.mxu0 0.0
  %899 = vmatpush1.msra.mxu0 0.0
  %900 = vmatprep.subr.mxu0 0.0
  %901 = vmatpush1.msra.mxu0 0.0
  %902 = vmatprep.subr.mxu0 0.0
  %903 = vmatpush1.msra.mxu0 0.0
  %904 = vmatprep.subr.mxu0 0.0
  %905 = vmatpush1.msra.mxu0 0.0
  %906 = vmatprep.subr.mxu0 0.0
  %907 = vmatpush1.msra.mxu0 0.0
  %908 = vmatprep.subr.mxu0 0.0
  %909 = vmatpush1.msra.mxu0 0.0
  %910 = vmatprep.subr.mxu0 0.0
  %911 = vmatpush1.msra.mxu0 0.0
  %912 = vmatprep.subr.mxu0 0.0
  %913 = vmatpush1.msra.mxu0 0.0
  %914 = vmatprep.subr.mxu0 0.0
  %915 = vmatpush1.msra.mxu0 0.0
  %916 = vmatprep.subr.mxu0 0.0
  %917 = vmatpush1.msra.mxu0 0.0
  %918 = vmatprep.subr.mxu0 0.0
  %919 = vmatpush1.msra.mxu0 0.0
  %920 = vmatprep.subr.mxu0 0.0
  %921 = vmatpush1.msra.mxu0 0.0
  %922 = vmatprep.subr.mxu0 0.0
  %923 = vmatpush1.msra.mxu0 0.0
  %924 = vmatprep.subr.mxu0 0.0
  %925 = vmatpush1.msra.mxu0 0.0
  %926 = vmatprep.subr.mxu0 0.0
  %927 = vmatpush1.msra.mxu0 0.0
  %928 = vmatprep.subr.mxu0 0.0
  %929 = vmatpush1.msra.mxu0 0.0
  %930 = vmatprep.mubr.f32.mxu0 0.0
  %931 = vmatmul.mubr.f32.gmra.mrb[0].mxu0 %v175
  %v932 = vpop.f32.mrb[0].mxu0
  %v933 = vadd.f32 %v96, %v932
  %v934 = vpop.f32.mrb[0].mxu0
  %v935 = vadd.f32 %v96, %v934
  %936 = vmatprep.mubr.f32.mxu0 0.0
  %937 = vmatmul.mubr.f32.gmra.mrb[0].mxu0 %v178
  %v938 = vpop.f32.mrb[0].mxu0
  %v939 = vadd.f32 %v101, %v938
  %v940 = vpop.f32.mrb[0].mxu0
  %v941 = vadd.f32 %v101, %v940
  %942 = vmatprep.mubr.f32.mxu0 0.0
  %943 = vmatmul.mubr.f32.gmra.mrb[0].mxu0 %v181
  %v944 = vpop.f32.mrb[0].mxu0
  %v945 = vadd.f32 %v106, %v944
  %v946 = vpop.f32.mrb[0].mxu0
  %v947 = vadd.f32 %v106, %v946
  %948 = vmatprep.mubr.f32.mxu0 0.0
  %949 = vmatmul.mubr.f32.gmra.mrb[0].mxu0 %v184
  %v950 = vpop.f32.mrb[0].mxu0
  %v951 = vadd.f32 %v111, %v950
  %v952 = vpop.f32.mrb[0].mxu0
  %v953 = vadd.f32 %v111, %v952
  %954 = vmatprep.mubr.f32.mxu0 0.0
  %955 = vmatmul.mubr.f32.gmra.mrb[0].mxu0 %v187
  %v956 = vpop.f32.mrb[0].mxu0
  %v957 = vadd.f32 %v116, %v956
  %v958 = vpop.f32.mrb[0].mxu0
  %v959 = vadd.f32 %v116, %v958
  %960 = vmatprep.mubr.f32.mxu0 0.0
  %961 = vmatmul.mubr.f32.gmra.mrb[0].mxu0 %v190
  %v962 = vpop.f32.mrb[0].mxu0
  %v963 = vadd.f32 %v121, %v962
  %v964 = vpop.f32.mrb[0].mxu0
  %v965 = vadd.f32 %v121, %v964
  %966 = vmatprep.mubr.f32.mxu0 0.0
  %967 = vmatmul.mubr.f32.gmra.mrb[0].mxu0 %v193
  %v968 = vpop.f32.mrb[0].mxu0
  %v969 = vadd.f32 %v126, %v968
  %v970 = vpop.f32.mrb[0].mxu0
  %v971 = vadd.f32 %v126, %v970
  %972 = vmatprep.mubr.f32.mxu0 0.0
  %973 = vmatmul.mubr.f32.gmra.mrb[0].mxu0 %v196
  %v974 = vpop.f32.mrb[0].mxu0
  %v975 = vadd.f32 %v131, %v974
  %v976 = vpop.f32.mrb[0].mxu0
  %v977 = vadd.f32 %v131, %v976
  %978 = vmatprep.mubr.f32.mxu0 0.0
  %979 = vmatmul.mubr.f32.gmra.mrb[0].mxu0 %v199
  %v980 = vpop.f32.mrb[0].mxu0
  %v981 = vadd.f32 %v136, %v980
  %v982 = vpop.f32.mrb[0].mxu0
  %v983 = vadd.f32 %v136, %v982
  %984 = vmatprep.mubr.f32.mxu0 0.0
  %985 = vmatmul.mubr.f32.gmra.mrb[0].mxu0 %v202
  %v986 = vpop.f32.mrb[0].mxu0
  %v987 = vadd.f32 %v141, %v986
  %v988 = vpop.f32.mrb[0].mxu0
  %v989 = vadd.f32 %v141, %v988
  %990 = vmatprep.mubr.f32.mxu0 0.0
  %991 = vmatmul.mubr.f32.gmra.mrb[0].mxu0 %v205
  %v992 = vpop.f32.mrb[0].mxu0
  %v993 = vadd.f32 %v146, %v992
  %v994 = vpop.f32.mrb[0].mxu0
  %v995 = vadd.f32 %v146, %v994
  %996 = vmatprep.mubr.f32.mxu0 0.0
  %997 = vmatmul.mubr.f32.gmra.mrb[0].mxu0 %v208
  %v998 = vpop.f32.mrb[0].mxu0
  %v999 = vadd.f32 %v151, %v998
  %v1000 = vpop.f32.mrb[0].mxu0
  %v1001 = vadd.f32 %v151, %v1000
  %1002 = vmatprep.mubr.f32.mxu0 0.0
  %1003 = vmatmul.mubr.f32.gmra.mrb[0].mxu0 %v211
  %v1004 = vpop.f32.mrb[0].mxu0
  %v1005 = vadd.f32 %v156, %v1004
  %v1006 = vpop.f32.mrb[0].mxu0
  %v1007 = vadd.f32 %v156, %v1006
  %1008 = vmatprep.mubr.f32.mxu0 0.0
  %1009 = vmatmul.mubr.f32.gmra.mrb[0].mxu0 %v214
  %v1010 = vpop.f32.mrb[0].mxu0
  %v1011 = vadd.f32 %v161, %v1010
  %v1012 = vpop.f32.mrb[0].mxu0
  %v1013 = vadd.f32 %v161, %v1012
  %1014 = vmatprep.mubr.f32.mxu0 0.0
  %1015 = vmatmul.mubr.f32.gmra.mrb[0].mxu0 %v217
  %v1016 = vpop.f32.mrb[0].mxu0
  %v1017 = vadd.f32 %v166, %v1016
  %v1018 = vpop.f32.mrb[0].mxu0
  %v1019 = vadd.f32 %v166, %v1018
  %1020 = vmatprep.mubr.f32.mxu0 0.0
  %1021 = vmatmul.mubr.f32.gmra.mrb[0].mxu0 %v220
  %v1022 = vpop.f32.mrb[0].mxu0
  %v1023 = vadd.f32 %v171, %v1022
  %v1024 = vpop.f32.mrb[0].mxu0
  %v1025 = vadd.f32 %v171, %v1024
  %1026 = vdwg.mxu0
  %1027 = vmatprep.subr.mxu0 %v56
  %1028 = vmatpush1.msra.mxu0 %v55
  %1029 = vmatprep.subr.mxu0 0.0
  %1030 = vmatpush1.msra.mxu0 0.0
  %1031 = vmatprep.subr.mxu0 0.0
  %1032 = vmatpush1.msra.mxu0 0.0
  %1033 = vmatprep.subr.mxu0 0.0
  %1034 = vmatpush1.msra.mxu0 0.0
  %1035 = vmatprep.subr.mxu0 0.0
  %1036 = vmatpush1.msra.mxu0 0.0
  %1037 = vmatprep.subr.mxu0 0.0
  %1038 = vmatpush1.msra.mxu0 0.0
  %1039 = vmatprep.subr.mxu0 0.0
  %1040 = vmatpush1.msra.mxu0 0.0
  %1041 = vmatprep.subr.mxu0 0.0
  %1042 = vmatpush1.msra.mxu0 0.0
  %1043 = vmatprep.subr.mxu0 0.0
  %1044 = vmatpush1.msra.mxu0 0.0
  %1045 = vmatprep.subr.mxu0 0.0
  %1046 = vmatpush1.msra.mxu0 0.0
  %1047 = vmatprep.subr.mxu0 0.0
  %1048 = vmatpush1.msra.mxu0 0.0
  %1049 = vmatprep.subr.mxu0 0.0
  %1050 = vmatpush1.msra.mxu0 0.0
  %1051 = vmatprep.subr.mxu0 0.0
  %1052 = vmatpush1.msra.mxu0 0.0
  %1053 = vmatprep.subr.mxu0 0.0
  %1054 = vmatpush1.msra.mxu0 0.0
  %1055 = vmatprep.subr.mxu0 0.0
  %1056 = vmatpush1.msra.mxu0 0.0
  %1057 = vmatprep.subr.mxu0 0.0
  %1058 = vmatpush1.msra.mxu0 0.0
  %1059 = vmatprep.subr.mxu0 0.0
  %1060 = vmatpush1.msra.mxu0 0.0
  %1061 = vmatprep.subr.mxu0 0.0
  %1062 = vmatpush1.msra.mxu0 0.0
  %1063 = vmatprep.subr.mxu0 0.0
  %1064 = vmatpush1.msra.mxu0 0.0
  %1065 = vmatprep.subr.mxu0 0.0
  %1066 = vmatpush1.msra.mxu0 0.0
  %1067 = vmatprep.subr.mxu0 0.0
  %1068 = vmatpush1.msra.mxu0 0.0
  %1069 = vmatprep.subr.mxu0 0.0
  %1070 = vmatpush1.msra.mxu0 0.0
  %1071 = vmatprep.subr.mxu0 0.0
  %1072 = vmatpush1.msra.mxu0 0.0
  %1073 = vmatprep.subr.mxu0 0.0
  %1074 = vmatpush1.msra.mxu0 0.0
  %1075 = vmatprep.subr.mxu0 0.0
  %1076 = vmatpush1.msra.mxu0 0.0
  %1077 = vmatprep.subr.mxu0 0.0
  %1078 = vmatpush1.msra.mxu0 0.0
  %1079 = vmatprep.subr.mxu0 0.0
  %1080 = vmatpush1.msra.mxu0 0.0
  %1081 = vmatprep.subr.mxu0 0.0
  %1082 = vmatpush1.msra.mxu0 0.0
  %1083 = vmatprep.subr.mxu0 0.0
  %1084 = vmatpush1.msra.mxu0 0.0
  %1085 = vmatprep.subr.mxu0 0.0
  %1086 = vmatpush1.msra.mxu0 0.0
  %1087 = vmatprep.subr.mxu0 0.0
  %1088 = vmatpush1.msra.mxu0 0.0
  %1089 = vmatprep.subr.mxu0 0.0
  %1090 = vmatpush1.msra.mxu0 0.0
  %1091 = vmatprep.mubr.f32.mxu0 0.0
  %1092 = vmatmul.mubr.f32.gmra.mrb[0].mxu0 %v175
  %v1093 = vpop.f32.mrb[0].mxu0
  %v1094 = vadd.f32 %v96, %v1093
  %v1095 = vpop.f32.mrb[0].mxu0
  %v1096 = vadd.f32 %v96, %v1095
  %1097 = vmatprep.mubr.f32.mxu0 0.0
  %1098 = vmatmul.mubr.f32.gmra.mrb[0].mxu0 %v178
  %v1099 = vpop.f32.mrb[0].mxu0
  %v1100 = vadd.f32 %v101, %v1099
  %v1101 = vpop.f32.mrb[0].mxu0
  %v1102 = vadd.f32 %v101, %v1101
  %1103 = vmatprep.mubr.f32.mxu0 0.0
  %1104 = vmatmul.mubr.f32.gmra.mrb[0].mxu0 %v181
  %v1105 = vpop.f32.mrb[0].mxu0
  %v1106 = vadd.f32 %v106, %v1105
  %v1107 = vpop.f32.mrb[0].mxu0
  %v1108 = vadd.f32 %v106, %v1107
  %1109 = vmatprep.mubr.f32.mxu0 0.0
  %1110 = vmatmul.mubr.f32.gmra.mrb[0].mxu0 %v184
  %v1111 = vpop.f32.mrb[0].mxu0
  %v1112 = vadd.f32 %v111, %v1111
  %v1113 = vpop.f32.mrb[0].mxu0
  %v1114 = vadd.f32 %v111, %v1113
  %1115 = vmatprep.mubr.f32.mxu0 0.0
  %1116 = vmatmul.mubr.f32.gmra.mrb[0].mxu0 %v187
  %v1117 = vpop.f32.mrb[0].mxu0
  %v1118 = vadd.f32 %v116, %v1117
  %v1119 = vpop.f32.mrb[0].mxu0
  %v1120 = vadd.f32 %v116, %v1119
  %1121 = vmatprep.mubr.f32.mxu0 0.0
  %1122 = vmatmul.mubr.f32.gmra.mrb[0].mxu0 %v190
  %v1123 = vpop.f32.mrb[0].mxu0
  %v1124 = vadd.f32 %v121, %v1123
  %v1125 = vpop.f32.mrb[0].mxu0
  %v1126 = vadd.f32 %v121, %v1125
  %1127 = vmatprep.mubr.f32.mxu0 0.0
  %1128 = vmatmul.mubr.f32.gmra.mrb[0].mxu0 %v193
  %v1129 = vpop.f32.mrb[0].mxu0
  %v1130 = vadd.f32 %v126, %v1129
  %v1131 = vpop.f32.mrb[0].mxu0
  %v1132 = vadd.f32 %v126, %v1131
  %1133 = vmatprep.mubr.f32.mxu0 0.0
  %1134 = vmatmul.mubr.f32.gmra.mrb[0].mxu0 %v196
  %v1135 = vpop.f32.mrb[0].mxu0
  %v1136 = vadd.f32 %v131, %v1135
  %v1137 = vpop.f32.mrb[0].mxu0
  %v1138 = vadd.f32 %v131, %v1137
  %1139 = vmatprep.mubr.f32.mxu0 0.0
  %1140 = vmatmul.mubr.f32.gmra.mrb[0].mxu0 %v199
  %v1141 = vpop.f32.mrb[0].mxu0
  %v1142 = vadd.f32 %v136, %v1141
  %v1143 = vpop.f32.mrb[0].mxu0
  %v1144 = vadd.f32 %v136, %v1143
  %1145 = vmatprep.mubr.f32.mxu0 0.0
  %1146 = vmatmul.mubr.f32.gmra.mrb[0].mxu0 %v202
  %v1147 = vpop.f32.mrb[0].mxu0
  %v1148 = vadd.f32 %v141, %v1147
  %v1149 = vpop.f32.mrb[0].mxu0
  %v1150 = vadd.f32 %v141, %v1149
  %1151 = vmatprep.mubr.f32.mxu0 0.0
  %1152 = vmatmul.mubr.f32.gmra.mrb[0].mxu0 %v205
  %v1153 = vpop.f32.mrb[0].mxu0
  %v1154 = vadd.f32 %v146, %v1153
  %v1155 = vpop.f32.mrb[0].mxu0
  %v1156 = vadd.f32 %v146, %v1155
  %1157 = vmatprep.mubr.f32.mxu0 0.0
  %1158 = vmatmul.mubr.f32.gmra.mrb[0].mxu0 %v208
  %v1159 = vpop.f32.mrb[0].mxu0
  %v1160 = vadd.f32 %v151, %v1159
  %v1161 = vpop.f32.mrb[0].mxu0
  %v1162 = vadd.f32 %v151, %v1161
  %1163 = vmatprep.mubr.f32.mxu0 0.0
  %1164 = vmatmul.mubr.f32.gmra.mrb[0].mxu0 %v211
  %v1165 = vpop.f32.mrb[0].mxu0
  %v1166 = vadd.f32 %v156, %v1165
  %v1167 = vpop.f32.mrb[0].mxu0
  %v1168 = vadd.f32 %v156, %v1167
  %1169 = vmatprep.mubr.f32.mxu0 0.0
  %1170 = vmatmul.mubr.f32.gmra.mrb[0].mxu0 %v214
  %v1171 = vpop.f32.mrb[0].mxu0
  %v1172 = vadd.f32 %v161, %v1171
  %v1173 = vpop.f32.mrb[0].mxu0
  %v1174 = vadd.f32 %v161, %v1173
  %1175 = vmatprep.mubr.f32.mxu0 0.0
  %1176 = vmatmul.mubr.f32.gmra.mrb[0].mxu0 %v217
  %v1177 = vpop.f32.mrb[0].mxu0
  %v1178 = vadd.f32 %v166, %v1177
  %v1179 = vpop.f32.mrb[0].mxu0
  %v1180 = vadd.f32 %v166, %v1179
  %1181 = vmatprep.mubr.f32.mxu0 0.0
  %1182 = vmatmul.mubr.f32.gmra.mrb[0].mxu0 %v220
  %v1183 = vpop.f32.mrb[0].mxu0
  %v1184 = vadd.f32 %v171, %v1183
  %v1185 = vpop.f32.mrb[0].mxu0
  %v1186 = vadd.f32 %v171, %v1185
  %1187 = vdwg.mxu0
  %1188 = vmatprep.subr.mxu0 %v58
  %1189 = vmatpush1.msra.mxu0 %v57
  %1190 = vmatprep.subr.mxu0 0.0
  %1191 = vmatpush1.msra.mxu0 0.0
  %1192 = vmatprep.subr.mxu0 0.0
  %1193 = vmatpush1.msra.mxu0 0.0
  %1194 = vmatprep.subr.mxu0 0.0
  %1195 = vmatpush1.msra.mxu0 0.0
  %1196 = vmatprep.subr.mxu0 0.0
  %1197 = vmatpush1.msra.mxu0 0.0
  %1198 = vmatprep.subr.mxu0 0.0
  %1199 = vmatpush1.msra.mxu0 0.0
  %1200 = vmatprep.subr.mxu0 0.0
  %1201 = vmatpush1.msra.mxu0 0.0
  %1202 = vmatprep.subr.mxu0 0.0
  %1203 = vmatpush1.msra.mxu0 0.0
  %1204 = vmatprep.subr.mxu0 0.0
  %1205 = vmatpush1.msra.mxu0 0.0
  %1206 = vmatprep.subr.mxu0 0.0
  %1207 = vmatpush1.msra.mxu0 0.0
  %1208 = vmatprep.subr.mxu0 0.0
  %1209 = vmatpush1.msra.mxu0 0.0
  %1210 = vmatprep.subr.mxu0 0.0
  %1211 = vmatpush1.msra.mxu0 0.0
  %1212 = vmatprep.subr.mxu0 0.0
  %1213 = vmatpush1.msra.mxu0 0.0
  %1214 = vmatprep.subr.mxu0 0.0
  %1215 = vmatpush1.msra.mxu0 0.0
  %1216 = vmatprep.subr.mxu0 0.0
  %1217 = vmatpush1.msra.mxu0 0.0
  %1218 = vmatprep.subr.mxu0 0.0
  %1219 = vmatpush1.msra.mxu0 0.0
  %1220 = vmatprep.subr.mxu0 0.0
  %1221 = vmatpush1.msra.mxu0 0.0
  %1222 = vmatprep.subr.mxu0 0.0
  %1223 = vmatpush1.msra.mxu0 0.0
  %1224 = vmatprep.subr.mxu0 0.0
  %1225 = vmatpush1.msra.mxu0 0.0
  %1226 = vmatprep.subr.mxu0 0.0
  %1227 = vmatpush1.msra.mxu0 0.0
  %1228 = vmatprep.subr.mxu0 0.0
  %1229 = vmatpush1.msra.mxu0 0.0
  %1230 = vmatprep.subr.mxu0 0.0
  %1231 = vmatpush1.msra.mxu0 0.0
  %1232 = vmatprep.subr.mxu0 0.0
  %1233 = vmatpush1.msra.mxu0 0.0
  %1234 = vmatprep.subr.mxu0 0.0
  %1235 = vmatpush1.msra.mxu0 0.0
  %1236 = vmatprep.subr.mxu0 0.0
  %1237 = vmatpush1.msra.mxu0 0.0
  %1238 = vmatprep.subr.mxu0 0.0
  %1239 = vmatpush1.msra.mxu0 0.0
  %1240 = vmatprep.subr.mxu0 0.0
  %1241 = vmatpush1.msra.mxu0 0.0
  %1242 = vmatprep.subr.mxu0 0.0
  %1243 = vmatpush1.msra.mxu0 0.0
  %1244 = vmatprep.subr.mxu0 0.0
  %1245 = vmatpush1.msra.mxu0 0.0
  %1246 = vmatprep.subr.mxu0 0.0
  %1247 = vmatpush1.msra.mxu0 0.0
  %1248 = vmatprep.subr.mxu0 0.0
  %1249 = vmatpush1.msra.mxu0 0.0
  %1250 = vmatprep.subr.mxu0 0.0
  %1251 = vmatpush1.msra.mxu0 0.0
  %1252 = vmatprep.mubr.f32.mxu0 0.0
  %1253 = vmatmul.mubr.f32.gmra.mrb[0].mxu0 %v175
  %v1254 = vpop.f32.mrb[0].mxu0
  %v1255 = vadd.f32 %v96, %v1254
  %v1256 = vpop.f32.mrb[0].mxu0
  %v1257 = vadd.f32 %v96, %v1256
  %1258 = vmatprep.mubr.f32.mxu0 0.0
  %1259 = vmatmul.mubr.f32.gmra.mrb[0].mxu0 %v178
  %v1260 = vpop.f32.mrb[0].mxu0
  %v1261 = vadd.f32 %v101, %v1260
  %v1262 = vpop.f32.mrb[0].mxu0
  %v1263 = vadd.f32 %v101, %v1262
  %1264 = vmatprep.mubr.f32.mxu0 0.0
  %1265 = vmatmul.mubr.f32.gmra.mrb[0].mxu0 %v181
  %v1266 = vpop.f32.mrb[0].mxu0
  %v1267 = vadd.f32 %v106, %v1266
  %v1268 = vpop.f32.mrb[0].mxu0
  %v1269 = vadd.f32 %v106, %v1268
  %1270 = vmatprep.mubr.f32.mxu0 0.0
  %1271 = vmatmul.mubr.f32.gmra.mrb[0].mxu0 %v184
  %v1272 = vpop.f32.mrb[0].mxu0
  %v1273 = vadd.f32 %v111, %v1272
  %v1274 = vpop.f32.mrb[0].mxu0
  %v1275 = vadd.f32 %v111, %v1274
  %1276 = vmatprep.mubr.f32.mxu0 0.0
  %1277 = vmatmul.mubr.f32.gmra.mrb[0].mxu0 %v187
  %v1278 = vpop.f32.mrb[0].mxu0
  %v1279 = vadd.f32 %v116, %v1278
  %v1280 = vpop.f32.mrb[0].mxu0
  %v1281 = vadd.f32 %v116, %v1280
  %1282 = vmatprep.mubr.f32.mxu0 0.0
  %1283 = vmatmul.mubr.f32.gmra.mrb[0].mxu0 %v190
  %v1284 = vpop.f32.mrb[0].mxu0
  %v1285 = vadd.f32 %v121, %v1284
  %v1286 = vpop.f32.mrb[0].mxu0
  %v1287 = vadd.f32 %v121, %v1286
  %1288 = vmatprep.mubr.f32.mxu0 0.0
  %1289 = vmatmul.mubr.f32.gmra.mrb[0].mxu0 %v193
  %v1290 = vpop.f32.mrb[0].mxu0
  %v1291 = vadd.f32 %v126, %v1290
  %v1292 = vpop.f32.mrb[0].mxu0
  %v1293 = vadd.f32 %v126, %v1292
  %1294 = vmatprep.mubr.f32.mxu0 0.0
  %1295 = vmatmul.mubr.f32.gmra.mrb[0].mxu0 %v196
  %v1296 = vpop.f32.mrb[0].mxu0
  %v1297 = vadd.f32 %v131, %v1296
  %v1298 = vpop.f32.mrb[0].mxu0
  %v1299 = vadd.f32 %v131, %v1298
  %1300 = vmatprep.mubr.f32.mxu0 0.0
  %1301 = vmatmul.mubr.f32.gmra.mrb[0].mxu0 %v199
  %v1302 = vpop.f32.mrb[0].mxu0
  %v1303 = vadd.f32 %v136, %v1302
  %v1304 = vpop.f32.mrb[0].mxu0
  %v1305 = vadd.f32 %v136, %v1304
  %1306 = vmatprep.mubr.f32.mxu0 0.0
  %1307 = vmatmul.mubr.f32.gmra.mrb[0].mxu0 %v202
  %v1308 = vpop.f32.mrb[0].mxu0
  %v1309 = vadd.f32 %v141, %v1308
  %v1310 = vpop.f32.mrb[0].mxu0
  %v1311 = vadd.f32 %v141, %v1310
  %1312 = vmatprep.mubr.f32.mxu0 0.0
  %1313 = vmatmul.mubr.f32.gmra.mrb[0].mxu0 %v205
  %v1314 = vpop.f32.mrb[0].mxu0
  %v1315 = vadd.f32 %v146, %v1314
  %v1316 = vpop.f32.mrb[0].mxu0
  %v1317 = vadd.f32 %v146, %v1316
  %1318 = vmatprep.mubr.f32.mxu0 0.0
  %1319 = vmatmul.mubr.f32.gmra.mrb[0].mxu0 %v208
  %v1320 = vpop.f32.mrb[0].mxu0
  %v1321 = vadd.f32 %v151, %v1320
  %v1322 = vpop.f32.mrb[0].mxu0
  %v1323 = vadd.f32 %v151, %v1322
  %1324 = vmatprep.mubr.f32.mxu0 0.0
  %1325 = vmatmul.mubr.f32.gmra.mrb[0].mxu0 %v211
  %v1326 = vpop.f32.mrb[0].mxu0
  %v1327 = vadd.f32 %v156, %v1326
  %v1328 = vpop.f32.mrb[0].mxu0
  %v1329 = vadd.f32 %v156, %v1328
  %1330 = vmatprep.mubr.f32.mxu0 0.0
  %1331 = vmatmul.mubr.f32.gmra.mrb[0].mxu0 %v214
  %v1332 = vpop.f32.mrb[0].mxu0
  %v1333 = vadd.f32 %v161, %v1332
  %v1334 = vpop.f32.mrb[0].mxu0
  %v1335 = vadd.f32 %v161, %v1334
  %1336 = vmatprep.mubr.f32.mxu0 0.0
  %1337 = vmatmul.mubr.f32.gmra.mrb[0].mxu0 %v217
  %v1338 = vpop.f32.mrb[0].mxu0
  %v1339 = vadd.f32 %v166, %v1338
  %v1340 = vpop.f32.mrb[0].mxu0
  %v1341 = vadd.f32 %v166, %v1340
  %1342 = vmatprep.mubr.f32.mxu0 0.0
  %1343 = vmatmul.mubr.f32.gmra.mrb[0].mxu0 %v220
  %v1344 = vpop.f32.mrb[0].mxu0
  %v1345 = vadd.f32 %v171, %v1344
  %v1346 = vpop.f32.mrb[0].mxu0
  %v1347 = vadd.f32 %v171, %v1346
  %1348 = vdwg.mxu0
  %1349 = vmatprep.subr.mxu0 %v60
  %1350 = vmatpush1.msra.mxu0 %v59
  %1351 = vmatprep.subr.mxu0 0.0
  %1352 = vmatpush1.msra.mxu0 0.0
  %1353 = vmatprep.subr.mxu0 0.0
  %1354 = vmatpush1.msra.mxu0 0.0
  %1355 = vmatprep.subr.mxu0 0.0
  %1356 = vmatpush1.msra.mxu0 0.0
  %1357 = vmatprep.subr.mxu0 0.0
  %1358 = vmatpush1.msra.mxu0 0.0
  %1359 = vmatprep.subr.mxu0 0.0
  %1360 = vmatpush1.msra.mxu0 0.0
  %1361 = vmatprep.subr.mxu0 0.0
  %1362 = vmatpush1.msra.mxu0 0.0
  %1363 = vmatprep.subr.mxu0 0.0
  %1364 = vmatpush1.msra.mxu0 0.0
  %1365 = vmatprep.subr.mxu0 0.0
  %1366 = vmatpush1.msra.mxu0 0.0
  %1367 = vmatprep.subr.mxu0 0.0
  %1368 = vmatpush1.msra.mxu0 0.0
  %1369 = vmatprep.subr.mxu0 0.0
  %1370 = vmatpush1.msra.mxu0 0.0
  %1371 = vmatprep.subr.mxu0 0.0
  %1372 = vmatpush1.msra.mxu0 0.0
  %1373 = vmatprep.subr.mxu0 0.0
  %1374 = vmatpush1.msra.mxu0 0.0
  %1375 = vmatprep.subr.mxu0 0.0
  %1376 = vmatpush1.msra.mxu0 0.0
  %1377 = vmatprep.subr.mxu0 0.0
  %1378 = vmatpush1.msra.mxu0 0.0
  %1379 = vmatprep.subr.mxu0 0.0
  %1380 = vmatpush1.msra.mxu0 0.0
  %1381 = vmatprep.subr.mxu0 0.0
  %1382 = vmatpush1.msra.mxu0 0.0
  %1383 = vmatprep.subr.mxu0 0.0
  %1384 = vmatpush1.msra.mxu0 0.0
  %1385 = vmatprep.subr.mxu0 0.0
  %1386 = vmatpush1.msra.mxu0 0.0
  %1387 = vmatprep.subr.mxu0 0.0
  %1388 = vmatpush1.msra.mxu0 0.0
  %1389 = vmatprep.subr.mxu0 0.0
  %1390 = vmatpush1.msra.mxu0 0.0
  %1391 = vmatprep.subr.mxu0 0.0
  %1392 = vmatpush1.msra.mxu0 0.0
  %1393 = vmatprep.subr.mxu0 0.0
  %1394 = vmatpush1.msra.mxu0 0.0
  %1395 = vmatprep.subr.mxu0 0.0
  %1396 = vmatpush1.msra.mxu0 0.0
  %1397 = vmatprep.subr.mxu0 0.0
  %1398 = vmatpush1.msra.mxu0 0.0
  %1399 = vmatprep.subr.mxu0 0.0
  %1400 = vmatpush1.msra.mxu0 0.0
  %1401 = vmatprep.subr.mxu0 0.0
  %1402 = vmatpush1.msra.mxu0 0.0
  %1403 = vmatprep.subr.mxu0 0.0
  %1404 = vmatpush1.msra.mxu0 0.0
  %1405 = vmatprep.subr.mxu0 0.0
  %1406 = vmatpush1.msra.mxu0 0.0
  %1407 = vmatprep.subr.mxu0 0.0
  %1408 = vmatpush1.msra.mxu0 0.0
  %1409 = vmatprep.subr.mxu0 0.0
  %1410 = vmatpush1.msra.mxu0 0.0
  %1411 = vmatprep.subr.mxu0 0.0
  %1412 = vmatpush1.msra.mxu0 0.0
  %1413 = vmatprep.mubr.f32.mxu0 0.0
  %1414 = vmatmul.mubr.f32.gmra.mrb[0].mxu0 %v175
  %v1415 = vpop.f32.mrb[0].mxu0
  %v1416 = vadd.f32 %v96, %v1415
  %v1417 = vpop.f32.mrb[0].mxu0
  %v1418 = vadd.f32 %v96, %v1417
  %1419 = vmatprep.mubr.f32.mxu0 0.0
  %1420 = vmatmul.mubr.f32.gmra.mrb[0].mxu0 %v178
  %v1421 = vpop.f32.mrb[0].mxu0
  %v1422 = vadd.f32 %v101, %v1421
  %v1423 = vpop.f32.mrb[0].mxu0
  %v1424 = vadd.f32 %v101, %v1423
  %1425 = vmatprep.mubr.f32.mxu0 0.0
  %1426 = vmatmul.mubr.f32.gmra.mrb[0].mxu0 %v181
  %v1427 = vpop.f32.mrb[0].mxu0
  %v1428 = vadd.f32 %v106, %v1427
  %v1429 = vpop.f32.mrb[0].mxu0
  %v1430 = vadd.f32 %v106, %v1429
  %1431 = vmatprep.mubr.f32.mxu0 0.0
  %1432 = vmatmul.mubr.f32.gmra.mrb[0].mxu0 %v184
  %v1433 = vpop.f32.mrb[0].mxu0
  %v1434 = vadd.f32 %v111, %v1433
  %v1435 = vpop.f32.mrb[0].mxu0
  %v1436 = vadd.f32 %v111, %v1435
  %1437 = vmatprep.mubr.f32.mxu0 0.0
  %1438 = vmatmul.mubr.f32.gmra.mrb[0].mxu0 %v187
  %v1439 = vpop.f32.mrb[0].mxu0
  %v1440 = vadd.f32 %v116, %v1439
  %v1441 = vpop.f32.mrb[0].mxu0
  %v1442 = vadd.f32 %v116, %v1441
  %1443 = vmatprep.mubr.f32.mxu0 0.0
  %1444 = vmatmul.mubr.f32.gmra.mrb[0].mxu0 %v190
  %v1445 = vpop.f32.mrb[0].mxu0
  %v1446 = vadd.f32 %v121, %v1445
  %v1447 = vpop.f32.mrb[0].mxu0
  %v1448 = vadd.f32 %v121, %v1447
  %1449 = vmatprep.mubr.f32.mxu0 0.0
  %1450 = vmatmul.mubr.f32.gmra.mrb[0].mxu0 %v193
  %v1451 = vpop.f32.mrb[0].mxu0
  %v1452 = vadd.f32 %v126, %v1451
  %v1453 = vpop.f32.mrb[0].mxu0
  %v1454 = vadd.f32 %v126, %v1453
  %1455 = vmatprep.mubr.f32.mxu0 0.0
  %1456 = vmatmul.mubr.f32.gmra.mrb[0].mxu0 %v196
  %v1457 = vpop.f32.mrb[0].mxu0
  %v1458 = vadd.f32 %v131, %v1457
  %v1459 = vpop.f32.mrb[0].mxu0
  %v1460 = vadd.f32 %v131, %v1459
  %1461 = vmatprep.mubr.f32.mxu0 0.0
  %1462 = vmatmul.mubr.f32.gmra.mrb[0].mxu0 %v199
  %v1463 = vpop.f32.mrb[0].mxu0
  %v1464 = vadd.f32 %v136, %v1463
  %v1465 = vpop.f32.mrb[0].mxu0
  %v1466 = vadd.f32 %v136, %v1465
  %1467 = vmatprep.mubr.f32.mxu0 0.0
  %1468 = vmatmul.mubr.f32.gmra.mrb[0].mxu0 %v202
  %v1469 = vpop.f32.mrb[0].mxu0
  %v1470 = vadd.f32 %v141, %v1469
  %v1471 = vpop.f32.mrb[0].mxu0
  %v1472 = vadd.f32 %v141, %v1471
  %1473 = vmatprep.mubr.f32.mxu0 0.0
  %1474 = vmatmul.mubr.f32.gmra.mrb[0].mxu0 %v205
  %v1475 = vpop.f32.mrb[0].mxu0
  %v1476 = vadd.f32 %v146, %v1475
  %v1477 = vpop.f32.mrb[0].mxu0
  %v1478 = vadd.f32 %v146, %v1477
  %1479 = vmatprep.mubr.f32.mxu0 0.0
  %1480 = vmatmul.mubr.f32.gmra.mrb[0].mxu0 %v208
  %v1481 = vpop.f32.mrb[0].mxu0
  %v1482 = vadd.f32 %v151, %v1481
  %v1483 = vpop.f32.mrb[0].mxu0
  %v1484 = vadd.f32 %v151, %v1483
  %1485 = vmatprep.mubr.f32.mxu0 0.0
  %1486 = vmatmul.mubr.f32.gmra.mrb[0].mxu0 %v211
  %v1487 = vpop.f32.mrb[0].mxu0
  %v1488 = vadd.f32 %v156, %v1487
  %v1489 = vpop.f32.mrb[0].mxu0
  %v1490 = vadd.f32 %v156, %v1489
  %1491 = vmatprep.mubr.f32.mxu0 0.0
  %1492 = vmatmul.mubr.f32.gmra.mrb[0].mxu0 %v214
  %v1493 = vpop.f32.mrb[0].mxu0
  %v1494 = vadd.f32 %v161, %v1493
  %v1495 = vpop.f32.mrb[0].mxu0
  %v1496 = vadd.f32 %v161, %v1495
  %1497 = vmatprep.mubr.f32.mxu0 0.0
  %1498 = vmatmul.mubr.f32.gmra.mrb[0].mxu0 %v217
  %v1499 = vpop.f32.mrb[0].mxu0
  %v1500 = vadd.f32 %v166, %v1499
  %v1501 = vpop.f32.mrb[0].mxu0
  %v1502 = vadd.f32 %v166, %v1501
  %1503 = vmatprep.mubr.f32.mxu0 0.0
  %1504 = vmatmul.mubr.f32.gmra.mrb[0].mxu0 %v220
  %v1505 = vpop.f32.mrb[0].mxu0
  %v1506 = vadd.f32 %v171, %v1505
  %v1507 = vpop.f32.mrb[0].mxu0
  %v1508 = vadd.f32 %v171, %v1507
  %1509 = vdwg.mxu0
  %1510 = vmatprep.subr.mxu0 %v62
  %1511 = vmatpush1.msra.mxu0 %v61
  %1512 = vmatprep.subr.mxu0 0.0
  %1513 = vmatpush1.msra.mxu0 0.0
  %1514 = vmatprep.subr.mxu0 0.0
  %1515 = vmatpush1.msra.mxu0 0.0
  %1516 = vmatprep.subr.mxu0 0.0
  %1517 = vmatpush1.msra.mxu0 0.0
  %1518 = vmatprep.subr.mxu0 0.0
  %1519 = vmatpush1.msra.mxu0 0.0
  %1520 = vmatprep.subr.mxu0 0.0
  %1521 = vmatpush1.msra.mxu0 0.0
  %1522 = vmatprep.subr.mxu0 0.0
  %1523 = vmatpush1.msra.mxu0 0.0
  %1524 = vmatprep.subr.mxu0 0.0
  %1525 = vmatpush1.msra.mxu0 0.0
  %1526 = vmatprep.subr.mxu0 0.0
  %1527 = vmatpush1.msra.mxu0 0.0
  %1528 = vmatprep.subr.mxu0 0.0
  %1529 = vmatpush1.msra.mxu0 0.0
  %1530 = vmatprep.subr.mxu0 0.0
  %1531 = vmatpush1.msra.mxu0 0.0
  %1532 = vmatprep.subr.mxu0 0.0
  %1533 = vmatpush1.msra.mxu0 0.0
  %1534 = vmatprep.subr.mxu0 0.0
  %1535 = vmatpush1.msra.mxu0 0.0
  %1536 = vmatprep.subr.mxu0 0.0
  %1537 = vmatpush1.msra.mxu0 0.0
  %1538 = vmatprep.subr.mxu0 0.0
  %1539 = vmatpush1.msra.mxu0 0.0
  %1540 = vmatprep.subr.mxu0 0.0
  %1541 = vmatpush1.msra.mxu0 0.0
  %1542 = vmatprep.subr.mxu0 0.0
  %1543 = vmatpush1.msra.mxu0 0.0
  %1544 = vmatprep.subr.mxu0 0.0
  %1545 = vmatpush1.msra.mxu0 0.0
  %1546 = vmatprep.subr.mxu0 0.0
  %1547 = vmatpush1.msra.mxu0 0.0
  %1548 = vmatprep.subr.mxu0 0.0
  %1549 = vmatpush1.msra.mxu0 0.0
  %1550 = vmatprep.subr.mxu0 0.0
  %1551 = vmatpush1.msra.mxu0 0.0
  %1552 = vmatprep.subr.mxu0 0.0
  %1553 = vmatpush1.msra.mxu0 0.0
  %1554 = vmatprep.subr.mxu0 0.0
  %1555 = vmatpush1.msra.mxu0 0.0
  %1556 = vmatprep.subr.mxu0 0.0
  %1557 = vmatpush1.msra.mxu0 0.0
  %1558 = vmatprep.subr.mxu0 0.0
  %1559 = vmatpush1.msra.mxu0 0.0
  %1560 = vmatprep.subr.mxu0 0.0
  %1561 = vmatpush1.msra.mxu0 0.0
  %1562 = vmatprep.subr.mxu0 0.0
  %1563 = vmatpush1.msra.mxu0 0.0
  %1564 = vmatprep.subr.mxu0 0.0
  %1565 = vmatpush1.msra.mxu0 0.0
  %1566 = vmatprep.subr.mxu0 0.0
  %1567 = vmatpush1.msra.mxu0 0.0
  %1568 = vmatprep.subr.mxu0 0.0
  %1569 = vmatpush1.msra.mxu0 0.0
  %1570 = vmatprep.subr.mxu0 0.0
  %1571 = vmatpush1.msra.mxu0 0.0
  %1572 = vmatprep.subr.mxu0 0.0
  %1573 = vmatpush1.msra.mxu0 0.0
  %1574 = vmatprep.mubr.f32.mxu0 0.0
  %1575 = vmatmul.mubr.f32.gmra.mrb[0].mxu0 %v175
  %v1576 = vpop.f32.mrb[0].mxu0
  %v1577 = vadd.f32 %v96, %v1576
  %v1578 = vpop.f32.mrb[0].mxu0
  %v1579 = vadd.f32 %v96, %v1578
  %1580 = vmatprep.mubr.f32.mxu0 0.0
  %1581 = vmatmul.mubr.f32.gmra.mrb[0].mxu0 %v178
  %v1582 = vpop.f32.mrb[0].mxu0
  %v1583 = vadd.f32 %v101, %v1582
  %v1584 = vpop.f32.mrb[0].mxu0
  %v1585 = vadd.f32 %v101, %v1584
  %1586 = vmatprep.mubr.f32.mxu0 0.0
  %1587 = vmatmul.mubr.f32.gmra.mrb[0].mxu0 %v181
  %v1588 = vpop.f32.mrb[0].mxu0
  %v1589 = vadd.f32 %v106, %v1588
  %v1590 = vpop.f32.mrb[0].mxu0
  %v1591 = vadd.f32 %v106, %v1590
  %1592 = vmatprep.mubr.f32.mxu0 0.0
  %1593 = vmatmul.mubr.f32.gmra.mrb[0].mxu0 %v184
  %v1594 = vpop.f32.mrb[0].mxu0
  %v1595 = vadd.f32 %v111, %v1594
  %v1596 = vpop.f32.mrb[0].mxu0
  %v1597 = vadd.f32 %v111, %v1596
  %1598 = vmatprep.mubr.f32.mxu0 0.0
  %1599 = vmatmul.mubr.f32.gmra.mrb[0].mxu0 %v187
  %v1600 = vpop.f32.mrb[0].mxu0
  %v1601 = vadd.f32 %v116, %v1600
  %v1602 = vpop.f32.mrb[0].mxu0
  %v1603 = vadd.f32 %v116, %v1602
  %1604 = vmatprep.mubr.f32.mxu0 0.0
  %1605 = vmatmul.mubr.f32.gmra.mrb[0].mxu0 %v190
  %v1606 = vpop.f32.mrb[0].mxu0
  %v1607 = vadd.f32 %v121, %v1606
  %v1608 = vpop.f32.mrb[0].mxu0
  %v1609 = vadd.f32 %v121, %v1608
  %1610 = vmatprep.mubr.f32.mxu0 0.0
  %1611 = vmatmul.mubr.f32.gmra.mrb[0].mxu0 %v193
  %v1612 = vpop.f32.mrb[0].mxu0
  %v1613 = vadd.f32 %v126, %v1612
  %v1614 = vpop.f32.mrb[0].mxu0
  %v1615 = vadd.f32 %v126, %v1614
  %1616 = vmatprep.mubr.f32.mxu0 0.0
  %1617 = vmatmul.mubr.f32.gmra.mrb[0].mxu0 %v196
  %v1618 = vpop.f32.mrb[0].mxu0
  %v1619 = vadd.f32 %v131, %v1618
  %v1620 = vpop.f32.mrb[0].mxu0
  %v1621 = vadd.f32 %v131, %v1620
  %1622 = vmatprep.mubr.f32.mxu0 0.0
  %1623 = vmatmul.mubr.f32.gmra.mrb[0].mxu0 %v199
  %v1624 = vpop.f32.mrb[0].mxu0
  %v1625 = vadd.f32 %v136, %v1624
  %v1626 = vpop.f32.mrb[0].mxu0
  %v1627 = vadd.f32 %v136, %v1626
  %1628 = vmatprep.mubr.f32.mxu0 0.0
  %1629 = vmatmul.mubr.f32.gmra.mrb[0].mxu0 %v202
  %v1630 = vpop.f32.mrb[0].mxu0
  %v1631 = vadd.f32 %v141, %v1630
  %v1632 = vpop.f32.mrb[0].mxu0
  %v1633 = vadd.f32 %v141, %v1632
  %1634 = vmatprep.mubr.f32.mxu0 0.0
  %1635 = vmatmul.mubr.f32.gmra.mrb[0].mxu0 %v205
  %v1636 = vpop.f32.mrb[0].mxu0
  %v1637 = vadd.f32 %v146, %v1636
  %v1638 = vpop.f32.mrb[0].mxu0
  %v1639 = vadd.f32 %v146, %v1638
  %1640 = vmatprep.mubr.f32.mxu0 0.0
  %1641 = vmatmul.mubr.f32.gmra.mrb[0].mxu0 %v208
  %v1642 = vpop.f32.mrb[0].mxu0
  %v1643 = vadd.f32 %v151, %v1642
  %v1644 = vpop.f32.mrb[0].mxu0
  %v1645 = vadd.f32 %v151, %v1644
  %1646 = vmatprep.mubr.f32.mxu0 0.0
  %1647 = vmatmul.mubr.f32.gmra.mrb[0].mxu0 %v211
  %v1648 = vpop.f32.mrb[0].mxu0
  %v1649 = vadd.f32 %v156, %v1648
  %v1650 = vpop.f32.mrb[0].mxu0
  %v1651 = vadd.f32 %v156, %v1650
  %1652 = vmatprep.mubr.f32.mxu0 0.0
  %1653 = vmatmul.mubr.f32.gmra.mrb[0].mxu0 %v214
  %v1654 = vpop.f32.mrb[0].mxu0
  %v1655 = vadd.f32 %v161, %v1654
  %v1656 = vpop.f32.mrb[0].mxu0
  %v1657 = vadd.f32 %v161, %v1656
  %1658 = vmatprep.mubr.f32.mxu0 0.0
  %1659 = vmatmul.mubr.f32.gmra.mrb[0].mxu0 %v217
  %v1660 = vpop.f32.mrb[0].mxu0
  %v1661 = vadd.f32 %v166, %v1660
  %v1662 = vpop.f32.mrb[0].mxu0
  %v1663 = vadd.f32 %v166, %v1662
  %1664 = vmatprep.mubr.f32.mxu0 0.0
  %1665 = vmatmul.mubr.f32.gmra.mrb[0].mxu0 %v220
  %v1666 = vpop.f32.mrb[0].mxu0
  %v1667 = vadd.f32 %v171, %v1666
  %v1668 = vpop.f32.mrb[0].mxu0
  %v1669 = vadd.f32 %v171, %v1668
  %1670 = vdwg.mxu0
  %1671 = vmatprep.subr.mxu0 %v64
  %1672 = vmatpush1.msra.mxu0 %v63
  %1673 = vmatprep.subr.mxu0 0.0
  %1674 = vmatpush1.msra.mxu0 0.0
  %1675 = vmatprep.subr.mxu0 0.0
  %1676 = vmatpush1.msra.mxu0 0.0
  %1677 = vmatprep.subr.mxu0 0.0
  %1678 = vmatpush1.msra.mxu0 0.0
  %1679 = vmatprep.subr.mxu0 0.0
  %1680 = vmatpush1.msra.mxu0 0.0
  %1681 = vmatprep.subr.mxu0 0.0
  %1682 = vmatpush1.msra.mxu0 0.0
  %1683 = vmatprep.subr.mxu0 0.0
  %1684 = vmatpush1.msra.mxu0 0.0
  %1685 = vmatprep.subr.mxu0 0.0
  %1686 = vmatpush1.msra.mxu0 0.0
  %1687 = vmatprep.subr.mxu0 0.0
  %1688 = vmatpush1.msra.mxu0 0.0
  %1689 = vmatprep.subr.mxu0 0.0
  %1690 = vmatpush1.msra.mxu0 0.0
  %1691 = vmatprep.subr.mxu0 0.0
  %1692 = vmatpush1.msra.mxu0 0.0
  %1693 = vmatprep.subr.mxu0 0.0
  %1694 = vmatpush1.msra.mxu0 0.0
  %1695 = vmatprep.subr.mxu0 0.0
  %1696 = vmatpush1.msra.mxu0 0.0
  %1697 = vmatprep.subr.mxu0 0.0
  %1698 = vmatpush1.msra.mxu0 0.0
  %1699 = vmatprep.subr.mxu0 0.0
  %1700 = vmatpush1.msra.mxu0 0.0
  %1701 = vmatprep.subr.mxu0 0.0
  %1702 = vmatpush1.msra.mxu0 0.0
  %1703 = vmatprep.subr.mxu0 0.0
  %1704 = vmatpush1.msra.mxu0 0.0
  %1705 = vmatprep.subr.mxu0 0.0
  %1706 = vmatpush1.msra.mxu0 0.0
  %1707 = vmatprep.subr.mxu0 0.0
  %1708 = vmatpush1.msra.mxu0 0.0
  %1709 = vmatprep.subr.mxu0 0.0
  %1710 = vmatpush1.msra.mxu0 0.0
  %1711 = vmatprep.subr.mxu0 0.0
  %1712 = vmatpush1.msra.mxu0 0.0
  %1713 = vmatprep.subr.mxu0 0.0
  %1714 = vmatpush1.msra.mxu0 0.0
  %1715 = vmatprep.subr.mxu0 0.0
  %1716 = vmatpush1.msra.mxu0 0.0
  %1717 = vmatprep.subr.mxu0 0.0
  %1718 = vmatpush1.msra.mxu0 0.0
  %1719 = vmatprep.subr.mxu0 0.0
  %1720 = vmatpush1.msra.mxu0 0.0
  %1721 = vmatprep.subr.mxu0 0.0
  %1722 = vmatpush1.msra.mxu0 0.0
  %1723 = vmatprep.subr.mxu0 0.0
  %1724 = vmatpush1.msra.mxu0 0.0
  %1725 = vmatprep.subr.mxu0 0.0
  %1726 = vmatpush1.msra.mxu0 0.0
  %1727 = vmatprep.subr.mxu0 0.0
  %1728 = vmatpush1.msra.mxu0 0.0
  %1729 = vmatprep.subr.mxu0 0.0
  %1730 = vmatpush1.msra.mxu0 0.0
  %1731 = vmatprep.subr.mxu0 0.0
  %1732 = vmatpush1.msra.mxu0 0.0
  %1733 = vmatprep.subr.mxu0 0.0
  %1734 = vmatpush1.msra.mxu0 0.0
  %1735 = vmatprep.mubr.f32.mxu0 0.0
  %1736 = vmatmul.mubr.f32.gmra.mrb[0].mxu0 %v175
  %v1737 = vpop.f32.mrb[0].mxu0
  %v1738 = vadd.f32 %v96, %v1737
  %v1739 = vpop.f32.mrb[0].mxu0
  %v1740 = vadd.f32 %v96, %v1739
  %1741 = vmatprep.mubr.f32.mxu0 0.0
  %1742 = vmatmul.mubr.f32.gmra.mrb[0].mxu0 %v178
  %v1743 = vpop.f32.mrb[0].mxu0
  %v1744 = vadd.f32 %v101, %v1743
  %v1745 = vpop.f32.mrb[0].mxu0
  %v1746 = vadd.f32 %v101, %v1745
  %1747 = vmatprep.mubr.f32.mxu0 0.0
  %1748 = vmatmul.mubr.f32.gmra.mrb[0].mxu0 %v181
  %v1749 = vpop.f32.mrb[0].mxu0
  %v1750 = vadd.f32 %v106, %v1749
  %v1751 = vpop.f32.mrb[0].mxu0
  %v1752 = vadd.f32 %v106, %v1751
  %1753 = vmatprep.mubr.f32.mxu0 0.0
  %1754 = vmatmul.mubr.f32.gmra.mrb[0].mxu0 %v184
  %v1755 = vpop.f32.mrb[0].mxu0
  %v1756 = vadd.f32 %v111, %v1755
  %v1757 = vpop.f32.mrb[0].mxu0
  %v1758 = vadd.f32 %v111, %v1757
  %1759 = vmatprep.mubr.f32.mxu0 0.0
  %1760 = vmatmul.mubr.f32.gmra.mrb[0].mxu0 %v187
  %v1761 = vpop.f32.mrb[0].mxu0
  %v1762 = vadd.f32 %v116, %v1761
  %v1763 = vpop.f32.mrb[0].mxu0
  %v1764 = vadd.f32 %v116, %v1763
  %1765 = vmatprep.mubr.f32.mxu0 0.0
  %1766 = vmatmul.mubr.f32.gmra.mrb[0].mxu0 %v190
  %v1767 = vpop.f32.mrb[0].mxu0
  %v1768 = vadd.f32 %v121, %v1767
  %v1769 = vpop.f32.mrb[0].mxu0
  %v1770 = vadd.f32 %v121, %v1769
  %1771 = vmatprep.mubr.f32.mxu0 0.0
  %1772 = vmatmul.mubr.f32.gmra.mrb[0].mxu0 %v193
  %v1773 = vpop.f32.mrb[0].mxu0
  %v1774 = vadd.f32 %v126, %v1773
  %v1775 = vpop.f32.mrb[0].mxu0
  %v1776 = vadd.f32 %v126, %v1775
  %1777 = vmatprep.mubr.f32.mxu0 0.0
  %1778 = vmatmul.mubr.f32.gmra.mrb[0].mxu0 %v196
  %v1779 = vpop.f32.mrb[0].mxu0
  %v1780 = vadd.f32 %v131, %v1779
  %v1781 = vpop.f32.mrb[0].mxu0
  %v1782 = vadd.f32 %v131, %v1781
  %1783 = vmatprep.mubr.f32.mxu0 0.0
  %1784 = vmatmul.mubr.f32.gmra.mrb[0].mxu0 %v199
  %v1785 = vpop.f32.mrb[0].mxu0
  %v1786 = vadd.f32 %v136, %v1785
  %v1787 = vpop.f32.mrb[0].mxu0
  %v1788 = vadd.f32 %v136, %v1787
  %1789 = vmatprep.mubr.f32.mxu0 0.0
  %1790 = vmatmul.mubr.f32.gmra.mrb[0].mxu0 %v202
  %v1791 = vpop.f32.mrb[0].mxu0
  %v1792 = vadd.f32 %v141, %v1791
  %v1793 = vpop.f32.mrb[0].mxu0
  %v1794 = vadd.f32 %v141, %v1793
  %1795 = vmatprep.mubr.f32.mxu0 0.0
  %1796 = vmatmul.mubr.f32.gmra.mrb[0].mxu0 %v205
  %v1797 = vpop.f32.mrb[0].mxu0
  %v1798 = vadd.f32 %v146, %v1797
  %v1799 = vpop.f32.mrb[0].mxu0
  %v1800 = vadd.f32 %v146, %v1799
  %1801 = vmatprep.mubr.f32.mxu0 0.0
  %1802 = vmatmul.mubr.f32.gmra.mrb[0].mxu0 %v208
  %v1803 = vpop.f32.mrb[0].mxu0
  %v1804 = vadd.f32 %v151, %v1803
  %v1805 = vpop.f32.mrb[0].mxu0
  %v1806 = vadd.f32 %v151, %v1805
  %1807 = vmatprep.mubr.f32.mxu0 0.0
  %1808 = vmatmul.mubr.f32.gmra.mrb[0].mxu0 %v211
  %v1809 = vpop.f32.mrb[0].mxu0
  %v1810 = vadd.f32 %v156, %v1809
  %v1811 = vpop.f32.mrb[0].mxu0
  %v1812 = vadd.f32 %v156, %v1811
  %1813 = vmatprep.mubr.f32.mxu0 0.0
  %1814 = vmatmul.mubr.f32.gmra.mrb[0].mxu0 %v214
  %v1815 = vpop.f32.mrb[0].mxu0
  %v1816 = vadd.f32 %v161, %v1815
  %v1817 = vpop.f32.mrb[0].mxu0
  %v1818 = vadd.f32 %v161, %v1817
  %1819 = vmatprep.mubr.f32.mxu0 0.0
  %1820 = vmatmul.mubr.f32.gmra.mrb[0].mxu0 %v217
  %v1821 = vpop.f32.mrb[0].mxu0
  %v1822 = vadd.f32 %v166, %v1821
  %v1823 = vpop.f32.mrb[0].mxu0
  %v1824 = vadd.f32 %v166, %v1823
  %1825 = vmatprep.mubr.f32.mxu0 0.0
  %1826 = vmatmul.mubr.f32.gmra.mrb[0].mxu0 %v220
  %v1827 = vpop.f32.mrb[0].mxu0
  %v1828 = vadd.f32 %v171, %v1827
  %v1829 = vpop.f32.mrb[0].mxu0
  %v1830 = vadd.f32 %v171, %v1829
  %1831 = vdwg.mxu0
  %1832 = vmatprep.subr.mxu0 %v66
  %1833 = vmatpush1.msra.mxu0 %v65
  %1834 = vmatprep.subr.mxu0 0.0
  %1835 = vmatpush1.msra.mxu0 0.0
  %1836 = vmatprep.subr.mxu0 0.0
  %1837 = vmatpush1.msra.mxu0 0.0
  %1838 = vmatprep.subr.mxu0 0.0
  %1839 = vmatpush1.msra.mxu0 0.0
  %1840 = vmatprep.subr.mxu0 0.0
  %1841 = vmatpush1.msra.mxu0 0.0
  %1842 = vmatprep.subr.mxu0 0.0
  %1843 = vmatpush1.msra.mxu0 0.0
  %1844 = vmatprep.subr.mxu0 0.0
  %1845 = vmatpush1.msra.mxu0 0.0
  %1846 = vmatprep.subr.mxu0 0.0
  %1847 = vmatpush1.msra.mxu0 0.0
  %1848 = vmatprep.subr.mxu0 0.0
  %1849 = vmatpush1.msra.mxu0 0.0
  %1850 = vmatprep.subr.mxu0 0.0
  %1851 = vmatpush1.msra.mxu0 0.0
  %1852 = vmatprep.subr.mxu0 0.0
  %1853 = vmatpush1.msra.mxu0 0.0
  %1854 = vmatprep.subr.mxu0 0.0
  %1855 = vmatpush1.msra.mxu0 0.0
  %1856 = vmatprep.subr.mxu0 0.0
  %1857 = vmatpush1.msra.mxu0 0.0
  %1858 = vmatprep.subr.mxu0 0.0
  %1859 = vmatpush1.msra.mxu0 0.0
  %1860 = vmatprep.subr.mxu0 0.0
  %1861 = vmatpush1.msra.mxu0 0.0
  %1862 = vmatprep.subr.mxu0 0.0
  %1863 = vmatpush1.msra.mxu0 0.0
  %1864 = vmatprep.subr.mxu0 0.0
  %1865 = vmatpush1.msra.mxu0 0.0
  %1866 = vmatprep.subr.mxu0 0.0
  %1867 = vmatpush1.msra.mxu0 0.0
  %1868 = vmatprep.subr.mxu0 0.0
  %1869 = vmatpush1.msra.mxu0 0.0
  %1870 = vmatprep.subr.mxu0 0.0
  %1871 = vmatpush1.msra.mxu0 0.0
  %1872 = vmatprep.subr.mxu0 0.0
  %1873 = vmatpush1.msra.mxu0 0.0
  %1874 = vmatprep.subr.mxu0 0.0
  %1875 = vmatpush1.msra.mxu0 0.0
  %1876 = vmatprep.subr.mxu0 0.0
  %1877 = vmatpush1.msra.mxu0 0.0
  %1878 = vmatprep.subr.mxu0 0.0
  %1879 = vmatpush1.msra.mxu0 0.0
  %1880 = vmatprep.subr.mxu0 0.0
  %1881 = vmatpush1.msra.mxu0 0.0
  %1882 = vmatprep.subr.mxu0 0.0
  %1883 = vmatpush1.msra.mxu0 0.0
  %1884 = vmatprep.subr.mxu0 0.0
  %1885 = vmatpush1.msra.mxu0 0.0
  %1886 = vmatprep.subr.mxu0 0.0
  %1887 = vmatpush1.msra.mxu0 0.0
  %1888 = vmatprep.subr.mxu0 0.0
  %1889 = vmatpush1.msra.mxu0 0.0
  %1890 = vmatprep.subr.mxu0 0.0
  %1891 = vmatpush1.msra.mxu0 0.0
  %1892 = vmatprep.subr.mxu0 0.0
  %1893 = vmatpush1.msra.mxu0 0.0
  %1894 = vmatprep.subr.mxu0 0.0
  %1895 = vmatpush1.msra.mxu0 0.0
  %1896 = vmatprep.mubr.f32.mxu0 0.0
  %1897 = vmatmul.mubr.f32.gmra.mrb[0].mxu0 %v175
  %v1898 = vpop.f32.mrb[0].mxu0
  %v1899 = vadd.f32 %v96, %v1898
  %v1900 = vpop.f32.mrb[0].mxu0
  %v1901 = vadd.f32 %v96, %v1900
  %1902 = vmatprep.mubr.f32.mxu0 0.0
  %1903 = vmatmul.mubr.f32.gmra.mrb[0].mxu0 %v178
  %v1904 = vpop.f32.mrb[0].mxu0
  %v1905 = vadd.f32 %v101, %v1904
  %v1906 = vpop.f32.mrb[0].mxu0
  %v1907 = vadd.f32 %v101, %v1906
  %1908 = vmatprep.mubr.f32.mxu0 0.0
  %1909 = vmatmul.mubr.f32.gmra.mrb[0].mxu0 %v181
  %v1910 = vpop.f32.mrb[0].mxu0
  %v1911 = vadd.f32 %v106, %v1910
  %v1912 = vpop.f32.mrb[0].mxu0
  %v1913 = vadd.f32 %v106, %v1912
  %1914 = vmatprep.mubr.f32.mxu0 0.0
  %1915 = vmatmul.mubr.f32.gmra.mrb[0].mxu0 %v184
  %v1916 = vpop.f32.mrb[0].mxu0
  %v1917 = vadd.f32 %v111, %v1916
  %v1918 = vpop.f32.mrb[0].mxu0
  %v1919 = vadd.f32 %v111, %v1918
  %1920 = vmatprep.mubr.f32.mxu0 0.0
  %1921 = vmatmul.mubr.f32.gmra.mrb[0].mxu0 %v187
  %v1922 = vpop.f32.mrb[0].mxu0
  %v1923 = vadd.f32 %v116, %v1922
  %v1924 = vpop.f32.mrb[0].mxu0
  %v1925 = vadd.f32 %v116, %v1924
  %1926 = vmatprep.mubr.f32.mxu0 0.0
  %1927 = vmatmul.mubr.f32.gmra.mrb[0].mxu0 %v190
  %v1928 = vpop.f32.mrb[0].mxu0
  %v1929 = vadd.f32 %v121, %v1928
  %v1930 = vpop.f32.mrb[0].mxu0
  %v1931 = vadd.f32 %v121, %v1930
  %1932 = vmatprep.mubr.f32.mxu0 0.0
  %1933 = vmatmul.mubr.f32.gmra.mrb[0].mxu0 %v193
  %v1934 = vpop.f32.mrb[0].mxu0
  %v1935 = vadd.f32 %v126, %v1934
  %v1936 = vpop.f32.mrb[0].mxu0
  %v1937 = vadd.f32 %v126, %v1936
  %1938 = vmatprep.mubr.f32.mxu0 0.0
  %1939 = vmatmul.mubr.f32.gmra.mrb[0].mxu0 %v196
  %v1940 = vpop.f32.mrb[0].mxu0
  %v1941 = vadd.f32 %v131, %v1940
  %v1942 = vpop.f32.mrb[0].mxu0
  %v1943 = vadd.f32 %v131, %v1942
  %1944 = vmatprep.mubr.f32.mxu0 0.0
  %1945 = vmatmul.mubr.f32.gmra.mrb[0].mxu0 %v199
  %v1946 = vpop.f32.mrb[0].mxu0
  %v1947 = vadd.f32 %v136, %v1946
  %v1948 = vpop.f32.mrb[0].mxu0
  %v1949 = vadd.f32 %v136, %v1948
  %1950 = vmatprep.mubr.f32.mxu0 0.0
  %1951 = vmatmul.mubr.f32.gmra.mrb[0].mxu0 %v202
  %v1952 = vpop.f32.mrb[0].mxu0
  %v1953 = vadd.f32 %v141, %v1952
  %v1954 = vpop.f32.mrb[0].mxu0
  %v1955 = vadd.f32 %v141, %v1954
  %1956 = vmatprep.mubr.f32.mxu0 0.0
  %1957 = vmatmul.mubr.f32.gmra.mrb[0].mxu0 %v205
  %v1958 = vpop.f32.mrb[0].mxu0
  %v1959 = vadd.f32 %v146, %v1958
  %v1960 = vpop.f32.mrb[0].mxu0
  %v1961 = vadd.f32 %v146, %v1960
  %1962 = vmatprep.mubr.f32.mxu0 0.0
  %1963 = vmatmul.mubr.f32.gmra.mrb[0].mxu0 %v208
  %v1964 = vpop.f32.mrb[0].mxu0
  %v1965 = vadd.f32 %v151, %v1964
  %v1966 = vpop.f32.mrb[0].mxu0
  %v1967 = vadd.f32 %v151, %v1966
  %1968 = vmatprep.mubr.f32.mxu0 0.0
  %1969 = vmatmul.mubr.f32.gmra.mrb[0].mxu0 %v211
  %v1970 = vpop.f32.mrb[0].mxu0
  %v1971 = vadd.f32 %v156, %v1970
  %v1972 = vpop.f32.mrb[0].mxu0
  %v1973 = vadd.f32 %v156, %v1972
  %1974 = vmatprep.mubr.f32.mxu0 0.0
  %1975 = vmatmul.mubr.f32.gmra.mrb[0].mxu0 %v214
  %v1976 = vpop.f32.mrb[0].mxu0
  %v1977 = vadd.f32 %v161, %v1976
  %v1978 = vpop.f32.mrb[0].mxu0
  %v1979 = vadd.f32 %v161, %v1978
  %1980 = vmatprep.mubr.f32.mxu0 0.0
  %1981 = vmatmul.mubr.f32.gmra.mrb[0].mxu0 %v217
  %v1982 = vpop.f32.mrb[0].mxu0
  %v1983 = vadd.f32 %v166, %v1982
  %v1984 = vpop.f32.mrb[0].mxu0
  %v1985 = vadd.f32 %v166, %v1984
  %1986 = vmatprep.mubr.f32.mxu0 0.0
  %1987 = vmatmul.mubr.f32.gmra.mrb[0].mxu0 %v220
  %v1988 = vpop.f32.mrb[0].mxu0
  %v1989 = vadd.f32 %v171, %v1988
  %v1990 = vpop.f32.mrb[0].mxu0
  %v1991 = vadd.f32 %v171, %v1990
  %1992 = vdwg.mxu0
  %1993 = vmatprep.subr.mxu0 %v68
  %1994 = vmatpush1.msra.mxu0 %v67
  %1995 = vmatprep.subr.mxu0 0.0
  %1996 = vmatpush1.msra.mxu0 0.0
  %1997 = vmatprep.subr.mxu0 0.0
  %1998 = vmatpush1.msra.mxu0 0.0
  %1999 = vmatprep.subr.mxu0 0.0
  %2000 = vmatpush1.msra.mxu0 0.0
  %2001 = vmatprep.subr.mxu0 0.0
  %2002 = vmatpush1.msra.mxu0 0.0
  %2003 = vmatprep.subr.mxu0 0.0
  %2004 = vmatpush1.msra.mxu0 0.0
  %2005 = vmatprep.subr.mxu0 0.0
  %2006 = vmatpush1.msra.mxu0 0.0
  %2007 = vmatprep.subr.mxu0 0.0
  %2008 = vmatpush1.msra.mxu0 0.0
  %2009 = vmatprep.subr.mxu0 0.0
  %2010 = vmatpush1.msra.mxu0 0.0
  %2011 = vmatprep.subr.mxu0 0.0
  %2012 = vmatpush1.msra.mxu0 0.0
  %2013 = vmatprep.subr.mxu0 0.0
  %2014 = vmatpush1.msra.mxu0 0.0
  %2015 = vmatprep.subr.mxu0 0.0
  %2016 = vmatpush1.msra.mxu0 0.0
  %2017 = vmatprep.subr.mxu0 0.0
  %2018 = vmatpush1.msra.mxu0 0.0
  %2019 = vmatprep.subr.mxu0 0.0
  %2020 = vmatpush1.msra.mxu0 0.0
  %2021 = vmatprep.subr.mxu0 0.0
  %2022 = vmatpush1.msra.mxu0 0.0
  %2023 = vmatprep.subr.mxu0 0.0
  %2024 = vmatpush1.msra.mxu0 0.0
  %2025 = vmatprep.subr.mxu0 0.0
  %2026 = vmatpush1.msra.mxu0 0.0
  %2027 = vmatprep.subr.mxu0 0.0
  %2028 = vmatpush1.msra.mxu0 0.0
  %2029 = vmatprep.subr.mxu0 0.0
  %2030 = vmatpush1.msra.mxu0 0.0
  %2031 = vmatprep.subr.mxu0 0.0
  %2032 = vmatpush1.msra.mxu0 0.0
  %2033 = vmatprep.subr.mxu0 0.0
  %2034 = vmatpush1.msra.mxu0 0.0
  %2035 = vmatprep.subr.mxu0 0.0
  %2036 = vmatpush1.msra.mxu0 0.0
  %2037 = vmatprep.subr.mxu0 0.0
  %2038 = vmatpush1.msra.mxu0 0.0
  %2039 = vmatprep.subr.mxu0 0.0
  %2040 = vmatpush1.msra.mxu0 0.0
  %2041 = vmatprep.subr.mxu0 0.0
  %2042 = vmatpush1.msra.mxu0 0.0
  %2043 = vmatprep.subr.mxu0 0.0
  %2044 = vmatpush1.msra.mxu0 0.0
  %2045 = vmatprep.subr.mxu0 0.0
  %2046 = vmatpush1.msra.mxu0 0.0
  %2047 = vmatprep.subr.mxu0 0.0
  %2048 = vmatpush1.msra.mxu0 0.0
  %2049 = vmatprep.subr.mxu0 0.0
  %2050 = vmatpush1.msra.mxu0 0.0
  %2051 = vmatprep.subr.mxu0 0.0
  %2052 = vmatpush1.msra.mxu0 0.0
  %2053 = vmatprep.subr.mxu0 0.0
  %2054 = vmatpush1.msra.mxu0 0.0
  %2055 = vmatprep.subr.mxu0 0.0
  %2056 = vmatpush1.msra.mxu0 0.0
  %2057 = vmatprep.mubr.f32.mxu0 0.0
  %2058 = vmatmul.mubr.f32.gmra.mrb[0].mxu0 %v175
  %v2059 = vpop.f32.mrb[0].mxu0
  %v2060 = vadd.f32 %v96, %v2059
  %v2061 = vpop.f32.mrb[0].mxu0
  %v2062 = vadd.f32 %v96, %v2061
  %2063 = vmatprep.mubr.f32.mxu0 0.0
  %2064 = vmatmul.mubr.f32.gmra.mrb[0].mxu0 %v178
  %v2065 = vpop.f32.mrb[0].mxu0
  %v2066 = vadd.f32 %v101, %v2065
  %v2067 = vpop.f32.mrb[0].mxu0
  %v2068 = vadd.f32 %v101, %v2067
  %2069 = vmatprep.mubr.f32.mxu0 0.0
  %2070 = vmatmul.mubr.f32.gmra.mrb[0].mxu0 %v181
  %v2071 = vpop.f32.mrb[0].mxu0
  %v2072 = vadd.f32 %v106, %v2071
  %v2073 = vpop.f32.mrb[0].mxu0
  %v2074 = vadd.f32 %v106, %v2073
  %2075 = vmatprep.mubr.f32.mxu0 0.0
  %2076 = vmatmul.mubr.f32.gmra.mrb[0].mxu0 %v184
  %v2077 = vpop.f32.mrb[0].mxu0
  %v2078 = vadd.f32 %v111, %v2077
  %v2079 = vpop.f32.mrb[0].mxu0
  %v2080 = vadd.f32 %v111, %v2079
  %2081 = vmatprep.mubr.f32.mxu0 0.0
  %2082 = vmatmul.mubr.f32.gmra.mrb[0].mxu0 %v187
  %v2083 = vpop.f32.mrb[0].mxu0
  %v2084 = vadd.f32 %v116, %v2083
  %v2085 = vpop.f32.mrb[0].mxu0
  %v2086 = vadd.f32 %v116, %v2085
  %2087 = vmatprep.mubr.f32.mxu0 0.0
  %2088 = vmatmul.mubr.f32.gmra.mrb[0].mxu0 %v190
  %v2089 = vpop.f32.mrb[0].mxu0
  %v2090 = vadd.f32 %v121, %v2089
  %v2091 = vpop.f32.mrb[0].mxu0
  %v2092 = vadd.f32 %v121, %v2091
  %2093 = vmatprep.mubr.f32.mxu0 0.0
  %2094 = vmatmul.mubr.f32.gmra.mrb[0].mxu0 %v193
  %v2095 = vpop.f32.mrb[0].mxu0
  %v2096 = vadd.f32 %v126, %v2095
  %v2097 = vpop.f32.mrb[0].mxu0
  %v2098 = vadd.f32 %v126, %v2097
  %2099 = vmatprep.mubr.f32.mxu0 0.0
  %2100 = vmatmul.mubr.f32.gmra.mrb[0].mxu0 %v196
  %v2101 = vpop.f32.mrb[0].mxu0
  %v2102 = vadd.f32 %v131, %v2101
  %v2103 = vpop.f32.mrb[0].mxu0
  %v2104 = vadd.f32 %v131, %v2103
  %2105 = vmatprep.mubr.f32.mxu0 0.0
  %2106 = vmatmul.mubr.f32.gmra.mrb[0].mxu0 %v199
  %v2107 = vpop.f32.mrb[0].mxu0
  %v2108 = vadd.f32 %v136, %v2107
  %v2109 = vpop.f32.mrb[0].mxu0
  %v2110 = vadd.f32 %v136, %v2109
  %2111 = vmatprep.mubr.f32.mxu0 0.0
  %2112 = vmatmul.mubr.f32.gmra.mrb[0].mxu0 %v202
  %v2113 = vpop.f32.mrb[0].mxu0
  %v2114 = vadd.f32 %v141, %v2113
  %v2115 = vpop.f32.mrb[0].mxu0
  %v2116 = vadd.f32 %v141, %v2115
  %2117 = vmatprep.mubr.f32.mxu0 0.0
  %2118 = vmatmul.mubr.f32.gmra.mrb[0].mxu0 %v205
  %v2119 = vpop.f32.mrb[0].mxu0
  %v2120 = vadd.f32 %v146, %v2119
  %v2121 = vpop.f32.mrb[0].mxu0
  %v2122 = vadd.f32 %v146, %v2121
  %2123 = vmatprep.mubr.f32.mxu0 0.0
  %2124 = vmatmul.mubr.f32.gmra.mrb[0].mxu0 %v208
  %v2125 = vpop.f32.mrb[0].mxu0
  %v2126 = vadd.f32 %v151, %v2125
  %v2127 = vpop.f32.mrb[0].mxu0
  %v2128 = vadd.f32 %v151, %v2127
  %2129 = vmatprep.mubr.f32.mxu0 0.0
  %2130 = vmatmul.mubr.f32.gmra.mrb[0].mxu0 %v211
  %v2131 = vpop.f32.mrb[0].mxu0
  %v2132 = vadd.f32 %v156, %v2131
  %v2133 = vpop.f32.mrb[0].mxu0
  %v2134 = vadd.f32 %v156, %v2133
  %2135 = vmatprep.mubr.f32.mxu0 0.0
  %2136 = vmatmul.mubr.f32.gmra.mrb[0].mxu0 %v214
  %v2137 = vpop.f32.mrb[0].mxu0
  %v2138 = vadd.f32 %v161, %v2137
  %v2139 = vpop.f32.mrb[0].mxu0
  %v2140 = vadd.f32 %v161, %v2139
  %2141 = vmatprep.mubr.f32.mxu0 0.0
  %2142 = vmatmul.mubr.f32.gmra.mrb[0].mxu0 %v217
  %v2143 = vpop.f32.mrb[0].mxu0
  %v2144 = vadd.f32 %v166, %v2143
  %v2145 = vpop.f32.mrb[0].mxu0
  %v2146 = vadd.f32 %v166, %v2145
  %2147 = vmatprep.mubr.f32.mxu0 0.0
  %2148 = vmatmul.mubr.f32.gmra.mrb[0].mxu0 %v220
  %v2149 = vpop.f32.mrb[0].mxu0
  %v2150 = vadd.f32 %v171, %v2149
  %v2151 = vpop.f32.mrb[0].mxu0
  %v2152 = vadd.f32 %v171, %v2151
  %2153 = vdwg.mxu0
  %2154 = vmatprep.subr.mxu0 %v70
  %2155 = vmatpush1.msra.mxu0 %v69
  %2156 = vmatprep.subr.mxu0 0.0
  %2157 = vmatpush1.msra.mxu0 0.0
  %2158 = vmatprep.subr.mxu0 0.0
  %2159 = vmatpush1.msra.mxu0 0.0
  %2160 = vmatprep.subr.mxu0 0.0
  %2161 = vmatpush1.msra.mxu0 0.0
  %2162 = vmatprep.subr.mxu0 0.0
  %2163 = vmatpush1.msra.mxu0 0.0
  %2164 = vmatprep.subr.mxu0 0.0
  %2165 = vmatpush1.msra.mxu0 0.0
  %2166 = vmatprep.subr.mxu0 0.0
  %2167 = vmatpush1.msra.mxu0 0.0
  %2168 = vmatprep.subr.mxu0 0.0
  %2169 = vmatpush1.msra.mxu0 0.0
  %2170 = vmatprep.subr.mxu0 0.0
  %2171 = vmatpush1.msra.mxu0 0.0
  %2172 = vmatprep.subr.mxu0 0.0
  %2173 = vmatpush1.msra.mxu0 0.0
  %2174 = vmatprep.subr.mxu0 0.0
  %2175 = vmatpush1.msra.mxu0 0.0
  %2176 = vmatprep.subr.mxu0 0.0
  %2177 = vmatpush1.msra.mxu0 0.0
  %2178 = vmatprep.subr.mxu0 0.0
  %2179 = vmatpush1.msra.mxu0 0.0
  %2180 = vmatprep.subr.mxu0 0.0
  %2181 = vmatpush1.msra.mxu0 0.0
  %2182 = vmatprep.subr.mxu0 0.0
  %2183 = vmatpush1.msra.mxu0 0.0
  %2184 = vmatprep.subr.mxu0 0.0
  %2185 = vmatpush1.msra.mxu0 0.0
  %2186 = vmatprep.subr.mxu0 0.0
  %2187 = vmatpush1.msra.mxu0 0.0
  %2188 = vmatprep.subr.mxu0 0.0
  %2189 = vmatpush1.msra.mxu0 0.0
  %2190 = vmatprep.subr.mxu0 0.0
  %2191 = vmatpush1.msra.mxu0 0.0
  %2192 = vmatprep.subr.mxu0 0.0
  %2193 = vmatpush1.msra.mxu0 0.0
  %2194 = vmatprep.subr.mxu0 0.0
  %2195 = vmatpush1.msra.mxu0 0.0
  %2196 = vmatprep.subr.mxu0 0.0
  %2197 = vmatpush1.msra.mxu0 0.0
  %2198 = vmatprep.subr.mxu0 0.0
  %2199 = vmatpush1.msra.mxu0 0.0
  %2200 = vmatprep.subr.mxu0 0.0
  %2201 = vmatpush1.msra.mxu0 0.0
  %2202 = vmatprep.subr.mxu0 0.0
  %2203 = vmatpush1.msra.mxu0 0.0
  %2204 = vmatprep.subr.mxu0 0.0
  %2205 = vmatpush1.msra.mxu0 0.0
  %2206 = vmatprep.subr.mxu0 0.0
  %2207 = vmatpush1.msra.mxu0 0.0
  %2208 = vmatprep.subr.mxu0 0.0
  %2209 = vmatpush1.msra.mxu0 0.0
  %2210 = vmatprep.subr.mxu0 0.0
  %2211 = vmatpush1.msra.mxu0 0.0
  %2212 = vmatprep.subr.mxu0 0.0
  %2213 = vmatpush1.msra.mxu0 0.0
  %2214 = vmatprep.subr.mxu0 0.0
  %2215 = vmatpush1.msra.mxu0 0.0
  %2216 = vmatprep.subr.mxu0 0.0
  %2217 = vmatpush1.msra.mxu0 0.0
  %2218 = vmatprep.mubr.f32.mxu0 0.0
  %2219 = vmatmul.mubr.f32.gmra.mrb[0].mxu0 %v175
  %v2220 = vpop.f32.mrb[0].mxu0
  %v2221 = vadd.f32 %v96, %v2220
  %v2222 = vpop.f32.mrb[0].mxu0
  %v2223 = vadd.f32 %v96, %v2222
  %2224 = vmatprep.mubr.f32.mxu0 0.0
  %2225 = vmatmul.mubr.f32.gmra.mrb[0].mxu0 %v178
  %v2226 = vpop.f32.mrb[0].mxu0
  %v2227 = vadd.f32 %v101, %v2226
  %v2228 = vpop.f32.mrb[0].mxu0
  %v2229 = vadd.f32 %v101, %v2228
  %2230 = vmatprep.mubr.f32.mxu0 0.0
  %2231 = vmatmul.mubr.f32.gmra.mrb[0].mxu0 %v181
  %v2232 = vpop.f32.mrb[0].mxu0
  %v2233 = vadd.f32 %v106, %v2232
  %v2234 = vpop.f32.mrb[0].mxu0
  %v2235 = vadd.f32 %v106, %v2234
  %2236 = vmatprep.mubr.f32.mxu0 0.0
  %2237 = vmatmul.mubr.f32.gmra.mrb[0].mxu0 %v184
  %v2238 = vpop.f32.mrb[0].mxu0
  %v2239 = vadd.f32 %v111, %v2238
  %v2240 = vpop.f32.mrb[0].mxu0
  %v2241 = vadd.f32 %v111, %v2240
  %2242 = vmatprep.mubr.f32.mxu0 0.0
  %2243 = vmatmul.mubr.f32.gmra.mrb[0].mxu0 %v187
  %v2244 = vpop.f32.mrb[0].mxu0
  %v2245 = vadd.f32 %v116, %v2244
  %v2246 = vpop.f32.mrb[0].mxu0
  %v2247 = vadd.f32 %v116, %v2246
  %2248 = vmatprep.mubr.f32.mxu0 0.0
  %2249 = vmatmul.mubr.f32.gmra.mrb[0].mxu0 %v190
  %v2250 = vpop.f32.mrb[0].mxu0
  %v2251 = vadd.f32 %v121, %v2250
  %v2252 = vpop.f32.mrb[0].mxu0
  %v2253 = vadd.f32 %v121, %v2252
  %2254 = vmatprep.mubr.f32.mxu0 0.0
  %2255 = vmatmul.mubr.f32.gmra.mrb[0].mxu0 %v193
  %v2256 = vpop.f32.mrb[0].mxu0
  %v2257 = vadd.f32 %v126, %v2256
  %v2258 = vpop.f32.mrb[0].mxu0
  %v2259 = vadd.f32 %v126, %v2258
  %2260 = vmatprep.mubr.f32.mxu0 0.0
  %2261 = vmatmul.mubr.f32.gmra.mrb[0].mxu0 %v196
  %v2262 = vpop.f32.mrb[0].mxu0
  %v2263 = vadd.f32 %v131, %v2262
  %v2264 = vpop.f32.mrb[0].mxu0
  %v2265 = vadd.f32 %v131, %v2264
  %2266 = vmatprep.mubr.f32.mxu0 0.0
  %2267 = vmatmul.mubr.f32.gmra.mrb[0].mxu0 %v199
  %v2268 = vpop.f32.mrb[0].mxu0
  %v2269 = vadd.f32 %v136, %v2268
  %v2270 = vpop.f32.mrb[0].mxu0
  %v2271 = vadd.f32 %v136, %v2270
  %2272 = vmatprep.mubr.f32.mxu0 0.0
  %2273 = vmatmul.mubr.f32.gmra.mrb[0].mxu0 %v202
  %v2274 = vpop.f32.mrb[0].mxu0
  %v2275 = vadd.f32 %v141, %v2274
  %v2276 = vpop.f32.mrb[0].mxu0
  %v2277 = vadd.f32 %v141, %v2276
  %2278 = vmatprep.mubr.f32.mxu0 0.0
  %2279 = vmatmul.mubr.f32.gmra.mrb[0].mxu0 %v205
  %v2280 = vpop.f32.mrb[0].mxu0
  %v2281 = vadd.f32 %v146, %v2280
  %v2282 = vpop.f32.mrb[0].mxu0
  %v2283 = vadd.f32 %v146, %v2282
  %2284 = vmatprep.mubr.f32.mxu0 0.0
  %2285 = vmatmul.mubr.f32.gmra.mrb[0].mxu0 %v208
  %v2286 = vpop.f32.mrb[0].mxu0
  %v2287 = vadd.f32 %v151, %v2286
  %v2288 = vpop.f32.mrb[0].mxu0
  %v2289 = vadd.f32 %v151, %v2288
  %2290 = vmatprep.mubr.f32.mxu0 0.0
  %2291 = vmatmul.mubr.f32.gmra.mrb[0].mxu0 %v211
  %v2292 = vpop.f32.mrb[0].mxu0
  %v2293 = vadd.f32 %v156, %v2292
  %v2294 = vpop.f32.mrb[0].mxu0
  %v2295 = vadd.f32 %v156, %v2294
  %2296 = vmatprep.mubr.f32.mxu0 0.0
  %2297 = vmatmul.mubr.f32.gmra.mrb[0].mxu0 %v214
  %v2298 = vpop.f32.mrb[0].mxu0
  %v2299 = vadd.f32 %v161, %v2298
  %v2300 = vpop.f32.mrb[0].mxu0
  %v2301 = vadd.f32 %v161, %v2300
  %2302 = vmatprep.mubr.f32.mxu0 0.0
  %2303 = vmatmul.mubr.f32.gmra.mrb[0].mxu0 %v217
  %v2304 = vpop.f32.mrb[0].mxu0
  %v2305 = vadd.f32 %v166, %v2304
  %v2306 = vpop.f32.mrb[0].mxu0
  %v2307 = vadd.f32 %v166, %v2306
  %2308 = vmatprep.mubr.f32.mxu0 0.0
  %2309 = vmatmul.mubr.f32.gmra.mrb[0].mxu0 %v220
  %v2310 = vpop.f32.mrb[0].mxu0
  %v2311 = vadd.f32 %v171, %v2310
  %v2312 = vpop.f32.mrb[0].mxu0
  %v2313 = vadd.f32 %v171, %v2312
  %2314 = vdwg.mxu0
  %2315 = vmatprep.subr.mxu0 %v72
  %2316 = vmatpush1.msra.mxu0 %v71
  %2317 = vmatprep.subr.mxu0 0.0
  %2318 = vmatpush1.msra.mxu0 0.0
  %2319 = vmatprep.subr.mxu0 0.0
  %2320 = vmatpush1.msra.mxu0 0.0
  %2321 = vmatprep.subr.mxu0 0.0
  %2322 = vmatpush1.msra.mxu0 0.0
  %2323 = vmatprep.subr.mxu0 0.0
  %2324 = vmatpush1.msra.mxu0 0.0
  %2325 = vmatprep.subr.mxu0 0.0
  %2326 = vmatpush1.msra.mxu0 0.0
  %2327 = vmatprep.subr.mxu0 0.0
  %2328 = vmatpush1.msra.mxu0 0.0
  %2329 = vmatprep.subr.mxu0 0.0
  %2330 = vmatpush1.msra.mxu0 0.0
  %2331 = vmatprep.subr.mxu0 0.0
  %2332 = vmatpush1.msra.mxu0 0.0
  %2333 = vmatprep.subr.mxu0 0.0
  %2334 = vmatpush1.msra.mxu0 0.0
  %2335 = vmatprep.subr.mxu0 0.0
  %2336 = vmatpush1.msra.mxu0 0.0
  %2337 = vmatprep.subr.mxu0 0.0
  %2338 = vmatpush1.msra.mxu0 0.0
  %2339 = vmatprep.subr.mxu0 0.0
  %2340 = vmatpush1.msra.mxu0 0.0
  %2341 = vmatprep.subr.mxu0 0.0
  %2342 = vmatpush1.msra.mxu0 0.0
  %2343 = vmatprep.subr.mxu0 0.0
  %2344 = vmatpush1.msra.mxu0 0.0
  %2345 = vmatprep.subr.mxu0 0.0
  %2346 = vmatpush1.msra.mxu0 0.0
  %2347 = vmatprep.subr.mxu0 0.0
  %2348 = vmatpush1.msra.mxu0 0.0
  %2349 = vmatprep.subr.mxu0 0.0
  %2350 = vmatpush1.msra.mxu0 0.0
  %2351 = vmatprep.subr.mxu0 0.0
  %2352 = vmatpush1.msra.mxu0 0.0
  %2353 = vmatprep.subr.mxu0 0.0
  %2354 = vmatpush1.msra.mxu0 0.0
  %2355 = vmatprep.subr.mxu0 0.0
  %2356 = vmatpush1.msra.mxu0 0.0
  %2357 = vmatprep.subr.mxu0 0.0
  %2358 = vmatpush1.msra.mxu0 0.0
  %2359 = vmatprep.subr.mxu0 0.0
  %2360 = vmatpush1.msra.mxu0 0.0
  %2361 = vmatprep.subr.mxu0 0.0
  %2362 = vmatpush1.msra.mxu0 0.0
  %2363 = vmatprep.subr.mxu0 0.0
  %2364 = vmatpush1.msra.mxu0 0.0
  %2365 = vmatprep.subr.mxu0 0.0
  %2366 = vmatpush1.msra.mxu0 0.0
  %2367 = vmatprep.subr.mxu0 0.0
  %2368 = vmatpush1.msra.mxu0 0.0
  %2369 = vmatprep.subr.mxu0 0.0
  %2370 = vmatpush1.msra.mxu0 0.0
  %2371 = vmatprep.subr.mxu0 0.0
  %2372 = vmatpush1.msra.mxu0 0.0
  %2373 = vmatprep.subr.mxu0 0.0
  %2374 = vmatpush1.msra.mxu0 0.0
  %2375 = vmatprep.subr.mxu0 0.0
  %2376 = vmatpush1.msra.mxu0 0.0
  %2377 = vmatprep.subr.mxu0 0.0
  %2378 = vmatpush1.msra.mxu0 0.0
  %2379 = vmatprep.mubr.f32.mxu0 0.0
  %2380 = vmatmul.mubr.f32.gmra.mrb[0].mxu0 %v175
  %v2381 = vpop.f32.mrb[0].mxu0
  %v2382 = vadd.f32 %v96, %v2381
  %v2383 = vpop.f32.mrb[0].mxu0
  %v2384 = vadd.f32 %v96, %v2383
  %2385 = vmatprep.mubr.f32.mxu0 0.0
  %2386 = vmatmul.mubr.f32.gmra.mrb[0].mxu0 %v178
  %v2387 = vpop.f32.mrb[0].mxu0
  %v2388 = vadd.f32 %v101, %v2387
  %v2389 = vpop.f32.mrb[0].mxu0
  %v2390 = vadd.f32 %v101, %v2389
  %2391 = vmatprep.mubr.f32.mxu0 0.0
  %2392 = vmatmul.mubr.f32.gmra.mrb[0].mxu0 %v181
  %v2393 = vpop.f32.mrb[0].mxu0
  %v2394 = vadd.f32 %v106, %v2393
  %v2395 = vpop.f32.mrb[0].mxu0
  %v2396 = vadd.f32 %v106, %v2395
  %2397 = vmatprep.mubr.f32.mxu0 0.0
  %2398 = vmatmul.mubr.f32.gmra.mrb[0].mxu0 %v184
  %v2399 = vpop.f32.mrb[0].mxu0
  %v2400 = vadd.f32 %v111, %v2399
  %v2401 = vpop.f32.mrb[0].mxu0
  %v2402 = vadd.f32 %v111, %v2401
  %2403 = vmatprep.mubr.f32.mxu0 0.0
  %2404 = vmatmul.mubr.f32.gmra.mrb[0].mxu0 %v187
  %v2405 = vpop.f32.mrb[0].mxu0
  %v2406 = vadd.f32 %v116, %v2405
  %v2407 = vpop.f32.mrb[0].mxu0
  %v2408 = vadd.f32 %v116, %v2407
  %2409 = vmatprep.mubr.f32.mxu0 0.0
  %2410 = vmatmul.mubr.f32.gmra.mrb[0].mxu0 %v190
  %v2411 = vpop.f32.mrb[0].mxu0
  %v2412 = vadd.f32 %v121, %v2411
  %v2413 = vpop.f32.mrb[0].mxu0
  %v2414 = vadd.f32 %v121, %v2413
  %2415 = vmatprep.mubr.f32.mxu0 0.0
  %2416 = vmatmul.mubr.f32.gmra.mrb[0].mxu0 %v193
  %v2417 = vpop.f32.mrb[0].mxu0
  %v2418 = vadd.f32 %v126, %v2417
  %v2419 = vpop.f32.mrb[0].mxu0
  %v2420 = vadd.f32 %v126, %v2419
  %2421 = vmatprep.mubr.f32.mxu0 0.0
  %2422 = vmatmul.mubr.f32.gmra.mrb[0].mxu0 %v196
  %v2423 = vpop.f32.mrb[0].mxu0
  %v2424 = vadd.f32 %v131, %v2423
  %v2425 = vpop.f32.mrb[0].mxu0
  %v2426 = vadd.f32 %v131, %v2425
  %2427 = vmatprep.mubr.f32.mxu0 0.0
  %2428 = vmatmul.mubr.f32.gmra.mrb[0].mxu0 %v199
  %v2429 = vpop.f32.mrb[0].mxu0
  %v2430 = vadd.f32 %v136, %v2429
  %v2431 = vpop.f32.mrb[0].mxu0
  %v2432 = vadd.f32 %v136, %v2431
  %2433 = vmatprep.mubr.f32.mxu0 0.0
  %2434 = vmatmul.mubr.f32.gmra.mrb[0].mxu0 %v202
  %v2435 = vpop.f32.mrb[0].mxu0
  %v2436 = vadd.f32 %v141, %v2435
  %v2437 = vpop.f32.mrb[0].mxu0
  %v2438 = vadd.f32 %v141, %v2437
  %2439 = vmatprep.mubr.f32.mxu0 0.0
  %2440 = vmatmul.mubr.f32.gmra.mrb[0].mxu0 %v205
  %v2441 = vpop.f32.mrb[0].mxu0
  %v2442 = vadd.f32 %v146, %v2441
  %v2443 = vpop.f32.mrb[0].mxu0
  %v2444 = vadd.f32 %v146, %v2443
  %2445 = vmatprep.mubr.f32.mxu0 0.0
  %2446 = vmatmul.mubr.f32.gmra.mrb[0].mxu0 %v208
  %v2447 = vpop.f32.mrb[0].mxu0
  %v2448 = vadd.f32 %v151, %v2447
  %v2449 = vpop.f32.mrb[0].mxu0
  %v2450 = vadd.f32 %v151, %v2449
  %2451 = vmatprep.mubr.f32.mxu0 0.0
  %2452 = vmatmul.mubr.f32.gmra.mrb[0].mxu0 %v211
  %v2453 = vpop.f32.mrb[0].mxu0
  %v2454 = vadd.f32 %v156, %v2453
  %v2455 = vpop.f32.mrb[0].mxu0
  %v2456 = vadd.f32 %v156, %v2455
  %2457 = vmatprep.mubr.f32.mxu0 0.0
  %2458 = vmatmul.mubr.f32.gmra.mrb[0].mxu0 %v214
  %v2459 = vpop.f32.mrb[0].mxu0
  %v2460 = vadd.f32 %v161, %v2459
  %v2461 = vpop.f32.mrb[0].mxu0
  %v2462 = vadd.f32 %v161, %v2461
  %2463 = vmatprep.mubr.f32.mxu0 0.0
  %2464 = vmatmul.mubr.f32.gmra.mrb[0].mxu0 %v217
  %v2465 = vpop.f32.mrb[0].mxu0
  %v2466 = vadd.f32 %v166, %v2465
  %v2467 = vpop.f32.mrb[0].mxu0
  %v2468 = vadd.f32 %v166, %v2467
  %2469 = vmatprep.mubr.f32.mxu0 0.0
  %2470 = vmatmul.mubr.f32.gmra.mrb[0].mxu0 %v220
  %v2471 = vpop.f32.mrb[0].mxu0
  %v2472 = vadd.f32 %v171, %v2471
  %v2473 = vpop.f32.mrb[0].mxu0
  %v2474 = vadd.f32 %v171, %v2473
  %2475 = vdwg.mxu0
  %2476 = vmatprep.subr.mxu0 %v74
  %2477 = vmatpush1.msra.mxu0 %v73
  %2478 = vmatprep.subr.mxu0 0.0
  %2479 = vmatpush1.msra.mxu0 0.0
  %2480 = vmatprep.subr.mxu0 0.0
  %2481 = vmatpush1.msra.mxu0 0.0
  %2482 = vmatprep.subr.mxu0 0.0
  %2483 = vmatpush1.msra.mxu0 0.0
  %2484 = vmatprep.subr.mxu0 0.0
  %2485 = vmatpush1.msra.mxu0 0.0
  %2486 = vmatprep.subr.mxu0 0.0
  %2487 = vmatpush1.msra.mxu0 0.0
  %2488 = vmatprep.subr.mxu0 0.0
  %2489 = vmatpush1.msra.mxu0 0.0
  %2490 = vmatprep.subr.mxu0 0.0
  %2491 = vmatpush1.msra.mxu0 0.0
  %2492 = vmatprep.subr.mxu0 0.0
  %2493 = vmatpush1.msra.mxu0 0.0
  %2494 = vmatprep.subr.mxu0 0.0
  %2495 = vmatpush1.msra.mxu0 0.0
  %2496 = vmatprep.subr.mxu0 0.0
  %2497 = vmatpush1.msra.mxu0 0.0
  %2498 = vmatprep.subr.mxu0 0.0
  %2499 = vmatpush1.msra.mxu0 0.0
  %2500 = vmatprep.subr.mxu0 0.0
  %2501 = vmatpush1.msra.mxu0 0.0
  %2502 = vmatprep.subr.mxu0 0.0
  %2503 = vmatpush1.msra.mxu0 0.0
  %2504 = vmatprep.subr.mxu0 0.0
  %2505 = vmatpush1.msra.mxu0 0.0
  %2506 = vmatprep.subr.mxu0 0.0
  %2507 = vmatpush1.msra.mxu0 0.0
  %2508 = vmatprep.subr.mxu0 0.0
  %2509 = vmatpush1.msra.mxu0 0.0
  %2510 = vmatprep.subr.mxu0 0.0
  %2511 = vmatpush1.msra.mxu0 0.0
  %2512 = vmatprep.subr.mxu0 0.0
  %2513 = vmatpush1.msra.mxu0 0.0
  %2514 = vmatprep.subr.mxu0 0.0
  %2515 = vmatpush1.msra.mxu0 0.0
  %2516 = vmatprep.subr.mxu0 0.0
  %2517 = vmatpush1.msra.mxu0 0.0
  %2518 = vmatprep.subr.mxu0 0.0
  %2519 = vmatpush1.msra.mxu0 0.0
  %2520 = vmatprep.subr.mxu0 0.0
  %2521 = vmatpush1.msra.mxu0 0.0
  %2522 = vmatprep.subr.mxu0 0.0
  %2523 = vmatpush1.msra.mxu0 0.0
  %2524 = vmatprep.subr.mxu0 0.0
  %2525 = vmatpush1.msra.mxu0 0.0
  %2526 = vmatprep.subr.mxu0 0.0
  %2527 = vmatpush1.msra.mxu0 0.0
  %2528 = vmatprep.subr.mxu0 0.0
  %2529 = vmatpush1.msra.mxu0 0.0
  %2530 = vmatprep.subr.mxu0 0.0
  %2531 = vmatpush1.msra.mxu0 0.0
  %2532 = vmatprep.subr.mxu0 0.0
  %2533 = vmatpush1.msra.mxu0 0.0
  %2534 = vmatprep.subr.mxu0 0.0
  %2535 = vmatpush1.msra.mxu0 0.0
  %2536 = vmatprep.subr.mxu0 0.0
  %2537 = vmatpush1.msra.mxu0 0.0
  %2538 = vmatprep.subr.mxu0 0.0
  %2539 = vmatpush1.msra.mxu0 0.0
  %2540 = vmatprep.mubr.f32.mxu0 0.0
  %2541 = vmatmul.mubr.f32.gmra.mrb[0].mxu0 %v175
  %v2542 = vpop.f32.mrb[0].mxu0
  %v2543 = vadd.f32 %v96, %v2542
  %v2544 = vpop.f32.mrb[0].mxu0
  %v2545 = vadd.f32 %v96, %v2544
  %2546 = vmatprep.mubr.f32.mxu0 0.0
  %2547 = vmatmul.mubr.f32.gmra.mrb[0].mxu0 %v178
  %v2548 = vpop.f32.mrb[0].mxu0
  %v2549 = vadd.f32 %v101, %v2548
  %v2550 = vpop.f32.mrb[0].mxu0
  %v2551 = vadd.f32 %v101, %v2550
  %2552 = vmatprep.mubr.f32.mxu0 0.0
  %2553 = vmatmul.mubr.f32.gmra.mrb[0].mxu0 %v181
  %v2554 = vpop.f32.mrb[0].mxu0
  %v2555 = vadd.f32 %v106, %v2554
  %v2556 = vpop.f32.mrb[0].mxu0
  %v2557 = vadd.f32 %v106, %v2556
  %2558 = vmatprep.mubr.f32.mxu0 0.0
  %2559 = vmatmul.mubr.f32.gmra.mrb[0].mxu0 %v184
  %v2560 = vpop.f32.mrb[0].mxu0
  %v2561 = vadd.f32 %v111, %v2560
  %v2562 = vpop.f32.mrb[0].mxu0
  %v2563 = vadd.f32 %v111, %v2562
  %2564 = vmatprep.mubr.f32.mxu0 0.0
  %2565 = vmatmul.mubr.f32.gmra.mrb[0].mxu0 %v187
  %v2566 = vpop.f32.mrb[0].mxu0
  %v2567 = vadd.f32 %v116, %v2566
  %v2568 = vpop.f32.mrb[0].mxu0
  %v2569 = vadd.f32 %v116, %v2568
  %2570 = vmatprep.mubr.f32.mxu0 0.0
  %2571 = vmatmul.mubr.f32.gmra.mrb[0].mxu0 %v190
  %v2572 = vpop.f32.mrb[0].mxu0
  %v2573 = vadd.f32 %v121, %v2572
  %v2574 = vpop.f32.mrb[0].mxu0
  %v2575 = vadd.f32 %v121, %v2574
  %2576 = vmatprep.mubr.f32.mxu0 0.0
  %2577 = vmatmul.mubr.f32.gmra.mrb[0].mxu0 %v193
  %v2578 = vpop.f32.mrb[0].mxu0
  %v2579 = vadd.f32 %v126, %v2578
  %v2580 = vpop.f32.mrb[0].mxu0
  %v2581 = vadd.f32 %v126, %v2580
  %2582 = vmatprep.mubr.f32.mxu0 0.0
  %2583 = vmatmul.mubr.f32.gmra.mrb[0].mxu0 %v196
  %v2584 = vpop.f32.mrb[0].mxu0
  %v2585 = vadd.f32 %v131, %v2584
  %v2586 = vpop.f32.mrb[0].mxu0
  %v2587 = vadd.f32 %v131, %v2586
  %2588 = vmatprep.mubr.f32.mxu0 0.0
  %2589 = vmatmul.mubr.f32.gmra.mrb[0].mxu0 %v199
  %v2590 = vpop.f32.mrb[0].mxu0
  %v2591 = vadd.f32 %v136, %v2590
  %v2592 = vpop.f32.mrb[0].mxu0
  %v2593 = vadd.f32 %v136, %v2592
  %2594 = vmatprep.mubr.f32.mxu0 0.0
  %2595 = vmatmul.mubr.f32.gmra.mrb[0].mxu0 %v202
  %v2596 = vpop.f32.mrb[0].mxu0
  %v2597 = vadd.f32 %v141, %v2596
  %v2598 = vpop.f32.mrb[0].mxu0
  %v2599 = vadd.f32 %v141, %v2598
  %2600 = vmatprep.mubr.f32.mxu0 0.0
  %2601 = vmatmul.mubr.f32.gmra.mrb[0].mxu0 %v205
  %v2602 = vpop.f32.mrb[0].mxu0
  %v2603 = vadd.f32 %v146, %v2602
  %v2604 = vpop.f32.mrb[0].mxu0
  %v2605 = vadd.f32 %v146, %v2604
  %2606 = vmatprep.mubr.f32.mxu0 0.0
  %2607 = vmatmul.mubr.f32.gmra.mrb[0].mxu0 %v208
  %v2608 = vpop.f32.mrb[0].mxu0
  %v2609 = vadd.f32 %v151, %v2608
  %v2610 = vpop.f32.mrb[0].mxu0
  %v2611 = vadd.f32 %v151, %v2610
  %2612 = vmatprep.mubr.f32.mxu0 0.0
  %2613 = vmatmul.mubr.f32.gmra.mrb[0].mxu0 %v211
  %v2614 = vpop.f32.mrb[0].mxu0
  %v2615 = vadd.f32 %v156, %v2614
  %v2616 = vpop.f32.mrb[0].mxu0
  %v2617 = vadd.f32 %v156, %v2616
  %2618 = vmatprep.mubr.f32.mxu0 0.0
  %2619 = vmatmul.mubr.f32.gmra.mrb[0].mxu0 %v214
  %v2620 = vpop.f32.mrb[0].mxu0
  %v2621 = vadd.f32 %v161, %v2620
  %v2622 = vpop.f32.mrb[0].mxu0
  %v2623 = vadd.f32 %v161, %v2622
  %2624 = vmatprep.mubr.f32.mxu0 0.0
  %2625 = vmatmul.mubr.f32.gmra.mrb[0].mxu0 %v217
  %v2626 = vpop.f32.mrb[0].mxu0
  %v2627 = vadd.f32 %v166, %v2626
  %v2628 = vpop.f32.mrb[0].mxu0
  %v2629 = vadd.f32 %v166, %v2628
  %2630 = vmatprep.mubr.f32.mxu0 0.0
  %2631 = vmatmul.mubr.f32.gmra.mrb[0].mxu0 %v220
  %v2632 = vpop.f32.mrb[0].mxu0
  %v2633 = vadd.f32 %v171, %v2632
  %v2634 = vpop.f32.mrb[0].mxu0
  %v2635 = vadd.f32 %v171, %v2634
  %2636 = vdwg.mxu0
  %2637 = vmatprep.subr.mxu0 %v76
  %2638 = vmatpush1.msra.mxu0 %v75
  %2639 = vmatprep.subr.mxu0 0.0
  %2640 = vmatpush1.msra.mxu0 0.0
  %2641 = vmatprep.subr.mxu0 0.0
  %2642 = vmatpush1.msra.mxu0 0.0
  %2643 = vmatprep.subr.mxu0 0.0
  %2644 = vmatpush1.msra.mxu0 0.0
  %2645 = vmatprep.subr.mxu0 0.0
  %2646 = vmatpush1.msra.mxu0 0.0
  %2647 = vmatprep.subr.mxu0 0.0
  %2648 = vmatpush1.msra.mxu0 0.0
  %2649 = vmatprep.subr.mxu0 0.0
  %2650 = vmatpush1.msra.mxu0 0.0
  %2651 = vmatprep.subr.mxu0 0.0
  %2652 = vmatpush1.msra.mxu0 0.0
  %2653 = vmatprep.subr.mxu0 0.0
  %2654 = vmatpush1.msra.mxu0 0.0
  %2655 = vmatprep.subr.mxu0 0.0
  %2656 = vmatpush1.msra.mxu0 0.0
  %2657 = vmatprep.subr.mxu0 0.0
  %2658 = vmatpush1.msra.mxu0 0.0
  %2659 = vmatprep.subr.mxu0 0.0
  %2660 = vmatpush1.msra.mxu0 0.0
  %2661 = vmatprep.subr.mxu0 0.0
  %2662 = vmatpush1.msra.mxu0 0.0
  %2663 = vmatprep.subr.mxu0 0.0
  %2664 = vmatpush1.msra.mxu0 0.0
  %2665 = vmatprep.subr.mxu0 0.0
  %2666 = vmatpush1.msra.mxu0 0.0
  %2667 = vmatprep.subr.mxu0 0.0
  %2668 = vmatpush1.msra.mxu0 0.0
  %2669 = vmatprep.subr.mxu0 0.0
  %2670 = vmatpush1.msra.mxu0 0.0
  %2671 = vmatprep.subr.mxu0 0.0
  %2672 = vmatpush1.msra.mxu0 0.0
  %2673 = vmatprep.subr.mxu0 0.0
  %2674 = vmatpush1.msra.mxu0 0.0
  %2675 = vmatprep.subr.mxu0 0.0
  %2676 = vmatpush1.msra.mxu0 0.0
  %2677 = vmatprep.subr.mxu0 0.0
  %2678 = vmatpush1.msra.mxu0 0.0
  %2679 = vmatprep.subr.mxu0 0.0
  %2680 = vmatpush1.msra.mxu0 0.0
  %2681 = vmatprep.subr.mxu0 0.0
  %2682 = vmatpush1.msra.mxu0 0.0
  %2683 = vmatprep.subr.mxu0 0.0
  %2684 = vmatpush1.msra.mxu0 0.0
  %2685 = vmatprep.subr.mxu0 0.0
  %2686 = vmatpush1.msra.mxu0 0.0
  %2687 = vmatprep.subr.mxu0 0.0
  %2688 = vmatpush1.msra.mxu0 0.0
  %2689 = vmatprep.subr.mxu0 0.0
  %2690 = vmatpush1.msra.mxu0 0.0
  %2691 = vmatprep.subr.mxu0 0.0
  %2692 = vmatpush1.msra.mxu0 0.0
  %2693 = vmatprep.subr.mxu0 0.0
  %2694 = vmatpush1.msra.mxu0 0.0
  %2695 = vmatprep.subr.mxu0 0.0
  %2696 = vmatpush1.msra.mxu0 0.0
  %2697 = vmatprep.subr.mxu0 0.0
  %2698 = vmatpush1.msra.mxu0 0.0
  %2699 = vmatprep.subr.mxu0 0.0
  %2700 = vmatpush1.msra.mxu0 0.0
  %2701 = vmatprep.mubr.f32.mxu0 0.0
  %2702 = vmatmul.mubr.f32.gmra.mrb[0].mxu0 %v175
  %v2703 = vpop.f32.mrb[0].mxu0
  %v2704 = vadd.f32 %v96, %v2703
  %v2705 = vpop.f32.mrb[0].mxu0
  %v2706 = vadd.f32 %v96, %v2705
  %2707 = vmatprep.mubr.f32.mxu0 0.0
  %2708 = vmatmul.mubr.f32.gmra.mrb[0].mxu0 %v178
  %v2709 = vpop.f32.mrb[0].mxu0
  %v2710 = vadd.f32 %v101, %v2709
  %v2711 = vpop.f32.mrb[0].mxu0
  %v2712 = vadd.f32 %v101, %v2711
  %2713 = vmatprep.mubr.f32.mxu0 0.0
  %2714 = vmatmul.mubr.f32.gmra.mrb[0].mxu0 %v181
  %v2715 = vpop.f32.mrb[0].mxu0
  %v2716 = vadd.f32 %v106, %v2715
  %v2717 = vpop.f32.mrb[0].mxu0
  %v2718 = vadd.f32 %v106, %v2717
  %2719 = vmatprep.mubr.f32.mxu0 0.0
  %2720 = vmatmul.mubr.f32.gmra.mrb[0].mxu0 %v184
  %v2721 = vpop.f32.mrb[0].mxu0
  %v2722 = vadd.f32 %v111, %v2721
  %v2723 = vpop.f32.mrb[0].mxu0
  %v2724 = vadd.f32 %v111, %v2723
  %2725 = vmatprep.mubr.f32.mxu0 0.0
  %2726 = vmatmul.mubr.f32.gmra.mrb[0].mxu0 %v187
  %v2727 = vpop.f32.mrb[0].mxu0
  %v2728 = vadd.f32 %v116, %v2727
  %v2729 = vpop.f32.mrb[0].mxu0
  %v2730 = vadd.f32 %v116, %v2729
  %2731 = vmatprep.mubr.f32.mxu0 0.0
  %2732 = vmatmul.mubr.f32.gmra.mrb[0].mxu0 %v190
  %v2733 = vpop.f32.mrb[0].mxu0
  %v2734 = vadd.f32 %v121, %v2733
  %v2735 = vpop.f32.mrb[0].mxu0
  %v2736 = vadd.f32 %v121, %v2735
  %2737 = vmatprep.mubr.f32.mxu0 0.0
  %2738 = vmatmul.mubr.f32.gmra.mrb[0].mxu0 %v193
  %v2739 = vpop.f32.mrb[0].mxu0
  %v2740 = vadd.f32 %v126, %v2739
  %v2741 = vpop.f32.mrb[0].mxu0
  %v2742 = vadd.f32 %v126, %v2741
  %2743 = vmatprep.mubr.f32.mxu0 0.0
  %2744 = vmatmul.mubr.f32.gmra.mrb[0].mxu0 %v196
  %v2745 = vpop.f32.mrb[0].mxu0
  %v2746 = vadd.f32 %v131, %v2745
  %v2747 = vpop.f32.mrb[0].mxu0
  %v2748 = vadd.f32 %v131, %v2747
  %2749 = vmatprep.mubr.f32.mxu0 0.0
  %2750 = vmatmul.mubr.f32.gmra.mrb[0].mxu0 %v199
  %v2751 = vpop.f32.mrb[0].mxu0
  %v2752 = vadd.f32 %v136, %v2751
  %v2753 = vpop.f32.mrb[0].mxu0
  %v2754 = vadd.f32 %v136, %v2753
  %2755 = vmatprep.mubr.f32.mxu0 0.0
  %2756 = vmatmul.mubr.f32.gmra.mrb[0].mxu0 %v202
  %v2757 = vpop.f32.mrb[0].mxu0
  %v2758 = vadd.f32 %v141, %v2757
  %v2759 = vpop.f32.mrb[0].mxu0
  %v2760 = vadd.f32 %v141, %v2759
  %2761 = vmatprep.mubr.f32.mxu0 0.0
  %2762 = vmatmul.mubr.f32.gmra.mrb[0].mxu0 %v205
  %v2763 = vpop.f32.mrb[0].mxu0
  %v2764 = vadd.f32 %v146, %v2763
  %v2765 = vpop.f32.mrb[0].mxu0
  %v2766 = vadd.f32 %v146, %v2765
  %2767 = vmatprep.mubr.f32.mxu0 0.0
  %2768 = vmatmul.mubr.f32.gmra.mrb[0].mxu0 %v208
  %v2769 = vpop.f32.mrb[0].mxu0
  %v2770 = vadd.f32 %v151, %v2769
  %v2771 = vpop.f32.mrb[0].mxu0
  %v2772 = vadd.f32 %v151, %v2771
  %2773 = vmatprep.mubr.f32.mxu0 0.0
  %2774 = vmatmul.mubr.f32.gmra.mrb[0].mxu0 %v211
  %v2775 = vpop.f32.mrb[0].mxu0
  %v2776 = vadd.f32 %v156, %v2775
  %v2777 = vpop.f32.mrb[0].mxu0
  %v2778 = vadd.f32 %v156, %v2777
  %2779 = vmatprep.mubr.f32.mxu0 0.0
  %2780 = vmatmul.mubr.f32.gmra.mrb[0].mxu0 %v214
  %v2781 = vpop.f32.mrb[0].mxu0
  %v2782 = vadd.f32 %v161, %v2781
  %v2783 = vpop.f32.mrb[0].mxu0
  %v2784 = vadd.f32 %v161, %v2783
  %2785 = vmatprep.mubr.f32.mxu0 0.0
  %2786 = vmatmul.mubr.f32.gmra.mrb[0].mxu0 %v217
  %v2787 = vpop.f32.mrb[0].mxu0
  %v2788 = vadd.f32 %v166, %v2787
  %v2789 = vpop.f32.mrb[0].mxu0
  %v2790 = vadd.f32 %v166, %v2789
  %2791 = vmatprep.mubr.f32.mxu0 0.0
  %2792 = vmatmul.mubr.f32.gmra.mrb[0].mxu0 %v220
  %v2793 = vpop.f32.mrb[0].mxu0
  %v2794 = vadd.f32 %v171, %v2793
  %v2795 = vpop.f32.mrb[0].mxu0
  %v2796 = vadd.f32 %v171, %v2795
  %2797 = vdwg.mxu0
  %2798 = vst [vmem:[#allocation2] sm:$0xff] %v289
  %2799 = vst [vmem:[#allocation2 + $0x8] sm:$0xff] %v291
  %2800 = vst [vmem:[#allocation2 + $0x10] sm:$0xff] %v450
  %2801 = vst [vmem:[#allocation2 + $0x18] sm:$0xff] %v452
  %2802 = vst [vmem:[#allocation2 + $0x20] sm:$0xff] %v611
  %2803 = vst [vmem:[#allocation2 + $0x28] sm:$0xff] %v613
  %2804 = vst [vmem:[#allocation2 + $0x30] sm:$0xff] %v772
  %2805 = vst [vmem:[#allocation2 + $0x38] sm:$0xff] %v774
  %2806 = vst [vmem:[#allocation2 + $0x40] sm:$0xff] %v933
  %2807 = vst [vmem:[#allocation2 + $0x48] sm:$0xff] %v935
  %2808 = vst [vmem:[#allocation2 + $0x50] sm:$0xff] %v1094
  %2809 = vst [vmem:[#allocation2 + $0x58] sm:$0xff] %v1096
  %2810 = vst [vmem:[#allocation2 + $0x60] sm:$0xff] %v1255
  %2811 = vst [vmem:[#allocation2 + $0x68] sm:$0xff] %v1257
  %2812 = vst [vmem:[#allocation2 + $0x70] sm:$0xff] %v1416
  %2813 = vst [vmem:[#allocation2 + $0x78] sm:$0xff] %v1418
  %2814 = vst [vmem:[#allocation2 + $0x80] sm:$0xff] %v1577
  %2815 = vst [vmem:[#allocation2 + $0x88] sm:$0xff] %v1579
  %2816 = vst [vmem:[#allocation2 + $0x90] sm:$0xff] %v1738
  %2817 = vst [vmem:[#allocation2 + $0x98] sm:$0xff] %v1740
  %2818 = vst [vmem:[#allocation2 + $0xa0] sm:$0xff] %v1899
  %2819 = vst [vmem:[#allocation2 + $0xa8] sm:$0xff] %v1901
  %2820 = vst [vmem:[#allocation2 + $0xb0] sm:$0xff] %v2060
  %2821 = vst [vmem:[#allocation2 + $0xb8] sm:$0xff] %v2062
  %2822 = vst [vmem:[#allocation2 + $0xc0] sm:$0xff] %v2221
  %2823 = vst [vmem:[#allocation2 + $0xc8] sm:$0xff] %v2223
  %2824 = vst [vmem:[#allocation2 + $0xd0] sm:$0xff] %v2382
  %2825 = vst [vmem:[#allocation2 + $0xd8] sm:$0xff] %v2384
  %2826 = vst [vmem:[#allocation2 + $0xe0] sm:$0xff] %v2543
  %2827 = vst [vmem:[#allocation2 + $0xe8] sm:$0xff] %v2545
  %2828 = vst [vmem:[#allocation2 + $0xf0] sm:$0xff] %v2704
  %2829 = vst [vmem:[#allocation2 + $0xf8] sm:$0xff] %v2706
  %2830 = vst [vmem:[#allocation2 + $0x100] sm:$0xff] %v295
  %2831 = vst [vmem:[#allocation2 + $0x108] sm:$0xff] %v297
  %2832 = vst [vmem:[#allocation2 + $0x110] sm:$0xff] %v456
  %2833 = vst [vmem:[#allocation2 + $0x118] sm:$0xff] %v458
  %2834 = vst [vmem:[#allocation2 + $0x120] sm:$0xff] %v617
  %2835 = vst [vmem:[#allocation2 + $0x128] sm:$0xff] %v619
  %2836 = vst [vmem:[#allocation2 + $0x130] sm:$0xff] %v778
  %2837 = vst [vmem:[#allocation2 + $0x138] sm:$0xff] %v780
  %2838 = vst [vmem:[#allocation2 + $0x140] sm:$0xff] %v939
  %2839 = vst [vmem:[#allocation2 + $0x148] sm:$0xff] %v941
  %2840 = vst [vmem:[#allocation2 + $0x150] sm:$0xff] %v1100
  %2841 = vst [vmem:[#allocation2 + $0x158] sm:$0xff] %v1102
  %2842 = vst [vmem:[#allocation2 + $0x160] sm:$0xff] %v1261
  %2843 = vst [vmem:[#allocation2 + $0x168] sm:$0xff] %v1263
  %2844 = vst [vmem:[#allocation2 + $0x170] sm:$0xff] %v1422
  %2845 = vst [vmem:[#allocation2 + $0x178] sm:$0xff] %v1424
  %2846 = vst [vmem:[#allocation2 + $0x180] sm:$0xff] %v1583
  %2847 = vst [vmem:[#allocation2 + $0x188] sm:$0xff] %v1585
  %2848 = vst [vmem:[#allocation2 + $0x190] sm:$0xff] %v1744
  %2849 = vst [vmem:[#allocation2 + $0x198] sm:$0xff] %v1746
  %2850 = vst [vmem:[#allocation2 + $0x1a0] sm:$0xff] %v1905
  %2851 = vst [vmem:[#allocation2 + $0x1a8] sm:$0xff] %v1907
  %2852 = vst [vmem:[#allocation2 + $0x1b0] sm:$0xff] %v2066
  %2853 = vst [vmem:[#allocation2 + $0x1b8] sm:$0xff] %v2068
  %2854 = vst [vmem:[#allocation2 + $0x1c0] sm:$0xff] %v2227
  %2855 = vst [vmem:[#allocation2 + $0x1c8] sm:$0xff] %v2229
  %2856 = vst [vmem:[#allocation2 + $0x1d0] sm:$0xff] %v2388
  %2857 = vst [vmem:[#allocation2 + $0x1d8] sm:$0xff] %v2390
  %2858 = vst [vmem:[#allocation2 + $0x1e0] sm:$0xff] %v2549
  %2859 = vst [vmem:[#allocation2 + $0x1e8] sm:$0xff] %v2551
  %2860 = vst [vmem:[#allocation2 + $0x1f0] sm:$0xff] %v2710
  %2861 = vst [vmem:[#allocation2 + $0x1f8] sm:$0xff] %v2712
  %2862 = vst [vmem:[#allocation2 + $0x200] sm:$0xff] %v301
  %2863 = vst [vmem:[#allocation2 + $0x208] sm:$0xff] %v303
  %2864 = vst [vmem:[#allocation2 + $0x210] sm:$0xff] %v462
  %2865 = vst [vmem:[#allocation2 + $0x218] sm:$0xff] %v464
  %2866 = vst [vmem:[#allocation2 + $0x220] sm:$0xff] %v623
  %2867 = vst [vmem:[#allocation2 + $0x228] sm:$0xff] %v625
  %2868 = vst [vmem:[#allocation2 + $0x230] sm:$0xff] %v784
  %2869 = vst [vmem:[#allocation2 + $0x238] sm:$0xff] %v786
  %2870 = vst [vmem:[#allocation2 + $0x240] sm:$0xff] %v945
  %2871 = vst [vmem:[#allocation2 + $0x248] sm:$0xff] %v947
  %2872 = vst [vmem:[#allocation2 + $0x250] sm:$0xff] %v1106
  %2873 = vst [vmem:[#allocation2 + $0x258] sm:$0xff] %v1108
  %2874 = vst [vmem:[#allocation2 + $0x260] sm:$0xff] %v1267
  %2875 = vst [vmem:[#allocation2 + $0x268] sm:$0xff] %v1269
  %2876 = vst [vmem:[#allocation2 + $0x270] sm:$0xff] %v1428
  %2877 = vst [vmem:[#allocation2 + $0x278] sm:$0xff] %v1430
  %2878 = vst [vmem:[#allocation2 + $0x280] sm:$0xff] %v1589
  %2879 = vst [vmem:[#allocation2 + $0x288] sm:$0xff] %v1591
  %2880 = vst [vmem:[#allocation2 + $0x290] sm:$0xff] %v1750
  %2881 = vst [vmem:[#allocation2 + $0x298] sm:$0xff] %v1752
  %2882 = vst [vmem:[#allocation2 + $0x2a0] sm:$0xff] %v1911
  %2883 = vst [vmem:[#allocation2 + $0x2a8] sm:$0xff] %v1913
  %2884 = vst [vmem:[#allocation2 + $0x2b0] sm:$0xff] %v2072
  %2885 = vst [vmem:[#allocation2 + $0x2b8] sm:$0xff] %v2074
  %2886 = vst [vmem:[#allocation2 + $0x2c0] sm:$0xff] %v2233
  %2887 = vst [vmem:[#allocation2 + $0x2c8] sm:$0xff] %v2235
  %2888 = vst [vmem:[#allocation2 + $0x2d0] sm:$0xff] %v2394
  %2889 = vst [vmem:[#allocation2 + $0x2d8] sm:$0xff] %v2396
  %2890 = vst [vmem:[#allocation2 + $0x2e0] sm:$0xff] %v2555
  %2891 = vst [vmem:[#allocation2 + $0x2e8] sm:$0xff] %v2557
  %2892 = vst [vmem:[#allocation2 + $0x2f0] sm:$0xff] %v2716
  %2893 = vst [vmem:[#allocation2 + $0x2f8] sm:$0xff] %v2718
  %2894 = vst [vmem:[#allocation2 + $0x300] sm:$0xff] %v307
  %2895 = vst [vmem:[#allocation2 + $0x308] sm:$0xff] %v309
  %2896 = vst [vmem:[#allocation2 + $0x310] sm:$0xff] %v468
  %2897 = vst [vmem:[#allocation2 + $0x318] sm:$0xff] %v470
  %2898 = vst [vmem:[#allocation2 + $0x320] sm:$0xff] %v629
  %2899 = vst [vmem:[#allocation2 + $0x328] sm:$0xff] %v631
  %2900 = vst [vmem:[#allocation2 + $0x330] sm:$0xff] %v790
  %2901 = vst [vmem:[#allocation2 + $0x338] sm:$0xff] %v792
  %2902 = vst [vmem:[#allocation2 + $0x340] sm:$0xff] %v951
  %2903 = vst [vmem:[#allocation2 + $0x348] sm:$0xff] %v953
  %2904 = vst [vmem:[#allocation2 + $0x350] sm:$0xff] %v1112
  %2905 = vst [vmem:[#allocation2 + $0x358] sm:$0xff] %v1114
  %2906 = vst [vmem:[#allocation2 + $0x360] sm:$0xff] %v1273
  %2907 = vst [vmem:[#allocation2 + $0x368] sm:$0xff] %v1275
  %2908 = vst [vmem:[#allocation2 + $0x370] sm:$0xff] %v1434
  %2909 = vst [vmem:[#allocation2 + $0x378] sm:$0xff] %v1436
  %2910 = vst [vmem:[#allocation2 + $0x380] sm:$0xff] %v1595
  %2911 = vst [vmem:[#allocation2 + $0x388] sm:$0xff] %v1597
  %2912 = vst [vmem:[#allocation2 + $0x390] sm:$0xff] %v1756
  %2913 = vst [vmem:[#allocation2 + $0x398] sm:$0xff] %v1758
  %2914 = vst [vmem:[#allocation2 + $0x3a0] sm:$0xff] %v1917
  %2915 = vst [vmem:[#allocation2 + $0x3a8] sm:$0xff] %v1919
  %2916 = vst [vmem:[#allocation2 + $0x3b0] sm:$0xff] %v2078
  %2917 = vst [vmem:[#allocation2 + $0x3b8] sm:$0xff] %v2080
  %2918 = vst [vmem:[#allocation2 + $0x3c0] sm:$0xff] %v2239
  %2919 = vst [vmem:[#allocation2 + $0x3c8] sm:$0xff] %v2241
  %2920 = vst [vmem:[#allocation2 + $0x3d0] sm:$0xff] %v2400
  %2921 = vst [vmem:[#allocation2 + $0x3d8] sm:$0xff] %v2402
  %2922 = vst [vmem:[#allocation2 + $0x3e0] sm:$0xff] %v2561
  %2923 = vst [vmem:[#allocation2 + $0x3e8] sm:$0xff] %v2563
  %2924 = vst [vmem:[#allocation2 + $0x3f0] sm:$0xff] %v2722
  %2925 = vst [vmem:[#allocation2 + $0x3f8] sm:$0xff] %v2724
  %2926 = vst [vmem:[#allocation2 + $0x400] sm:$0xff] %v313
  %2927 = vst [vmem:[#allocation2 + $0x408] sm:$0xff] %v315
  %2928 = vst [vmem:[#allocation2 + $0x410] sm:$0xff] %v474
  %2929 = vst [vmem:[#allocation2 + $0x418] sm:$0xff] %v476
  %2930 = vst [vmem:[#allocation2 + $0x420] sm:$0xff] %v635
  %2931 = vst [vmem:[#allocation2 + $0x428] sm:$0xff] %v637
  %2932 = vst [vmem:[#allocation2 + $0x430] sm:$0xff] %v796
  %2933 = vst [vmem:[#allocation2 + $0x438] sm:$0xff] %v798
  %2934 = vst [vmem:[#allocation2 + $0x440] sm:$0xff] %v957
  %2935 = vst [vmem:[#allocation2 + $0x448] sm:$0xff] %v959
  %2936 = vst [vmem:[#allocation2 + $0x450] sm:$0xff] %v1118
  %2937 = vst [vmem:[#allocation2 + $0x458] sm:$0xff] %v1120
  %2938 = vst [vmem:[#allocation2 + $0x460] sm:$0xff] %v1279
  %2939 = vst [vmem:[#allocation2 + $0x468] sm:$0xff] %v1281
  %2940 = vst [vmem:[#allocation2 + $0x470] sm:$0xff] %v1440
  %2941 = vst [vmem:[#allocation2 + $0x478] sm:$0xff] %v1442
  %2942 = vst [vmem:[#allocation2 + $0x480] sm:$0xff] %v1601
  %2943 = vst [vmem:[#allocation2 + $0x488] sm:$0xff] %v1603
  %2944 = vst [vmem:[#allocation2 + $0x490] sm:$0xff] %v1762
  %2945 = vst [vmem:[#allocation2 + $0x498] sm:$0xff] %v1764
  %2946 = vst [vmem:[#allocation2 + $0x4a0] sm:$0xff] %v1923
  %2947 = vst [vmem:[#allocation2 + $0x4a8] sm:$0xff] %v1925
  %2948 = vst [vmem:[#allocation2 + $0x4b0] sm:$0xff] %v2084
  %2949 = vst [vmem:[#allocation2 + $0x4b8] sm:$0xff] %v2086
  %2950 = vst [vmem:[#allocation2 + $0x4c0] sm:$0xff] %v2245
  %2951 = vst [vmem:[#allocation2 + $0x4c8] sm:$0xff] %v2247
  %2952 = vst [vmem:[#allocation2 + $0x4d0] sm:$0xff] %v2406
  %2953 = vst [vmem:[#allocation2 + $0x4d8] sm:$0xff] %v2408
  %2954 = vst [vmem:[#allocation2 + $0x4e0] sm:$0xff] %v2567
  %2955 = vst [vmem:[#allocation2 + $0x4e8] sm:$0xff] %v2569
  %2956 = vst [vmem:[#allocation2 + $0x4f0] sm:$0xff] %v2728
  %2957 = vst [vmem:[#allocation2 + $0x4f8] sm:$0xff] %v2730
  %2958 = vst [vmem:[#allocation2 + $0x500] sm:$0xff] %v319
  %2959 = vst [vmem:[#allocation2 + $0x508] sm:$0xff] %v321
  %2960 = vst [vmem:[#allocation2 + $0x510] sm:$0xff] %v480
  %2961 = vst [vmem:[#allocation2 + $0x518] sm:$0xff] %v482
  %2962 = vst [vmem:[#allocation2 + $0x520] sm:$0xff] %v641
  %2963 = vst [vmem:[#allocation2 + $0x528] sm:$0xff] %v643
  %2964 = vst [vmem:[#allocation2 + $0x530] sm:$0xff] %v802
  %2965 = vst [vmem:[#allocation2 + $0x538] sm:$0xff] %v804
  %2966 = vst [vmem:[#allocation2 + $0x540] sm:$0xff] %v963
  %2967 = vst [vmem:[#allocation2 + $0x548] sm:$0xff] %v965
  %2968 = vst [vmem:[#allocation2 + $0x550] sm:$0xff] %v1124
  %2969 = vst [vmem:[#allocation2 + $0x558] sm:$0xff] %v1126
  %2970 = vst [vmem:[#allocation2 + $0x560] sm:$0xff] %v1285
  %2971 = vst [vmem:[#allocation2 + $0x568] sm:$0xff] %v1287
  %2972 = vst [vmem:[#allocation2 + $0x570] sm:$0xff] %v1446
  %2973 = vst [vmem:[#allocation2 + $0x578] sm:$0xff] %v1448
  %2974 = vst [vmem:[#allocation2 + $0x580] sm:$0xff] %v1607
  %2975 = vst [vmem:[#allocation2 + $0x588] sm:$0xff] %v1609
  %2976 = vst [vmem:[#allocation2 + $0x590] sm:$0xff] %v1768
  %2977 = vst [vmem:[#allocation2 + $0x598] sm:$0xff] %v1770
  %2978 = vst [vmem:[#allocation2 + $0x5a0] sm:$0xff] %v1929
  %2979 = vst [vmem:[#allocation2 + $0x5a8] sm:$0xff] %v1931
  %2980 = vst [vmem:[#allocation2 + $0x5b0] sm:$0xff] %v2090
  %2981 = vst [vmem:[#allocation2 + $0x5b8] sm:$0xff] %v2092
  %2982 = vst [vmem:[#allocation2 + $0x5c0] sm:$0xff] %v2251
  %2983 = vst [vmem:[#allocation2 + $0x5c8] sm:$0xff] %v2253
  %2984 = vst [vmem:[#allocation2 + $0x5d0] sm:$0xff] %v2412
  %2985 = vst [vmem:[#allocation2 + $0x5d8] sm:$0xff] %v2414
  %2986 = vst [vmem:[#allocation2 + $0x5e0] sm:$0xff] %v2573
  %2987 = vst [vmem:[#allocation2 + $0x5e8] sm:$0xff] %v2575
  %2988 = vst [vmem:[#allocation2 + $0x5f0] sm:$0xff] %v2734
  %2989 = vst [vmem:[#allocation2 + $0x5f8] sm:$0xff] %v2736
  %2990 = vst [vmem:[#allocation2 + $0x600] sm:$0xff] %v325
  %2991 = vst [vmem:[#allocation2 + $0x608] sm:$0xff] %v327
  %2992 = vst [vmem:[#allocation2 + $0x610] sm:$0xff] %v486
  %2993 = vst [vmem:[#allocation2 + $0x618] sm:$0xff] %v488
  %2994 = vst [vmem:[#allocation2 + $0x620] sm:$0xff] %v647
  %2995 = vst [vmem:[#allocation2 + $0x628] sm:$0xff] %v649
  %2996 = vst [vmem:[#allocation2 + $0x630] sm:$0xff] %v808
  %2997 = vst [vmem:[#allocation2 + $0x638] sm:$0xff] %v810
  %2998 = vst [vmem:[#allocation2 + $0x640] sm:$0xff] %v969
  %2999 = vst [vmem:[#allocation2 + $0x648] sm:$0xff] %v971
  %3000 = vst [vmem:[#allocation2 + $0x650] sm:$0xff] %v1130
  %3001 = vst [vmem:[#allocation2 + $0x658] sm:$0xff] %v1132
  %3002 = vst [vmem:[#allocation2 + $0x660] sm:$0xff] %v1291
  %3003 = vst [vmem:[#allocation2 + $0x668] sm:$0xff] %v1293
  %3004 = vst [vmem:[#allocation2 + $0x670] sm:$0xff] %v1452
  %3005 = vst [vmem:[#allocation2 + $0x678] sm:$0xff] %v1454
  %3006 = vst [vmem:[#allocation2 + $0x680] sm:$0xff] %v1613
  %3007 = vst [vmem:[#allocation2 + $0x688] sm:$0xff] %v1615
  %3008 = vst [vmem:[#allocation2 + $0x690] sm:$0xff] %v1774
  %3009 = vst [vmem:[#allocation2 + $0x698] sm:$0xff] %v1776
  %3010 = vst [vmem:[#allocation2 + $0x6a0] sm:$0xff] %v1935
  %3011 = vst [vmem:[#allocation2 + $0x6a8] sm:$0xff] %v1937
  %3012 = vst [vmem:[#allocation2 + $0x6b0] sm:$0xff] %v2096
  %3013 = vst [vmem:[#allocation2 + $0x6b8] sm:$0xff] %v2098
  %3014 = vst [vmem:[#allocation2 + $0x6c0] sm:$0xff] %v2257
  %3015 = vst [vmem:[#allocation2 + $0x6c8] sm:$0xff] %v2259
  %3016 = vst [vmem:[#allocation2 + $0x6d0] sm:$0xff] %v2418
  %3017 = vst [vmem:[#allocation2 + $0x6d8] sm:$0xff] %v2420
  %3018 = vst [vmem:[#allocation2 + $0x6e0] sm:$0xff] %v2579
  %3019 = vst [vmem:[#allocation2 + $0x6e8] sm:$0xff] %v2581
  %3020 = vst [vmem:[#allocation2 + $0x6f0] sm:$0xff] %v2740
  %3021 = vst [vmem:[#allocation2 + $0x6f8] sm:$0xff] %v2742
  %3022 = vst [vmem:[#allocation2 + $0x700] sm:$0xff] %v331
  %3023 = vst [vmem:[#allocation2 + $0x708] sm:$0xff] %v333
  %3024 = vst [vmem:[#allocation2 + $0x710] sm:$0xff] %v492
  %3025 = vst [vmem:[#allocation2 + $0x718] sm:$0xff] %v494
  %3026 = vst [vmem:[#allocation2 + $0x720] sm:$0xff] %v653
  %3027 = vst [vmem:[#allocation2 + $0x728] sm:$0xff] %v655
  %3028 = vst [vmem:[#allocation2 + $0x730] sm:$0xff] %v814
  %3029 = vst [vmem:[#allocation2 + $0x738] sm:$0xff] %v816
  %3030 = vst [vmem:[#allocation2 + $0x740] sm:$0xff] %v975
  %3031 = vst [vmem:[#allocation2 + $0x748] sm:$0xff] %v977
  %3032 = vst [vmem:[#allocation2 + $0x750] sm:$0xff] %v1136
  %3033 = vst [vmem:[#allocation2 + $0x758] sm:$0xff] %v1138
  %3034 = vst [vmem:[#allocation2 + $0x760] sm:$0xff] %v1297
  %3035 = vst [vmem:[#allocation2 + $0x768] sm:$0xff] %v1299
  %3036 = vst [vmem:[#allocation2 + $0x770] sm:$0xff] %v1458
  %3037 = vst [vmem:[#allocation2 + $0x778] sm:$0xff] %v1460
  %3038 = vst [vmem:[#allocation2 + $0x780] sm:$0xff] %v1619
  %3039 = vst [vmem:[#allocation2 + $0x788] sm:$0xff] %v1621
  %3040 = vst [vmem:[#allocation2 + $0x790] sm:$0xff] %v1780
  %3041 = vst [vmem:[#allocation2 + $0x798] sm:$0xff] %v1782
  %3042 = vst [vmem:[#allocation2 + $0x7a0] sm:$0xff] %v1941
  %3043 = vst [vmem:[#allocation2 + $0x7a8] sm:$0xff] %v1943
  %3044 = vst [vmem:[#allocation2 + $0x7b0] sm:$0xff] %v2102
  %3045 = vst [vmem:[#allocation2 + $0x7b8] sm:$0xff] %v2104
  %3046 = vst [vmem:[#allocation2 + $0x7c0] sm:$0xff] %v2263
  %3047 = vst [vmem:[#allocation2 + $0x7c8] sm:$0xff] %v2265
  %3048 = vst [vmem:[#allocation2 + $0x7d0] sm:$0xff] %v2424
  %3049 = vst [vmem:[#allocation2 + $0x7d8] sm:$0xff] %v2426
  %3050 = vst [vmem:[#allocation2 + $0x7e0] sm:$0xff] %v2585
  %3051 = vst [vmem:[#allocation2 + $0x7e8] sm:$0xff] %v2587
  %3052 = vst [vmem:[#allocation2 + $0x7f0] sm:$0xff] %v2746
  %3053 = vst [vmem:[#allocation2 + $0x7f8] sm:$0xff] %v2748
  %3054 = vst [vmem:[#allocation2 + $0x800] sm:$0xff] %v337
  %3055 = vst [vmem:[#allocation2 + $0x808] sm:$0xff] %v339
  %3056 = vst [vmem:[#allocation2 + $0x810] sm:$0xff] %v498
  %3057 = vst [vmem:[#allocation2 + $0x818] sm:$0xff] %v500
  %3058 = vst [vmem:[#allocation2 + $0x820] sm:$0xff] %v659
  %3059 = vst [vmem:[#allocation2 + $0x828] sm:$0xff] %v661
  %3060 = vst [vmem:[#allocation2 + $0x830] sm:$0xff] %v820
  %3061 = vst [vmem:[#allocation2 + $0x838] sm:$0xff] %v822
  %3062 = vst [vmem:[#allocation2 + $0x840] sm:$0xff] %v981
  %3063 = vst [vmem:[#allocation2 + $0x848] sm:$0xff] %v983
  %3064 = vst [vmem:[#allocation2 + $0x850] sm:$0xff] %v1142
  %3065 = vst [vmem:[#allocation2 + $0x858] sm:$0xff] %v1144
  %3066 = vst [vmem:[#allocation2 + $0x860] sm:$0xff] %v1303
  %3067 = vst [vmem:[#allocation2 + $0x868] sm:$0xff] %v1305
  %3068 = vst [vmem:[#allocation2 + $0x870] sm:$0xff] %v1464
  %3069 = vst [vmem:[#allocation2 + $0x878] sm:$0xff] %v1466
  %3070 = vst [vmem:[#allocation2 + $0x880] sm:$0xff] %v1625
  %3071 = vst [vmem:[#allocation2 + $0x888] sm:$0xff] %v1627
  %3072 = vst [vmem:[#allocation2 + $0x890] sm:$0xff] %v1786
  %3073 = vst [vmem:[#allocation2 + $0x898] sm:$0xff] %v1788
  %3074 = vst [vmem:[#allocation2 + $0x8a0] sm:$0xff] %v1947
  %3075 = vst [vmem:[#allocation2 + $0x8a8] sm:$0xff] %v1949
  %3076 = vst [vmem:[#allocation2 + $0x8b0] sm:$0xff] %v2108
  %3077 = vst [vmem:[#allocation2 + $0x8b8] sm:$0xff] %v2110
  %3078 = vst [vmem:[#allocation2 + $0x8c0] sm:$0xff] %v2269
  %3079 = vst [vmem:[#allocation2 + $0x8c8] sm:$0xff] %v2271
  %3080 = vst [vmem:[#allocation2 + $0x8d0] sm:$0xff] %v2430
  %3081 = vst [vmem:[#allocation2 + $0x8d8] sm:$0xff] %v2432
  %3082 = vst [vmem:[#allocation2 + $0x8e0] sm:$0xff] %v2591
  %3083 = vst [vmem:[#allocation2 + $0x8e8] sm:$0xff] %v2593
  %3084 = vst [vmem:[#allocation2 + $0x8f0] sm:$0xff] %v2752
  %3085 = vst [vmem:[#allocation2 + $0x8f8] sm:$0xff] %v2754
  %3086 = vst [vmem:[#allocation2 + $0x900] sm:$0xff] %v343
  %3087 = vst [vmem:[#allocation2 + $0x908] sm:$0xff] %v345
  %3088 = vst [vmem:[#allocation2 + $0x910] sm:$0xff] %v504
  %3089 = vst [vmem:[#allocation2 + $0x918] sm:$0xff] %v506
  %3090 = vst [vmem:[#allocation2 + $0x920] sm:$0xff] %v665
  %3091 = vst [vmem:[#allocation2 + $0x928] sm:$0xff] %v667
  %3092 = vst [vmem:[#allocation2 + $0x930] sm:$0xff] %v826
  %3093 = vst [vmem:[#allocation2 + $0x938] sm:$0xff] %v828
  %3094 = vst [vmem:[#allocation2 + $0x940] sm:$0xff] %v987
  %3095 = vst [vmem:[#allocation2 + $0x948] sm:$0xff] %v989
  %3096 = vst [vmem:[#allocation2 + $0x950] sm:$0xff] %v1148
  %3097 = vst [vmem:[#allocation2 + $0x958] sm:$0xff] %v1150
  %3098 = vst [vmem:[#allocation2 + $0x960] sm:$0xff] %v1309
  %3099 = vst [vmem:[#allocation2 + $0x968] sm:$0xff] %v1311
  %3100 = vst [vmem:[#allocation2 + $0x970] sm:$0xff] %v1470
  %3101 = vst [vmem:[#allocation2 + $0x978] sm:$0xff] %v1472
  %3102 = vst [vmem:[#allocation2 + $0x980] sm:$0xff] %v1631
  %3103 = vst [vmem:[#allocation2 + $0x988] sm:$0xff] %v1633
  %3104 = vst [vmem:[#allocation2 + $0x990] sm:$0xff] %v1792
  %3105 = vst [vmem:[#allocation2 + $0x998] sm:$0xff] %v1794
  %3106 = vst [vmem:[#allocation2 + $0x9a0] sm:$0xff] %v1953
  %3107 = vst [vmem:[#allocation2 + $0x9a8] sm:$0xff] %v1955
  %3108 = vst [vmem:[#allocation2 + $0x9b0] sm:$0xff] %v2114
  %3109 = vst [vmem:[#allocation2 + $0x9b8] sm:$0xff] %v2116
  %3110 = vst [vmem:[#allocation2 + $0x9c0] sm:$0xff] %v2275
  %3111 = vst [vmem:[#allocation2 + $0x9c8] sm:$0xff] %v2277
  %3112 = vst [vmem:[#allocation2 + $0x9d0] sm:$0xff] %v2436
  %3113 = vst [vmem:[#allocation2 + $0x9d8] sm:$0xff] %v2438
  %3114 = vst [vmem:[#allocation2 + $0x9e0] sm:$0xff] %v2597
  %3115 = vst [vmem:[#allocation2 + $0x9e8] sm:$0xff] %v2599
  %3116 = vst [vmem:[#allocation2 + $0x9f0] sm:$0xff] %v2758
  %3117 = vst [vmem:[#allocation2 + $0x9f8] sm:$0xff] %v2760
  %3118 = vst [vmem:[#allocation2 + $0xa00] sm:$0xff] %v349
  %3119 = vst [vmem:[#allocation2 + $0xa08] sm:$0xff] %v351
  %3120 = vst [vmem:[#allocation2 + $0xa10] sm:$0xff] %v510
  %3121 = vst [vmem:[#allocation2 + $0xa18] sm:$0xff] %v512
  %3122 = vst [vmem:[#allocation2 + $0xa20] sm:$0xff] %v671
  %3123 = vst [vmem:[#allocation2 + $0xa28] sm:$0xff] %v673
  %3124 = vst [vmem:[#allocation2 + $0xa30] sm:$0xff] %v832
  %3125 = vst [vmem:[#allocation2 + $0xa38] sm:$0xff] %v834
  %3126 = vst [vmem:[#allocation2 + $0xa40] sm:$0xff] %v993
  %3127 = vst [vmem:[#allocation2 + $0xa48] sm:$0xff] %v995
  %3128 = vst [vmem:[#allocation2 + $0xa50] sm:$0xff] %v1154
  %3129 = vst [vmem:[#allocation2 + $0xa58] sm:$0xff] %v1156
  %3130 = vst [vmem:[#allocation2 + $0xa60] sm:$0xff] %v1315
  %3131 = vst [vmem:[#allocation2 + $0xa68] sm:$0xff] %v1317
  %3132 = vst [vmem:[#allocation2 + $0xa70] sm:$0xff] %v1476
  %3133 = vst [vmem:[#allocation2 + $0xa78] sm:$0xff] %v1478
  %3134 = vst [vmem:[#allocation2 + $0xa80] sm:$0xff] %v1637
  %3135 = vst [vmem:[#allocation2 + $0xa88] sm:$0xff] %v1639
  %3136 = vst [vmem:[#allocation2 + $0xa90] sm:$0xff] %v1798
  %3137 = vst [vmem:[#allocation2 + $0xa98] sm:$0xff] %v1800
  %3138 = vst [vmem:[#allocation2 + $0xaa0] sm:$0xff] %v1959
  %3139 = vst [vmem:[#allocation2 + $0xaa8] sm:$0xff] %v1961
  %3140 = vst [vmem:[#allocation2 + $0xab0] sm:$0xff] %v2120
  %3141 = vst [vmem:[#allocation2 + $0xab8] sm:$0xff] %v2122
  %3142 = vst [vmem:[#allocation2 + $0xac0] sm:$0xff] %v2281
  %3143 = vst [vmem:[#allocation2 + $0xac8] sm:$0xff] %v2283
  %3144 = vst [vmem:[#allocation2 + $0xad0] sm:$0xff] %v2442
  %3145 = vst [vmem:[#allocation2 + $0xad8] sm:$0xff] %v2444
  %3146 = vst [vmem:[#allocation2 + $0xae0] sm:$0xff] %v2603
  %3147 = vst [vmem:[#allocation2 + $0xae8] sm:$0xff] %v2605
  %3148 = vst [vmem:[#allocation2 + $0xaf0] sm:$0xff] %v2764
  %3149 = vst [vmem:[#allocation2 + $0xaf8] sm:$0xff] %v2766
  %3150 = vst [vmem:[#allocation2 + $0xb00] sm:$0xff] %v355
  %3151 = vst [vmem:[#allocation2 + $0xb08] sm:$0xff] %v357
  %3152 = vst [vmem:[#allocation2 + $0xb10] sm:$0xff] %v516
  %3153 = vst [vmem:[#allocation2 + $0xb18] sm:$0xff] %v518
  %3154 = vst [vmem:[#allocation2 + $0xb20] sm:$0xff] %v677
  %3155 = vst [vmem:[#allocation2 + $0xb28] sm:$0xff] %v679
  %3156 = vst [vmem:[#allocation2 + $0xb30] sm:$0xff] %v838
  %3157 = vst [vmem:[#allocation2 + $0xb38] sm:$0xff] %v840
  %3158 = vst [vmem:[#allocation2 + $0xb40] sm:$0xff] %v999
  %3159 = vst [vmem:[#allocation2 + $0xb48] sm:$0xff] %v1001
  %3160 = vst [vmem:[#allocation2 + $0xb50] sm:$0xff] %v1160
  %3161 = vst [vmem:[#allocation2 + $0xb58] sm:$0xff] %v1162
  %3162 = vst [vmem:[#allocation2 + $0xb60] sm:$0xff] %v1321
  %3163 = vst [vmem:[#allocation2 + $0xb68] sm:$0xff] %v1323
  %3164 = vst [vmem:[#allocation2 + $0xb70] sm:$0xff] %v1482
  %3165 = vst [vmem:[#allocation2 + $0xb78] sm:$0xff] %v1484
  %3166 = vst [vmem:[#allocation2 + $0xb80] sm:$0xff] %v1643
  %3167 = vst [vmem:[#allocation2 + $0xb88] sm:$0xff] %v1645
  %3168 = vst [vmem:[#allocation2 + $0xb90] sm:$0xff] %v1804
  %3169 = vst [vmem:[#allocation2 + $0xb98] sm:$0xff] %v1806
  %3170 = vst [vmem:[#allocation2 + $0xba0] sm:$0xff] %v1965
  %3171 = vst [vmem:[#allocation2 + $0xba8] sm:$0xff] %v1967
  %3172 = vst [vmem:[#allocation2 + $0xbb0] sm:$0xff] %v2126
  %3173 = vst [vmem:[#allocation2 + $0xbb8] sm:$0xff] %v2128
  %3174 = vst [vmem:[#allocation2 + $0xbc0] sm:$0xff] %v2287
  %3175 = vst [vmem:[#allocation2 + $0xbc8] sm:$0xff] %v2289
  %3176 = vst [vmem:[#allocation2 + $0xbd0] sm:$0xff] %v2448
  %3177 = vst [vmem:[#allocation2 + $0xbd8] sm:$0xff] %v2450
  %3178 = vst [vmem:[#allocation2 + $0xbe0] sm:$0xff] %v2609
  %3179 = vst [vmem:[#allocation2 + $0xbe8] sm:$0xff] %v2611
  %3180 = vst [vmem:[#allocation2 + $0xbf0] sm:$0xff] %v2770
  %3181 = vst [vmem:[#allocation2 + $0xbf8] sm:$0xff] %v2772
  %3182 = vst [vmem:[#allocation2 + $0xc00] sm:$0xff] %v361
  %3183 = vst [vmem:[#allocation2 + $0xc08] sm:$0xff] %v363
  %3184 = vst [vmem:[#allocation2 + $0xc10] sm:$0xff] %v522
  %3185 = vst [vmem:[#allocation2 + $0xc18] sm:$0xff] %v524
  %3186 = vst [vmem:[#allocation2 + $0xc20] sm:$0xff] %v683
  %3187 = vst [vmem:[#allocation2 + $0xc28] sm:$0xff] %v685
  %3188 = vst [vmem:[#allocation2 + $0xc30] sm:$0xff] %v844
  %3189 = vst [vmem:[#allocation2 + $0xc38] sm:$0xff] %v846
  %3190 = vst [vmem:[#allocation2 + $0xc40] sm:$0xff] %v1005
  %3191 = vst [vmem:[#allocation2 + $0xc48] sm:$0xff] %v1007
  %3192 = vst [vmem:[#allocation2 + $0xc50] sm:$0xff] %v1166
  %3193 = vst [vmem:[#allocation2 + $0xc58] sm:$0xff] %v1168
  %3194 = vst [vmem:[#allocation2 + $0xc60] sm:$0xff] %v1327
  %3195 = vst [vmem:[#allocation2 + $0xc68] sm:$0xff] %v1329
  %3196 = vst [vmem:[#allocation2 + $0xc70] sm:$0xff] %v1488
  %3197 = vst [vmem:[#allocation2 + $0xc78] sm:$0xff] %v1490
  %3198 = vst [vmem:[#allocation2 + $0xc80] sm:$0xff] %v1649
  %3199 = vst [vmem:[#allocation2 + $0xc88] sm:$0xff] %v1651
  %3200 = vst [vmem:[#allocation2 + $0xc90] sm:$0xff] %v1810
  %3201 = vst [vmem:[#allocation2 + $0xc98] sm:$0xff] %v1812
  %3202 = vst [vmem:[#allocation2 + $0xca0] sm:$0xff] %v1971
  %3203 = vst [vmem:[#allocation2 + $0xca8] sm:$0xff] %v1973
  %3204 = vst [vmem:[#allocation2 + $0xcb0] sm:$0xff] %v2132
  %3205 = vst [vmem:[#allocation2 + $0xcb8] sm:$0xff] %v2134
  %3206 = vst [vmem:[#allocation2 + $0xcc0] sm:$0xff] %v2293
  %3207 = vst [vmem:[#allocation2 + $0xcc8] sm:$0xff] %v2295
  %3208 = vst [vmem:[#allocation2 + $0xcd0] sm:$0xff] %v2454
  %3209 = vst [vmem:[#allocation2 + $0xcd8] sm:$0xff] %v2456
  %3210 = vst [vmem:[#allocation2 + $0xce0] sm:$0xff] %v2615
  %3211 = vst [vmem:[#allocation2 + $0xce8] sm:$0xff] %v2617
  %3212 = vst [vmem:[#allocation2 + $0xcf0] sm:$0xff] %v2776
  %3213 = vst [vmem:[#allocation2 + $0xcf8] sm:$0xff] %v2778
  %3214 = vst [vmem:[#allocation2 + $0xd00] sm:$0xff] %v367
  %3215 = vst [vmem:[#allocation2 + $0xd08] sm:$0xff] %v369
  %3216 = vst [vmem:[#allocation2 + $0xd10] sm:$0xff] %v528
  %3217 = vst [vmem:[#allocation2 + $0xd18] sm:$0xff] %v530
  %3218 = vst [vmem:[#allocation2 + $0xd20] sm:$0xff] %v689
  %3219 = vst [vmem:[#allocation2 + $0xd28] sm:$0xff] %v691
  %3220 = vst [vmem:[#allocation2 + $0xd30] sm:$0xff] %v850
  %3221 = vst [vmem:[#allocation2 + $0xd38] sm:$0xff] %v852
  %3222 = vst [vmem:[#allocation2 + $0xd40] sm:$0xff] %v1011
  %3223 = vst [vmem:[#allocation2 + $0xd48] sm:$0xff] %v1013
  %3224 = vst [vmem:[#allocation2 + $0xd50] sm:$0xff] %v1172
  %3225 = vst [vmem:[#allocation2 + $0xd58] sm:$0xff] %v1174
  %3226 = vst [vmem:[#allocation2 + $0xd60] sm:$0xff] %v1333
  %3227 = vst [vmem:[#allocation2 + $0xd68] sm:$0xff] %v1335
  %3228 = vst [vmem:[#allocation2 + $0xd70] sm:$0xff] %v1494
  %3229 = vst [vmem:[#allocation2 + $0xd78] sm:$0xff] %v1496
  %3230 = vst [vmem:[#allocation2 + $0xd80] sm:$0xff] %v1655
  %3231 = vst [vmem:[#allocation2 + $0xd88] sm:$0xff] %v1657
  %3232 = vst [vmem:[#allocation2 + $0xd90] sm:$0xff] %v1816
  %3233 = vst [vmem:[#allocation2 + $0xd98] sm:$0xff] %v1818
  %3234 = vst [vmem:[#allocation2 + $0xda0] sm:$0xff] %v1977
  %3235 = vst [vmem:[#allocation2 + $0xda8] sm:$0xff] %v1979
  %3236 = vst [vmem:[#allocation2 + $0xdb0] sm:$0xff] %v2138
  %3237 = vst [vmem:[#allocation2 + $0xdb8] sm:$0xff] %v2140
  %3238 = vst [vmem:[#allocation2 + $0xdc0] sm:$0xff] %v2299
  %3239 = vst [vmem:[#allocation2 + $0xdc8] sm:$0xff] %v2301
  %3240 = vst [vmem:[#allocation2 + $0xdd0] sm:$0xff] %v2460
  %3241 = vst [vmem:[#allocation2 + $0xdd8] sm:$0xff] %v2462
  %3242 = vst [vmem:[#allocation2 + $0xde0] sm:$0xff] %v2621
  %3243 = vst [vmem:[#allocation2 + $0xde8] sm:$0xff] %v2623
  %3244 = vst [vmem:[#allocation2 + $0xdf0] sm:$0xff] %v2782
  %3245 = vst [vmem:[#allocation2 + $0xdf8] sm:$0xff] %v2784
  %3246 = vst [vmem:[#allocation2 + $0xe00] sm:$0xff] %v373
  %3247 = vst [vmem:[#allocation2 + $0xe08] sm:$0xff] %v375
  %3248 = vst [vmem:[#allocation2 + $0xe10] sm:$0xff] %v534
  %3249 = vst [vmem:[#allocation2 + $0xe18] sm:$0xff] %v536
  %3250 = vst [vmem:[#allocation2 + $0xe20] sm:$0xff] %v695
  %3251 = vst [vmem:[#allocation2 + $0xe28] sm:$0xff] %v697
  %3252 = vst [vmem:[#allocation2 + $0xe30] sm:$0xff] %v856
  %3253 = vst [vmem:[#allocation2 + $0xe38] sm:$0xff] %v858
  %3254 = vst [vmem:[#allocation2 + $0xe40] sm:$0xff] %v1017
  %3255 = vst [vmem:[#allocation2 + $0xe48] sm:$0xff] %v1019
  %3256 = vst [vmem:[#allocation2 + $0xe50] sm:$0xff] %v1178
  %3257 = vst [vmem:[#allocation2 + $0xe58] sm:$0xff] %v1180
  %3258 = vst [vmem:[#allocation2 + $0xe60] sm:$0xff] %v1339
  %3259 = vst [vmem:[#allocation2 + $0xe68] sm:$0xff] %v1341
  %3260 = vst [vmem:[#allocation2 + $0xe70] sm:$0xff] %v1500
  %3261 = vst [vmem:[#allocation2 + $0xe78] sm:$0xff] %v1502
  %3262 = vst [vmem:[#allocation2 + $0xe80] sm:$0xff] %v1661
  %3263 = vst [vmem:[#allocation2 + $0xe88] sm:$0xff] %v1663
  %3264 = vst [vmem:[#allocation2 + $0xe90] sm:$0xff] %v1822
  %3265 = vst [vmem:[#allocation2 + $0xe98] sm:$0xff] %v1824
  %3266 = vst [vmem:[#allocation2 + $0xea0] sm:$0xff] %v1983
  %3267 = vst [vmem:[#allocation2 + $0xea8] sm:$0xff] %v1985
  %3268 = vst [vmem:[#allocation2 + $0xeb0] sm:$0xff] %v2144
  %3269 = vst [vmem:[#allocation2 + $0xeb8] sm:$0xff] %v2146
  %3270 = vst [vmem:[#allocation2 + $0xec0] sm:$0xff] %v2305
  %3271 = vst [vmem:[#allocation2 + $0xec8] sm:$0xff] %v2307
  %3272 = vst [vmem:[#allocation2 + $0xed0] sm:$0xff] %v2466
  %3273 = vst [vmem:[#allocation2 + $0xed8] sm:$0xff] %v2468
  %3274 = vst [vmem:[#allocation2 + $0xee0] sm:$0xff] %v2627
  %3275 = vst [vmem:[#allocation2 + $0xee8] sm:$0xff] %v2629
  %3276 = vst [vmem:[#allocation2 + $0xef0] sm:$0xff] %v2788
  %3277 = vst [vmem:[#allocation2 + $0xef8] sm:$0xff] %v2790
  %3278 = vst [vmem:[#allocation2 + $0xf00] sm:$0xff] %v379
  %3279 = vst [vmem:[#allocation2 + $0xf08] sm:$0xff] %v381
  %3280 = vst [vmem:[#allocation2 + $0xf10] sm:$0xff] %v540
  %3281 = vst [vmem:[#allocation2 + $0xf18] sm:$0xff] %v542
  %3282 = vst [vmem:[#allocation2 + $0xf20] sm:$0xff] %v701
  %3283 = vst [vmem:[#allocation2 + $0xf28] sm:$0xff] %v703
  %3284 = vst [vmem:[#allocation2 + $0xf30] sm:$0xff] %v862
  %3285 = vst [vmem:[#allocation2 + $0xf38] sm:$0xff] %v864
  %3286 = vst [vmem:[#allocation2 + $0xf40] sm:$0xff] %v1023
  %3287 = vst [vmem:[#allocation2 + $0xf48] sm:$0xff] %v1025
  %3288 = vst [vmem:[#allocation2 + $0xf50] sm:$0xff] %v1184
  %3289 = vst [vmem:[#allocation2 + $0xf58] sm:$0xff] %v1186
  %3290 = vst [vmem:[#allocation2 + $0xf60] sm:$0xff] %v1345
  %3291 = vst [vmem:[#allocation2 + $0xf68] sm:$0xff] %v1347
  %3292 = vst [vmem:[#allocation2 + $0xf70] sm:$0xff] %v1506
  %3293 = vst [vmem:[#allocation2 + $0xf78] sm:$0xff] %v1508
  %3294 = vst [vmem:[#allocation2 + $0xf80] sm:$0xff] %v1667
  %3295 = vst [vmem:[#allocation2 + $0xf88] sm:$0xff] %v1669
  %3296 = vst [vmem:[#allocation2 + $0xf90] sm:$0xff] %v1828
  %3297 = vst [vmem:[#allocation2 + $0xf98] sm:$0xff] %v1830
  %3298 = vst [vmem:[#allocation2 + $0xfa0] sm:$0xff] %v1989
  %3299 = vst [vmem:[#allocation2 + $0xfa8] sm:$0xff] %v1991
  %3300 = vst [vmem:[#allocation2 + $0xfb0] sm:$0xff] %v2150
  %3301 = vst [vmem:[#allocation2 + $0xfb8] sm:$0xff] %v2152
  %3302 = vst [vmem:[#allocation2 + $0xfc0] sm:$0xff] %v2311
  %3303 = vst [vmem:[#allocation2 + $0xfc8] sm:$0xff] %v2313
  %3304 = vst [vmem:[#allocation2 + $0xfd0] sm:$0xff] %v2472
  %3305 = vst [vmem:[#allocation2 + $0xfd8] sm:$0xff] %v2474
  %3306 = vst [vmem:[#allocation2 + $0xfe0] sm:$0xff] %v2633
  %3307 = vst [vmem:[#allocation2 + $0xfe8] sm:$0xff] %v2635
  %3308 = vst [vmem:[#allocation2 + $0xff0] sm:$0xff] %v2794
  %3309 = vst [vmem:[#allocation2 + $0xff8] sm:$0xff] %v2796
  %v3310 = vld [vmem:[%s4] sm:$0xff]
  %v3311 = vld [vmem:[%s4 + $0x8] sm:$0xff]
  %v3312 = vld [vmem:[%s4 + $0x10] sm:$0xff]
  %v3313 = vld [vmem:[%s4 + $0x18] sm:$0xff]
  %v3314 = vld [vmem:[%s4 + $0x20] sm:$0xff]
  %v3315 = vld [vmem:[%s4 + $0x28] sm:$0xff]
  %v3316 = vld [vmem:[%s4 + $0x30] sm:$0xff]
  %v3317 = vld [vmem:[%s4 + $0x38] sm:$0xff]
  %v3318 = vld [vmem:[%s4 + $0x40] sm:$0xff]
  %v3319 = vld [vmem:[%s4 + $0x48] sm:$0xff]
  %v3320 = vld [vmem:[%s4 + $0x50] sm:$0xff]
  %v3321 = vld [vmem:[%s4 + $0x58] sm:$0xff]
  %v3322 = vld [vmem:[%s4 + $0x60] sm:$0xff]
  %v3323 = vld [vmem:[%s4 + $0x68] sm:$0xff]
  %v3324 = vld [vmem:[%s4 + $0x70] sm:$0xff]
  %v3325 = vld [vmem:[%s4 + $0x78] sm:$0xff]
  %v3326 = vld [vmem:[%s1] sm:$0xff]
  %v3327 = vld [vmem:[%s1 + $0x8] sm:$0xff]
  %v3328 = vld [vmem:[%s1 + $0x10] sm:$0xff]
  %v3329 = vld [vmem:[%s1 + $0x18] sm:$0xff]
  %v3330 = vld [vmem:[%s1 + $0x20] sm:$0xff]
  %v3331 = vld [vmem:[%s1 + $0x28] sm:$0xff]
  %v3332 = vld [vmem:[%s1 + $0x30] sm:$0xff]
  %v3333 = vld [vmem:[%s1 + $0x38] sm:$0xff]
  %v3334 = vld [vmem:[%s1 + $0x40] sm:$0xff]
  %v3335 = vld [vmem:[%s1 + $0x48] sm:$0xff]
  %v3336 = vld [vmem:[%s1 + $0x50] sm:$0xff]
  %v3337 = vld [vmem:[%s1 + $0x58] sm:$0xff]
  %v3338 = vld [vmem:[%s1 + $0x60] sm:$0xff]
  %v3339 = vld [vmem:[%s1 + $0x68] sm:$0xff]
  %v3340 = vld [vmem:[%s1 + $0x70] sm:$0xff]
  %v3341 = vld [vmem:[%s1 + $0x78] sm:$0xff]
  %v3342 = vld [vmem:[%s2] sm:$0xff]
  %v3343 = vld [vmem:[%s2 + $0x8] sm:$0xff]
  %v3344 = vld [vmem:[%s2 + $0x10] sm:$0xff]
  %v3345 = vld [vmem:[%s2 + $0x18] sm:$0xff]
  %v3346 = vld [vmem:[%s2 + $0x20] sm:$0xff]
  %v3347 = vld [vmem:[%s2 + $0x28] sm:$0xff]
  %v3348 = vld [vmem:[%s2 + $0x30] sm:$0xff]
  %v3349 = vld [vmem:[%s2 + $0x38] sm:$0xff]
  %v3350 = vld [vmem:[%s2 + $0x40] sm:$0xff]
  %v3351 = vld [vmem:[%s2 + $0x48] sm:$0xff]
  %v3352 = vld [vmem:[%s2 + $0x50] sm:$0xff]
  %v3353 = vld [vmem:[%s2 + $0x58] sm:$0xff]
  %v3354 = vld [vmem:[%s2 + $0x60] sm:$0xff]
  %v3355 = vld [vmem:[%s2 + $0x68] sm:$0xff]
  %v3356 = vld [vmem:[%s2 + $0x70] sm:$0xff]
  %v3357 = vld [vmem:[%s2 + $0x78] sm:$0xff]
  %v3358 = vld [vmem:[#allocation2] sm:$0xff]
  %v3359 = vld [vmem:[#allocation2 + $0x8] sm:$0xff]
  %v3360 = vld [vmem:[#allocation2 + $0x10] sm:$0xff]
  %v3361 = vld [vmem:[#allocation2 + $0x18] sm:$0xff]
  %v3362 = vld [vmem:[#allocation2 + $0x100] sm:$0xff]
  %v3363 = vld [vmem:[#allocation2 + $0x108] sm:$0xff]
  %v3364 = vld [vmem:[#allocation2 + $0x110] sm:$0xff]
  %v3365 = vld [vmem:[#allocation2 + $0x118] sm:$0xff]
  %v3366 = vld [vmem:[#allocation2 + $0x200] sm:$0xff]
  %v3367 = vld [vmem:[#allocation2 + $0x208] sm:$0xff]
  %v3368 = vld [vmem:[#allocation2 + $0x210] sm:$0xff]
  %v3369 = vld [vmem:[#allocation2 + $0x218] sm:$0xff]
  %v3370 = vld [vmem:[#allocation2 + $0x300] sm:$0xff]
  %v3371 = vld [vmem:[#allocation2 + $0x308] sm:$0xff]
  %v3372 = vld [vmem:[#allocation2 + $0x310] sm:$0xff]
  %v3373 = vld [vmem:[#allocation2 + $0x318] sm:$0xff]
  %v3374 = vld [vmem:[#allocation2 + $0x400] sm:$0xff]
  %v3375 = vld [vmem:[#allocation2 + $0x408] sm:$0xff]
  %v3376 = vld [vmem:[#allocation2 + $0x410] sm:$0xff]
  %v3377 = vld [vmem:[#allocation2 + $0x418] sm:$0xff]
  %v3378 = vld [vmem:[#allocation2 + $0x500] sm:$0xff]
  %v3379 = vld [vmem:[#allocation2 + $0x508] sm:$0xff]
  %v3380 = vld [vmem:[#allocation2 + $0x510] sm:$0xff]
  %v3381 = vld [vmem:[#allocation2 + $0x518] sm:$0xff]
  %v3382 = vld [vmem:[#allocation2 + $0x600] sm:$0xff]
  %v3383 = vld [vmem:[#allocation2 + $0x608] sm:$0xff]
  %v3384 = vld [vmem:[#allocation2 + $0x610] sm:$0xff]
  %v3385 = vld [vmem:[#allocation2 + $0x618] sm:$0xff]
  %v3386 = vld [vmem:[#allocation2 + $0x700] sm:$0xff]
  %v3387 = vld [vmem:[#allocation2 + $0x708] sm:$0xff]
  %v3388 = vld [vmem:[#allocation2 + $0x710] sm:$0xff]
  %v3389 = vld [vmem:[#allocation2 + $0x718] sm:$0xff]
  %v3390 = vld [vmem:[#allocation2 + $0x800] sm:$0xff]
  %v3391 = vld [vmem:[#allocation2 + $0x808] sm:$0xff]
  %v3392 = vld [vmem:[#allocation2 + $0x810] sm:$0xff]
  %v3393 = vld [vmem:[#allocation2 + $0x818] sm:$0xff]
  %v3394 = vld [vmem:[#allocation2 + $0x900] sm:$0xff]
  %v3395 = vld [vmem:[#allocation2 + $0x908] sm:$0xff]
  %v3396 = vld [vmem:[#allocation2 + $0x910] sm:$0xff]
  %v3397 = vld [vmem:[#allocation2 + $0x918] sm:$0xff]
  %v3398 = vld [vmem:[#allocation2 + $0xa00] sm:$0xff]
  %v3399 = vld [vmem:[#allocation2 + $0xa08] sm:$0xff]
  %v3400 = vld [vmem:[#allocation2 + $0xa10] sm:$0xff]
  %v3401 = vld [vmem:[#allocation2 + $0xa18] sm:$0xff]
  %v3402 = vld [vmem:[#allocation2 + $0xb00] sm:$0xff]
  %v3403 = vld [vmem:[#allocation2 + $0xb08] sm:$0xff]
  %v3404 = vld [vmem:[#allocation2 + $0xb10] sm:$0xff]
  %v3405 = vld [vmem:[#allocation2 + $0xb18] sm:$0xff]
  %v3406 = vld [vmem:[#allocation2 + $0xc00] sm:$0xff]
  %v3407 = vld [vmem:[#allocation2 + $0xc08] sm:$0xff]
  %v3408 = vld [vmem:[#allocation2 + $0xc10] sm:$0xff]
  %v3409 = vld [vmem:[#allocation2 + $0xc18] sm:$0xff]
  %v3410 = vld [vmem:[#allocation2 + $0xd00] sm:$0xff]
  %v3411 = vld [vmem:[#allocation2 + $0xd08] sm:$0xff]
  %v3412 = vld [vmem:[#allocation2 + $0xd10] sm:$0xff]
  %v3413 = vld [vmem:[#allocation2 + $0xd18] sm:$0xff]
  %v3414 = vld [vmem:[#allocation2 + $0xe00] sm:$0xff]
  %v3415 = vld [vmem:[#allocation2 + $0xe08] sm:$0xff]
  %v3416 = vld [vmem:[#allocation2 + $0xe10] sm:$0xff]
  %v3417 = vld [vmem:[#allocation2 + $0xe18] sm:$0xff]
  %v3418 = vld [vmem:[#allocation2 + $0xf00] sm:$0xff]
  %v3419 = vld [vmem:[#allocation2 + $0xf08] sm:$0xff]
  %v3420 = vld [vmem:[#allocation2 + $0xf10] sm:$0xff]
  %v3421 = vld [vmem:[#allocation2 + $0xf18] sm:$0xff]
  %vm3422 = vcmask 261120
  %v3424 = vsel %vm3422, %v3310, 0
  %v3427 = vsel %vm3422, %v3311, 0
  %v3430 = vsel %vm3422, %v3312, 0
  %v3433 = vsel %vm3422, %v3313, 0
  %v3436 = vsel %vm3422, %v3314, 0
  %v3439 = vsel %vm3422, %v3315, 0
  %v3442 = vsel %vm3422, %v3316, 0
  %v3445 = vsel %vm3422, %v3317, 0
  %v3448 = vsel %vm3422, %v3318, 0
  %v3451 = vsel %vm3422, %v3319, 0
  %v3454 = vsel %vm3422, %v3320, 0
  %v3457 = vsel %vm3422, %v3321, 0
  %v3460 = vsel %vm3422, %v3322, 0
  %v3463 = vsel %vm3422, %v3323, 0
  %v3466 = vsel %vm3422, %v3324, 0
  %v3469 = vsel %vm3422, %v3325, 0
  %3471 = vmatprep.subr.mxu0 %v3327
  %3472 = vmatpush1.msra.mxu0 %v3326
  %3473 = vmatprep.subr.mxu0 %v3331
  %3474 = vmatpush1.msra.mxu0 %v3330
  %3475 = vmatprep.subr.mxu0 %v3335
  %3476 = vmatpush1.msra.mxu0 %v3334
  %3477 = vmatprep.subr.mxu0 %v3339
  %3478 = vmatpush1.msra.mxu0 %v3338
  %3479 = vmatprep.subr.mxu0 0.0
  %3480 = vmatpush1.msra.mxu0 0.0
  %3481 = vmatprep.subr.mxu0 0.0
  %3482 = vmatpush1.msra.mxu0 0.0
  %3483 = vmatprep.subr.mxu0 0.0
  %3484 = vmatpush1.msra.mxu0 0.0
  %3485 = vmatprep.subr.mxu0 0.0
  %3486 = vmatpush1.msra.mxu0 0.0
  %3487 = vmatprep.subr.mxu0 0.0
  %3488 = vmatpush1.msra.mxu0 0.0
  %3489 = vmatprep.subr.mxu0 0.0
  %3490 = vmatpush1.msra.mxu0 0.0
  %3491 = vmatprep.subr.mxu0 0.0
  %3492 = vmatpush1.msra.mxu0 0.0
  %3493 = vmatprep.subr.mxu0 0.0
  %3494 = vmatpush1.msra.mxu0 0.0
  %3495 = vmatprep.subr.mxu0 0.0
  %3496 = vmatpush1.msra.mxu0 0.0
  %3497 = vmatprep.subr.mxu0 0.0
  %3498 = vmatpush1.msra.mxu0 0.0
  %3499 = vmatprep.subr.mxu0 0.0
  %3500 = vmatpush1.msra.mxu0 0.0
  %3501 = vmatprep.subr.mxu0 0.0
  %3502 = vmatpush1.msra.mxu0 0.0
  %3503 = vmatprep.subr.mxu0 0.0
  %3504 = vmatpush1.msra.mxu0 0.0
  %3505 = vmatprep.subr.mxu0 0.0
  %3506 = vmatpush1.msra.mxu0 0.0
  %3507 = vmatprep.subr.mxu0 0.0
  %3508 = vmatpush1.msra.mxu0 0.0
  %3509 = vmatprep.subr.mxu0 0.0
  %3510 = vmatpush1.msra.mxu0 0.0
  %3511 = vmatprep.subr.mxu0 0.0
  %3512 = vmatpush1.msra.mxu0 0.0
  %3513 = vmatprep.subr.mxu0 0.0
  %3514 = vmatpush1.msra.mxu0 0.0
  %3515 = vmatprep.subr.mxu0 0.0
  %3516 = vmatpush1.msra.mxu0 0.0
  %3517 = vmatprep.subr.mxu0 0.0
  %3518 = vmatpush1.msra.mxu0 0.0
  %3519 = vmatprep.subr.mxu0 0.0
  %3520 = vmatpush1.msra.mxu0 0.0
  %3521 = vmatprep.subr.mxu0 0.0
  %3522 = vmatpush1.msra.mxu0 0.0
  %3523 = vmatprep.subr.mxu0 0.0
  %3524 = vmatpush1.msra.mxu0 0.0
  %3525 = vmatprep.subr.mxu0 0.0
  %3526 = vmatpush1.msra.mxu0 0.0
  %3527 = vmatprep.subr.mxu0 0.0
  %3528 = vmatpush1.msra.mxu0 0.0
  %3529 = vmatprep.subr.mxu0 0.0
  %3530 = vmatpush1.msra.mxu0 0.0
  %3531 = vmatprep.subr.mxu0 0.0
  %3532 = vmatpush1.msra.mxu0 0.0
  %3533 = vmatprep.subr.mxu0 0.0
  %3534 = vmatpush1.msra.mxu0 0.0
  %3535 = vmatprep.mubr.f32.mxu0 0.0
  %3536 = vmatmul.mubr.f32.gmra.mrb[0].mxu0 %v3424
  %v3537 = vpop.f32.mrb[0].mxu0
  %v3538 = vadd.f32 0.0, %v3537
  %v3539 = vpop.f32.mrb[0].mxu0
  %v3540 = vadd.f32 0.0, %v3539
  %3541 = vmatprep.mubr.f32.mxu0 0.0
  %3542 = vmatmul.mubr.f32.gmra.mrb[0].mxu0 %v3427
  %v3543 = vpop.f32.mrb[0].mxu0
  %v3544 = vadd.f32 0.0, %v3543
  %v3545 = vpop.f32.mrb[0].mxu0
  %v3546 = vadd.f32 0.0, %v3545
  %3547 = vmatprep.mubr.f32.mxu0 0.0
  %3548 = vmatmul.mubr.f32.gmra.mrb[0].mxu0 %v3430
  %v3549 = vpop.f32.mrb[0].mxu0
  %v3550 = vadd.f32 0.0, %v3549
  %v3551 = vpop.f32.mrb[0].mxu0
  %v3552 = vadd.f32 0.0, %v3551
  %3553 = vmatprep.mubr.f32.mxu0 0.0
  %3554 = vmatmul.mubr.f32.gmra.mrb[0].mxu0 %v3433
  %v3555 = vpop.f32.mrb[0].mxu0
  %v3556 = vadd.f32 0.0, %v3555
  %v3557 = vpop.f32.mrb[0].mxu0
  %v3558 = vadd.f32 0.0, %v3557
  %3559 = vmatprep.mubr.f32.mxu0 0.0
  %3560 = vmatmul.mubr.f32.gmra.mrb[0].mxu0 %v3436
  %v3561 = vpop.f32.mrb[0].mxu0
  %v3562 = vadd.f32 0.0, %v3561
  %v3563 = vpop.f32.mrb[0].mxu0
  %v3564 = vadd.f32 0.0, %v3563
  %3565 = vmatprep.mubr.f32.mxu0 0.0
  %3566 = vmatmul.mubr.f32.gmra.mrb[0].mxu0 %v3439
  %v3567 = vpop.f32.mrb[0].mxu0
  %v3568 = vadd.f32 0.0, %v3567
  %v3569 = vpop.f32.mrb[0].mxu0
  %v3570 = vadd.f32 0.0, %v3569
  %3571 = vmatprep.mubr.f32.mxu0 0.0
  %3572 = vmatmul.mubr.f32.gmra.mrb[0].mxu0 %v3442
  %v3573 = vpop.f32.mrb[0].mxu0
  %v3574 = vadd.f32 0.0, %v3573
  %v3575 = vpop.f32.mrb[0].mxu0
  %v3576 = vadd.f32 0.0, %v3575
  %3577 = vmatprep.mubr.f32.mxu0 0.0
  %3578 = vmatmul.mubr.f32.gmra.mrb[0].mxu0 %v3445
  %v3579 = vpop.f32.mrb[0].mxu0
  %v3580 = vadd.f32 0.0, %v3579
  %v3581 = vpop.f32.mrb[0].mxu0
  %v3582 = vadd.f32 0.0, %v3581
  %3583 = vmatprep.mubr.f32.mxu0 0.0
  %3584 = vmatmul.mubr.f32.gmra.mrb[0].mxu0 %v3448
  %v3585 = vpop.f32.mrb[0].mxu0
  %v3586 = vadd.f32 0.0, %v3585
  %v3587 = vpop.f32.mrb[0].mxu0
  %v3588 = vadd.f32 0.0, %v3587
  %3589 = vmatprep.mubr.f32.mxu0 0.0
  %3590 = vmatmul.mubr.f32.gmra.mrb[0].mxu0 %v3451
  %v3591 = vpop.f32.mrb[0].mxu0
  %v3592 = vadd.f32 0.0, %v3591
  %v3593 = vpop.f32.mrb[0].mxu0
  %v3594 = vadd.f32 0.0, %v3593
  %3595 = vmatprep.mubr.f32.mxu0 0.0
  %3596 = vmatmul.mubr.f32.gmra.mrb[0].mxu0 %v3454
  %v3597 = vpop.f32.mrb[0].mxu0
  %v3598 = vadd.f32 0.0, %v3597
  %v3599 = vpop.f32.mrb[0].mxu0
  %v3600 = vadd.f32 0.0, %v3599
  %3601 = vmatprep.mubr.f32.mxu0 0.0
  %3602 = vmatmul.mubr.f32.gmra.mrb[0].mxu0 %v3457
  %v3603 = vpop.f32.mrb[0].mxu0
  %v3604 = vadd.f32 0.0, %v3603
  %v3605 = vpop.f32.mrb[0].mxu0
  %v3606 = vadd.f32 0.0, %v3605
  %3607 = vmatprep.mubr.f32.mxu0 0.0
  %3608 = vmatmul.mubr.f32.gmra.mrb[0].mxu0 %v3460
  %v3609 = vpop.f32.mrb[0].mxu0
  %v3610 = vadd.f32 0.0, %v3609
  %v3611 = vpop.f32.mrb[0].mxu0
  %v3612 = vadd.f32 0.0, %v3611
  %3613 = vmatprep.mubr.f32.mxu0 0.0
  %3614 = vmatmul.mubr.f32.gmra.mrb[0].mxu0 %v3463
  %v3615 = vpop.f32.mrb[0].mxu0
  %v3616 = vadd.f32 0.0, %v3615
  %v3617 = vpop.f32.mrb[0].mxu0
  %v3618 = vadd.f32 0.0, %v3617
  %3619 = vmatprep.mubr.f32.mxu0 0.0
  %3620 = vmatmul.mubr.f32.gmra.mrb[0].mxu0 %v3466
  %v3621 = vpop.f32.mrb[0].mxu0
  %v3622 = vadd.f32 0.0, %v3621
  %v3623 = vpop.f32.mrb[0].mxu0
  %v3624 = vadd.f32 0.0, %v3623
  %3625 = vmatprep.mubr.f32.mxu0 0.0
  %3626 = vmatmul.mubr.f32.gmra.mrb[0].mxu0 %v3469
  %v3627 = vpop.f32.mrb[0].mxu0
  %v3628 = vadd.f32 0.0, %v3627
  %v3629 = vpop.f32.mrb[0].mxu0
  %v3630 = vadd.f32 0.0, %v3629
  %3631 = vdwg.mxu0
  %3632 = vmatprep.subr.mxu0 %v3329
  %3633 = vmatpush1.msra.mxu0 %v3328
  %3634 = vmatprep.subr.mxu0 %v3333
  %3635 = vmatpush1.msra.mxu0 %v3332
  %3636 = vmatprep.subr.mxu0 %v3337
  %3637 = vmatpush1.msra.mxu0 %v3336
  %3638 = vmatprep.subr.mxu0 %v3341
  %3639 = vmatpush1.msra.mxu0 %v3340
  %3640 = vmatprep.subr.mxu0 0.0
  %3641 = vmatpush1.msra.mxu0 0.0
  %3642 = vmatprep.subr.mxu0 0.0
  %3643 = vmatpush1.msra.mxu0 0.0
  %3644 = vmatprep.subr.mxu0 0.0
  %3645 = vmatpush1.msra.mxu0 0.0
  %3646 = vmatprep.subr.mxu0 0.0
  %3647 = vmatpush1.msra.mxu0 0.0
  %3648 = vmatprep.subr.mxu0 0.0
  %3649 = vmatpush1.msra.mxu0 0.0
  %3650 = vmatprep.subr.mxu0 0.0
  %3651 = vmatpush1.msra.mxu0 0.0
  %3652 = vmatprep.subr.mxu0 0.0
  %3653 = vmatpush1.msra.mxu0 0.0
  %3654 = vmatprep.subr.mxu0 0.0
  %3655 = vmatpush1.msra.mxu0 0.0
  %3656 = vmatprep.subr.mxu0 0.0
  %3657 = vmatpush1.msra.mxu0 0.0
  %3658 = vmatprep.subr.mxu0 0.0
  %3659 = vmatpush1.msra.mxu0 0.0
  %3660 = vmatprep.subr.mxu0 0.0
  %3661 = vmatpush1.msra.mxu0 0.0
  %3662 = vmatprep.subr.mxu0 0.0
  %3663 = vmatpush1.msra.mxu0 0.0
  %3664 = vmatprep.subr.mxu0 0.0
  %3665 = vmatpush1.msra.mxu0 0.0
  %3666 = vmatprep.subr.mxu0 0.0
  %3667 = vmatpush1.msra.mxu0 0.0
  %3668 = vmatprep.subr.mxu0 0.0
  %3669 = vmatpush1.msra.mxu0 0.0
  %3670 = vmatprep.subr.mxu0 0.0
  %3671 = vmatpush1.msra.mxu0 0.0
  %3672 = vmatprep.subr.mxu0 0.0
  %3673 = vmatpush1.msra.mxu0 0.0
  %3674 = vmatprep.subr.mxu0 0.0
  %3675 = vmatpush1.msra.mxu0 0.0
  %3676 = vmatprep.subr.mxu0 0.0
  %3677 = vmatpush1.msra.mxu0 0.0
  %3678 = vmatprep.subr.mxu0 0.0
  %3679 = vmatpush1.msra.mxu0 0.0
  %3680 = vmatprep.subr.mxu0 0.0
  %3681 = vmatpush1.msra.mxu0 0.0
  %3682 = vmatprep.subr.mxu0 0.0
  %3683 = vmatpush1.msra.mxu0 0.0
  %3684 = vmatprep.subr.mxu0 0.0
  %3685 = vmatpush1.msra.mxu0 0.0
  %3686 = vmatprep.subr.mxu0 0.0
  %3687 = vmatpush1.msra.mxu0 0.0
  %3688 = vmatprep.subr.mxu0 0.0
  %3689 = vmatpush1.msra.mxu0 0.0
  %3690 = vmatprep.subr.mxu0 0.0
  %3691 = vmatpush1.msra.mxu0 0.0
  %3692 = vmatprep.subr.mxu0 0.0
  %3693 = vmatpush1.msra.mxu0 0.0
  %3694 = vmatprep.subr.mxu0 0.0
  %3695 = vmatpush1.msra.mxu0 0.0
  %3696 = vmatprep.mubr.f32.mxu0 0.0
  %3697 = vmatmul.mubr.f32.gmra.mrb[0].mxu0 %v3424
  %v3698 = vpop.f32.mrb[0].mxu0
  %v3699 = vadd.f32 0.0, %v3698
  %v3700 = vpop.f32.mrb[0].mxu0
  %v3701 = vadd.f32 0.0, %v3700
  %3702 = vmatprep.mubr.f32.mxu0 0.0
  %3703 = vmatmul.mubr.f32.gmra.mrb[0].mxu0 %v3427
  %v3704 = vpop.f32.mrb[0].mxu0
  %v3705 = vadd.f32 0.0, %v3704
  %v3706 = vpop.f32.mrb[0].mxu0
  %v3707 = vadd.f32 0.0, %v3706
  %3708 = vmatprep.mubr.f32.mxu0 0.0
  %3709 = vmatmul.mubr.f32.gmra.mrb[0].mxu0 %v3430
  %v3710 = vpop.f32.mrb[0].mxu0
  %v3711 = vadd.f32 0.0, %v3710
  %v3712 = vpop.f32.mrb[0].mxu0
  %v3713 = vadd.f32 0.0, %v3712
  %3714 = vmatprep.mubr.f32.mxu0 0.0
  %3715 = vmatmul.mubr.f32.gmra.mrb[0].mxu0 %v3433
  %v3716 = vpop.f32.mrb[0].mxu0
  %v3717 = vadd.f32 0.0, %v3716
  %v3718 = vpop.f32.mrb[0].mxu0
  %v3719 = vadd.f32 0.0, %v3718
  %3720 = vmatprep.mubr.f32.mxu0 0.0
  %3721 = vmatmul.mubr.f32.gmra.mrb[0].mxu0 %v3436
  %v3722 = vpop.f32.mrb[0].mxu0
  %v3723 = vadd.f32 0.0, %v3722
  %v3724 = vpop.f32.mrb[0].mxu0
  %v3725 = vadd.f32 0.0, %v3724
  %3726 = vmatprep.mubr.f32.mxu0 0.0
  %3727 = vmatmul.mubr.f32.gmra.mrb[0].mxu0 %v3439
  %v3728 = vpop.f32.mrb[0].mxu0
  %v3729 = vadd.f32 0.0, %v3728
  %v3730 = vpop.f32.mrb[0].mxu0
  %v3731 = vadd.f32 0.0, %v3730
  %3732 = vmatprep.mubr.f32.mxu0 0.0
  %3733 = vmatmul.mubr.f32.gmra.mrb[0].mxu0 %v3442
  %v3734 = vpop.f32.mrb[0].mxu0
  %v3735 = vadd.f32 0.0, %v3734
  %v3736 = vpop.f32.mrb[0].mxu0
  %v3737 = vadd.f32 0.0, %v3736
  %3738 = vmatprep.mubr.f32.mxu0 0.0
  %3739 = vmatmul.mubr.f32.gmra.mrb[0].mxu0 %v3445
  %v3740 = vpop.f32.mrb[0].mxu0
  %v3741 = vadd.f32 0.0, %v3740
  %v3742 = vpop.f32.mrb[0].mxu0
  %v3743 = vadd.f32 0.0, %v3742
  %3744 = vmatprep.mubr.f32.mxu0 0.0
  %3745 = vmatmul.mubr.f32.gmra.mrb[0].mxu0 %v3448
  %v3746 = vpop.f32.mrb[0].mxu0
  %v3747 = vadd.f32 0.0, %v3746
  %v3748 = vpop.f32.mrb[0].mxu0
  %v3749 = vadd.f32 0.0, %v3748
  %3750 = vmatprep.mubr.f32.mxu0 0.0
  %3751 = vmatmul.mubr.f32.gmra.mrb[0].mxu0 %v3451
  %v3752 = vpop.f32.mrb[0].mxu0
  %v3753 = vadd.f32 0.0, %v3752
  %v3754 = vpop.f32.mrb[0].mxu0
  %v3755 = vadd.f32 0.0, %v3754
  %3756 = vmatprep.mubr.f32.mxu0 0.0
  %3757 = vmatmul.mubr.f32.gmra.mrb[0].mxu0 %v3454
  %v3758 = vpop.f32.mrb[0].mxu0
  %v3759 = vadd.f32 0.0, %v3758
  %v3760 = vpop.f32.mrb[0].mxu0
  %v3761 = vadd.f32 0.0, %v3760
  %3762 = vmatprep.mubr.f32.mxu0 0.0
  %3763 = vmatmul.mubr.f32.gmra.mrb[0].mxu0 %v3457
  %v3764 = vpop.f32.mrb[0].mxu0
  %v3765 = vadd.f32 0.0, %v3764
  %v3766 = vpop.f32.mrb[0].mxu0
  %v3767 = vadd.f32 0.0, %v3766
  %3768 = vmatprep.mubr.f32.mxu0 0.0
  %3769 = vmatmul.mubr.f32.gmra.mrb[0].mxu0 %v3460
  %v3770 = vpop.f32.mrb[0].mxu0
  %v3771 = vadd.f32 0.0, %v3770
  %v3772 = vpop.f32.mrb[0].mxu0
  %v3773 = vadd.f32 0.0, %v3772
  %3774 = vmatprep.mubr.f32.mxu0 0.0
  %3775 = vmatmul.mubr.f32.gmra.mrb[0].mxu0 %v3463
  %v3776 = vpop.f32.mrb[0].mxu0
  %v3777 = vadd.f32 0.0, %v3776
  %v3778 = vpop.f32.mrb[0].mxu0
  %v3779 = vadd.f32 0.0, %v3778
  %3780 = vmatprep.mubr.f32.mxu0 0.0
  %3781 = vmatmul.mubr.f32.gmra.mrb[0].mxu0 %v3466
  %v3782 = vpop.f32.mrb[0].mxu0
  %v3783 = vadd.f32 0.0, %v3782
  %v3784 = vpop.f32.mrb[0].mxu0
  %v3785 = vadd.f32 0.0, %v3784
  %3786 = vmatprep.mubr.f32.mxu0 0.0
  %3787 = vmatmul.mubr.f32.gmra.mrb[0].mxu0 %v3469
  %v3788 = vpop.f32.mrb[0].mxu0
  %v3789 = vadd.f32 0.0, %v3788
  %v3790 = vpop.f32.mrb[0].mxu0
  %v3791 = vadd.f32 0.0, %v3790
  %3792 = vdwg.mxu0
  %v3793 = vadd.f32 %v3358, %v3538
  %v3794 = vadd.f32 %v3359, %v3540
  %v3795 = vadd.f32 %v3360, %v3699
  %v3796 = vadd.f32 %v3361, %v3701
  %v3797 = vadd.f32 %v3362, %v3544
  %v3798 = vadd.f32 %v3363, %v3546
  %v3799 = vadd.f32 %v3364, %v3705
  %v3800 = vadd.f32 %v3365, %v3707
  %v3801 = vadd.f32 %v3366, %v3550
  %v3802 = vadd.f32 %v3367, %v3552
  %v3803 = vadd.f32 %v3368, %v3711
  %v3804 = vadd.f32 %v3369, %v3713
  %v3805 = vadd.f32 %v3370, %v3556
  %v3806 = vadd.f32 %v3371, %v3558
  %v3807 = vadd.f32 %v3372, %v3717
  %v3808 = vadd.f32 %v3373, %v3719
  %v3809 = vadd.f32 %v3374, %v3562
  %v3810 = vadd.f32 %v3375, %v3564
  %v3811 = vadd.f32 %v3376, %v3723
  %v3812 = vadd.f32 %v3377, %v3725
  %v3813 = vadd.f32 %v3378, %v3568
  %v3814 = vadd.f32 %v3379, %v3570
  %v3815 = vadd.f32 %v3380, %v3729
  %v3816 = vadd.f32 %v3381, %v3731
  %v3817 = vadd.f32 %v3382, %v3574
  %v3818 = vadd.f32 %v3383, %v3576
  %v3819 = vadd.f32 %v3384, %v3735
  %v3820 = vadd.f32 %v3385, %v3737
  %v3821 = vadd.f32 %v3386, %v3580
  %v3822 = vadd.f32 %v3387, %v3582
  %v3823 = vadd.f32 %v3388, %v3741
  %v3824 = vadd.f32 %v3389, %v3743
  %v3825 = vadd.f32 %v3390, %v3586
  %v3826 = vadd.f32 %v3391, %v3588
  %v3827 = vadd.f32 %v3392, %v3747
  %v3828 = vadd.f32 %v3393, %v3749
  %v3829 = vadd.f32 %v3394, %v3592
  %v3830 = vadd.f32 %v3395, %v3594
  %v3831 = vadd.f32 %v3396, %v3753
  %v3832 = vadd.f32 %v3397, %v3755
  %v3833 = vadd.f32 %v3398, %v3598
  %v3834 = vadd.f32 %v3399, %v3600
  %v3835 = vadd.f32 %v3400, %v3759
  %v3836 = vadd.f32 %v3401, %v3761
  %v3837 = vadd.f32 %v3402, %v3604
  %v3838 = vadd.f32 %v3403, %v3606
  %v3839 = vadd.f32 %v3404, %v3765
  %v3840 = vadd.f32 %v3405, %v3767
  %v3841 = vadd.f32 %v3406, %v3610
  %v3842 = vadd.f32 %v3407, %v3612
  %v3843 = vadd.f32 %v3408, %v3771
  %v3844 = vadd.f32 %v3409, %v3773
  %v3845 = vadd.f32 %v3410, %v3616
  %v3846 = vadd.f32 %v3411, %v3618
  %v3847 = vadd.f32 %v3412, %v3777
  %v3848 = vadd.f32 %v3413, %v3779
  %v3849 = vadd.f32 %v3414, %v3622
  %v3850 = vadd.f32 %v3415, %v3624
  %v3851 = vadd.f32 %v3416, %v3783
  %v3852 = vadd.f32 %v3417, %v3785
  %v3853 = vadd.f32 %v3418, %v3628
  %v3854 = vadd.f32 %v3419, %v3630
  %v3855 = vadd.f32 %v3420, %v3789
  %v3856 = vadd.f32 %v3421, %v3791
  %v3857 = vxor.u32 %v3793, 2147483648
  %v3858 = vxor.u32 %v3794, 2147483648
  %v3859 = vxor.u32 %v3795, 2147483648
  %v3860 = vxor.u32 %v3796, 2147483648
  %v3861 = vxor.u32 %v3797, 2147483648
  %v3862 = vxor.u32 %v3798, 2147483648
  %v3863 = vxor.u32 %v3799, 2147483648
  %v3864 = vxor.u32 %v3800, 2147483648
  %v3865 = vxor.u32 %v3801, 2147483648
  %v3866 = vxor.u32 %v3802, 2147483648
  %v3867 = vxor.u32 %v3803, 2147483648
  %v3868 = vxor.u32 %v3804, 2147483648
  %v3869 = vxor.u32 %v3805, 2147483648
  %v3870 = vxor.u32 %v3806, 2147483648
  %v3871 = vxor.u32 %v3807, 2147483648
  %v3872 = vxor.u32 %v3808, 2147483648
  %v3873 = vxor.u32 %v3809, 2147483648
  %v3874 = vxor.u32 %v3810, 2147483648
  %v3875 = vxor.u32 %v3811, 2147483648
  %v3876 = vxor.u32 %v3812, 2147483648
  %v3877 = vxor.u32 %v3813, 2147483648
  %v3878 = vxor.u32 %v3814, 2147483648
  %v3879 = vxor.u32 %v3815, 2147483648
  %v3880 = vxor.u32 %v3816, 2147483648
  %v3881 = vxor.u32 %v3817, 2147483648
  %v3882 = vxor.u32 %v3818, 2147483648
  %v3883 = vxor.u32 %v3819, 2147483648
  %v3884 = vxor.u32 %v3820, 2147483648
  %v3885 = vxor.u32 %v3821, 2147483648
  %v3886 = vxor.u32 %v3822, 2147483648
  %v3887 = vxor.u32 %v3823, 2147483648
  %v3888 = vxor.u32 %v3824, 2147483648
  %v3889 = vxor.u32 %v3825, 2147483648
  %v3890 = vxor.u32 %v3826, 2147483648
  %v3891 = vxor.u32 %v3827, 2147483648
  %v3892 = vxor.u32 %v3828, 2147483648
  %v3893 = vxor.u32 %v3829, 2147483648
  %v3894 = vxor.u32 %v3830, 2147483648
  %v3895 = vxor.u32 %v3831, 2147483648
  %v3896 = vxor.u32 %v3832, 2147483648
  %v3897 = vxor.u32 %v3833, 2147483648
  %v3898 = vxor.u32 %v3834, 2147483648
  %v3899 = vxor.u32 %v3835, 2147483648
  %v3900 = vxor.u32 %v3836, 2147483648
  %v3901 = vxor.u32 %v3837, 2147483648
  %v3902 = vxor.u32 %v3838, 2147483648
  %v3903 = vxor.u32 %v3839, 2147483648
  %v3904 = vxor.u32 %v3840, 2147483648
  %v3905 = vmul.f32 %v3857, 1.442695
  %v3906 = vpow.pop %v3905
  %v3907 = vmul.f32 %v3858, 1.442695
  %v3908 = vpow.pop %v3907
  %v3909 = vmul.f32 %v3859, 1.442695
  %v3910 = vpow.pop %v3909
  %v3911 = vmul.f32 %v3860, 1.442695
  %v3912 = vpow.pop %v3911
  %v3913 = vmul.f32 %v3861, 1.442695
  %v3914 = vpow.pop %v3913
  %v3915 = vmul.f32 %v3862, 1.442695
  %v3916 = vpow.pop %v3915
  %v3917 = vmul.f32 %v3863, 1.442695
  %v3918 = vpow.pop %v3917
  %v3919 = vmul.f32 %v3864, 1.442695
  %v3920 = vpow.pop %v3919
  %v3921 = vmul.f32 %v3865, 1.442695
  %v3922 = vpow.pop %v3921
  %v3923 = vmul.f32 %v3866, 1.442695
  %v3924 = vpow.pop %v3923
  %v3925 = vmul.f32 %v3867, 1.442695
  %v3926 = vpow.pop %v3925
  %v3927 = vmul.f32 %v3868, 1.442695
  %v3928 = vpow.pop %v3927
  %v3929 = vmul.f32 %v3869, 1.442695
  %v3930 = vpow.pop %v3929
  %v3931 = vmul.f32 %v3870, 1.442695
  %v3932 = vpow.pop %v3931
  %v3933 = vmul.f32 %v3871, 1.442695
  %v3934 = vpow.pop %v3933
  %v3935 = vmul.f32 %v3872, 1.442695
  %v3936 = vpow.pop %v3935
  %v3937 = vmul.f32 %v3873, 1.442695
  %v3938 = vpow.pop %v3937
  %v3939 = vmul.f32 %v3874, 1.442695
  %v3940 = vpow.pop %v3939
  %v3941 = vmul.f32 %v3875, 1.442695
  %v3942 = vpow.pop %v3941
  %v3943 = vmul.f32 %v3876, 1.442695
  %v3944 = vpow.pop %v3943
  %v3945 = vmul.f32 %v3877, 1.442695
  %v3946 = vpow.pop %v3945
  %v3947 = vmul.f32 %v3878, 1.442695
  %v3948 = vpow.pop %v3947
  %v3949 = vmul.f32 %v3879, 1.442695
  %v3950 = vpow.pop %v3949
  %v3951 = vmul.f32 %v3880, 1.442695
  %v3952 = vpow.pop %v3951
  %v3953 = vmul.f32 %v3881, 1.442695
  %v3954 = vpow.pop %v3953
  %v3955 = vmul.f32 %v3882, 1.442695
  %v3956 = vpow.pop %v3955
  %v3957 = vmul.f32 %v3883, 1.442695
  %v3958 = vpow.pop %v3957
  %v3959 = vmul.f32 %v3884, 1.442695
  %v3960 = vpow.pop %v3959
  %v3961 = vmul.f32 %v3885, 1.442695
  %v3962 = vpow.pop %v3961
  %v3963 = vmul.f32 %v3886, 1.442695
  %v3964 = vpow.pop %v3963
  %v3965 = vmul.f32 %v3887, 1.442695
  %v3966 = vpow.pop %v3965
  %v3967 = vmul.f32 %v3888, 1.442695
  %v3968 = vpow.pop %v3967
  %v3969 = vmul.f32 %v3889, 1.442695
  %v3970 = vpow.pop %v3969
  %v3971 = vmul.f32 %v3890, 1.442695
  %v3972 = vpow.pop %v3971
  %v3973 = vmul.f32 %v3891, 1.442695
  %v3974 = vpow.pop %v3973
  %v3975 = vmul.f32 %v3892, 1.442695
  %v3976 = vpow.pop %v3975
  %v3977 = vmul.f32 %v3893, 1.442695
  %v3978 = vpow.pop %v3977
  %v3979 = vmul.f32 %v3894, 1.442695
  %v3980 = vpow.pop %v3979
  %v3981 = vmul.f32 %v3895, 1.442695
  %v3982 = vpow.pop %v3981
  %v3983 = vmul.f32 %v3896, 1.442695
  %v3984 = vpow.pop %v3983
  %v3985 = vmul.f32 %v3897, 1.442695
  %v3986 = vpow.pop %v3985
  %v3987 = vmul.f32 %v3898, 1.442695
  %v3988 = vpow.pop %v3987
  %v3989 = vmul.f32 %v3899, 1.442695
  %v3990 = vpow.pop %v3989
  %v3991 = vmul.f32 %v3900, 1.442695
  %v3992 = vpow.pop %v3991
  %v3993 = vmul.f32 %v3901, 1.442695
  %v3994 = vpow.pop %v3993
  %v3995 = vmul.f32 %v3902, 1.442695
  %v3996 = vpow.pop %v3995
  %v3997 = vmul.f32 %v3903, 1.442695
  %v3998 = vpow.pop %v3997
  %v3999 = vmul.f32 %v3904, 1.442695
  %v4000 = vpow.pop %v3999
  %v4001 = vadd.f32 %v3906, 1.0
  %v4002 = vadd.f32 %v3908, 1.0
  %v4003 = vadd.f32 %v3910, 1.0
  %v4004 = vadd.f32 %v3912, 1.0
  %v4005 = vadd.f32 %v3914, 1.0
  %v4006 = vadd.f32 %v3916, 1.0
  %v4007 = vadd.f32 %v3918, 1.0
  %v4008 = vadd.f32 %v3920, 1.0
  %v4009 = vadd.f32 %v3922, 1.0
  %v4010 = vadd.f32 %v3924, 1.0
  %v4011 = vadd.f32 %v3926, 1.0
  %v4012 = vadd.f32 %v3928, 1.0
  %v4013 = vadd.f32 %v3930, 1.0
  %v4014 = vadd.f32 %v3932, 1.0
  %v4015 = vadd.f32 %v3934, 1.0
  %v4016 = vadd.f32 %v3936, 1.0
  %v4017 = vadd.f32 %v3938, 1.0
  %v4018 = vadd.f32 %v3940, 1.0
  %v4019 = vadd.f32 %v3942, 1.0
  %v4020 = vadd.f32 %v3944, 1.0
  %v4021 = vadd.f32 %v3946, 1.0
  %v4022 = vadd.f32 %v3948, 1.0
  %v4023 = vadd.f32 %v3950, 1.0
  %v4024 = vadd.f32 %v3952, 1.0
  %v4025 = vadd.f32 %v3954, 1.0
  %v4026 = vadd.f32 %v3956, 1.0
  %v4027 = vadd.f32 %v3958, 1.0
  %v4028 = vadd.f32 %v3960, 1.0
  %v4029 = vadd.f32 %v3962, 1.0
  %v4030 = vadd.f32 %v3964, 1.0
  %v4031 = vadd.f32 %v3966, 1.0
  %v4032 = vadd.f32 %v3968, 1.0
  %v4033 = vadd.f32 %v3970, 1.0
  %v4034 = vadd.f32 %v3972, 1.0
  %v4035 = vadd.f32 %v3974, 1.0
  %v4036 = vadd.f32 %v3976, 1.0
  %v4037 = vadd.f32 %v3978, 1.0
  %v4038 = vadd.f32 %v3980, 1.0
  %v4039 = vadd.f32 %v3982, 1.0
  %v4040 = vadd.f32 %v3984, 1.0
  %v4041 = vadd.f32 %v3986, 1.0
  %v4042 = vadd.f32 %v3988, 1.0
  %v4043 = vadd.f32 %v3990, 1.0
  %v4044 = vadd.f32 %v3992, 1.0
  %v4045 = vadd.f32 %v3994, 1.0
  %v4046 = vadd.f32 %v3996, 1.0
  %v4047 = vadd.f32 %v3998, 1.0
  %v4048 = vadd.f32 %v4000, 1.0
  %v4049 = vrcp.pop %v4001
  %v4050 = vmul.f32 1.0, %v4049
  %v4051 = vrcp.pop %v4002
  %v4052 = vmul.f32 1.0, %v4051
  %v4053 = vrcp.pop %v4003
  %v4054 = vmul.f32 1.0, %v4053
  %v4055 = vrcp.pop %v4004
  %v4056 = vmul.f32 1.0, %v4055
  %v4057 = vrcp.pop %v4005
  %v4058 = vmul.f32 1.0, %v4057
  %v4059 = vrcp.pop %v4006
  %v4060 = vmul.f32 1.0, %v4059
  %v4061 = vrcp.pop %v4007
  %v4062 = vmul.f32 1.0, %v4061
  %v4063 = vrcp.pop %v4008
  %v4064 = vmul.f32 1.0, %v4063
  %v4065 = vrcp.pop %v4009
  %v4066 = vmul.f32 1.0, %v4065
  %v4067 = vrcp.pop %v4010
  %v4068 = vmul.f32 1.0, %v4067
  %v4069 = vrcp.pop %v4011
  %v4070 = vmul.f32 1.0, %v4069
  %v4071 = vrcp.pop %v4012
  %v4072 = vmul.f32 1.0, %v4071
  %v4073 = vrcp.pop %v4013
  %v4074 = vmul.f32 1.0, %v4073
  %v4075 = vrcp.pop %v4014
  %v4076 = vmul.f32 1.0, %v4075
  %v4077 = vrcp.pop %v4015
  %v4078 = vmul.f32 1.0, %v4077
  %v4079 = vrcp.pop %v4016
  %v4080 = vmul.f32 1.0, %v4079
  %v4081 = vrcp.pop %v4017
  %v4082 = vmul.f32 1.0, %v4081
  %v4083 = vrcp.pop %v4018
  %v4084 = vmul.f32 1.0, %v4083
  %v4085 = vrcp.pop %v4019
  %v4086 = vmul.f32 1.0, %v4085
  %v4087 = vrcp.pop %v4020
  %v4088 = vmul.f32 1.0, %v4087
  %v4089 = vrcp.pop %v4021
  %v4090 = vmul.f32 1.0, %v4089
  %v4091 = vrcp.pop %v4022
  %v4092 = vmul.f32 1.0, %v4091
  %v4093 = vrcp.pop %v4023
  %v4094 = vmul.f32 1.0, %v4093
  %v4095 = vrcp.pop %v4024
  %v4096 = vmul.f32 1.0, %v4095
  %v4097 = vrcp.pop %v4025
  %v4098 = vmul.f32 1.0, %v4097
  %v4099 = vrcp.pop %v4026
  %v4100 = vmul.f32 1.0, %v4099
  %v4101 = vrcp.pop %v4027
  %v4102 = vmul.f32 1.0, %v4101
  %v4103 = vrcp.pop %v4028
  %v4104 = vmul.f32 1.0, %v4103
  %v4105 = vrcp.pop %v4029
  %v4106 = vmul.f32 1.0, %v4105
  %v4107 = vrcp.pop %v4030
  %v4108 = vmul.f32 1.0, %v4107
  %v4109 = vrcp.pop %v4031
  %v4110 = vmul.f32 1.0, %v4109
  %v4111 = vrcp.pop %v4032
  %v4112 = vmul.f32 1.0, %v4111
  %v4113 = vrcp.pop %v4033
  %v4114 = vmul.f32 1.0, %v4113
  %v4115 = vrcp.pop %v4034
  %v4116 = vmul.f32 1.0, %v4115
  %v4117 = vrcp.pop %v4035
  %v4118 = vmul.f32 1.0, %v4117
  %v4119 = vrcp.pop %v4036
  %v4120 = vmul.f32 1.0, %v4119
  %v4121 = vrcp.pop %v4037
  %v4122 = vmul.f32 1.0, %v4121
  %v4123 = vrcp.pop %v4038
  %v4124 = vmul.f32 1.0, %v4123
  %v4125 = vrcp.pop %v4039
  %v4126 = vmul.f32 1.0, %v4125
  %v4127 = vrcp.pop %v4040
  %v4128 = vmul.f32 1.0, %v4127
  %v4129 = vrcp.pop %v4041
  %v4130 = vmul.f32 1.0, %v4129
  %v4131 = vrcp.pop %v4042
  %v4132 = vmul.f32 1.0, %v4131
  %v4133 = vrcp.pop %v4043
  %v4134 = vmul.f32 1.0, %v4133
  %v4135 = vrcp.pop %v4044
  %v4136 = vmul.f32 1.0, %v4135
  %v4137 = vrcp.pop %v4045
  %v4138 = vmul.f32 1.0, %v4137
  %v4139 = vrcp.pop %v4046
  %v4140 = vmul.f32 1.0, %v4139
  %v4141 = vrcp.pop %v4047
  %v4142 = vmul.f32 1.0, %v4141
  %v4143 = vrcp.pop %v4048
  %v4144 = vmul.f32 1.0, %v4143
  %v4145 = vtanh.pop %v3841
  %v4146 = vtanh.pop %v3842
  %v4147 = vtanh.pop %v3843
  %v4148 = vtanh.pop %v3844
  %v4149 = vtanh.pop %v3845
  %v4150 = vtanh.pop %v3846
  %v4151 = vtanh.pop %v3847
  %v4152 = vtanh.pop %v3848
  %v4153 = vtanh.pop %v3849
  %v4154 = vtanh.pop %v3850
  %v4155 = vtanh.pop %v3851
  %v4156 = vtanh.pop %v3852
  %v4157 = vtanh.pop %v3853
  %v4158 = vtanh.pop %v3854
  %v4159 = vtanh.pop %v3855
  %v4160 = vtanh.pop %v3856
  %v4161 = vmul.f32 %v4082, %v3342
  %v4162 = vmul.f32 %v4084, %v3343
  %v4163 = vmul.f32 %v4086, %v3344
  %v4164 = vmul.f32 %v4088, %v3345
  %v4165 = vmul.f32 %v4090, %v3346
  %v4166 = vmul.f32 %v4092, %v3347
  %v4167 = vmul.f32 %v4094, %v3348
  %v4168 = vmul.f32 %v4096, %v3349
  %v4169 = vmul.f32 %v4098, %v3350
  %v4170 = vmul.f32 %v4100, %v3351
  %v4171 = vmul.f32 %v4102, %v3352
  %v4172 = vmul.f32 %v4104, %v3353
  %v4173 = vmul.f32 %v4106, %v3354
  %v4174 = vmul.f32 %v4108, %v3355
  %v4175 = vmul.f32 %v4110, %v3356
  %v4176 = vmul.f32 %v4112, %v3357
  %v4177 = vmul.f32 %v4050, %v4145
  %v4178 = vmul.f32 %v4052, %v4146
  %v4179 = vmul.f32 %v4054, %v4147
  %v4180 = vmul.f32 %v4056, %v4148
  %v4181 = vmul.f32 %v4058, %v4149
  %v4182 = vmul.f32 %v4060, %v4150
  %v4183 = vmul.f32 %v4062, %v4151
  %v4184 = vmul.f32 %v4064, %v4152
  %v4185 = vmul.f32 %v4066, %v4153
  %v4186 = vmul.f32 %v4068, %v4154
  %v4187 = vmul.f32 %v4070, %v4155
  %v4188 = vmul.f32 %v4072, %v4156
  %v4189 = vmul.f32 %v4074, %v4157
  %v4190 = vmul.f32 %v4076, %v4158
  %v4191 = vmul.f32 %v4078, %v4159
  %v4192 = vmul.f32 %v4080, %v4160
  %v4193 = vadd.f32 %v4161, %v4177
  %v4194 = vadd.f32 %v4162, %v4178
  %v4195 = vadd.f32 %v4163, %v4179
  %v4196 = vadd.f32 %v4164, %v4180
  %v4197 = vadd.f32 %v4165, %v4181
  %v4198 = vadd.f32 %v4166, %v4182
  %v4199 = vadd.f32 %v4167, %v4183
  %v4200 = vadd.f32 %v4168, %v4184
  %v4201 = vadd.f32 %v4169, %v4185
  %v4202 = vadd.f32 %v4170, %v4186
  %v4203 = vadd.f32 %v4171, %v4187
  %v4204 = vadd.f32 %v4172, %v4188
  %v4205 = vadd.f32 %v4173, %v4189
  %v4206 = vadd.f32 %v4174, %v4190
  %v4207 = vadd.f32 %v4175, %v4191
  %v4208 = vadd.f32 %v4176, %v4192
  %v4209 = vtanh.pop %v4193
  %v4210 = vtanh.pop %v4194
  %v4211 = vtanh.pop %v4195
  %v4212 = vtanh.pop %v4196
  %v4213 = vtanh.pop %v4197
  %v4214 = vtanh.pop %v4198
  %v4215 = vtanh.pop %v4199
  %v4216 = vtanh.pop %v4200
  %v4217 = vtanh.pop %v4201
  %v4218 = vtanh.pop %v4202
  %v4219 = vtanh.pop %v4203
  %v4220 = vtanh.pop %v4204
  %v4221 = vtanh.pop %v4205
  %v4222 = vtanh.pop %v4206
  %v4223 = vtanh.pop %v4207
  %v4224 = vtanh.pop %v4208
  %v4225 = vmul.f32 %v4114, %v4209
  %v4226 = vmul.f32 %v4116, %v4210
  %v4227 = vmul.f32 %v4118, %v4211
  %v4228 = vmul.f32 %v4120, %v4212
  %v4229 = vmul.f32 %v4122, %v4213
  %v4230 = vmul.f32 %v4124, %v4214
  %v4231 = vmul.f32 %v4126, %v4215
  %v4232 = vmul.f32 %v4128, %v4216
  %v4233 = vmul.f32 %v4130, %v4217
  %v4234 = vmul.f32 %v4132, %v4218
  %v4235 = vmul.f32 %v4134, %v4219
  %v4236 = vmul.f32 %v4136, %v4220
  %v4237 = vmul.f32 %v4138, %v4221
  %v4238 = vmul.f32 %v4140, %v4222
  %v4239 = vmul.f32 %v4142, %v4223
  %v4240 = vmul.f32 %v4144, %v4224
  %4241 = vst [vmem:[#allocation3] sm:$0xff] %v4225
  %4242 = vst [vmem:[#allocation3 + $0x8] sm:$0xff] %v4226
  %4243 = vst [vmem:[#allocation3 + $0x10] sm:$0xff] %v4227
  %4244 = vst [vmem:[#allocation3 + $0x18] sm:$0xff] %v4228
  %4245 = vst [vmem:[#allocation3 + $0x20] sm:$0xff] %v4229
  %4246 = vst [vmem:[#allocation3 + $0x28] sm:$0xff] %v4230
  %4247 = vst [vmem:[#allocation3 + $0x30] sm:$0xff] %v4231
  %4248 = vst [vmem:[#allocation3 + $0x38] sm:$0xff] %v4232
  %4249 = vst [vmem:[#allocation3 + $0x40] sm:$0xff] %v4233
  %4250 = vst [vmem:[#allocation3 + $0x48] sm:$0xff] %v4234
  %4251 = vst [vmem:[#allocation3 + $0x50] sm:$0xff] %v4235
  %4252 = vst [vmem:[#allocation3 + $0x58] sm:$0xff] %v4236
  %4253 = vst [vmem:[#allocation3 + $0x60] sm:$0xff] %v4237
  %4254 = vst [vmem:[#allocation3 + $0x68] sm:$0xff] %v4238
  %4255 = vst [vmem:[#allocation3 + $0x70] sm:$0xff] %v4239
  %4256 = vst [vmem:[#allocation3 + $0x78] sm:$0xff] %v4240
  %v4257 = vld [vmem:[#allocation2 + $0x20] sm:$0xff]
  %v4258 = vld [vmem:[#allocation2 + $0x28] sm:$0xff]
  %v4259 = vld [vmem:[#allocation2 + $0x30] sm:$0xff]
  %v4260 = vld [vmem:[#allocation2 + $0x38] sm:$0xff]
  %v4261 = vld [vmem:[#allocation2 + $0x120] sm:$0xff]
  %v4262 = vld [vmem:[#allocation2 + $0x128] sm:$0xff]
  %v4263 = vld [vmem:[#allocation2 + $0x130] sm:$0xff]
  %v4264 = vld [vmem:[#allocation2 + $0x138] sm:$0xff]
  %v4265 = vld [vmem:[#allocation2 + $0x220] sm:$0xff]
  %v4266 = vld [vmem:[#allocation2 + $0x228] sm:$0xff]
  %v4267 = vld [vmem:[#allocation2 + $0x230] sm:$0xff]
  %v4268 = vld [vmem:[#allocation2 + $0x238] sm:$0xff]
  %v4269 = vld [vmem:[#allocation2 + $0x320] sm:$0xff]
  %v4270 = vld [vmem:[#allocation2 + $0x328] sm:$0xff]
  %v4271 = vld [vmem:[#allocation2 + $0x330] sm:$0xff]
  %v4272 = vld [vmem:[#allocation2 + $0x338] sm:$0xff]
  %v4273 = vld [vmem:[#allocation2 + $0x420] sm:$0xff]
  %v4274 = vld [vmem:[#allocation2 + $0x428] sm:$0xff]
  %v4275 = vld [vmem:[#allocation2 + $0x430] sm:$0xff]
  %v4276 = vld [vmem:[#allocation2 + $0x438] sm:$0xff]
  %v4277 = vld [vmem:[#allocation2 + $0x520] sm:$0xff]
  %v4278 = vld [vmem:[#allocation2 + $0x528] sm:$0xff]
  %v4279 = vld [vmem:[#allocation2 + $0x530] sm:$0xff]
  %v4280 = vld [vmem:[#allocation2 + $0x538] sm:$0xff]
  %v4281 = vld [vmem:[#allocation2 + $0x620] sm:$0xff]
  %v4282 = vld [vmem:[#allocation2 + $0x628] sm:$0xff]
  %v4283 = vld [vmem:[#allocation2 + $0x630] sm:$0xff]
  %v4284 = vld [vmem:[#allocation2 + $0x638] sm:$0xff]
  %v4285 = vld [vmem:[#allocation2 + $0x720] sm:$0xff]
  %v4286 = vld [vmem:[#allocation2 + $0x728] sm:$0xff]
  %v4287 = vld [vmem:[#allocation2 + $0x730] sm:$0xff]
  %v4288 = vld [vmem:[#allocation2 + $0x738] sm:$0xff]
  %v4289 = vld [vmem:[#allocation2 + $0x820] sm:$0xff]
  %v4290 = vld [vmem:[#allocation2 + $0x828] sm:$0xff]
  %v4291 = vld [vmem:[#allocation2 + $0x830] sm:$0xff]
  %v4292 = vld [vmem:[#allocation2 + $0x838] sm:$0xff]
  %v4293 = vld [vmem:[#allocation2 + $0x920] sm:$0xff]
  %v4294 = vld [vmem:[#allocation2 + $0x928] sm:$0xff]
  %v4295 = vld [vmem:[#allocation2 + $0x930] sm:$0xff]
  %v4296 = vld [vmem:[#allocation2 + $0x938] sm:$0xff]
  %v4297 = vld [vmem:[#allocation2 + $0xa20] sm:$0xff]
  %v4298 = vld [vmem:[#allocation2 + $0xa28] sm:$0xff]
  %v4299 = vld [vmem:[#allocation2 + $0xa30] sm:$0xff]
  %v4300 = vld [vmem:[#allocation2 + $0xa38] sm:$0xff]
  %v4301 = vld [vmem:[#allocation2 + $0xb20] sm:$0xff]
  %v4302 = vld [vmem:[#allocation2 + $0xb28] sm:$0xff]
  %v4303 = vld [vmem:[#allocation2 + $0xb30] sm:$0xff]
  %v4304 = vld [vmem:[#allocation2 + $0xb38] sm:$0xff]
  %v4305 = vld [vmem:[#allocation2 + $0xc20] sm:$0xff]
  %v4306 = vld [vmem:[#allocation2 + $0xc28] sm:$0xff]
  %v4307 = vld [vmem:[#allocation2 + $0xc30] sm:$0xff]
  %v4308 = vld [vmem:[#allocation2 + $0xc38] sm:$0xff]
  %v4309 = vld [vmem:[#allocation2 + $0xd20] sm:$0xff]
  %v4310 = vld [vmem:[#allocation2 + $0xd28] sm:$0xff]
  %v4311 = vld [vmem:[#allocation2 + $0xd30] sm:$0xff]
  %v4312 = vld [vmem:[#allocation2 + $0xd38] sm:$0xff]
  %v4313 = vld [vmem:[#allocation2 + $0xe20] sm:$0xff]
  %v4314 = vld [vmem:[#allocation2 + $0xe28] sm:$0xff]
  %v4315 = vld [vmem:[#allocation2 + $0xe30] sm:$0xff]
  %v4316 = vld [vmem:[#allocation2 + $0xe38] sm:$0xff]
  %v4317 = vld [vmem:[#allocation2 + $0xf20] sm:$0xff]
  %v4318 = vld [vmem:[#allocation2 + $0xf28] sm:$0xff]
  %v4319 = vld [vmem:[#allocation2 + $0xf30] sm:$0xff]
  %v4320 = vld [vmem:[#allocation2 + $0xf38] sm:$0xff]
  %4321 = vmatprep.subr.mxu0 %v4226
  %4322 = vmatpush1.msra.mxu0 %v4225
  %4323 = vmatprep.subr.mxu0 %v4230
  %4324 = vmatpush1.msra.mxu0 %v4229
  %4325 = vmatprep.subr.mxu0 %v4234
  %4326 = vmatpush1.msra.mxu0 %v4233
  %4327 = vmatprep.subr.mxu0 %v4238
  %4328 = vmatpush1.msra.mxu0 %v4237
  %4329 = vmatprep.subr.mxu0 0.0
  %4330 = vmatpush1.msra.mxu0 0.0
  %4331 = vmatprep.subr.mxu0 0.0
  %4332 = vmatpush1.msra.mxu0 0.0
  %4333 = vmatprep.subr.mxu0 0.0
  %4334 = vmatpush1.msra.mxu0 0.0
  %4335 = vmatprep.subr.mxu0 0.0
  %4336 = vmatpush1.msra.mxu0 0.0
  %4337 = vmatprep.subr.mxu0 0.0
  %4338 = vmatpush1.msra.mxu0 0.0
  %4339 = vmatprep.subr.mxu0 0.0
  %4340 = vmatpush1.msra.mxu0 0.0
  %4341 = vmatprep.subr.mxu0 0.0
  %4342 = vmatpush1.msra.mxu0 0.0
  %4343 = vmatprep.subr.mxu0 0.0
  %4344 = vmatpush1.msra.mxu0 0.0
  %4345 = vmatprep.subr.mxu0 0.0
  %4346 = vmatpush1.msra.mxu0 0.0
  %4347 = vmatprep.subr.mxu0 0.0
  %4348 = vmatpush1.msra.mxu0 0.0
  %4349 = vmatprep.subr.mxu0 0.0
  %4350 = vmatpush1.msra.mxu0 0.0
  %4351 = vmatprep.subr.mxu0 0.0
  %4352 = vmatpush1.msra.mxu0 0.0
  %4353 = vmatprep.subr.mxu0 0.0
  %4354 = vmatpush1.msra.mxu0 0.0
  %4355 = vmatprep.subr.mxu0 0.0
  %4356 = vmatpush1.msra.mxu0 0.0
  %4357 = vmatprep.subr.mxu0 0.0
  %4358 = vmatpush1.msra.mxu0 0.0
  %4359 = vmatprep.subr.mxu0 0.0
  %4360 = vmatpush1.msra.mxu0 0.0
  %4361 = vmatprep.subr.mxu0 0.0
  %4362 = vmatpush1.msra.mxu0 0.0
  %4363 = vmatprep.subr.mxu0 0.0
  %4364 = vmatpush1.msra.mxu0 0.0
  %4365 = vmatprep.subr.mxu0 0.0
  %4366 = vmatpush1.msra.mxu0 0.0
  %4367 = vmatprep.subr.mxu0 0.0
  %4368 = vmatpush1.msra.mxu0 0.0
  %4369 = vmatprep.subr.mxu0 0.0
  %4370 = vmatpush1.msra.mxu0 0.0
  %4371 = vmatprep.subr.mxu0 0.0
  %4372 = vmatpush1.msra.mxu0 0.0
  %4373 = vmatprep.subr.mxu0 0.0
  %4374 = vmatpush1.msra.mxu0 0.0
  %4375 = vmatprep.subr.mxu0 0.0
  %4376 = vmatpush1.msra.mxu0 0.0
  %4377 = vmatprep.subr.mxu0 0.0
  %4378 = vmatpush1.msra.mxu0 0.0
  %4379 = vmatprep.subr.mxu0 0.0
  %4380 = vmatpush1.msra.mxu0 0.0
  %4381 = vmatprep.subr.mxu0 0.0
  %4382 = vmatpush1.msra.mxu0 0.0
  %4383 = vmatprep.subr.mxu0 0.0
  %4384 = vmatpush1.msra.mxu0 0.0
  %4385 = vmatprep.mubr.f32.mxu0 0.0
  %4386 = vmatmul.mubr.f32.gmra.mrb[0].mxu0 %v3424
  %v4387 = vpop.f32.mrb[0].mxu0
  %v4388 = vadd.f32 0.0, %v4387
  %v4389 = vpop.f32.mrb[0].mxu0
  %v4390 = vadd.f32 0.0, %v4389
  %4391 = vmatprep.mubr.f32.mxu0 0.0
  %4392 = vmatmul.mubr.f32.gmra.mrb[0].mxu0 %v3427
  %v4393 = vpop.f32.mrb[0].mxu0
  %v4394 = vadd.f32 0.0, %v4393
  %v4395 = vpop.f32.mrb[0].mxu0
  %v4396 = vadd.f32 0.0, %v4395
  %4397 = vmatprep.mubr.f32.mxu0 0.0
  %4398 = vmatmul.mubr.f32.gmra.mrb[0].mxu0 %v3430
  %v4399 = vpop.f32.mrb[0].mxu0
  %v4400 = vadd.f32 0.0, %v4399
  %v4401 = vpop.f32.mrb[0].mxu0
  %v4402 = vadd.f32 0.0, %v4401
  %4403 = vmatprep.mubr.f32.mxu0 0.0
  %4404 = vmatmul.mubr.f32.gmra.mrb[0].mxu0 %v3433
  %v4405 = vpop.f32.mrb[0].mxu0
  %v4406 = vadd.f32 0.0, %v4405
  %v4407 = vpop.f32.mrb[0].mxu0
  %v4408 = vadd.f32 0.0, %v4407
  %4409 = vmatprep.mubr.f32.mxu0 0.0
  %4410 = vmatmul.mubr.f32.gmra.mrb[0].mxu0 %v3436
  %v4411 = vpop.f32.mrb[0].mxu0
  %v4412 = vadd.f32 0.0, %v4411
  %v4413 = vpop.f32.mrb[0].mxu0
  %v4414 = vadd.f32 0.0, %v4413
  %4415 = vmatprep.mubr.f32.mxu0 0.0
  %4416 = vmatmul.mubr.f32.gmra.mrb[0].mxu0 %v3439
  %v4417 = vpop.f32.mrb[0].mxu0
  %v4418 = vadd.f32 0.0, %v4417
  %v4419 = vpop.f32.mrb[0].mxu0
  %v4420 = vadd.f32 0.0, %v4419
  %4421 = vmatprep.mubr.f32.mxu0 0.0
  %4422 = vmatmul.mubr.f32.gmra.mrb[0].mxu0 %v3442
  %v4423 = vpop.f32.mrb[0].mxu0
  %v4424 = vadd.f32 0.0, %v4423
  %v4425 = vpop.f32.mrb[0].mxu0
  %v4426 = vadd.f32 0.0, %v4425
  %4427 = vmatprep.mubr.f32.mxu0 0.0
  %4428 = vmatmul.mubr.f32.gmra.mrb[0].mxu0 %v3445
  %v4429 = vpop.f32.mrb[0].mxu0
  %v4430 = vadd.f32 0.0, %v4429
  %v4431 = vpop.f32.mrb[0].mxu0
  %v4432 = vadd.f32 0.0, %v4431
  %4433 = vmatprep.mubr.f32.mxu0 0.0
  %4434 = vmatmul.mubr.f32.gmra.mrb[0].mxu0 %v3448
  %v4435 = vpop.f32.mrb[0].mxu0
  %v4436 = vadd.f32 0.0, %v4435
  %v4437 = vpop.f32.mrb[0].mxu0
  %v4438 = vadd.f32 0.0, %v4437
  %4439 = vmatprep.mubr.f32.mxu0 0.0
  %4440 = vmatmul.mubr.f32.gmra.mrb[0].mxu0 %v3451
  %v4441 = vpop.f32.mrb[0].mxu0
  %v4442 = vadd.f32 0.0, %v4441
  %v4443 = vpop.f32.mrb[0].mxu0
  %v4444 = vadd.f32 0.0, %v4443
  %4445 = vmatprep.mubr.f32.mxu0 0.0
  %4446 = vmatmul.mubr.f32.gmra.mrb[0].mxu0 %v3454
  %v4447 = vpop.f32.mrb[0].mxu0
  %v4448 = vadd.f32 0.0, %v4447
  %v4449 = vpop.f32.mrb[0].mxu0
  %v4450 = vadd.f32 0.0, %v4449
  %4451 = vmatprep.mubr.f32.mxu0 0.0
  %4452 = vmatmul.mubr.f32.gmra.mrb[0].mxu0 %v3457
  %v4453 = vpop.f32.mrb[0].mxu0
  %v4454 = vadd.f32 0.0, %v4453
  %v4455 = vpop.f32.mrb[0].mxu0
  %v4456 = vadd.f32 0.0, %v4455
  %4457 = vmatprep.mubr.f32.mxu0 0.0
  %4458 = vmatmul.mubr.f32.gmra.mrb[0].mxu0 %v3460
  %v4459 = vpop.f32.mrb[0].mxu0
  %v4460 = vadd.f32 0.0, %v4459
  %v4461 = vpop.f32.mrb[0].mxu0
  %v4462 = vadd.f32 0.0, %v4461
  %4463 = vmatprep.mubr.f32.mxu0 0.0
  %4464 = vmatmul.mubr.f32.gmra.mrb[0].mxu0 %v3463
  %v4465 = vpop.f32.mrb[0].mxu0
  %v4466 = vadd.f32 0.0, %v4465
  %v4467 = vpop.f32.mrb[0].mxu0
  %v4468 = vadd.f32 0.0, %v4467
  %4469 = vmatprep.mubr.f32.mxu0 0.0
  %4470 = vmatmul.mubr.f32.gmra.mrb[0].mxu0 %v3466
  %v4471 = vpop.f32.mrb[0].mxu0
  %v4472 = vadd.f32 0.0, %v4471
  %v4473 = vpop.f32.mrb[0].mxu0
  %v4474 = vadd.f32 0.0, %v4473
  %4475 = vmatprep.mubr.f32.mxu0 0.0
  %4476 = vmatmul.mubr.f32.gmra.mrb[0].mxu0 %v3469
  %v4477 = vpop.f32.mrb[0].mxu0
  %v4478 = vadd.f32 0.0, %v4477
  %v4479 = vpop.f32.mrb[0].mxu0
  %v4480 = vadd.f32 0.0, %v4479
  %4481 = vdwg.mxu0
  %4482 = vmatprep.subr.mxu0 %v4228
  %4483 = vmatpush1.msra.mxu0 %v4227
  %4484 = vmatprep.subr.mxu0 %v4232
  %4485 = vmatpush1.msra.mxu0 %v4231
  %4486 = vmatprep.subr.mxu0 %v4236
  %4487 = vmatpush1.msra.mxu0 %v4235
  %4488 = vmatprep.subr.mxu0 %v4240
  %4489 = vmatpush1.msra.mxu0 %v4239
  %4490 = vmatprep.subr.mxu0 0.0
  %4491 = vmatpush1.msra.mxu0 0.0
  %4492 = vmatprep.subr.mxu0 0.0
  %4493 = vmatpush1.msra.mxu0 0.0
  %4494 = vmatprep.subr.mxu0 0.0
  %4495 = vmatpush1.msra.mxu0 0.0
  %4496 = vmatprep.subr.mxu0 0.0
  %4497 = vmatpush1.msra.mxu0 0.0
  %4498 = vmatprep.subr.mxu0 0.0
  %4499 = vmatpush1.msra.mxu0 0.0
  %4500 = vmatprep.subr.mxu0 0.0
  %4501 = vmatpush1.msra.mxu0 0.0
  %4502 = vmatprep.subr.mxu0 0.0
  %4503 = vmatpush1.msra.mxu0 0.0
  %4504 = vmatprep.subr.mxu0 0.0
  %4505 = vmatpush1.msra.mxu0 0.0
  %4506 = vmatprep.subr.mxu0 0.0
  %4507 = vmatpush1.msra.mxu0 0.0
  %4508 = vmatprep.subr.mxu0 0.0
  %4509 = vmatpush1.msra.mxu0 0.0
  %4510 = vmatprep.subr.mxu0 0.0
  %4511 = vmatpush1.msra.mxu0 0.0
  %4512 = vmatprep.subr.mxu0 0.0
  %4513 = vmatpush1.msra.mxu0 0.0
  %4514 = vmatprep.subr.mxu0 0.0
  %4515 = vmatpush1.msra.mxu0 0.0
  %4516 = vmatprep.subr.mxu0 0.0
  %4517 = vmatpush1.msra.mxu0 0.0
  %4518 = vmatprep.subr.mxu0 0.0
  %4519 = vmatpush1.msra.mxu0 0.0
  %4520 = vmatprep.subr.mxu0 0.0
  %4521 = vmatpush1.msra.mxu0 0.0
  %4522 = vmatprep.subr.mxu0 0.0
  %4523 = vmatpush1.msra.mxu0 0.0
  %4524 = vmatprep.subr.mxu0 0.0
  %4525 = vmatpush1.msra.mxu0 0.0
  %4526 = vmatprep.subr.mxu0 0.0
  %4527 = vmatpush1.msra.mxu0 0.0
  %4528 = vmatprep.subr.mxu0 0.0
  %4529 = vmatpush1.msra.mxu0 0.0
  %4530 = vmatprep.subr.mxu0 0.0
  %4531 = vmatpush1.msra.mxu0 0.0
  %4532 = vmatprep.subr.mxu0 0.0
  %4533 = vmatpush1.msra.mxu0 0.0
  %4534 = vmatprep.subr.mxu0 0.0
  %4535 = vmatpush1.msra.mxu0 0.0
  %4536 = vmatprep.subr.mxu0 0.0
  %4537 = vmatpush1.msra.mxu0 0.0
  %4538 = vmatprep.subr.mxu0 0.0
  %4539 = vmatpush1.msra.mxu0 0.0
  %4540 = vmatprep.subr.mxu0 0.0
  %4541 = vmatpush1.msra.mxu0 0.0
  %4542 = vmatprep.subr.mxu0 0.0
  %4543 = vmatpush1.msra.mxu0 0.0
  %4544 = vmatprep.subr.mxu0 0.0
  %4545 = vmatpush1.msra.mxu0 0.0
  %4546 = vmatprep.mubr.f32.mxu0 0.0
  %4547 = vmatmul.mubr.f32.gmra.mrb[0].mxu0 %v3424
  %v4548 = vpop.f32.mrb[0].mxu0
  %v4549 = vadd.f32 0.0, %v4548
  %v4550 = vpop.f32.mrb[0].mxu0
  %v4551 = vadd.f32 0.0, %v4550
  %4552 = vmatprep.mubr.f32.mxu0 0.0
  %4553 = vmatmul.mubr.f32.gmra.mrb[0].mxu0 %v3427
  %v4554 = vpop.f32.mrb[0].mxu0
  %v4555 = vadd.f32 0.0, %v4554
  %v4556 = vpop.f32.mrb[0].mxu0
  %v4557 = vadd.f32 0.0, %v4556
  %4558 = vmatprep.mubr.f32.mxu0 0.0
  %4559 = vmatmul.mubr.f32.gmra.mrb[0].mxu0 %v3430
  %v4560 = vpop.f32.mrb[0].mxu0
  %v4561 = vadd.f32 0.0, %v4560
  %v4562 = vpop.f32.mrb[0].mxu0
  %v4563 = vadd.f32 0.0, %v4562
  %4564 = vmatprep.mubr.f32.mxu0 0.0
  %4565 = vmatmul.mubr.f32.gmra.mrb[0].mxu0 %v3433
  %v4566 = vpop.f32.mrb[0].mxu0
  %v4567 = vadd.f32 0.0, %v4566
  %v4568 = vpop.f32.mrb[0].mxu0
  %v4569 = vadd.f32 0.0, %v4568
  %4570 = vmatprep.mubr.f32.mxu0 0.0
  %4571 = vmatmul.mubr.f32.gmra.mrb[0].mxu0 %v3436
  %v4572 = vpop.f32.mrb[0].mxu0
  %v4573 = vadd.f32 0.0, %v4572
  %v4574 = vpop.f32.mrb[0].mxu0
  %v4575 = vadd.f32 0.0, %v4574
  %4576 = vmatprep.mubr.f32.mxu0 0.0
  %4577 = vmatmul.mubr.f32.gmra.mrb[0].mxu0 %v3439
  %v4578 = vpop.f32.mrb[0].mxu0
  %v4579 = vadd.f32 0.0, %v4578
  %v4580 = vpop.f32.mrb[0].mxu0
  %v4581 = vadd.f32 0.0, %v4580
  %4582 = vmatprep.mubr.f32.mxu0 0.0
  %4583 = vmatmul.mubr.f32.gmra.mrb[0].mxu0 %v3442
  %v4584 = vpop.f32.mrb[0].mxu0
  %v4585 = vadd.f32 0.0, %v4584
  %v4586 = vpop.f32.mrb[0].mxu0
  %v4587 = vadd.f32 0.0, %v4586
  %4588 = vmatprep.mubr.f32.mxu0 0.0
  %4589 = vmatmul.mubr.f32.gmra.mrb[0].mxu0 %v3445
  %v4590 = vpop.f32.mrb[0].mxu0
  %v4591 = vadd.f32 0.0, %v4590
  %v4592 = vpop.f32.mrb[0].mxu0
  %v4593 = vadd.f32 0.0, %v4592
  %4594 = vmatprep.mubr.f32.mxu0 0.0
  %4595 = vmatmul.mubr.f32.gmra.mrb[0].mxu0 %v3448
  %v4596 = vpop.f32.mrb[0].mxu0
  %v4597 = vadd.f32 0.0, %v4596
  %v4598 = vpop.f32.mrb[0].mxu0
  %v4599 = vadd.f32 0.0, %v4598
  %4600 = vmatprep.mubr.f32.mxu0 0.0
  %4601 = vmatmul.mubr.f32.gmra.mrb[0].mxu0 %v3451
  %v4602 = vpop.f32.mrb[0].mxu0
  %v4603 = vadd.f32 0.0, %v4602
  %v4604 = vpop.f32.mrb[0].mxu0
  %v4605 = vadd.f32 0.0, %v4604
  %4606 = vmatprep.mubr.f32.mxu0 0.0
  %4607 = vmatmul.mubr.f32.gmra.mrb[0].mxu0 %v3454
  %v4608 = vpop.f32.mrb[0].mxu0
  %v4609 = vadd.f32 0.0, %v4608
  %v4610 = vpop.f32.mrb[0].mxu0
  %v4611 = vadd.f32 0.0, %v4610
  %4612 = vmatprep.mubr.f32.mxu0 0.0
  %4613 = vmatmul.mubr.f32.gmra.mrb[0].mxu0 %v3457
  %v4614 = vpop.f32.mrb[0].mxu0
  %v4615 = vadd.f32 0.0, %v4614
  %v4616 = vpop.f32.mrb[0].mxu0
  %v4617 = vadd.f32 0.0, %v4616
  %4618 = vmatprep.mubr.f32.mxu0 0.0
  %4619 = vmatmul.mubr.f32.gmra.mrb[0].mxu0 %v3460
  %v4620 = vpop.f32.mrb[0].mxu0
  %v4621 = vadd.f32 0.0, %v4620
  %v4622 = vpop.f32.mrb[0].mxu0
  %v4623 = vadd.f32 0.0, %v4622
  %4624 = vmatprep.mubr.f32.mxu0 0.0
  %4625 = vmatmul.mubr.f32.gmra.mrb[0].mxu0 %v3463
  %v4626 = vpop.f32.mrb[0].mxu0
  %v4627 = vadd.f32 0.0, %v4626
  %v4628 = vpop.f32.mrb[0].mxu0
  %v4629 = vadd.f32 0.0, %v4628
  %4630 = vmatprep.mubr.f32.mxu0 0.0
  %4631 = vmatmul.mubr.f32.gmra.mrb[0].mxu0 %v3466
  %v4632 = vpop.f32.mrb[0].mxu0
  %v4633 = vadd.f32 0.0, %v4632
  %v4634 = vpop.f32.mrb[0].mxu0
  %v4635 = vadd.f32 0.0, %v4634
  %4636 = vmatprep.mubr.f32.mxu0 0.0
  %4637 = vmatmul.mubr.f32.gmra.mrb[0].mxu0 %v3469
  %v4638 = vpop.f32.mrb[0].mxu0
  %v4639 = vadd.f32 0.0, %v4638
  %v4640 = vpop.f32.mrb[0].mxu0
  %v4641 = vadd.f32 0.0, %v4640
  %4642 = vdwg.mxu0
  %v4643 = vadd.f32 %v4257, %v4388
  %v4644 = vadd.f32 %v4258, %v4390
  %v4645 = vadd.f32 %v4259, %v4549
  %v4646 = vadd.f32 %v4260, %v4551
  %v4647 = vadd.f32 %v4261, %v4394
  %v4648 = vadd.f32 %v4262, %v4396
  %v4649 = vadd.f32 %v4263, %v4555
  %v4650 = vadd.f32 %v4264, %v4557
  %v4651 = vadd.f32 %v4265, %v4400
  %v4652 = vadd.f32 %v4266, %v4402
  %v4653 = vadd.f32 %v4267, %v4561
  %v4654 = vadd.f32 %v4268, %v4563
  %v4655 = vadd.f32 %v4269, %v4406
  %v4656 = vadd.f32 %v4270, %v4408
  %v4657 = vadd.f32 %v4271, %v4567
  %v4658 = vadd.f32 %v4272, %v4569
  %v4659 = vadd.f32 %v4273, %v4412
  %v4660 = vadd.f32 %v4274, %v4414
  %v4661 = vadd.f32 %v4275, %v4573
  %v4662 = vadd.f32 %v4276, %v4575
  %v4663 = vadd.f32 %v4277, %v4418
  %v4664 = vadd.f32 %v4278, %v4420
  %v4665 = vadd.f32 %v4279, %v4579
  %v4666 = vadd.f32 %v4280, %v4581
  %v4667 = vadd.f32 %v4281, %v4424
  %v4668 = vadd.f32 %v4282, %v4426
  %v4669 = vadd.f32 %v4283, %v4585
  %v4670 = vadd.f32 %v4284, %v4587
  %v4671 = vadd.f32 %v4285, %v4430
  %v4672 = vadd.f32 %v4286, %v4432
  %v4673 = vadd.f32 %v4287, %v4591
  %v4674 = vadd.f32 %v4288, %v4593
  %v4675 = vadd.f32 %v4289, %v4436
  %v4676 = vadd.f32 %v4290, %v4438
  %v4677 = vadd.f32 %v4291, %v4597
  %v4678 = vadd.f32 %v4292, %v4599
  %v4679 = vadd.f32 %v4293, %v4442
  %v4680 = vadd.f32 %v4294, %v4444
  %v4681 = vadd.f32 %v4295, %v4603
  %v4682 = vadd.f32 %v4296, %v4605
  %v4683 = vadd.f32 %v4297, %v4448
  %v4684 = vadd.f32 %v4298, %v4450
  %v4685 = vadd.f32 %v4299, %v4609
  %v4686 = vadd.f32 %v4300, %v4611
  %v4687 = vadd.f32 %v4301, %v4454
  %v4688 = vadd.f32 %v4302, %v4456
  %v4689 = vadd.f32 %v4303, %v4615
  %v4690 = vadd.f32 %v4304, %v4617
  %v4691 = vadd.f32 %v4305, %v4460
  %v4692 = vadd.f32 %v4306, %v4462
  %v4693 = vadd.f32 %v4307, %v4621
  %v4694 = vadd.f32 %v4308, %v4623
  %v4695 = vadd.f32 %v4309, %v4466
  %v4696 = vadd.f32 %v4310, %v4468
  %v4697 = vadd.f32 %v4311, %v4627
  %v4698 = vadd.f32 %v4312, %v4629
  %v4699 = vadd.f32 %v4313, %v4472
  %v4700 = vadd.f32 %v4314, %v4474
  %v4701 = vadd.f32 %v4315, %v4633
  %v4702 = vadd.f32 %v4316, %v4635
  %v4703 = vadd.f32 %v4317, %v4478
  %v4704 = vadd.f32 %v4318, %v4480
  %v4705 = vadd.f32 %v4319, %v4639
  %v4706 = vadd.f32 %v4320, %v4641
  %v4707 = vxor.u32 %v4643, 2147483648
  %v4708 = vxor.u32 %v4644, 2147483648
  %v4709 = vxor.u32 %v4645, 2147483648
  %v4710 = vxor.u32 %v4646, 2147483648
  %v4711 = vxor.u32 %v4647, 2147483648
  %v4712 = vxor.u32 %v4648, 2147483648
  %v4713 = vxor.u32 %v4649, 2147483648
  %v4714 = vxor.u32 %v4650, 2147483648
  %v4715 = vxor.u32 %v4651, 2147483648
  %v4716 = vxor.u32 %v4652, 2147483648
  %v4717 = vxor.u32 %v4653, 2147483648
  %v4718 = vxor.u32 %v4654, 2147483648
  %v4719 = vxor.u32 %v4655, 2147483648
  %v4720 = vxor.u32 %v4656, 2147483648
  %v4721 = vxor.u32 %v4657, 2147483648
  %v4722 = vxor.u32 %v4658, 2147483648
  %v4723 = vxor.u32 %v4659, 2147483648
  %v4724 = vxor.u32 %v4660, 2147483648
  %v4725 = vxor.u32 %v4661, 2147483648
  %v4726 = vxor.u32 %v4662, 2147483648
  %v4727 = vxor.u32 %v4663, 2147483648
  %v4728 = vxor.u32 %v4664, 2147483648
  %v4729 = vxor.u32 %v4665, 2147483648
  %v4730 = vxor.u32 %v4666, 2147483648
  %v4731 = vxor.u32 %v4667, 2147483648
  %v4732 = vxor.u32 %v4668, 2147483648
  %v4733 = vxor.u32 %v4669, 2147483648
  %v4734 = vxor.u32 %v4670, 2147483648
  %v4735 = vxor.u32 %v4671, 2147483648
  %v4736 = vxor.u32 %v4672, 2147483648
  %v4737 = vxor.u32 %v4673, 2147483648
  %v4738 = vxor.u32 %v4674, 2147483648
  %v4739 = vxor.u32 %v4675, 2147483648
  %v4740 = vxor.u32 %v4676, 2147483648
  %v4741 = vxor.u32 %v4677, 2147483648
  %v4742 = vxor.u32 %v4678, 2147483648
  %v4743 = vxor.u32 %v4679, 2147483648
  %v4744 = vxor.u32 %v4680, 2147483648
  %v4745 = vxor.u32 %v4681, 2147483648
  %v4746 = vxor.u32 %v4682, 2147483648
  %v4747 = vxor.u32 %v4683, 2147483648
  %v4748 = vxor.u32 %v4684, 2147483648
  %v4749 = vxor.u32 %v4685, 2147483648
  %v4750 = vxor.u32 %v4686, 2147483648
  %v4751 = vxor.u32 %v4687, 2147483648
  %v4752 = vxor.u32 %v4688, 2147483648
  %v4753 = vxor.u32 %v4689, 2147483648
  %v4754 = vxor.u32 %v4690, 2147483648
  %v4755 = vmul.f32 %v4707, 1.442695
  %v4756 = vpow.pop %v4755
  %v4757 = vmul.f32 %v4708, 1.442695
  %v4758 = vpow.pop %v4757
  %v4759 = vmul.f32 %v4709, 1.442695
  %v4760 = vpow.pop %v4759
  %v4761 = vmul.f32 %v4710, 1.442695
  %v4762 = vpow.pop %v4761
  %v4763 = vmul.f32 %v4711, 1.442695
  %v4764 = vpow.pop %v4763
  %v4765 = vmul.f32 %v4712, 1.442695
  %v4766 = vpow.pop %v4765
  %v4767 = vmul.f32 %v4713, 1.442695
  %v4768 = vpow.pop %v4767
  %v4769 = vmul.f32 %v4714, 1.442695
  %v4770 = vpow.pop %v4769
  %v4771 = vmul.f32 %v4715, 1.442695
  %v4772 = vpow.pop %v4771
  %v4773 = vmul.f32 %v4716, 1.442695
  %v4774 = vpow.pop %v4773
  %v4775 = vmul.f32 %v4717, 1.442695
  %v4776 = vpow.pop %v4775
  %v4777 = vmul.f32 %v4718, 1.442695
  %v4778 = vpow.pop %v4777
  %v4779 = vmul.f32 %v4719, 1.442695
  %v4780 = vpow.pop %v4779
  %v4781 = vmul.f32 %v4720, 1.442695
  %v4782 = vpow.pop %v4781
  %v4783 = vmul.f32 %v4721, 1.442695
  %v4784 = vpow.pop %v4783
  %v4785 = vmul.f32 %v4722, 1.442695
  %v4786 = vpow.pop %v4785
  %v4787 = vmul.f32 %v4723, 1.442695
  %v4788 = vpow.pop %v4787
  %v4789 = vmul.f32 %v4724, 1.442695
  %v4790 = vpow.pop %v4789
  %v4791 = vmul.f32 %v4725, 1.442695
  %v4792 = vpow.pop %v4791
  %v4793 = vmul.f32 %v4726, 1.442695
  %v4794 = vpow.pop %v4793
  %v4795 = vmul.f32 %v4727, 1.442695
  %v4796 = vpow.pop %v4795
  %v4797 = vmul.f32 %v4728, 1.442695
  %v4798 = vpow.pop %v4797
  %v4799 = vmul.f32 %v4729, 1.442695
  %v4800 = vpow.pop %v4799
  %v4801 = vmul.f32 %v4730, 1.442695
  %v4802 = vpow.pop %v4801
  %v4803 = vmul.f32 %v4731, 1.442695
  %v4804 = vpow.pop %v4803
  %v4805 = vmul.f32 %v4732, 1.442695
  %v4806 = vpow.pop %v4805
  %v4807 = vmul.f32 %v4733, 1.442695
  %v4808 = vpow.pop %v4807
  %v4809 = vmul.f32 %v4734, 1.442695
  %v4810 = vpow.pop %v4809
  %v4811 = vmul.f32 %v4735, 1.442695
  %v4812 = vpow.pop %v4811
  %v4813 = vmul.f32 %v4736, 1.442695
  %v4814 = vpow.pop %v4813
  %v4815 = vmul.f32 %v4737, 1.442695
  %v4816 = vpow.pop %v4815
  %v4817 = vmul.f32 %v4738, 1.442695
  %v4818 = vpow.pop %v4817
  %v4819 = vmul.f32 %v4739, 1.442695
  %v4820 = vpow.pop %v4819
  %v4821 = vmul.f32 %v4740, 1.442695
  %v4822 = vpow.pop %v4821
  %v4823 = vmul.f32 %v4741, 1.442695
  %v4824 = vpow.pop %v4823
  %v4825 = vmul.f32 %v4742, 1.442695
  %v4826 = vpow.pop %v4825
  %v4827 = vmul.f32 %v4743, 1.442695
  %v4828 = vpow.pop %v4827
  %v4829 = vmul.f32 %v4744, 1.442695
  %v4830 = vpow.pop %v4829
  %v4831 = vmul.f32 %v4745, 1.442695
  %v4832 = vpow.pop %v4831
  %v4833 = vmul.f32 %v4746, 1.442695
  %v4834 = vpow.pop %v4833
  %v4835 = vmul.f32 %v4747, 1.442695
  %v4836 = vpow.pop %v4835
  %v4837 = vmul.f32 %v4748, 1.442695
  %v4838 = vpow.pop %v4837
  %v4839 = vmul.f32 %v4749, 1.442695
  %v4840 = vpow.pop %v4839
  %v4841 = vmul.f32 %v4750, 1.442695
  %v4842 = vpow.pop %v4841
  %v4843 = vmul.f32 %v4751, 1.442695
  %v4844 = vpow.pop %v4843
  %v4845 = vmul.f32 %v4752, 1.442695
  %v4846 = vpow.pop %v4845
  %v4847 = vmul.f32 %v4753, 1.442695
  %v4848 = vpow.pop %v4847
  %v4849 = vmul.f32 %v4754, 1.442695
  %v4850 = vpow.pop %v4849
  %v4851 = vadd.f32 %v4756, 1.0
  %v4852 = vadd.f32 %v4758, 1.0
  %v4853 = vadd.f32 %v4760, 1.0
  %v4854 = vadd.f32 %v4762, 1.0
  %v4855 = vadd.f32 %v4764, 1.0
  %v4856 = vadd.f32 %v4766, 1.0
  %v4857 = vadd.f32 %v4768, 1.0
  %v4858 = vadd.f32 %v4770, 1.0
  %v4859 = vadd.f32 %v4772, 1.0
  %v4860 = vadd.f32 %v4774, 1.0
  %v4861 = vadd.f32 %v4776, 1.0
  %v4862 = vadd.f32 %v4778, 1.0
  %v4863 = vadd.f32 %v4780, 1.0
  %v4864 = vadd.f32 %v4782, 1.0
  %v4865 = vadd.f32 %v4784, 1.0
  %v4866 = vadd.f32 %v4786, 1.0
  %v4867 = vadd.f32 %v4788, 1.0
  %v4868 = vadd.f32 %v4790, 1.0
  %v4869 = vadd.f32 %v4792, 1.0
  %v4870 = vadd.f32 %v4794, 1.0
  %v4871 = vadd.f32 %v4796, 1.0
  %v4872 = vadd.f32 %v4798, 1.0
  %v4873 = vadd.f32 %v4800, 1.0
  %v4874 = vadd.f32 %v4802, 1.0
  %v4875 = vadd.f32 %v4804, 1.0
  %v4876 = vadd.f32 %v4806, 1.0
  %v4877 = vadd.f32 %v4808, 1.0
  %v4878 = vadd.f32 %v4810, 1.0
  %v4879 = vadd.f32 %v4812, 1.0
  %v4880 = vadd.f32 %v4814, 1.0
  %v4881 = vadd.f32 %v4816, 1.0
  %v4882 = vadd.f32 %v4818, 1.0
  %v4883 = vadd.f32 %v4820, 1.0
  %v4884 = vadd.f32 %v4822, 1.0
  %v4885 = vadd.f32 %v4824, 1.0
  %v4886 = vadd.f32 %v4826, 1.0
  %v4887 = vadd.f32 %v4828, 1.0
  %v4888 = vadd.f32 %v4830, 1.0
  %v4889 = vadd.f32 %v4832, 1.0
  %v4890 = vadd.f32 %v4834, 1.0
  %v4891 = vadd.f32 %v4836, 1.0
  %v4892 = vadd.f32 %v4838, 1.0
  %v4893 = vadd.f32 %v4840, 1.0
  %v4894 = vadd.f32 %v4842, 1.0
  %v4895 = vadd.f32 %v4844, 1.0
  %v4896 = vadd.f32 %v4846, 1.0
  %v4897 = vadd.f32 %v4848, 1.0
  %v4898 = vadd.f32 %v4850, 1.0
  %v4899 = vrcp.pop %v4851
  %v4900 = vmul.f32 1.0, %v4899
  %v4901 = vrcp.pop %v4852
  %v4902 = vmul.f32 1.0, %v4901
  %v4903 = vrcp.pop %v4853
  %v4904 = vmul.f32 1.0, %v4903
  %v4905 = vrcp.pop %v4854
  %v4906 = vmul.f32 1.0, %v4905
  %v4907 = vrcp.pop %v4855
  %v4908 = vmul.f32 1.0, %v4907
  %v4909 = vrcp.pop %v4856
  %v4910 = vmul.f32 1.0, %v4909
  %v4911 = vrcp.pop %v4857
  %v4912 = vmul.f32 1.0, %v4911
  %v4913 = vrcp.pop %v4858
  %v4914 = vmul.f32 1.0, %v4913
  %v4915 = vrcp.pop %v4859
  %v4916 = vmul.f32 1.0, %v4915
  %v4917 = vrcp.pop %v4860
  %v4918 = vmul.f32 1.0, %v4917
  %v4919 = vrcp.pop %v4861
  %v4920 = vmul.f32 1.0, %v4919
  %v4921 = vrcp.pop %v4862
  %v4922 = vmul.f32 1.0, %v4921
  %v4923 = vrcp.pop %v4863
  %v4924 = vmul.f32 1.0, %v4923
  %v4925 = vrcp.pop %v4864
  %v4926 = vmul.f32 1.0, %v4925
  %v4927 = vrcp.pop %v4865
  %v4928 = vmul.f32 1.0, %v4927
  %v4929 = vrcp.pop %v4866
  %v4930 = vmul.f32 1.0, %v4929
  %v4931 = vrcp.pop %v4867
  %v4932 = vmul.f32 1.0, %v4931
  %v4933 = vrcp.pop %v4868
  %v4934 = vmul.f32 1.0, %v4933
  %v4935 = vrcp.pop %v4869
  %v4936 = vmul.f32 1.0, %v4935
  %v4937 = vrcp.pop %v4870
  %v4938 = vmul.f32 1.0, %v4937
  %v4939 = vrcp.pop %v4871
  %v4940 = vmul.f32 1.0, %v4939
  %v4941 = vrcp.pop %v4872
  %v4942 = vmul.f32 1.0, %v4941
  %v4943 = vrcp.pop %v4873
  %v4944 = vmul.f32 1.0, %v4943
  %v4945 = vrcp.pop %v4874
  %v4946 = vmul.f32 1.0, %v4945
  %v4947 = vrcp.pop %v4875
  %v4948 = vmul.f32 1.0, %v4947
  %v4949 = vrcp.pop %v4876
  %v4950 = vmul.f32 1.0, %v4949
  %v4951 = vrcp.pop %v4877
  %v4952 = vmul.f32 1.0, %v4951
  %v4953 = vrcp.pop %v4878
  %v4954 = vmul.f32 1.0, %v4953
  %v4955 = vrcp.pop %v4879
  %v4956 = vmul.f32 1.0, %v4955
  %v4957 = vrcp.pop %v4880
  %v4958 = vmul.f32 1.0, %v4957
  %v4959 = vrcp.pop %v4881
  %v4960 = vmul.f32 1.0, %v4959
  %v4961 = vrcp.pop %v4882
  %v4962 = vmul.f32 1.0, %v4961
  %v4963 = vrcp.pop %v4883
  %v4964 = vmul.f32 1.0, %v4963
  %v4965 = vrcp.pop %v4884
  %v4966 = vmul.f32 1.0, %v4965
  %v4967 = vrcp.pop %v4885
  %v4968 = vmul.f32 1.0, %v4967
  %v4969 = vrcp.pop %v4886
  %v4970 = vmul.f32 1.0, %v4969
  %v4971 = vrcp.pop %v4887
  %v4972 = vmul.f32 1.0, %v4971
  %v4973 = vrcp.pop %v4888
  %v4974 = vmul.f32 1.0, %v4973
  %v4975 = vrcp.pop %v4889
  %v4976 = vmul.f32 1.0, %v4975
  %v4977 = vrcp.pop %v4890
  %v4978 = vmul.f32 1.0, %v4977
  %v4979 = vrcp.pop %v4891
  %v4980 = vmul.f32 1.0, %v4979
  %v4981 = vrcp.pop %v4892
  %v4982 = vmul.f32 1.0, %v4981
  %v4983 = vrcp.pop %v4893
  %v4984 = vmul.f32 1.0, %v4983
  %v4985 = vrcp.pop %v4894
  %v4986 = vmul.f32 1.0, %v4985
  %v4987 = vrcp.pop %v4895
  %v4988 = vmul.f32 1.0, %v4987
  %v4989 = vrcp.pop %v4896
  %v4990 = vmul.f32 1.0, %v4989
  %v4991 = vrcp.pop %v4897
  %v4992 = vmul.f32 1.0, %v4991
  %v4993 = vrcp.pop %v4898
  %v4994 = vmul.f32 1.0, %v4993
  %v4995 = vtanh.pop %v4691
  %v4996 = vtanh.pop %v4692
  %v4997 = vtanh.pop %v4693
  %v4998 = vtanh.pop %v4694
  %v4999 = vtanh.pop %v4695
  %v5000 = vtanh.pop %v4696
  %v5001 = vtanh.pop %v4697
  %v5002 = vtanh.pop %v4698
  %v5003 = vtanh.pop %v4699
  %v5004 = vtanh.pop %v4700
  %v5005 = vtanh.pop %v4701
  %v5006 = vtanh.pop %v4702
  %v5007 = vtanh.pop %v4703
  %v5008 = vtanh.pop %v4704
  %v5009 = vtanh.pop %v4705
  %v5010 = vtanh.pop %v4706
  %v5011 = vmul.f32 %v4932, %v4193
  %v5012 = vmul.f32 %v4934, %v4194
  %v5013 = vmul.f32 %v4936, %v4195
  %v5014 = vmul.f32 %v4938, %v4196
  %v5015 = vmul.f32 %v4940, %v4197
  %v5016 = vmul.f32 %v4942, %v4198
  %v5017 = vmul.f32 %v4944, %v4199
  %v5018 = vmul.f32 %v4946, %v4200
  %v5019 = vmul.f32 %v4948, %v4201
  %v5020 = vmul.f32 %v4950, %v4202
  %v5021 = vmul.f32 %v4952, %v4203
  %v5022 = vmul.f32 %v4954, %v4204
  %v5023 = vmul.f32 %v4956, %v4205
  %v5024 = vmul.f32 %v4958, %v4206
  %v5025 = vmul.f32 %v4960, %v4207
  %v5026 = vmul.f32 %v4962, %v4208
  %v5027 = vmul.f32 %v4900, %v4995
  %v5028 = vmul.f32 %v4902, %v4996
  %v5029 = vmul.f32 %v4904, %v4997
  %v5030 = vmul.f32 %v4906, %v4998
  %v5031 = vmul.f32 %v4908, %v4999
  %v5032 = vmul.f32 %v4910, %v5000
  %v5033 = vmul.f32 %v4912, %v5001
  %v5034 = vmul.f32 %v4914, %v5002
  %v5035 = vmul.f32 %v4916, %v5003
  %v5036 = vmul.f32 %v4918, %v5004
  %v5037 = vmul.f32 %v4920, %v5005
  %v5038 = vmul.f32 %v4922, %v5006
  %v5039 = vmul.f32 %v4924, %v5007
  %v5040 = vmul.f32 %v4926, %v5008
  %v5041 = vmul.f32 %v4928, %v5009
  %v5042 = vmul.f32 %v4930, %v5010
  %v5043 = vadd.f32 %v5011, %v5027
  %v5044 = vadd.f32 %v5012, %v5028
  %v5045 = vadd.f32 %v5013, %v5029
  %v5046 = vadd.f32 %v5014, %v5030
  %v5047 = vadd.f32 %v5015, %v5031
  %v5048 = vadd.f32 %v5016, %v5032
  %v5049 = vadd.f32 %v5017, %v5033
  %v5050 = vadd.f32 %v5018, %v5034
  %v5051 = vadd.f32 %v5019, %v5035
  %v5052 = vadd.f32 %v5020, %v5036
  %v5053 = vadd.f32 %v5021, %v5037
  %v5054 = vadd.f32 %v5022, %v5038
  %v5055 = vadd.f32 %v5023, %v5039
  %v5056 = vadd.f32 %v5024, %v5040
  %v5057 = vadd.f32 %v5025, %v5041
  %v5058 = vadd.f32 %v5026, %v5042
  %v5059 = vtanh.pop %v5043
  %v5060 = vtanh.pop %v5044
  %v5061 = vtanh.pop %v5045
  %v5062 = vtanh.pop %v5046
  %v5063 = vtanh.pop %v5047
  %v5064 = vtanh.pop %v5048
  %v5065 = vtanh.pop %v5049
  %v5066 = vtanh.pop %v5050
  %v5067 = vtanh.pop %v5051
  %v5068 = vtanh.pop %v5052
  %v5069 = vtanh.pop %v5053
  %v5070 = vtanh.pop %v5054
  %v5071 = vtanh.pop %v5055
  %v5072 = vtanh.pop %v5056
  %v5073 = vtanh.pop %v5057
  %v5074 = vtanh.pop %v5058
  %v5075 = vmul.f32 %v4964, %v5059
  %v5076 = vmul.f32 %v4966, %v5060
  %v5077 = vmul.f32 %v4968, %v5061
  %v5078 = vmul.f32 %v4970, %v5062
  %v5079 = vmul.f32 %v4972, %v5063
  %v5080 = vmul.f32 %v4974, %v5064
  %v5081 = vmul.f32 %v4976, %v5065
  %v5082 = vmul.f32 %v4978, %v5066
  %v5083 = vmul.f32 %v4980, %v5067
  %v5084 = vmul.f32 %v4982, %v5068
  %v5085 = vmul.f32 %v4984, %v5069
  %v5086 = vmul.f32 %v4986, %v5070
  %v5087 = vmul.f32 %v4988, %v5071
  %v5088 = vmul.f32 %v4990, %v5072
  %v5089 = vmul.f32 %v4992, %v5073
  %v5090 = vmul.f32 %v4994, %v5074
  %5091 = vst [vmem:[#allocation3 + $0x80] sm:$0xff] %v5075
  %5092 = vst [vmem:[#allocation3 + $0x88] sm:$0xff] %v5076
  %5093 = vst [vmem:[#allocation3 + $0x90] sm:$0xff] %v5077
  %5094 = vst [vmem:[#allocation3 + $0x98] sm:$0xff] %v5078
  %5095 = vst [vmem:[#allocation3 + $0xa0] sm:$0xff] %v5079
  %5096 = vst [vmem:[#allocation3 + $0xa8] sm:$0xff] %v5080
  %5097 = vst [vmem:[#allocation3 + $0xb0] sm:$0xff] %v5081
  %5098 = vst [vmem:[#allocation3 + $0xb8] sm:$0xff] %v5082
  %5099 = vst [vmem:[#allocation3 + $0xc0] sm:$0xff] %v5083
  %5100 = vst [vmem:[#allocation3 + $0xc8] sm:$0xff] %v5084
  %5101 = vst [vmem:[#allocation3 + $0xd0] sm:$0xff] %v5085
  %5102 = vst [vmem:[#allocation3 + $0xd8] sm:$0xff] %v5086
  %5103 = vst [vmem:[#allocation3 + $0xe0] sm:$0xff] %v5087
  %5104 = vst [vmem:[#allocation3 + $0xe8] sm:$0xff] %v5088
  %5105 = vst [vmem:[#allocation3 + $0xf0] sm:$0xff] %v5089
  %5106 = vst [vmem:[#allocation3 + $0xf8] sm:$0xff] %v5090
  %v5107 = vld [vmem:[#allocation2 + $0x40] sm:$0xff]
  %v5108 = vld [vmem:[#allocation2 + $0x48] sm:$0xff]
  %v5109 = vld [vmem:[#allocation2 + $0x50] sm:$0xff]
  %v5110 = vld [vmem:[#allocation2 + $0x58] sm:$0xff]
  %v5111 = vld [vmem:[#allocation2 + $0x140] sm:$0xff]
  %v5112 = vld [vmem:[#allocation2 + $0x148] sm:$0xff]
  %v5113 = vld [vmem:[#allocation2 + $0x150] sm:$0xff]
  %v5114 = vld [vmem:[#allocation2 + $0x158] sm:$0xff]
  %v5115 = vld [vmem:[#allocation2 + $0x240] sm:$0xff]
  %v5116 = vld [vmem:[#allocation2 + $0x248] sm:$0xff]
  %v5117 = vld [vmem:[#allocation2 + $0x250] sm:$0xff]
  %v5118 = vld [vmem:[#allocation2 + $0x258] sm:$0xff]
  %v5119 = vld [vmem:[#allocation2 + $0x340] sm:$0xff]
  %v5120 = vld [vmem:[#allocation2 + $0x348] sm:$0xff]
  %v5121 = vld [vmem:[#allocation2 + $0x350] sm:$0xff]
  %v5122 = vld [vmem:[#allocation2 + $0x358] sm:$0xff]
  %v5123 = vld [vmem:[#allocation2 + $0x440] sm:$0xff]
  %v5124 = vld [vmem:[#allocation2 + $0x448] sm:$0xff]
  %v5125 = vld [vmem:[#allocation2 + $0x450] sm:$0xff]
  %v5126 = vld [vmem:[#allocation2 + $0x458] sm:$0xff]
  %v5127 = vld [vmem:[#allocation2 + $0x540] sm:$0xff]
  %v5128 = vld [vmem:[#allocation2 + $0x548] sm:$0xff]
  %v5129 = vld [vmem:[#allocation2 + $0x550] sm:$0xff]
  %v5130 = vld [vmem:[#allocation2 + $0x558] sm:$0xff]
  %v5131 = vld [vmem:[#allocation2 + $0x640] sm:$0xff]
  %v5132 = vld [vmem:[#allocation2 + $0x648] sm:$0xff]
  %v5133 = vld [vmem:[#allocation2 + $0x650] sm:$0xff]
  %v5134 = vld [vmem:[#allocation2 + $0x658] sm:$0xff]
  %v5135 = vld [vmem:[#allocation2 + $0x740] sm:$0xff]
  %v5136 = vld [vmem:[#allocation2 + $0x748] sm:$0xff]
  %v5137 = vld [vmem:[#allocation2 + $0x750] sm:$0xff]
  %v5138 = vld [vmem:[#allocation2 + $0x758] sm:$0xff]
  %v5139 = vld [vmem:[#allocation2 + $0x840] sm:$0xff]
  %v5140 = vld [vmem:[#allocation2 + $0x848] sm:$0xff]
  %v5141 = vld [vmem:[#allocation2 + $0x850] sm:$0xff]
  %v5142 = vld [vmem:[#allocation2 + $0x858] sm:$0xff]
  %v5143 = vld [vmem:[#allocation2 + $0x940] sm:$0xff]
  %v5144 = vld [vmem:[#allocation2 + $0x948] sm:$0xff]
  %v5145 = vld [vmem:[#allocation2 + $0x950] sm:$0xff]
  %v5146 = vld [vmem:[#allocation2 + $0x958] sm:$0xff]
  %v5147 = vld [vmem:[#allocation2 + $0xa40] sm:$0xff]
  %v5148 = vld [vmem:[#allocation2 + $0xa48] sm:$0xff]
  %v5149 = vld [vmem:[#allocation2 + $0xa50] sm:$0xff]
  %v5150 = vld [vmem:[#allocation2 + $0xa58] sm:$0xff]
  %v5151 = vld [vmem:[#allocation2 + $0xb40] sm:$0xff]
  %v5152 = vld [vmem:[#allocation2 + $0xb48] sm:$0xff]
  %v5153 = vld [vmem:[#allocation2 + $0xb50] sm:$0xff]
  %v5154 = vld [vmem:[#allocation2 + $0xb58] sm:$0xff]
  %v5155 = vld [vmem:[#allocation2 + $0xc40] sm:$0xff]
  %v5156 = vld [vmem:[#allocation2 + $0xc48] sm:$0xff]
  %v5157 = vld [vmem:[#allocation2 + $0xc50] sm:$0xff]
  %v5158 = vld [vmem:[#allocation2 + $0xc58] sm:$0xff]
  %v5159 = vld [vmem:[#allocation2 + $0xd40] sm:$0xff]
  %v5160 = vld [vmem:[#allocation2 + $0xd48] sm:$0xff]
  %v5161 = vld [vmem:[#allocation2 + $0xd50] sm:$0xff]
  %v5162 = vld [vmem:[#allocation2 + $0xd58] sm:$0xff]
  %v5163 = vld [vmem:[#allocation2 + $0xe40] sm:$0xff]
  %v5164 = vld [vmem:[#allocation2 + $0xe48] sm:$0xff]
  %v5165 = vld [vmem:[#allocation2 + $0xe50] sm:$0xff]
  %v5166 = vld [vmem:[#allocation2 + $0xe58] sm:$0xff]
  %v5167 = vld [vmem:[#allocation2 + $0xf40] sm:$0xff]
  %v5168 = vld [vmem:[#allocation2 + $0xf48] sm:$0xff]
  %v5169 = vld [vmem:[#allocation2 + $0xf50] sm:$0xff]
  %v5170 = vld [vmem:[#allocation2 + $0xf58] sm:$0xff]
  %5171 = vmatprep.subr.mxu0 %v5076
  %5172 = vmatpush1.msra.mxu0 %v5075
  %5173 = vmatprep.subr.mxu0 %v5080
  %5174 = vmatpush1.msra.mxu0 %v5079
  %5175 = vmatprep.subr.mxu0 %v5084
  %5176 = vmatpush1.msra.mxu0 %v5083
  %5177 = vmatprep.subr.mxu0 %v5088
  %5178 = vmatpush1.msra.mxu0 %v5087
  %5179 = vmatprep.subr.mxu0 0.0
  %5180 = vmatpush1.msra.mxu0 0.0
  %5181 = vmatprep.subr.mxu0 0.0
  %5182 = vmatpush1.msra.mxu0 0.0
  %5183 = vmatprep.subr.mxu0 0.0
  %5184 = vmatpush1.msra.mxu0 0.0
  %5185 = vmatprep.subr.mxu0 0.0
  %5186 = vmatpush1.msra.mxu0 0.0
  %5187 = vmatprep.subr.mxu0 0.0
  %5188 = vmatpush1.msra.mxu0 0.0
  %5189 = vmatprep.subr.mxu0 0.0
  %5190 = vmatpush1.msra.mxu0 0.0
  %5191 = vmatprep.subr.mxu0 0.0
  %5192 = vmatpush1.msra.mxu0 0.0
  %5193 = vmatprep.subr.mxu0 0.0
  %5194 = vmatpush1.msra.mxu0 0.0
  %5195 = vmatprep.subr.mxu0 0.0
  %5196 = vmatpush1.msra.mxu0 0.0
  %5197 = vmatprep.subr.mxu0 0.0
  %5198 = vmatpush1.msra.mxu0 0.0
  %5199 = vmatprep.subr.mxu0 0.0
  %5200 = vmatpush1.msra.mxu0 0.0
  %5201 = vmatprep.subr.mxu0 0.0
  %5202 = vmatpush1.msra.mxu0 0.0
  %5203 = vmatprep.subr.mxu0 0.0
  %5204 = vmatpush1.msra.mxu0 0.0
  %5205 = vmatprep.subr.mxu0 0.0
  %5206 = vmatpush1.msra.mxu0 0.0
  %5207 = vmatprep.subr.mxu0 0.0
  %5208 = vmatpush1.msra.mxu0 0.0
  %5209 = vmatprep.subr.mxu0 0.0
  %5210 = vmatpush1.msra.mxu0 0.0
  %5211 = vmatprep.subr.mxu0 0.0
  %5212 = vmatpush1.msra.mxu0 0.0
  %5213 = vmatprep.subr.mxu0 0.0
  %5214 = vmatpush1.msra.mxu0 0.0
  %5215 = vmatprep.subr.mxu0 0.0
  %5216 = vmatpush1.msra.mxu0 0.0
  %5217 = vmatprep.subr.mxu0 0.0
  %5218 = vmatpush1.msra.mxu0 0.0
  %5219 = vmatprep.subr.mxu0 0.0
  %5220 = vmatpush1.msra.mxu0 0.0
  %5221 = vmatprep.subr.mxu0 0.0
  %5222 = vmatpush1.msra.mxu0 0.0
  %5223 = vmatprep.subr.mxu0 0.0
  %5224 = vmatpush1.msra.mxu0 0.0
  %5225 = vmatprep.subr.mxu0 0.0
  %5226 = vmatpush1.msra.mxu0 0.0
  %5227 = vmatprep.subr.mxu0 0.0
  %5228 = vmatpush1.msra.mxu0 0.0
  %5229 = vmatprep.subr.mxu0 0.0
  %5230 = vmatpush1.msra.mxu0 0.0
  %5231 = vmatprep.subr.mxu0 0.0
  %5232 = vmatpush1.msra.mxu0 0.0
  %5233 = vmatprep.subr.mxu0 0.0
  %5234 = vmatpush1.msra.mxu0 0.0
  %5235 = vmatprep.mubr.f32.mxu0 0.0
  %5236 = vmatmul.mubr.f32.gmra.mrb[0].mxu0 %v3424
  %v5237 = vpop.f32.mrb[0].mxu0
  %v5238 = vadd.f32 0.0, %v5237
  %v5239 = vpop.f32.mrb[0].mxu0
  %v5240 = vadd.f32 0.0, %v5239
  %5241 = vmatprep.mubr.f32.mxu0 0.0
  %5242 = vmatmul.mubr.f32.gmra.mrb[0].mxu0 %v3427
  %v5243 = vpop.f32.mrb[0].mxu0
  %v5244 = vadd.f32 0.0, %v5243
  %v5245 = vpop.f32.mrb[0].mxu0
  %v5246 = vadd.f32 0.0, %v5245
  %5247 = vmatprep.mubr.f32.mxu0 0.0
  %5248 = vmatmul.mubr.f32.gmra.mrb[0].mxu0 %v3430
  %v5249 = vpop.f32.mrb[0].mxu0
  %v5250 = vadd.f32 0.0, %v5249
  %v5251 = vpop.f32.mrb[0].mxu0
  %v5252 = vadd.f32 0.0, %v5251
  %5253 = vmatprep.mubr.f32.mxu0 0.0
  %5254 = vmatmul.mubr.f32.gmra.mrb[0].mxu0 %v3433
  %v5255 = vpop.f32.mrb[0].mxu0
  %v5256 = vadd.f32 0.0, %v5255
  %v5257 = vpop.f32.mrb[0].mxu0
  %v5258 = vadd.f32 0.0, %v5257
  %5259 = vmatprep.mubr.f32.mxu0 0.0
  %5260 = vmatmul.mubr.f32.gmra.mrb[0].mxu0 %v3436
  %v5261 = vpop.f32.mrb[0].mxu0
  %v5262 = vadd.f32 0.0, %v5261
  %v5263 = vpop.f32.mrb[0].mxu0
  %v5264 = vadd.f32 0.0, %v5263
  %5265 = vmatprep.mubr.f32.mxu0 0.0
  %5266 = vmatmul.mubr.f32.gmra.mrb[0].mxu0 %v3439
  %v5267 = vpop.f32.mrb[0].mxu0
  %v5268 = vadd.f32 0.0, %v5267
  %v5269 = vpop.f32.mrb[0].mxu0
  %v5270 = vadd.f32 0.0, %v5269
  %5271 = vmatprep.mubr.f32.mxu0 0.0
  %5272 = vmatmul.mubr.f32.gmra.mrb[0].mxu0 %v3442
  %v5273 = vpop.f32.mrb[0].mxu0
  %v5274 = vadd.f32 0.0, %v5273
  %v5275 = vpop.f32.mrb[0].mxu0
  %v5276 = vadd.f32 0.0, %v5275
  %5277 = vmatprep.mubr.f32.mxu0 0.0
  %5278 = vmatmul.mubr.f32.gmra.mrb[0].mxu0 %v3445
  %v5279 = vpop.f32.mrb[0].mxu0
  %v5280 = vadd.f32 0.0, %v5279
  %v5281 = vpop.f32.mrb[0].mxu0
  %v5282 = vadd.f32 0.0, %v5281
  %5283 = vmatprep.mubr.f32.mxu0 0.0
  %5284 = vmatmul.mubr.f32.gmra.mrb[0].mxu0 %v3448
  %v5285 = vpop.f32.mrb[0].mxu0
  %v5286 = vadd.f32 0.0, %v5285
  %v5287 = vpop.f32.mrb[0].mxu0
  %v5288 = vadd.f32 0.0, %v5287
  %5289 = vmatprep.mubr.f32.mxu0 0.0
  %5290 = vmatmul.mubr.f32.gmra.mrb[0].mxu0 %v3451
  %v5291 = vpop.f32.mrb[0].mxu0
  %v5292 = vadd.f32 0.0, %v5291
  %v5293 = vpop.f32.mrb[0].mxu0
  %v5294 = vadd.f32 0.0, %v5293
  %5295 = vmatprep.mubr.f32.mxu0 0.0
  %5296 = vmatmul.mubr.f32.gmra.mrb[0].mxu0 %v3454
  %v5297 = vpop.f32.mrb[0].mxu0
  %v5298 = vadd.f32 0.0, %v5297
  %v5299 = vpop.f32.mrb[0].mxu0
  %v5300 = vadd.f32 0.0, %v5299
  %5301 = vmatprep.mubr.f32.mxu0 0.0
  %5302 = vmatmul.mubr.f32.gmra.mrb[0].mxu0 %v3457
  %v5303 = vpop.f32.mrb[0].mxu0
  %v5304 = vadd.f32 0.0, %v5303
  %v5305 = vpop.f32.mrb[0].mxu0
  %v5306 = vadd.f32 0.0, %v5305
  %5307 = vmatprep.mubr.f32.mxu0 0.0
  %5308 = vmatmul.mubr.f32.gmra.mrb[0].mxu0 %v3460
  %v5309 = vpop.f32.mrb[0].mxu0
  %v5310 = vadd.f32 0.0, %v5309
  %v5311 = vpop.f32.mrb[0].mxu0
  %v5312 = vadd.f32 0.0, %v5311
  %5313 = vmatprep.mubr.f32.mxu0 0.0
  %5314 = vmatmul.mubr.f32.gmra.mrb[0].mxu0 %v3463
  %v5315 = vpop.f32.mrb[0].mxu0
  %v5316 = vadd.f32 0.0, %v5315
  %v5317 = vpop.f32.mrb[0].mxu0
  %v5318 = vadd.f32 0.0, %v5317
  %5319 = vmatprep.mubr.f32.mxu0 0.0
  %5320 = vmatmul.mubr.f32.gmra.mrb[0].mxu0 %v3466
  %v5321 = vpop.f32.mrb[0].mxu0
  %v5322 = vadd.f32 0.0, %v5321
  %v5323 = vpop.f32.mrb[0].mxu0
  %v5324 = vadd.f32 0.0, %v5323
  %5325 = vmatprep.mubr.f32.mxu0 0.0
  %5326 = vmatmul.mubr.f32.gmra.mrb[0].mxu0 %v3469
  %v5327 = vpop.f32.mrb[0].mxu0
  %v5328 = vadd.f32 0.0, %v5327
  %v5329 = vpop.f32.mrb[0].mxu0
  %v5330 = vadd.f32 0.0, %v5329
  %5331 = vdwg.mxu0
  %5332 = vmatprep.subr.mxu0 %v5078
  %5333 = vmatpush1.msra.mxu0 %v5077
  %5334 = vmatprep.subr.mxu0 %v5082
  %5335 = vmatpush1.msra.mxu0 %v5081
  %5336 = vmatprep.subr.mxu0 %v5086
  %5337 = vmatpush1.msra.mxu0 %v5085
  %5338 = vmatprep.subr.mxu0 %v5090
  %5339 = vmatpush1.msra.mxu0 %v5089
  %5340 = vmatprep.subr.mxu0 0.0
  %5341 = vmatpush1.msra.mxu0 0.0
  %5342 = vmatprep.subr.mxu0 0.0
  %5343 = vmatpush1.msra.mxu0 0.0
  %5344 = vmatprep.subr.mxu0 0.0
  %5345 = vmatpush1.msra.mxu0 0.0
  %5346 = vmatprep.subr.mxu0 0.0
  %5347 = vmatpush1.msra.mxu0 0.0
  %5348 = vmatprep.subr.mxu0 0.0
  %5349 = vmatpush1.msra.mxu0 0.0
  %5350 = vmatprep.subr.mxu0 0.0
  %5351 = vmatpush1.msra.mxu0 0.0
  %5352 = vmatprep.subr.mxu0 0.0
  %5353 = vmatpush1.msra.mxu0 0.0
  %5354 = vmatprep.subr.mxu0 0.0
  %5355 = vmatpush1.msra.mxu0 0.0
  %5356 = vmatprep.subr.mxu0 0.0
  %5357 = vmatpush1.msra.mxu0 0.0
  %5358 = vmatprep.subr.mxu0 0.0
  %5359 = vmatpush1.msra.mxu0 0.0
  %5360 = vmatprep.subr.mxu0 0.0
  %5361 = vmatpush1.msra.mxu0 0.0
  %5362 = vmatprep.subr.mxu0 0.0
  %5363 = vmatpush1.msra.mxu0 0.0
  %5364 = vmatprep.subr.mxu0 0.0
  %5365 = vmatpush1.msra.mxu0 0.0
  %5366 = vmatprep.subr.mxu0 0.0
  %5367 = vmatpush1.msra.mxu0 0.0
  %5368 = vmatprep.subr.mxu0 0.0
  %5369 = vmatpush1.msra.mxu0 0.0
  %5370 = vmatprep.subr.mxu0 0.0
  %5371 = vmatpush1.msra.mxu0 0.0
  %5372 = vmatprep.subr.mxu0 0.0
  %5373 = vmatpush1.msra.mxu0 0.0
  %5374 = vmatprep.subr.mxu0 0.0
  %5375 = vmatpush1.msra.mxu0 0.0
  %5376 = vmatprep.subr.mxu0 0.0
  %5377 = vmatpush1.msra.mxu0 0.0
  %5378 = vmatprep.subr.mxu0 0.0
  %5379 = vmatpush1.msra.mxu0 0.0
  %5380 = vmatprep.subr.mxu0 0.0
  %5381 = vmatpush1.msra.mxu0 0.0
  %5382 = vmatprep.subr.mxu0 0.0
  %5383 = vmatpush1.msra.mxu0 0.0
  %5384 = vmatprep.subr.mxu0 0.0
  %5385 = vmatpush1.msra.mxu0 0.0
  %5386 = vmatprep.subr.mxu0 0.0
  %5387 = vmatpush1.msra.mxu0 0.0
  %5388 = vmatprep.subr.mxu0 0.0
  %5389 = vmatpush1.msra.mxu0 0.0
  %5390 = vmatprep.subr.mxu0 0.0
  %5391 = vmatpush1.msra.mxu0 0.0
  %5392 = vmatprep.subr.mxu0 0.0
  %5393 = vmatpush1.msra.mxu0 0.0
  %5394 = vmatprep.subr.mxu0 0.0
  %5395 = vmatpush1.msra.mxu0 0.0
  %5396 = vmatprep.mubr.f32.mxu0 0.0
  %5397 = vmatmul.mubr.f32.gmra.mrb[0].mxu0 %v3424
  %v5398 = vpop.f32.mrb[0].mxu0
  %v5399 = vadd.f32 0.0, %v5398
  %v5400 = vpop.f32.mrb[0].mxu0
  %v5401 = vadd.f32 0.0, %v5400
  %5402 = vmatprep.mubr.f32.mxu0 0.0
  %5403 = vmatmul.mubr.f32.gmra.mrb[0].mxu0 %v3427
  %v5404 = vpop.f32.mrb[0].mxu0
  %v5405 = vadd.f32 0.0, %v5404
  %v5406 = vpop.f32.mrb[0].mxu0
  %v5407 = vadd.f32 0.0, %v5406
  %5408 = vmatprep.mubr.f32.mxu0 0.0
  %5409 = vmatmul.mubr.f32.gmra.mrb[0].mxu0 %v3430
  %v5410 = vpop.f32.mrb[0].mxu0
  %v5411 = vadd.f32 0.0, %v5410
  %v5412 = vpop.f32.mrb[0].mxu0
  %v5413 = vadd.f32 0.0, %v5412
  %5414 = vmatprep.mubr.f32.mxu0 0.0
  %5415 = vmatmul.mubr.f32.gmra.mrb[0].mxu0 %v3433
  %v5416 = vpop.f32.mrb[0].mxu0
  %v5417 = vadd.f32 0.0, %v5416
  %v5418 = vpop.f32.mrb[0].mxu0
  %v5419 = vadd.f32 0.0, %v5418
  %5420 = vmatprep.mubr.f32.mxu0 0.0
  %5421 = vmatmul.mubr.f32.gmra.mrb[0].mxu0 %v3436
  %v5422 = vpop.f32.mrb[0].mxu0
  %v5423 = vadd.f32 0.0, %v5422
  %v5424 = vpop.f32.mrb[0].mxu0
  %v5425 = vadd.f32 0.0, %v5424
  %5426 = vmatprep.mubr.f32.mxu0 0.0
  %5427 = vmatmul.mubr.f32.gmra.mrb[0].mxu0 %v3439
  %v5428 = vpop.f32.mrb[0].mxu0
  %v5429 = vadd.f32 0.0, %v5428
  %v5430 = vpop.f32.mrb[0].mxu0
  %v5431 = vadd.f32 0.0, %v5430
  %5432 = vmatprep.mubr.f32.mxu0 0.0
  %5433 = vmatmul.mubr.f32.gmra.mrb[0].mxu0 %v3442
  %v5434 = vpop.f32.mrb[0].mxu0
  %v5435 = vadd.f32 0.0, %v5434
  %v5436 = vpop.f32.mrb[0].mxu0
  %v5437 = vadd.f32 0.0, %v5436
  %5438 = vmatprep.mubr.f32.mxu0 0.0
  %5439 = vmatmul.mubr.f32.gmra.mrb[0].mxu0 %v3445
  %v5440 = vpop.f32.mrb[0].mxu0
  %v5441 = vadd.f32 0.0, %v5440
  %v5442 = vpop.f32.mrb[0].mxu0
  %v5443 = vadd.f32 0.0, %v5442
  %5444 = vmatprep.mubr.f32.mxu0 0.0
  %5445 = vmatmul.mubr.f32.gmra.mrb[0].mxu0 %v3448
  %v5446 = vpop.f32.mrb[0].mxu0
  %v5447 = vadd.f32 0.0, %v5446
  %v5448 = vpop.f32.mrb[0].mxu0
  %v5449 = vadd.f32 0.0, %v5448
  %5450 = vmatprep.mubr.f32.mxu0 0.0
  %5451 = vmatmul.mubr.f32.gmra.mrb[0].mxu0 %v3451
  %v5452 = vpop.f32.mrb[0].mxu0
  %v5453 = vadd.f32 0.0, %v5452
  %v5454 = vpop.f32.mrb[0].mxu0
  %v5455 = vadd.f32 0.0, %v5454
  %5456 = vmatprep.mubr.f32.mxu0 0.0
  %5457 = vmatmul.mubr.f32.gmra.mrb[0].mxu0 %v3454
  %v5458 = vpop.f32.mrb[0].mxu0
  %v5459 = vadd.f32 0.0, %v5458
  %v5460 = vpop.f32.mrb[0].mxu0
  %v5461 = vadd.f32 0.0, %v5460
  %5462 = vmatprep.mubr.f32.mxu0 0.0
  %5463 = vmatmul.mubr.f32.gmra.mrb[0].mxu0 %v3457
  %v5464 = vpop.f32.mrb[0].mxu0
  %v5465 = vadd.f32 0.0, %v5464
  %v5466 = vpop.f32.mrb[0].mxu0
  %v5467 = vadd.f32 0.0, %v5466
  %5468 = vmatprep.mubr.f32.mxu0 0.0
  %5469 = vmatmul.mubr.f32.gmra.mrb[0].mxu0 %v3460
  %v5470 = vpop.f32.mrb[0].mxu0
  %v5471 = vadd.f32 0.0, %v5470
  %v5472 = vpop.f32.mrb[0].mxu0
  %v5473 = vadd.f32 0.0, %v5472
  %5474 = vmatprep.mubr.f32.mxu0 0.0
  %5475 = vmatmul.mubr.f32.gmra.mrb[0].mxu0 %v3463
  %v5476 = vpop.f32.mrb[0].mxu0
  %v5477 = vadd.f32 0.0, %v5476
  %v5478 = vpop.f32.mrb[0].mxu0
  %v5479 = vadd.f32 0.0, %v5478
  %5480 = vmatprep.mubr.f32.mxu0 0.0
  %5481 = vmatmul.mubr.f32.gmra.mrb[0].mxu0 %v3466
  %v5482 = vpop.f32.mrb[0].mxu0
  %v5483 = vadd.f32 0.0, %v5482
  %v5484 = vpop.f32.mrb[0].mxu0
  %v5485 = vadd.f32 0.0, %v5484
  %5486 = vmatprep.mubr.f32.mxu0 0.0
  %5487 = vmatmul.mubr.f32.gmra.mrb[0].mxu0 %v3469
  %v5488 = vpop.f32.mrb[0].mxu0
  %v5489 = vadd.f32 0.0, %v5488
  %v5490 = vpop.f32.mrb[0].mxu0
  %v5491 = vadd.f32 0.0, %v5490
  %5492 = vdwg.mxu0
  %v5493 = vadd.f32 %v5107, %v5238
  %v5494 = vadd.f32 %v5108, %v5240
  %v5495 = vadd.f32 %v5109, %v5399
  %v5496 = vadd.f32 %v5110, %v5401
  %v5497 = vadd.f32 %v5111, %v5244
  %v5498 = vadd.f32 %v5112, %v5246
  %v5499 = vadd.f32 %v5113, %v5405
  %v5500 = vadd.f32 %v5114, %v5407
  %v5501 = vadd.f32 %v5115, %v5250
  %v5502 = vadd.f32 %v5116, %v5252
  %v5503 = vadd.f32 %v5117, %v5411
  %v5504 = vadd.f32 %v5118, %v5413
  %v5505 = vadd.f32 %v5119, %v5256
  %v5506 = vadd.f32 %v5120, %v5258
  %v5507 = vadd.f32 %v5121, %v5417
  %v5508 = vadd.f32 %v5122, %v5419
  %v5509 = vadd.f32 %v5123, %v5262
  %v5510 = vadd.f32 %v5124, %v5264
  %v5511 = vadd.f32 %v5125, %v5423
  %v5512 = vadd.f32 %v5126, %v5425
  %v5513 = vadd.f32 %v5127, %v5268
  %v5514 = vadd.f32 %v5128, %v5270
  %v5515 = vadd.f32 %v5129, %v5429
  %v5516 = vadd.f32 %v5130, %v5431
  %v5517 = vadd.f32 %v5131, %v5274
  %v5518 = vadd.f32 %v5132, %v5276
  %v5519 = vadd.f32 %v5133, %v5435
  %v5520 = vadd.f32 %v5134, %v5437
  %v5521 = vadd.f32 %v5135, %v5280
  %v5522 = vadd.f32 %v5136, %v5282
  %v5523 = vadd.f32 %v5137, %v5441
  %v5524 = vadd.f32 %v5138, %v5443
  %v5525 = vadd.f32 %v5139, %v5286
  %v5526 = vadd.f32 %v5140, %v5288
  %v5527 = vadd.f32 %v5141, %v5447
  %v5528 = vadd.f32 %v5142, %v5449
  %v5529 = vadd.f32 %v5143, %v5292
  %v5530 = vadd.f32 %v5144, %v5294
  %v5531 = vadd.f32 %v5145, %v5453
  %v5532 = vadd.f32 %v5146, %v5455
  %v5533 = vadd.f32 %v5147, %v5298
  %v5534 = vadd.f32 %v5148, %v5300
  %v5535 = vadd.f32 %v5149, %v5459
  %v5536 = vadd.f32 %v5150, %v5461
  %v5537 = vadd.f32 %v5151, %v5304
  %v5538 = vadd.f32 %v5152, %v5306
  %v5539 = vadd.f32 %v5153, %v5465
  %v5540 = vadd.f32 %v5154, %v5467
  %v5541 = vadd.f32 %v5155, %v5310
  %v5542 = vadd.f32 %v5156, %v5312
  %v5543 = vadd.f32 %v5157, %v5471
  %v5544 = vadd.f32 %v5158, %v5473
  %v5545 = vadd.f32 %v5159, %v5316
  %v5546 = vadd.f32 %v5160, %v5318
  %v5547 = vadd.f32 %v5161, %v5477
  %v5548 = vadd.f32 %v5162, %v5479
  %v5549 = vadd.f32 %v5163, %v5322
  %v5550 = vadd.f32 %v5164, %v5324
  %v5551 = vadd.f32 %v5165, %v5483
  %v5552 = vadd.f32 %v5166, %v5485
  %v5553 = vadd.f32 %v5167, %v5328
  %v5554 = vadd.f32 %v5168, %v5330
  %v5555 = vadd.f32 %v5169, %v5489
  %v5556 = vadd.f32 %v5170, %v5491
  %v5557 = vxor.u32 %v5493, 2147483648
  %v5558 = vxor.u32 %v5494, 2147483648
  %v5559 = vxor.u32 %v5495, 2147483648
  %v5560 = vxor.u32 %v5496, 2147483648
  %v5561 = vxor.u32 %v5497, 2147483648
  %v5562 = vxor.u32 %v5498, 2147483648
  %v5563 = vxor.u32 %v5499, 2147483648
  %v5564 = vxor.u32 %v5500, 2147483648
  %v5565 = vxor.u32 %v5501, 2147483648
  %v5566 = vxor.u32 %v5502, 2147483648
  %v5567 = vxor.u32 %v5503, 2147483648
  %v5568 = vxor.u32 %v5504, 2147483648
  %v5569 = vxor.u32 %v5505, 2147483648
  %v5570 = vxor.u32 %v5506, 2147483648
  %v5571 = vxor.u32 %v5507, 2147483648
  %v5572 = vxor.u32 %v5508, 2147483648
  %v5573 = vxor.u32 %v5509, 2147483648
  %v5574 = vxor.u32 %v5510, 2147483648
  %v5575 = vxor.u32 %v5511, 2147483648
  %v5576 = vxor.u32 %v5512, 2147483648
  %v5577 = vxor.u32 %v5513, 2147483648
  %v5578 = vxor.u32 %v5514, 2147483648
  %v5579 = vxor.u32 %v5515, 2147483648
  %v5580 = vxor.u32 %v5516, 2147483648
  %v5581 = vxor.u32 %v5517, 2147483648
  %v5582 = vxor.u32 %v5518, 2147483648
  %v5583 = vxor.u32 %v5519, 2147483648
  %v5584 = vxor.u32 %v5520, 2147483648
  %v5585 = vxor.u32 %v5521, 2147483648
  %v5586 = vxor.u32 %v5522, 2147483648
  %v5587 = vxor.u32 %v5523, 2147483648
  %v5588 = vxor.u32 %v5524, 2147483648
  %v5589 = vxor.u32 %v5525, 2147483648
  %v5590 = vxor.u32 %v5526, 2147483648
  %v5591 = vxor.u32 %v5527, 2147483648
  %v5592 = vxor.u32 %v5528, 2147483648
  %v5593 = vxor.u32 %v5529, 2147483648
  %v5594 = vxor.u32 %v5530, 2147483648
  %v5595 = vxor.u32 %v5531, 2147483648
  %v5596 = vxor.u32 %v5532, 2147483648
  %v5597 = vxor.u32 %v5533, 2147483648
  %v5598 = vxor.u32 %v5534, 2147483648
  %v5599 = vxor.u32 %v5535, 2147483648
  %v5600 = vxor.u32 %v5536, 2147483648
  %v5601 = vxor.u32 %v5537, 2147483648
  %v5602 = vxor.u32 %v5538, 2147483648
  %v5603 = vxor.u32 %v5539, 2147483648
  %v5604 = vxor.u32 %v5540, 2147483648
  %v5605 = vmul.f32 %v5557, 1.442695
  %v5606 = vpow.pop %v5605
  %v5607 = vmul.f32 %v5558, 1.442695
  %v5608 = vpow.pop %v5607
  %v5609 = vmul.f32 %v5559, 1.442695
  %v5610 = vpow.pop %v5609
  %v5611 = vmul.f32 %v5560, 1.442695
  %v5612 = vpow.pop %v5611
  %v5613 = vmul.f32 %v5561, 1.442695
  %v5614 = vpow.pop %v5613
  %v5615 = vmul.f32 %v5562, 1.442695
  %v5616 = vpow.pop %v5615
  %v5617 = vmul.f32 %v5563, 1.442695
  %v5618 = vpow.pop %v5617
  %v5619 = vmul.f32 %v5564, 1.442695
  %v5620 = vpow.pop %v5619
  %v5621 = vmul.f32 %v5565, 1.442695
  %v5622 = vpow.pop %v5621
  %v5623 = vmul.f32 %v5566, 1.442695
  %v5624 = vpow.pop %v5623
  %v5625 = vmul.f32 %v5567, 1.442695
  %v5626 = vpow.pop %v5625
  %v5627 = vmul.f32 %v5568, 1.442695
  %v5628 = vpow.pop %v5627
  %v5629 = vmul.f32 %v5569, 1.442695
  %v5630 = vpow.pop %v5629
  %v5631 = vmul.f32 %v5570, 1.442695
  %v5632 = vpow.pop %v5631
  %v5633 = vmul.f32 %v5571, 1.442695
  %v5634 = vpow.pop %v5633
  %v5635 = vmul.f32 %v5572, 1.442695
  %v5636 = vpow.pop %v5635
  %v5637 = vmul.f32 %v5573, 1.442695
  %v5638 = vpow.pop %v5637
  %v5639 = vmul.f32 %v5574, 1.442695
  %v5640 = vpow.pop %v5639
  %v5641 = vmul.f32 %v5575, 1.442695
  %v5642 = vpow.pop %v5641
  %v5643 = vmul.f32 %v5576, 1.442695
  %v5644 = vpow.pop %v5643
  %v5645 = vmul.f32 %v5577, 1.442695
  %v5646 = vpow.pop %v5645
  %v5647 = vmul.f32 %v5578, 1.442695
  %v5648 = vpow.pop %v5647
  %v5649 = vmul.f32 %v5579, 1.442695
  %v5650 = vpow.pop %v5649
  %v5651 = vmul.f32 %v5580, 1.442695
  %v5652 = vpow.pop %v5651
  %v5653 = vmul.f32 %v5581, 1.442695
  %v5654 = vpow.pop %v5653
  %v5655 = vmul.f32 %v5582, 1.442695
  %v5656 = vpow.pop %v5655
  %v5657 = vmul.f32 %v5583, 1.442695
  %v5658 = vpow.pop %v5657
  %v5659 = vmul.f32 %v5584, 1.442695
  %v5660 = vpow.pop %v5659
  %v5661 = vmul.f32 %v5585, 1.442695
  %v5662 = vpow.pop %v5661
  %v5663 = vmul.f32 %v5586, 1.442695
  %v5664 = vpow.pop %v5663
  %v5665 = vmul.f32 %v5587, 1.442695
  %v5666 = vpow.pop %v5665
  %v5667 = vmul.f32 %v5588, 1.442695
  %v5668 = vpow.pop %v5667
  %v5669 = vmul.f32 %v5589, 1.442695
  %v5670 = vpow.pop %v5669
  %v5671 = vmul.f32 %v5590, 1.442695
  %v5672 = vpow.pop %v5671
  %v5673 = vmul.f32 %v5591, 1.442695
  %v5674 = vpow.pop %v5673
  %v5675 = vmul.f32 %v5592, 1.442695
  %v5676 = vpow.pop %v5675
  %v5677 = vmul.f32 %v5593, 1.442695
  %v5678 = vpow.pop %v5677
  %v5679 = vmul.f32 %v5594, 1.442695
  %v5680 = vpow.pop %v5679
  %v5681 = vmul.f32 %v5595, 1.442695
  %v5682 = vpow.pop %v5681
  %v5683 = vmul.f32 %v5596, 1.442695
  %v5684 = vpow.pop %v5683
  %v5685 = vmul.f32 %v5597, 1.442695
  %v5686 = vpow.pop %v5685
  %v5687 = vmul.f32 %v5598, 1.442695
  %v5688 = vpow.pop %v5687
  %v5689 = vmul.f32 %v5599, 1.442695
  %v5690 = vpow.pop %v5689
  %v5691 = vmul.f32 %v5600, 1.442695
  %v5692 = vpow.pop %v5691
  %v5693 = vmul.f32 %v5601, 1.442695
  %v5694 = vpow.pop %v5693
  %v5695 = vmul.f32 %v5602, 1.442695
  %v5696 = vpow.pop %v5695
  %v5697 = vmul.f32 %v5603, 1.442695
  %v5698 = vpow.pop %v5697
  %v5699 = vmul.f32 %v5604, 1.442695
  %v5700 = vpow.pop %v5699
  %v5701 = vadd.f32 %v5606, 1.0
  %v5702 = vadd.f32 %v5608, 1.0
  %v5703 = vadd.f32 %v5610, 1.0
  %v5704 = vadd.f32 %v5612, 1.0
  %v5705 = vadd.f32 %v5614, 1.0
  %v5706 = vadd.f32 %v5616, 1.0
  %v5707 = vadd.f32 %v5618, 1.0
  %v5708 = vadd.f32 %v5620, 1.0
  %v5709 = vadd.f32 %v5622, 1.0
  %v5710 = vadd.f32 %v5624, 1.0
  %v5711 = vadd.f32 %v5626, 1.0
  %v5712 = vadd.f32 %v5628, 1.0
  %v5713 = vadd.f32 %v5630, 1.0
  %v5714 = vadd.f32 %v5632, 1.0
  %v5715 = vadd.f32 %v5634, 1.0
  %v5716 = vadd.f32 %v5636, 1.0
  %v5717 = vadd.f32 %v5638, 1.0
  %v5718 = vadd.f32 %v5640, 1.0
  %v5719 = vadd.f32 %v5642, 1.0
  %v5720 = vadd.f32 %v5644, 1.0
  %v5721 = vadd.f32 %v5646, 1.0
  %v5722 = vadd.f32 %v5648, 1.0
  %v5723 = vadd.f32 %v5650, 1.0
  %v5724 = vadd.f32 %v5652, 1.0
  %v5725 = vadd.f32 %v5654, 1.0
  %v5726 = vadd.f32 %v5656, 1.0
  %v5727 = vadd.f32 %v5658, 1.0
  %v5728 = vadd.f32 %v5660, 1.0
  %v5729 = vadd.f32 %v5662, 1.0
  %v5730 = vadd.f32 %v5664, 1.0
  %v5731 = vadd.f32 %v5666, 1.0
  %v5732 = vadd.f32 %v5668, 1.0
  %v5733 = vadd.f32 %v5670, 1.0
  %v5734 = vadd.f32 %v5672, 1.0
  %v5735 = vadd.f32 %v5674, 1.0
  %v5736 = vadd.f32 %v5676, 1.0
  %v5737 = vadd.f32 %v5678, 1.0
  %v5738 = vadd.f32 %v5680, 1.0
  %v5739 = vadd.f32 %v5682, 1.0
  %v5740 = vadd.f32 %v5684, 1.0
  %v5741 = vadd.f32 %v5686, 1.0
  %v5742 = vadd.f32 %v5688, 1.0
  %v5743 = vadd.f32 %v5690, 1.0
  %v5744 = vadd.f32 %v5692, 1.0
  %v5745 = vadd.f32 %v5694, 1.0
  %v5746 = vadd.f32 %v5696, 1.0
  %v5747 = vadd.f32 %v5698, 1.0
  %v5748 = vadd.f32 %v5700, 1.0
  %v5749 = vrcp.pop %v5701
  %v5750 = vmul.f32 1.0, %v5749
  %v5751 = vrcp.pop %v5702
  %v5752 = vmul.f32 1.0, %v5751
  %v5753 = vrcp.pop %v5703
  %v5754 = vmul.f32 1.0, %v5753
  %v5755 = vrcp.pop %v5704
  %v5756 = vmul.f32 1.0, %v5755
  %v5757 = vrcp.pop %v5705
  %v5758 = vmul.f32 1.0, %v5757
  %v5759 = vrcp.pop %v5706
  %v5760 = vmul.f32 1.0, %v5759
  %v5761 = vrcp.pop %v5707
  %v5762 = vmul.f32 1.0, %v5761
  %v5763 = vrcp.pop %v5708
  %v5764 = vmul.f32 1.0, %v5763
  %v5765 = vrcp.pop %v5709
  %v5766 = vmul.f32 1.0, %v5765
  %v5767 = vrcp.pop %v5710
  %v5768 = vmul.f32 1.0, %v5767
  %v5769 = vrcp.pop %v5711
  %v5770 = vmul.f32 1.0, %v5769
  %v5771 = vrcp.pop %v5712
  %v5772 = vmul.f32 1.0, %v5771
  %v5773 = vrcp.pop %v5713
  %v5774 = vmul.f32 1.0, %v5773
  %v5775 = vrcp.pop %v5714
  %v5776 = vmul.f32 1.0, %v5775
  %v5777 = vrcp.pop %v5715
  %v5778 = vmul.f32 1.0, %v5777
  %v5779 = vrcp.pop %v5716
  %v5780 = vmul.f32 1.0, %v5779
  %v5781 = vrcp.pop %v5717
  %v5782 = vmul.f32 1.0, %v5781
  %v5783 = vrcp.pop %v5718
  %v5784 = vmul.f32 1.0, %v5783
  %v5785 = vrcp.pop %v5719
  %v5786 = vmul.f32 1.0, %v5785
  %v5787 = vrcp.pop %v5720
  %v5788 = vmul.f32 1.0, %v5787
  %v5789 = vrcp.pop %v5721
  %v5790 = vmul.f32 1.0, %v5789
  %v5791 = vrcp.pop %v5722
  %v5792 = vmul.f32 1.0, %v5791
  %v5793 = vrcp.pop %v5723
  %v5794 = vmul.f32 1.0, %v5793
  %v5795 = vrcp.pop %v5724
  %v5796 = vmul.f32 1.0, %v5795
  %v5797 = vrcp.pop %v5725
  %v5798 = vmul.f32 1.0, %v5797
  %v5799 = vrcp.pop %v5726
  %v5800 = vmul.f32 1.0, %v5799
  %v5801 = vrcp.pop %v5727
  %v5802 = vmul.f32 1.0, %v5801
  %v5803 = vrcp.pop %v5728
  %v5804 = vmul.f32 1.0, %v5803
  %v5805 = vrcp.pop %v5729
  %v5806 = vmul.f32 1.0, %v5805
  %v5807 = vrcp.pop %v5730
  %v5808 = vmul.f32 1.0, %v5807
  %v5809 = vrcp.pop %v5731
  %v5810 = vmul.f32 1.0, %v5809
  %v5811 = vrcp.pop %v5732
  %v5812 = vmul.f32 1.0, %v5811
  %v5813 = vrcp.pop %v5733
  %v5814 = vmul.f32 1.0, %v5813
  %v5815 = vrcp.pop %v5734
  %v5816 = vmul.f32 1.0, %v5815
  %v5817 = vrcp.pop %v5735
  %v5818 = vmul.f32 1.0, %v5817
  %v5819 = vrcp.pop %v5736
  %v5820 = vmul.f32 1.0, %v5819
  %v5821 = vrcp.pop %v5737
  %v5822 = vmul.f32 1.0, %v5821
  %v5823 = vrcp.pop %v5738
  %v5824 = vmul.f32 1.0, %v5823
  %v5825 = vrcp.pop %v5739
  %v5826 = vmul.f32 1.0, %v5825
  %v5827 = vrcp.pop %v5740
  %v5828 = vmul.f32 1.0, %v5827
  %v5829 = vrcp.pop %v5741
  %v5830 = vmul.f32 1.0, %v5829
  %v5831 = vrcp.pop %v5742
  %v5832 = vmul.f32 1.0, %v5831
  %v5833 = vrcp.pop %v5743
  %v5834 = vmul.f32 1.0, %v5833
  %v5835 = vrcp.pop %v5744
  %v5836 = vmul.f32 1.0, %v5835
  %v5837 = vrcp.pop %v5745
  %v5838 = vmul.f32 1.0, %v5837
  %v5839 = vrcp.pop %v5746
  %v5840 = vmul.f32 1.0, %v5839
  %v5841 = vrcp.pop %v5747
  %v5842 = vmul.f32 1.0, %v5841
  %v5843 = vrcp.pop %v5748
  %v5844 = vmul.f32 1.0, %v5843
  %v5845 = vtanh.pop %v5541
  %v5846 = vtanh.pop %v5542
  %v5847 = vtanh.pop %v5543
  %v5848 = vtanh.pop %v5544
  %v5849 = vtanh.pop %v5545
  %v5850 = vtanh.pop %v5546
  %v5851 = vtanh.pop %v5547
  %v5852 = vtanh.pop %v5548
  %v5853 = vtanh.pop %v5549
  %v5854 = vtanh.pop %v5550
  %v5855 = vtanh.pop %v5551
  %v5856 = vtanh.pop %v5552
  %v5857 = vtanh.pop %v5553
  %v5858 = vtanh.pop %v5554
  %v5859 = vtanh.pop %v5555
  %v5860 = vtanh.pop %v5556
  %v5861 = vmul.f32 %v5782, %v5043
  %v5862 = vmul.f32 %v5784, %v5044
  %v5863 = vmul.f32 %v5786, %v5045
  %v5864 = vmul.f32 %v5788, %v5046
  %v5865 = vmul.f32 %v5790, %v5047
  %v5866 = vmul.f32 %v5792, %v5048
  %v5867 = vmul.f32 %v5794, %v5049
  %v5868 = vmul.f32 %v5796, %v5050
  %v5869 = vmul.f32 %v5798, %v5051
  %v5870 = vmul.f32 %v5800, %v5052
  %v5871 = vmul.f32 %v5802, %v5053
  %v5872 = vmul.f32 %v5804, %v5054
  %v5873 = vmul.f32 %v5806, %v5055
  %v5874 = vmul.f32 %v5808, %v5056
  %v5875 = vmul.f32 %v5810, %v5057
  %v5876 = vmul.f32 %v5812, %v5058
  %v5877 = vmul.f32 %v5750, %v5845
  %v5878 = vmul.f32 %v5752, %v5846
  %v5879 = vmul.f32 %v5754, %v5847
  %v5880 = vmul.f32 %v5756, %v5848
  %v5881 = vmul.f32 %v5758, %v5849
  %v5882 = vmul.f32 %v5760, %v5850
  %v5883 = vmul.f32 %v5762, %v5851
  %v5884 = vmul.f32 %v5764, %v5852
  %v5885 = vmul.f32 %v5766, %v5853
  %v5886 = vmul.f32 %v5768, %v5854
  %v5887 = vmul.f32 %v5770, %v5855
  %v5888 = vmul.f32 %v5772, %v5856
  %v5889 = vmul.f32 %v5774, %v5857
  %v5890 = vmul.f32 %v5776, %v5858
  %v5891 = vmul.f32 %v5778, %v5859
  %v5892 = vmul.f32 %v5780, %v5860
  %v5893 = vadd.f32 %v5861, %v5877
  %v5894 = vadd.f32 %v5862, %v5878
  %v5895 = vadd.f32 %v5863, %v5879
  %v5896 = vadd.f32 %v5864, %v5880
  %v5897 = vadd.f32 %v5865, %v5881
  %v5898 = vadd.f32 %v5866, %v5882
  %v5899 = vadd.f32 %v5867, %v5883
  %v5900 = vadd.f32 %v5868, %v5884
  %v5901 = vadd.f32 %v5869, %v5885
  %v5902 = vadd.f32 %v5870, %v5886
  %v5903 = vadd.f32 %v5871, %v5887
  %v5904 = vadd.f32 %v5872, %v5888
  %v5905 = vadd.f32 %v5873, %v5889
  %v5906 = vadd.f32 %v5874, %v5890
  %v5907 = vadd.f32 %v5875, %v5891
  %v5908 = vadd.f32 %v5876, %v5892
  %v5909 = vtanh.pop %v5893
  %v5910 = vtanh.pop %v5894
  %v5911 = vtanh.pop %v5895
  %v5912 = vtanh.pop %v5896
  %v5913 = vtanh.pop %v5897
  %v5914 = vtanh.pop %v5898
  %v5915 = vtanh.pop %v5899
  %v5916 = vtanh.pop %v5900
  %v5917 = vtanh.pop %v5901
  %v5918 = vtanh.pop %v5902
  %v5919 = vtanh.pop %v5903
  %v5920 = vtanh.pop %v5904
  %v5921 = vtanh.pop %v5905
  %v5922 = vtanh.pop %v5906
  %v5923 = vtanh.pop %v5907
  %v5924 = vtanh.pop %v5908
  %v5925 = vmul.f32 %v5814, %v5909
  %v5926 = vmul.f32 %v5816, %v5910
  %v5927 = vmul.f32 %v5818, %v5911
  %v5928 = vmul.f32 %v5820, %v5912
  %v5929 = vmul.f32 %v5822, %v5913
  %v5930 = vmul.f32 %v5824, %v5914
  %v5931 = vmul.f32 %v5826, %v5915
  %v5932 = vmul.f32 %v5828, %v5916
  %v5933 = vmul.f32 %v5830, %v5917
  %v5934 = vmul.f32 %v5832, %v5918
  %v5935 = vmul.f32 %v5834, %v5919
  %v5936 = vmul.f32 %v5836, %v5920
  %v5937 = vmul.f32 %v5838, %v5921
  %v5938 = vmul.f32 %v5840, %v5922
  %v5939 = vmul.f32 %v5842, %v5923
  %v5940 = vmul.f32 %v5844, %v5924
  %5941 = vst [vmem:[#allocation3 + $0x100] sm:$0xff] %v5925
  %5942 = vst [vmem:[#allocation3 + $0x108] sm:$0xff] %v5926
  %5943 = vst [vmem:[#allocation3 + $0x110] sm:$0xff] %v5927
  %5944 = vst [vmem:[#allocation3 + $0x118] sm:$0xff] %v5928
  %5945 = vst [vmem:[#allocation3 + $0x120] sm:$0xff] %v5929
  %5946 = vst [vmem:[#allocation3 + $0x128] sm:$0xff] %v5930
  %5947 = vst [vmem:[#allocation3 + $0x130] sm:$0xff] %v5931
  %5948 = vst [vmem:[#allocation3 + $0x138] sm:$0xff] %v5932
  %5949 = vst [vmem:[#allocation3 + $0x140] sm:$0xff] %v5933
  %5950 = vst [vmem:[#allocation3 + $0x148] sm:$0xff] %v5934
  %5951 = vst [vmem:[#allocation3 + $0x150] sm:$0xff] %v5935
  %5952 = vst [vmem:[#allocation3 + $0x158] sm:$0xff] %v5936
  %5953 = vst [vmem:[#allocation3 + $0x160] sm:$0xff] %v5937
  %5954 = vst [vmem:[#allocation3 + $0x168] sm:$0xff] %v5938
  %5955 = vst [vmem:[#allocation3 + $0x170] sm:$0xff] %v5939
  %5956 = vst [vmem:[#allocation3 + $0x178] sm:$0xff] %v5940
  %v5957 = vld [vmem:[#allocation2 + $0x60] sm:$0xff]
  %v5958 = vld [vmem:[#allocation2 + $0x68] sm:$0xff]
  %v5959 = vld [vmem:[#allocation2 + $0x70] sm:$0xff]
  %v5960 = vld [vmem:[#allocation2 + $0x78] sm:$0xff]
  %v5961 = vld [vmem:[#allocation2 + $0x160] sm:$0xff]
  %v5962 = vld [vmem:[#allocation2 + $0x168] sm:$0xff]
  %v5963 = vld [vmem:[#allocation2 + $0x170] sm:$0xff]
  %v5964 = vld [vmem:[#allocation2 + $0x178] sm:$0xff]
  %v5965 = vld [vmem:[#allocation2 + $0x260] sm:$0xff]
  %v5966 = vld [vmem:[#allocation2 + $0x268] sm:$0xff]
  %v5967 = vld [vmem:[#allocation2 + $0x270] sm:$0xff]
  %v5968 = vld [vmem:[#allocation2 + $0x278] sm:$0xff]
  %v5969 = vld [vmem:[#allocation2 + $0x360] sm:$0xff]
  %v5970 = vld [vmem:[#allocation2 + $0x368] sm:$0xff]
  %v5971 = vld [vmem:[#allocation2 + $0x370] sm:$0xff]
  %v5972 = vld [vmem:[#allocation2 + $0x378] sm:$0xff]
  %v5973 = vld [vmem:[#allocation2 + $0x460] sm:$0xff]
  %v5974 = vld [vmem:[#allocation2 + $0x468] sm:$0xff]
  %v5975 = vld [vmem:[#allocation2 + $0x470] sm:$0xff]
  %v5976 = vld [vmem:[#allocation2 + $0x478] sm:$0xff]
  %v5977 = vld [vmem:[#allocation2 + $0x560] sm:$0xff]
  %v5978 = vld [vmem:[#allocation2 + $0x568] sm:$0xff]
  %v5979 = vld [vmem:[#allocation2 + $0x570] sm:$0xff]
  %v5980 = vld [vmem:[#allocation2 + $0x578] sm:$0xff]
  %v5981 = vld [vmem:[#allocation2 + $0x660] sm:$0xff]
  %v5982 = vld [vmem:[#allocation2 + $0x668] sm:$0xff]
  %v5983 = vld [vmem:[#allocation2 + $0x670] sm:$0xff]
  %v5984 = vld [vmem:[#allocation2 + $0x678] sm:$0xff]
  %v5985 = vld [vmem:[#allocation2 + $0x760] sm:$0xff]
  %v5986 = vld [vmem:[#allocation2 + $0x768] sm:$0xff]
  %v5987 = vld [vmem:[#allocation2 + $0x770] sm:$0xff]
  %v5988 = vld [vmem:[#allocation2 + $0x778] sm:$0xff]
  %v5989 = vld [vmem:[#allocation2 + $0x860] sm:$0xff]
  %v5990 = vld [vmem:[#allocation2 + $0x868] sm:$0xff]
  %v5991 = vld [vmem:[#allocation2 + $0x870] sm:$0xff]
  %v5992 = vld [vmem:[#allocation2 + $0x878] sm:$0xff]
  %v5993 = vld [vmem:[#allocation2 + $0x960] sm:$0xff]
  %v5994 = vld [vmem:[#allocation2 + $0x968] sm:$0xff]
  %v5995 = vld [vmem:[#allocation2 + $0x970] sm:$0xff]
  %v5996 = vld [vmem:[#allocation2 + $0x978] sm:$0xff]
  %v5997 = vld [vmem:[#allocation2 + $0xa60] sm:$0xff]
  %v5998 = vld [vmem:[#allocation2 + $0xa68] sm:$0xff]
  %v5999 = vld [vmem:[#allocation2 + $0xa70] sm:$0xff]
  %v6000 = vld [vmem:[#allocation2 + $0xa78] sm:$0xff]
  %v6001 = vld [vmem:[#allocation2 + $0xb60] sm:$0xff]
  %v6002 = vld [vmem:[#allocation2 + $0xb68] sm:$0xff]
  %v6003 = vld [vmem:[#allocation2 + $0xb70] sm:$0xff]
  %v6004 = vld [vmem:[#allocation2 + $0xb78] sm:$0xff]
  %v6005 = vld [vmem:[#allocation2 + $0xc60] sm:$0xff]
  %v6006 = vld [vmem:[#allocation2 + $0xc68] sm:$0xff]
  %v6007 = vld [vmem:[#allocation2 + $0xc70] sm:$0xff]
  %v6008 = vld [vmem:[#allocation2 + $0xc78] sm:$0xff]
  %v6009 = vld [vmem:[#allocation2 + $0xd60] sm:$0xff]
  %v6010 = vld [vmem:[#allocation2 + $0xd68] sm:$0xff]
  %v6011 = vld [vmem:[#allocation2 + $0xd70] sm:$0xff]
  %v6012 = vld [vmem:[#allocation2 + $0xd78] sm:$0xff]
  %v6013 = vld [vmem:[#allocation2 + $0xe60] sm:$0xff]
  %v6014 = vld [vmem:[#allocation2 + $0xe68] sm:$0xff]
  %v6015 = vld [vmem:[#allocation2 + $0xe70] sm:$0xff]
  %v6016 = vld [vmem:[#allocation2 + $0xe78] sm:$0xff]
  %v6017 = vld [vmem:[#allocation2 + $0xf60] sm:$0xff]
  %v6018 = vld [vmem:[#allocation2 + $0xf68] sm:$0xff]
  %v6019 = vld [vmem:[#allocation2 + $0xf70] sm:$0xff]
  %v6020 = vld [vmem:[#allocation2 + $0xf78] sm:$0xff]
  %6021 = vmatprep.subr.mxu0 %v5926
  %6022 = vmatpush1.msra.mxu0 %v5925
  %6023 = vmatprep.subr.mxu0 %v5930
  %6024 = vmatpush1.msra.mxu0 %v5929
  %6025 = vmatprep.subr.mxu0 %v5934
  %6026 = vmatpush1.msra.mxu0 %v5933
  %6027 = vmatprep.subr.mxu0 %v5938
  %6028 = vmatpush1.msra.mxu0 %v5937
  %6029 = vmatprep.subr.mxu0 0.0
  %6030 = vmatpush1.msra.mxu0 0.0
  %6031 = vmatprep.subr.mxu0 0.0
  %6032 = vmatpush1.msra.mxu0 0.0
  %6033 = vmatprep.subr.mxu0 0.0
  %6034 = vmatpush1.msra.mxu0 0.0
  %6035 = vmatprep.subr.mxu0 0.0
  %6036 = vmatpush1.msra.mxu0 0.0
  %6037 = vmatprep.subr.mxu0 0.0
  %6038 = vmatpush1.msra.mxu0 0.0
  %6039 = vmatprep.subr.mxu0 0.0
  %6040 = vmatpush1.msra.mxu0 0.0
  %6041 = vmatprep.subr.mxu0 0.0
  %6042 = vmatpush1.msra.mxu0 0.0
  %6043 = vmatprep.subr.mxu0 0.0
  %6044 = vmatpush1.msra.mxu0 0.0
  %6045 = vmatprep.subr.mxu0 0.0
  %6046 = vmatpush1.msra.mxu0 0.0
  %6047 = vmatprep.subr.mxu0 0.0
  %6048 = vmatpush1.msra.mxu0 0.0
  %6049 = vmatprep.subr.mxu0 0.0
  %6050 = vmatpush1.msra.mxu0 0.0
  %6051 = vmatprep.subr.mxu0 0.0
  %6052 = vmatpush1.msra.mxu0 0.0
  %6053 = vmatprep.subr.mxu0 0.0
  %6054 = vmatpush1.msra.mxu0 0.0
  %6055 = vmatprep.subr.mxu0 0.0
  %6056 = vmatpush1.msra.mxu0 0.0
  %6057 = vmatprep.subr.mxu0 0.0
  %6058 = vmatpush1.msra.mxu0 0.0
  %6059 = vmatprep.subr.mxu0 0.0
  %6060 = vmatpush1.msra.mxu0 0.0
  %6061 = vmatprep.subr.mxu0 0.0
  %6062 = vmatpush1.msra.mxu0 0.0
  %6063 = vmatprep.subr.mxu0 0.0
  %6064 = vmatpush1.msra.mxu0 0.0
  %6065 = vmatprep.subr.mxu0 0.0
  %6066 = vmatpush1.msra.mxu0 0.0
  %6067 = vmatprep.subr.mxu0 0.0
  %6068 = vmatpush1.msra.mxu0 0.0
  %6069 = vmatprep.subr.mxu0 0.0
  %6070 = vmatpush1.msra.mxu0 0.0
  %6071 = vmatprep.subr.mxu0 0.0
  %6072 = vmatpush1.msra.mxu0 0.0
  %6073 = vmatprep.subr.mxu0 0.0
  %6074 = vmatpush1.msra.mxu0 0.0
  %6075 = vmatprep.subr.mxu0 0.0
  %6076 = vmatpush1.msra.mxu0 0.0
  %6077 = vmatprep.subr.mxu0 0.0
  %6078 = vmatpush1.msra.mxu0 0.0
  %6079 = vmatprep.subr.mxu0 0.0
  %6080 = vmatpush1.msra.mxu0 0.0
  %6081 = vmatprep.subr.mxu0 0.0
  %6082 = vmatpush1.msra.mxu0 0.0
  %6083 = vmatprep.subr.mxu0 0.0
  %6084 = vmatpush1.msra.mxu0 0.0
  %6085 = vmatprep.mubr.f32.mxu0 0.0
  %6086 = vmatmul.mubr.f32.gmra.mrb[0].mxu0 %v3424
  %v6087 = vpop.f32.mrb[0].mxu0
  %v6088 = vadd.f32 0.0, %v6087
  %v6089 = vpop.f32.mrb[0].mxu0
  %v6090 = vadd.f32 0.0, %v6089
  %6091 = vmatprep.mubr.f32.mxu0 0.0
  %6092 = vmatmul.mubr.f32.gmra.mrb[0].mxu0 %v3427
  %v6093 = vpop.f32.mrb[0].mxu0
  %v6094 = vadd.f32 0.0, %v6093
  %v6095 = vpop.f32.mrb[0].mxu0
  %v6096 = vadd.f32 0.0, %v6095
  %6097 = vmatprep.mubr.f32.mxu0 0.0
  %6098 = vmatmul.mubr.f32.gmra.mrb[0].mxu0 %v3430
  %v6099 = vpop.f32.mrb[0].mxu0
  %v6100 = vadd.f32 0.0, %v6099
  %v6101 = vpop.f32.mrb[0].mxu0
  %v6102 = vadd.f32 0.0, %v6101
  %6103 = vmatprep.mubr.f32.mxu0 0.0
  %6104 = vmatmul.mubr.f32.gmra.mrb[0].mxu0 %v3433
  %v6105 = vpop.f32.mrb[0].mxu0
  %v6106 = vadd.f32 0.0, %v6105
  %v6107 = vpop.f32.mrb[0].mxu0
  %v6108 = vadd.f32 0.0, %v6107
  %6109 = vmatprep.mubr.f32.mxu0 0.0
  %6110 = vmatmul.mubr.f32.gmra.mrb[0].mxu0 %v3436
  %v6111 = vpop.f32.mrb[0].mxu0
  %v6112 = vadd.f32 0.0, %v6111
  %v6113 = vpop.f32.mrb[0].mxu0
  %v6114 = vadd.f32 0.0, %v6113
  %6115 = vmatprep.mubr.f32.mxu0 0.0
  %6116 = vmatmul.mubr.f32.gmra.mrb[0].mxu0 %v3439
  %v6117 = vpop.f32.mrb[0].mxu0
  %v6118 = vadd.f32 0.0, %v6117
  %v6119 = vpop.f32.mrb[0].mxu0
  %v6120 = vadd.f32 0.0, %v6119
  %6121 = vmatprep.mubr.f32.mxu0 0.0
  %6122 = vmatmul.mubr.f32.gmra.mrb[0].mxu0 %v3442
  %v6123 = vpop.f32.mrb[0].mxu0
  %v6124 = vadd.f32 0.0, %v6123
  %v6125 = vpop.f32.mrb[0].mxu0
  %v6126 = vadd.f32 0.0, %v6125
  %6127 = vmatprep.mubr.f32.mxu0 0.0
  %6128 = vmatmul.mubr.f32.gmra.mrb[0].mxu0 %v3445
  %v6129 = vpop.f32.mrb[0].mxu0
  %v6130 = vadd.f32 0.0, %v6129
  %v6131 = vpop.f32.mrb[0].mxu0
  %v6132 = vadd.f32 0.0, %v6131
  %6133 = vmatprep.mubr.f32.mxu0 0.0
  %6134 = vmatmul.mubr.f32.gmra.mrb[0].mxu0 %v3448
  %v6135 = vpop.f32.mrb[0].mxu0
  %v6136 = vadd.f32 0.0, %v6135
  %v6137 = vpop.f32.mrb[0].mxu0
  %v6138 = vadd.f32 0.0, %v6137
  %6139 = vmatprep.mubr.f32.mxu0 0.0
  %6140 = vmatmul.mubr.f32.gmra.mrb[0].mxu0 %v3451
  %v6141 = vpop.f32.mrb[0].mxu0
  %v6142 = vadd.f32 0.0, %v6141
  %v6143 = vpop.f32.mrb[0].mxu0
  %v6144 = vadd.f32 0.0, %v6143
  %6145 = vmatprep.mubr.f32.mxu0 0.0
  %6146 = vmatmul.mubr.f32.gmra.mrb[0].mxu0 %v3454
  %v6147 = vpop.f32.mrb[0].mxu0
  %v6148 = vadd.f32 0.0, %v6147
  %v6149 = vpop.f32.mrb[0].mxu0
  %v6150 = vadd.f32 0.0, %v6149
  %6151 = vmatprep.mubr.f32.mxu0 0.0
  %6152 = vmatmul.mubr.f32.gmra.mrb[0].mxu0 %v3457
  %v6153 = vpop.f32.mrb[0].mxu0
  %v6154 = vadd.f32 0.0, %v6153
  %v6155 = vpop.f32.mrb[0].mxu0
  %v6156 = vadd.f32 0.0, %v6155
  %6157 = vmatprep.mubr.f32.mxu0 0.0
  %6158 = vmatmul.mubr.f32.gmra.mrb[0].mxu0 %v3460
  %v6159 = vpop.f32.mrb[0].mxu0
  %v6160 = vadd.f32 0.0, %v6159
  %v6161 = vpop.f32.mrb[0].mxu0
  %v6162 = vadd.f32 0.0, %v6161
  %6163 = vmatprep.mubr.f32.mxu0 0.0
  %6164 = vmatmul.mubr.f32.gmra.mrb[0].mxu0 %v3463
  %v6165 = vpop.f32.mrb[0].mxu0
  %v6166 = vadd.f32 0.0, %v6165
  %v6167 = vpop.f32.mrb[0].mxu0
  %v6168 = vadd.f32 0.0, %v6167
  %6169 = vmatprep.mubr.f32.mxu0 0.0
  %6170 = vmatmul.mubr.f32.gmra.mrb[0].mxu0 %v3466
  %v6171 = vpop.f32.mrb[0].mxu0
  %v6172 = vadd.f32 0.0, %v6171
  %v6173 = vpop.f32.mrb[0].mxu0
  %v6174 = vadd.f32 0.0, %v6173
  %6175 = vmatprep.mubr.f32.mxu0 0.0
  %6176 = vmatmul.mubr.f32.gmra.mrb[0].mxu0 %v3469
  %v6177 = vpop.f32.mrb[0].mxu0
  %v6178 = vadd.f32 0.0, %v6177
  %v6179 = vpop.f32.mrb[0].mxu0
  %v6180 = vadd.f32 0.0, %v6179
  %6181 = vdwg.mxu0
  %6182 = vmatprep.subr.mxu0 %v5928
  %6183 = vmatpush1.msra.mxu0 %v5927
  %6184 = vmatprep.subr.mxu0 %v5932
  %6185 = vmatpush1.msra.mxu0 %v5931
  %6186 = vmatprep.subr.mxu0 %v5936
  %6187 = vmatpush1.msra.mxu0 %v5935
  %6188 = vmatprep.subr.mxu0 %v5940
  %6189 = vmatpush1.msra.mxu0 %v5939
  %6190 = vmatprep.subr.mxu0 0.0
  %6191 = vmatpush1.msra.mxu0 0.0
  %6192 = vmatprep.subr.mxu0 0.0
  %6193 = vmatpush1.msra.mxu0 0.0
  %6194 = vmatprep.subr.mxu0 0.0
  %6195 = vmatpush1.msra.mxu0 0.0
  %6196 = vmatprep.subr.mxu0 0.0
  %6197 = vmatpush1.msra.mxu0 0.0
  %6198 = vmatprep.subr.mxu0 0.0
  %6199 = vmatpush1.msra.mxu0 0.0
  %6200 = vmatprep.subr.mxu0 0.0
  %6201 = vmatpush1.msra.mxu0 0.0
  %6202 = vmatprep.subr.mxu0 0.0
  %6203 = vmatpush1.msra.mxu0 0.0
  %6204 = vmatprep.subr.mxu0 0.0
  %6205 = vmatpush1.msra.mxu0 0.0
  %6206 = vmatprep.subr.mxu0 0.0
  %6207 = vmatpush1.msra.mxu0 0.0
  %6208 = vmatprep.subr.mxu0 0.0
  %6209 = vmatpush1.msra.mxu0 0.0
  %6210 = vmatprep.subr.mxu0 0.0
  %6211 = vmatpush1.msra.mxu0 0.0
  %6212 = vmatprep.subr.mxu0 0.0
  %6213 = vmatpush1.msra.mxu0 0.0
  %6214 = vmatprep.subr.mxu0 0.0
  %6215 = vmatpush1.msra.mxu0 0.0
  %6216 = vmatprep.subr.mxu0 0.0
  %6217 = vmatpush1.msra.mxu0 0.0
  %6218 = vmatprep.subr.mxu0 0.0
  %6219 = vmatpush1.msra.mxu0 0.0
  %6220 = vmatprep.subr.mxu0 0.0
  %6221 = vmatpush1.msra.mxu0 0.0
  %6222 = vmatprep.subr.mxu0 0.0
  %6223 = vmatpush1.msra.mxu0 0.0
  %6224 = vmatprep.subr.mxu0 0.0
  %6225 = vmatpush1.msra.mxu0 0.0
  %6226 = vmatprep.subr.mxu0 0.0
  %6227 = vmatpush1.msra.mxu0 0.0
  %6228 = vmatprep.subr.mxu0 0.0
  %6229 = vmatpush1.msra.mxu0 0.0
  %6230 = vmatprep.subr.mxu0 0.0
  %6231 = vmatpush1.msra.mxu0 0.0
  %6232 = vmatprep.subr.mxu0 0.0
  %6233 = vmatpush1.msra.mxu0 0.0
  %6234 = vmatprep.subr.mxu0 0.0
  %6235 = vmatpush1.msra.mxu0 0.0
  %6236 = vmatprep.subr.mxu0 0.0
  %6237 = vmatpush1.msra.mxu0 0.0
  %6238 = vmatprep.subr.mxu0 0.0
  %6239 = vmatpush1.msra.mxu0 0.0
  %6240 = vmatprep.subr.mxu0 0.0
  %6241 = vmatpush1.msra.mxu0 0.0
  %6242 = vmatprep.subr.mxu0 0.0
  %6243 = vmatpush1.msra.mxu0 0.0
  %6244 = vmatprep.subr.mxu0 0.0
  %6245 = vmatpush1.msra.mxu0 0.0
  %6246 = vmatprep.mubr.f32.mxu0 0.0
  %6247 = vmatmul.mubr.f32.gmra.mrb[0].mxu0 %v3424
  %v6248 = vpop.f32.mrb[0].mxu0
  %v6249 = vadd.f32 0.0, %v6248
  %v6250 = vpop.f32.mrb[0].mxu0
  %v6251 = vadd.f32 0.0, %v6250
  %6252 = vmatprep.mubr.f32.mxu0 0.0
  %6253 = vmatmul.mubr.f32.gmra.mrb[0].mxu0 %v3427
  %v6254 = vpop.f32.mrb[0].mxu0
  %v6255 = vadd.f32 0.0, %v6254
  %v6256 = vpop.f32.mrb[0].mxu0
  %v6257 = vadd.f32 0.0, %v6256
  %6258 = vmatprep.mubr.f32.mxu0 0.0
  %6259 = vmatmul.mubr.f32.gmra.mrb[0].mxu0 %v3430
  %v6260 = vpop.f32.mrb[0].mxu0
  %v6261 = vadd.f32 0.0, %v6260
  %v6262 = vpop.f32.mrb[0].mxu0
  %v6263 = vadd.f32 0.0, %v6262
  %6264 = vmatprep.mubr.f32.mxu0 0.0
  %6265 = vmatmul.mubr.f32.gmra.mrb[0].mxu0 %v3433
  %v6266 = vpop.f32.mrb[0].mxu0
  %v6267 = vadd.f32 0.0, %v6266
  %v6268 = vpop.f32.mrb[0].mxu0
  %v6269 = vadd.f32 0.0, %v6268
  %6270 = vmatprep.mubr.f32.mxu0 0.0
  %6271 = vmatmul.mubr.f32.gmra.mrb[0].mxu0 %v3436
  %v6272 = vpop.f32.mrb[0].mxu0
  %v6273 = vadd.f32 0.0, %v6272
  %v6274 = vpop.f32.mrb[0].mxu0
  %v6275 = vadd.f32 0.0, %v6274
  %6276 = vmatprep.mubr.f32.mxu0 0.0
  %6277 = vmatmul.mubr.f32.gmra.mrb[0].mxu0 %v3439
  %v6278 = vpop.f32.mrb[0].mxu0
  %v6279 = vadd.f32 0.0, %v6278
  %v6280 = vpop.f32.mrb[0].mxu0
  %v6281 = vadd.f32 0.0, %v6280
  %6282 = vmatprep.mubr.f32.mxu0 0.0
  %6283 = vmatmul.mubr.f32.gmra.mrb[0].mxu0 %v3442
  %v6284 = vpop.f32.mrb[0].mxu0
  %v6285 = vadd.f32 0.0, %v6284
  %v6286 = vpop.f32.mrb[0].mxu0
  %v6287 = vadd.f32 0.0, %v6286
  %6288 = vmatprep.mubr.f32.mxu0 0.0
  %6289 = vmatmul.mubr.f32.gmra.mrb[0].mxu0 %v3445
  %v6290 = vpop.f32.mrb[0].mxu0
  %v6291 = vadd.f32 0.0, %v6290
  %v6292 = vpop.f32.mrb[0].mxu0
  %v6293 = vadd.f32 0.0, %v6292
  %6294 = vmatprep.mubr.f32.mxu0 0.0
  %6295 = vmatmul.mubr.f32.gmra.mrb[0].mxu0 %v3448
  %v6296 = vpop.f32.mrb[0].mxu0
  %v6297 = vadd.f32 0.0, %v6296
  %v6298 = vpop.f32.mrb[0].mxu0
  %v6299 = vadd.f32 0.0, %v6298
  %6300 = vmatprep.mubr.f32.mxu0 0.0
  %6301 = vmatmul.mubr.f32.gmra.mrb[0].mxu0 %v3451
  %v6302 = vpop.f32.mrb[0].mxu0
  %v6303 = vadd.f32 0.0, %v6302
  %v6304 = vpop.f32.mrb[0].mxu0
  %v6305 = vadd.f32 0.0, %v6304
  %6306 = vmatprep.mubr.f32.mxu0 0.0
  %6307 = vmatmul.mubr.f32.gmra.mrb[0].mxu0 %v3454
  %v6308 = vpop.f32.mrb[0].mxu0
  %v6309 = vadd.f32 0.0, %v6308
  %v6310 = vpop.f32.mrb[0].mxu0
  %v6311 = vadd.f32 0.0, %v6310
  %6312 = vmatprep.mubr.f32.mxu0 0.0
  %6313 = vmatmul.mubr.f32.gmra.mrb[0].mxu0 %v3457
  %v6314 = vpop.f32.mrb[0].mxu0
  %v6315 = vadd.f32 0.0, %v6314
  %v6316 = vpop.f32.mrb[0].mxu0
  %v6317 = vadd.f32 0.0, %v6316
  %6318 = vmatprep.mubr.f32.mxu0 0.0
  %6319 = vmatmul.mubr.f32.gmra.mrb[0].mxu0 %v3460
  %v6320 = vpop.f32.mrb[0].mxu0
  %v6321 = vadd.f32 0.0, %v6320
  %v6322 = vpop.f32.mrb[0].mxu0
  %v6323 = vadd.f32 0.0, %v6322
  %6324 = vmatprep.mubr.f32.mxu0 0.0
  %6325 = vmatmul.mubr.f32.gmra.mrb[0].mxu0 %v3463
  %v6326 = vpop.f32.mrb[0].mxu0
  %v6327 = vadd.f32 0.0, %v6326
  %v6328 = vpop.f32.mrb[0].mxu0
  %v6329 = vadd.f32 0.0, %v6328
  %6330 = vmatprep.mubr.f32.mxu0 0.0
  %6331 = vmatmul.mubr.f32.gmra.mrb[0].mxu0 %v3466
  %v6332 = vpop.f32.mrb[0].mxu0
  %v6333 = vadd.f32 0.0, %v6332
  %v6334 = vpop.f32.mrb[0].mxu0
  %v6335 = vadd.f32 0.0, %v6334
  %6336 = vmatprep.mubr.f32.mxu0 0.0
  %6337 = vmatmul.mubr.f32.gmra.mrb[0].mxu0 %v3469
  %v6338 = vpop.f32.mrb[0].mxu0
  %v6339 = vadd.f32 0.0, %v6338
  %v6340 = vpop.f32.mrb[0].mxu0
  %v6341 = vadd.f32 0.0, %v6340
  %6342 = vdwg.mxu0
  %v6343 = vadd.f32 %v5957, %v6088
  %v6344 = vadd.f32 %v5958, %v6090
  %v6345 = vadd.f32 %v5959, %v6249
  %v6346 = vadd.f32 %v5960, %v6251
  %v6347 = vadd.f32 %v5961, %v6094
  %v6348 = vadd.f32 %v5962, %v6096
  %v6349 = vadd.f32 %v5963, %v6255
  %v6350 = vadd.f32 %v5964, %v6257
  %v6351 = vadd.f32 %v5965, %v6100
  %v6352 = vadd.f32 %v5966, %v6102
  %v6353 = vadd.f32 %v5967, %v6261
  %v6354 = vadd.f32 %v5968, %v6263
  %v6355 = vadd.f32 %v5969, %v6106
  %v6356 = vadd.f32 %v5970, %v6108
  %v6357 = vadd.f32 %v5971, %v6267
  %v6358 = vadd.f32 %v5972, %v6269
  %v6359 = vadd.f32 %v5973, %v6112
  %v6360 = vadd.f32 %v5974, %v6114
  %v6361 = vadd.f32 %v5975, %v6273
  %v6362 = vadd.f32 %v5976, %v6275
  %v6363 = vadd.f32 %v5977, %v6118
  %v6364 = vadd.f32 %v5978, %v6120
  %v6365 = vadd.f32 %v5979, %v6279
  %v6366 = vadd.f32 %v5980, %v6281
  %v6367 = vadd.f32 %v5981, %v6124
  %v6368 = vadd.f32 %v5982, %v6126
  %v6369 = vadd.f32 %v5983, %v6285
  %v6370 = vadd.f32 %v5984, %v6287
  %v6371 = vadd.f32 %v5985, %v6130
  %v6372 = vadd.f32 %v5986, %v6132
  %v6373 = vadd.f32 %v5987, %v6291
  %v6374 = vadd.f32 %v5988, %v6293
  %v6375 = vadd.f32 %v5989, %v6136
  %v6376 = vadd.f32 %v5990, %v6138
  %v6377 = vadd.f32 %v5991, %v6297
  %v6378 = vadd.f32 %v5992, %v6299
  %v6379 = vadd.f32 %v5993, %v6142
  %v6380 = vadd.f32 %v5994, %v6144
  %v6381 = vadd.f32 %v5995, %v6303
  %v6382 = vadd.f32 %v5996, %v6305
  %v6383 = vadd.f32 %v5997, %v6148
  %v6384 = vadd.f32 %v5998, %v6150
  %v6385 = vadd.f32 %v5999, %v6309
  %v6386 = vadd.f32 %v6000, %v6311
  %v6387 = vadd.f32 %v6001, %v6154
  %v6388 = vadd.f32 %v6002, %v6156
  %v6389 = vadd.f32 %v6003, %v6315
  %v6390 = vadd.f32 %v6004, %v6317
  %v6391 = vadd.f32 %v6005, %v6160
  %v6392 = vadd.f32 %v6006, %v6162
  %v6393 = vadd.f32 %v6007, %v6321
  %v6394 = vadd.f32 %v6008, %v6323
  %v6395 = vadd.f32 %v6009, %v6166
  %v6396 = vadd.f32 %v6010, %v6168
  %v6397 = vadd.f32 %v6011, %v6327
  %v6398 = vadd.f32 %v6012, %v6329
  %v6399 = vadd.f32 %v6013, %v6172
  %v6400 = vadd.f32 %v6014, %v6174
  %v6401 = vadd.f32 %v6015, %v6333
  %v6402 = vadd.f32 %v6016, %v6335
  %v6403 = vadd.f32 %v6017, %v6178
  %v6404 = vadd.f32 %v6018, %v6180
  %v6405 = vadd.f32 %v6019, %v6339
  %v6406 = vadd.f32 %v6020, %v6341
  %v6407 = vxor.u32 %v6343, 2147483648
  %v6408 = vxor.u32 %v6344, 2147483648
  %v6409 = vxor.u32 %v6345, 2147483648
  %v6410 = vxor.u32 %v6346, 2147483648
  %v6411 = vxor.u32 %v6347, 2147483648
  %v6412 = vxor.u32 %v6348, 2147483648
  %v6413 = vxor.u32 %v6349, 2147483648
  %v6414 = vxor.u32 %v6350, 2147483648
  %v6415 = vxor.u32 %v6351, 2147483648
  %v6416 = vxor.u32 %v6352, 2147483648
  %v6417 = vxor.u32 %v6353, 2147483648
  %v6418 = vxor.u32 %v6354, 2147483648
  %v6419 = vxor.u32 %v6355, 2147483648
  %v6420 = vxor.u32 %v6356, 2147483648
  %v6421 = vxor.u32 %v6357, 2147483648
  %v6422 = vxor.u32 %v6358, 2147483648
  %v6423 = vxor.u32 %v6359, 2147483648
  %v6424 = vxor.u32 %v6360, 2147483648
  %v6425 = vxor.u32 %v6361, 2147483648
  %v6426 = vxor.u32 %v6362, 2147483648
  %v6427 = vxor.u32 %v6363, 2147483648
  %v6428 = vxor.u32 %v6364, 2147483648
  %v6429 = vxor.u32 %v6365, 2147483648
  %v6430 = vxor.u32 %v6366, 2147483648
  %v6431 = vxor.u32 %v6367, 2147483648
  %v6432 = vxor.u32 %v6368, 2147483648
  %v6433 = vxor.u32 %v6369, 2147483648
  %v6434 = vxor.u32 %v6370, 2147483648
  %v6435 = vxor.u32 %v6371, 2147483648
  %v6436 = vxor.u32 %v6372, 2147483648
  %v6437 = vxor.u32 %v6373, 2147483648
  %v6438 = vxor.u32 %v6374, 2147483648
  %v6439 = vxor.u32 %v6375, 2147483648
  %v6440 = vxor.u32 %v6376, 2147483648
  %v6441 = vxor.u32 %v6377, 2147483648
  %v6442 = vxor.u32 %v6378, 2147483648
  %v6443 = vxor.u32 %v6379, 2147483648
  %v6444 = vxor.u32 %v6380, 2147483648
  %v6445 = vxor.u32 %v6381, 2147483648
  %v6446 = vxor.u32 %v6382, 2147483648
  %v6447 = vxor.u32 %v6383, 2147483648
  %v6448 = vxor.u32 %v6384, 2147483648
  %v6449 = vxor.u32 %v6385, 2147483648
  %v6450 = vxor.u32 %v6386, 2147483648
  %v6451 = vxor.u32 %v6387, 2147483648
  %v6452 = vxor.u32 %v6388, 2147483648
  %v6453 = vxor.u32 %v6389, 2147483648
  %v6454 = vxor.u32 %v6390, 2147483648
  %v6455 = vmul.f32 %v6407, 1.442695
  %v6456 = vpow.pop %v6455
  %v6457 = vmul.f32 %v6408, 1.442695
  %v6458 = vpow.pop %v6457
  %v6459 = vmul.f32 %v6409, 1.442695
  %v6460 = vpow.pop %v6459
  %v6461 = vmul.f32 %v6410, 1.442695
  %v6462 = vpow.pop %v6461
  %v6463 = vmul.f32 %v6411, 1.442695
  %v6464 = vpow.pop %v6463
  %v6465 = vmul.f32 %v6412, 1.442695
  %v6466 = vpow.pop %v6465
  %v6467 = vmul.f32 %v6413, 1.442695
  %v6468 = vpow.pop %v6467
  %v6469 = vmul.f32 %v6414, 1.442695
  %v6470 = vpow.pop %v6469
  %v6471 = vmul.f32 %v6415, 1.442695
  %v6472 = vpow.pop %v6471
  %v6473 = vmul.f32 %v6416, 1.442695
  %v6474 = vpow.pop %v6473
  %v6475 = vmul.f32 %v6417, 1.442695
  %v6476 = vpow.pop %v6475
  %v6477 = vmul.f32 %v6418, 1.442695
  %v6478 = vpow.pop %v6477
  %v6479 = vmul.f32 %v6419, 1.442695
  %v6480 = vpow.pop %v6479
  %v6481 = vmul.f32 %v6420, 1.442695
  %v6482 = vpow.pop %v6481
  %v6483 = vmul.f32 %v6421, 1.442695
  %v6484 = vpow.pop %v6483
  %v6485 = vmul.f32 %v6422, 1.442695
  %v6486 = vpow.pop %v6485
  %v6487 = vmul.f32 %v6423, 1.442695
  %v6488 = vpow.pop %v6487
  %v6489 = vmul.f32 %v6424, 1.442695
  %v6490 = vpow.pop %v6489
  %v6491 = vmul.f32 %v6425, 1.442695
  %v6492 = vpow.pop %v6491
  %v6493 = vmul.f32 %v6426, 1.442695
  %v6494 = vpow.pop %v6493
  %v6495 = vmul.f32 %v6427, 1.442695
  %v6496 = vpow.pop %v6495
  %v6497 = vmul.f32 %v6428, 1.442695
  %v6498 = vpow.pop %v6497
  %v6499 = vmul.f32 %v6429, 1.442695
  %v6500 = vpow.pop %v6499
  %v6501 = vmul.f32 %v6430, 1.442695
  %v6502 = vpow.pop %v6501
  %v6503 = vmul.f32 %v6431, 1.442695
  %v6504 = vpow.pop %v6503
  %v6505 = vmul.f32 %v6432, 1.442695
  %v6506 = vpow.pop %v6505
  %v6507 = vmul.f32 %v6433, 1.442695
  %v6508 = vpow.pop %v6507
  %v6509 = vmul.f32 %v6434, 1.442695
  %v6510 = vpow.pop %v6509
  %v6511 = vmul.f32 %v6435, 1.442695
  %v6512 = vpow.pop %v6511
  %v6513 = vmul.f32 %v6436, 1.442695
  %v6514 = vpow.pop %v6513
  %v6515 = vmul.f32 %v6437, 1.442695
  %v6516 = vpow.pop %v6515
  %v6517 = vmul.f32 %v6438, 1.442695
  %v6518 = vpow.pop %v6517
  %v6519 = vmul.f32 %v6439, 1.442695
  %v6520 = vpow.pop %v6519
  %v6521 = vmul.f32 %v6440, 1.442695
  %v6522 = vpow.pop %v6521
  %v6523 = vmul.f32 %v6441, 1.442695
  %v6524 = vpow.pop %v6523
  %v6525 = vmul.f32 %v6442, 1.442695
  %v6526 = vpow.pop %v6525
  %v6527 = vmul.f32 %v6443, 1.442695
  %v6528 = vpow.pop %v6527
  %v6529 = vmul.f32 %v6444, 1.442695
  %v6530 = vpow.pop %v6529
  %v6531 = vmul.f32 %v6445, 1.442695
  %v6532 = vpow.pop %v6531
  %v6533 = vmul.f32 %v6446, 1.442695
  %v6534 = vpow.pop %v6533
  %v6535 = vmul.f32 %v6447, 1.442695
  %v6536 = vpow.pop %v6535
  %v6537 = vmul.f32 %v6448, 1.442695
  %v6538 = vpow.pop %v6537
  %v6539 = vmul.f32 %v6449, 1.442695
  %v6540 = vpow.pop %v6539
  %v6541 = vmul.f32 %v6450, 1.442695
  %v6542 = vpow.pop %v6541
  %v6543 = vmul.f32 %v6451, 1.442695
  %v6544 = vpow.pop %v6543
  %v6545 = vmul.f32 %v6452, 1.442695
  %v6546 = vpow.pop %v6545
  %v6547 = vmul.f32 %v6453, 1.442695
  %v6548 = vpow.pop %v6547
  %v6549 = vmul.f32 %v6454, 1.442695
  %v6550 = vpow.pop %v6549
  %v6551 = vadd.f32 %v6456, 1.0
  %v6552 = vadd.f32 %v6458, 1.0
  %v6553 = vadd.f32 %v6460, 1.0
  %v6554 = vadd.f32 %v6462, 1.0
  %v6555 = vadd.f32 %v6464, 1.0
  %v6556 = vadd.f32 %v6466, 1.0
  %v6557 = vadd.f32 %v6468, 1.0
  %v6558 = vadd.f32 %v6470, 1.0
  %v6559 = vadd.f32 %v6472, 1.0
  %v6560 = vadd.f32 %v6474, 1.0
  %v6561 = vadd.f32 %v6476, 1.0
  %v6562 = vadd.f32 %v6478, 1.0
  %v6563 = vadd.f32 %v6480, 1.0
  %v6564 = vadd.f32 %v6482, 1.0
  %v6565 = vadd.f32 %v6484, 1.0
  %v6566 = vadd.f32 %v6486, 1.0
  %v6567 = vadd.f32 %v6488, 1.0
  %v6568 = vadd.f32 %v6490, 1.0
  %v6569 = vadd.f32 %v6492, 1.0
  %v6570 = vadd.f32 %v6494, 1.0
  %v6571 = vadd.f32 %v6496, 1.0
  %v6572 = vadd.f32 %v6498, 1.0
  %v6573 = vadd.f32 %v6500, 1.0
  %v6574 = vadd.f32 %v6502, 1.0
  %v6575 = vadd.f32 %v6504, 1.0
  %v6576 = vadd.f32 %v6506, 1.0
  %v6577 = vadd.f32 %v6508, 1.0
  %v6578 = vadd.f32 %v6510, 1.0
  %v6579 = vadd.f32 %v6512, 1.0
  %v6580 = vadd.f32 %v6514, 1.0
  %v6581 = vadd.f32 %v6516, 1.0
  %v6582 = vadd.f32 %v6518, 1.0
  %v6583 = vadd.f32 %v6520, 1.0
  %v6584 = vadd.f32 %v6522, 1.0
  %v6585 = vadd.f32 %v6524, 1.0
  %v6586 = vadd.f32 %v6526, 1.0
  %v6587 = vadd.f32 %v6528, 1.0
  %v6588 = vadd.f32 %v6530, 1.0
  %v6589 = vadd.f32 %v6532, 1.0
  %v6590 = vadd.f32 %v6534, 1.0
  %v6591 = vadd.f32 %v6536, 1.0
  %v6592 = vadd.f32 %v6538, 1.0
  %v6593 = vadd.f32 %v6540, 1.0
  %v6594 = vadd.f32 %v6542, 1.0
  %v6595 = vadd.f32 %v6544, 1.0
  %v6596 = vadd.f32 %v6546, 1.0
  %v6597 = vadd.f32 %v6548, 1.0
  %v6598 = vadd.f32 %v6550, 1.0
  %v6599 = vrcp.pop %v6551
  %v6600 = vmul.f32 1.0, %v6599
  %v6601 = vrcp.pop %v6552
  %v6602 = vmul.f32 1.0, %v6601
  %v6603 = vrcp.pop %v6553
  %v6604 = vmul.f32 1.0, %v6603
  %v6605 = vrcp.pop %v6554
  %v6606 = vmul.f32 1.0, %v6605
  %v6607 = vrcp.pop %v6555
  %v6608 = vmul.f32 1.0, %v6607
  %v6609 = vrcp.pop %v6556
  %v6610 = vmul.f32 1.0, %v6609
  %v6611 = vrcp.pop %v6557
  %v6612 = vmul.f32 1.0, %v6611
  %v6613 = vrcp.pop %v6558
  %v6614 = vmul.f32 1.0, %v6613
  %v6615 = vrcp.pop %v6559
  %v6616 = vmul.f32 1.0, %v6615
  %v6617 = vrcp.pop %v6560
  %v6618 = vmul.f32 1.0, %v6617
  %v6619 = vrcp.pop %v6561
  %v6620 = vmul.f32 1.0, %v6619
  %v6621 = vrcp.pop %v6562
  %v6622 = vmul.f32 1.0, %v6621
  %v6623 = vrcp.pop %v6563
  %v6624 = vmul.f32 1.0, %v6623
  %v6625 = vrcp.pop %v6564
  %v6626 = vmul.f32 1.0, %v6625
  %v6627 = vrcp.pop %v6565
  %v6628 = vmul.f32 1.0, %v6627
  %v6629 = vrcp.pop %v6566
  %v6630 = vmul.f32 1.0, %v6629
  %v6631 = vrcp.pop %v6567
  %v6632 = vmul.f32 1.0, %v6631
  %v6633 = vrcp.pop %v6568
  %v6634 = vmul.f32 1.0, %v6633
  %v6635 = vrcp.pop %v6569
  %v6636 = vmul.f32 1.0, %v6635
  %v6637 = vrcp.pop %v6570
  %v6638 = vmul.f32 1.0, %v6637
  %v6639 = vrcp.pop %v6571
  %v6640 = vmul.f32 1.0, %v6639
  %v6641 = vrcp.pop %v6572
  %v6642 = vmul.f32 1.0, %v6641
  %v6643 = vrcp.pop %v6573
  %v6644 = vmul.f32 1.0, %v6643
  %v6645 = vrcp.pop %v6574
  %v6646 = vmul.f32 1.0, %v6645
  %v6647 = vrcp.pop %v6575
  %v6648 = vmul.f32 1.0, %v6647
  %v6649 = vrcp.pop %v6576
  %v6650 = vmul.f32 1.0, %v6649
  %v6651 = vrcp.pop %v6577
  %v6652 = vmul.f32 1.0, %v6651
  %v6653 = vrcp.pop %v6578
  %v6654 = vmul.f32 1.0, %v6653
  %v6655 = vrcp.pop %v6579
  %v6656 = vmul.f32 1.0, %v6655
  %v6657 = vrcp.pop %v6580
  %v6658 = vmul.f32 1.0, %v6657
  %v6659 = vrcp.pop %v6581
  %v6660 = vmul.f32 1.0, %v6659
  %v6661 = vrcp.pop %v6582
  %v6662 = vmul.f32 1.0, %v6661
  %v6663 = vrcp.pop %v6583
  %v6664 = vmul.f32 1.0, %v6663
  %v6665 = vrcp.pop %v6584
  %v6666 = vmul.f32 1.0, %v6665
  %v6667 = vrcp.pop %v6585
  %v6668 = vmul.f32 1.0, %v6667
  %v6669 = vrcp.pop %v6586
  %v6670 = vmul.f32 1.0, %v6669
  %v6671 = vrcp.pop %v6587
  %v6672 = vmul.f32 1.0, %v6671
  %v6673 = vrcp.pop %v6588
  %v6674 = vmul.f32 1.0, %v6673
  %v6675 = vrcp.pop %v6589
  %v6676 = vmul.f32 1.0, %v6675
  %v6677 = vrcp.pop %v6590
  %v6678 = vmul.f32 1.0, %v6677
  %v6679 = vrcp.pop %v6591
  %v6680 = vmul.f32 1.0, %v6679
  %v6681 = vrcp.pop %v6592
  %v6682 = vmul.f32 1.0, %v6681
  %v6683 = vrcp.pop %v6593
  %v6684 = vmul.f32 1.0, %v6683
  %v6685 = vrcp.pop %v6594
  %v6686 = vmul.f32 1.0, %v6685
  %v6687 = vrcp.pop %v6595
  %v6688 = vmul.f32 1.0, %v6687
  %v6689 = vrcp.pop %v6596
  %v6690 = vmul.f32 1.0, %v6689
  %v6691 = vrcp.pop %v6597
  %v6692 = vmul.f32 1.0, %v6691
  %v6693 = vrcp.pop %v6598
  %v6694 = vmul.f32 1.0, %v6693
  %v6695 = vtanh.pop %v6391
  %v6696 = vtanh.pop %v6392
  %v6697 = vtanh.pop %v6393
  %v6698 = vtanh.pop %v6394
  %v6699 = vtanh.pop %v6395
  %v6700 = vtanh.pop %v6396
  %v6701 = vtanh.pop %v6397
  %v6702 = vtanh.pop %v6398
  %v6703 = vtanh.pop %v6399
  %v6704 = vtanh.pop %v6400
  %v6705 = vtanh.pop %v6401
  %v6706 = vtanh.pop %v6402
  %v6707 = vtanh.pop %v6403
  %v6708 = vtanh.pop %v6404
  %v6709 = vtanh.pop %v6405
  %v6710 = vtanh.pop %v6406
  %v6711 = vmul.f32 %v6632, %v5893
  %v6712 = vmul.f32 %v6634, %v5894
  %v6713 = vmul.f32 %v6636, %v5895
  %v6714 = vmul.f32 %v6638, %v5896
  %v6715 = vmul.f32 %v6640, %v5897
  %v6716 = vmul.f32 %v6642, %v5898
  %v6717 = vmul.f32 %v6644, %v5899
  %v6718 = vmul.f32 %v6646, %v5900
  %v6719 = vmul.f32 %v6648, %v5901
  %v6720 = vmul.f32 %v6650, %v5902
  %v6721 = vmul.f32 %v6652, %v5903
  %v6722 = vmul.f32 %v6654, %v5904
  %v6723 = vmul.f32 %v6656, %v5905
  %v6724 = vmul.f32 %v6658, %v5906
  %v6725 = vmul.f32 %v6660, %v5907
  %v6726 = vmul.f32 %v6662, %v5908
  %v6727 = vmul.f32 %v6600, %v6695
  %v6728 = vmul.f32 %v6602, %v6696
  %v6729 = vmul.f32 %v6604, %v6697
  %v6730 = vmul.f32 %v6606, %v6698
  %v6731 = vmul.f32 %v6608, %v6699
  %v6732 = vmul.f32 %v6610, %v6700
  %v6733 = vmul.f32 %v6612, %v6701
  %v6734 = vmul.f32 %v6614, %v6702
  %v6735 = vmul.f32 %v6616, %v6703
  %v6736 = vmul.f32 %v6618, %v6704
  %v6737 = vmul.f32 %v6620, %v6705
  %v6738 = vmul.f32 %v6622, %v6706
  %v6739 = vmul.f32 %v6624, %v6707
  %v6740 = vmul.f32 %v6626, %v6708
  %v6741 = vmul.f32 %v6628, %v6709
  %v6742 = vmul.f32 %v6630, %v6710
  %v6743 = vadd.f32 %v6711, %v6727
  %v6744 = vadd.f32 %v6712, %v6728
  %v6745 = vadd.f32 %v6713, %v6729
  %v6746 = vadd.f32 %v6714, %v6730
  %v6747 = vadd.f32 %v6715, %v6731
  %v6748 = vadd.f32 %v6716, %v6732
  %v6749 = vadd.f32 %v6717, %v6733
  %v6750 = vadd.f32 %v6718, %v6734
  %v6751 = vadd.f32 %v6719, %v6735
  %v6752 = vadd.f32 %v6720, %v6736
  %v6753 = vadd.f32 %v6721, %v6737
  %v6754 = vadd.f32 %v6722, %v6738
  %v6755 = vadd.f32 %v6723, %v6739
  %v6756 = vadd.f32 %v6724, %v6740
  %v6757 = vadd.f32 %v6725, %v6741
  %v6758 = vadd.f32 %v6726, %v6742
  %v6759 = vtanh.pop %v6743
  %v6760 = vtanh.pop %v6744
  %v6761 = vtanh.pop %v6745
  %v6762 = vtanh.pop %v6746
  %v6763 = vtanh.pop %v6747
  %v6764 = vtanh.pop %v6748
  %v6765 = vtanh.pop %v6749
  %v6766 = vtanh.pop %v6750
  %v6767 = vtanh.pop %v6751
  %v6768 = vtanh.pop %v6752
  %v6769 = vtanh.pop %v6753
  %v6770 = vtanh.pop %v6754
  %v6771 = vtanh.pop %v6755
  %v6772 = vtanh.pop %v6756
  %v6773 = vtanh.pop %v6757
  %v6774 = vtanh.pop %v6758
  %v6775 = vmul.f32 %v6664, %v6759
  %v6776 = vmul.f32 %v6666, %v6760
  %v6777 = vmul.f32 %v6668, %v6761
  %v6778 = vmul.f32 %v6670, %v6762
  %v6779 = vmul.f32 %v6672, %v6763
  %v6780 = vmul.f32 %v6674, %v6764
  %v6781 = vmul.f32 %v6676, %v6765
  %v6782 = vmul.f32 %v6678, %v6766
  %v6783 = vmul.f32 %v6680, %v6767
  %v6784 = vmul.f32 %v6682, %v6768
  %v6785 = vmul.f32 %v6684, %v6769
  %v6786 = vmul.f32 %v6686, %v6770
  %v6787 = vmul.f32 %v6688, %v6771
  %v6788 = vmul.f32 %v6690, %v6772
  %v6789 = vmul.f32 %v6692, %v6773
  %v6790 = vmul.f32 %v6694, %v6774
  %6791 = vst [vmem:[#allocation3 + $0x180] sm:$0xff] %v6775
  %6792 = vst [vmem:[#allocation3 + $0x188] sm:$0xff] %v6776
  %6793 = vst [vmem:[#allocation3 + $0x190] sm:$0xff] %v6777
  %6794 = vst [vmem:[#allocation3 + $0x198] sm:$0xff] %v6778
  %6795 = vst [vmem:[#allocation3 + $0x1a0] sm:$0xff] %v6779
  %6796 = vst [vmem:[#allocation3 + $0x1a8] sm:$0xff] %v6780
  %6797 = vst [vmem:[#allocation3 + $0x1b0] sm:$0xff] %v6781
  %6798 = vst [vmem:[#allocation3 + $0x1b8] sm:$0xff] %v6782
  %6799 = vst [vmem:[#allocation3 + $0x1c0] sm:$0xff] %v6783
  %6800 = vst [vmem:[#allocation3 + $0x1c8] sm:$0xff] %v6784
  %6801 = vst [vmem:[#allocation3 + $0x1d0] sm:$0xff] %v6785
  %6802 = vst [vmem:[#allocation3 + $0x1d8] sm:$0xff] %v6786
  %6803 = vst [vmem:[#allocation3 + $0x1e0] sm:$0xff] %v6787
  %6804 = vst [vmem:[#allocation3 + $0x1e8] sm:$0xff] %v6788
  %6805 = vst [vmem:[#allocation3 + $0x1f0] sm:$0xff] %v6789
  %6806 = vst [vmem:[#allocation3 + $0x1f8] sm:$0xff] %v6790
  %v6807 = vld [vmem:[#allocation2 + $0x80] sm:$0xff]
  %v6808 = vld [vmem:[#allocation2 + $0x88] sm:$0xff]
  %v6809 = vld [vmem:[#allocation2 + $0x90] sm:$0xff]
  %v6810 = vld [vmem:[#allocation2 + $0x98] sm:$0xff]
  %v6811 = vld [vmem:[#allocation2 + $0x180] sm:$0xff]
  %v6812 = vld [vmem:[#allocation2 + $0x188] sm:$0xff]
  %v6813 = vld [vmem:[#allocation2 + $0x190] sm:$0xff]
  %v6814 = vld [vmem:[#allocation2 + $0x198] sm:$0xff]
  %v6815 = vld [vmem:[#allocation2 + $0x280] sm:$0xff]
  %v6816 = vld [vmem:[#allocation2 + $0x288] sm:$0xff]
  %v6817 = vld [vmem:[#allocation2 + $0x290] sm:$0xff]
  %v6818 = vld [vmem:[#allocation2 + $0x298] sm:$0xff]
  %v6819 = vld [vmem:[#allocation2 + $0x380] sm:$0xff]
  %v6820 = vld [vmem:[#allocation2 + $0x388] sm:$0xff]
  %v6821 = vld [vmem:[#allocation2 + $0x390] sm:$0xff]
  %v6822 = vld [vmem:[#allocation2 + $0x398] sm:$0xff]
  %v6823 = vld [vmem:[#allocation2 + $0x480] sm:$0xff]
  %v6824 = vld [vmem:[#allocation2 + $0x488] sm:$0xff]
  %v6825 = vld [vmem:[#allocation2 + $0x490] sm:$0xff]
  %v6826 = vld [vmem:[#allocation2 + $0x498] sm:$0xff]
  %v6827 = vld [vmem:[#allocation2 + $0x580] sm:$0xff]
  %v6828 = vld [vmem:[#allocation2 + $0x588] sm:$0xff]
  %v6829 = vld [vmem:[#allocation2 + $0x590] sm:$0xff]
  %v6830 = vld [vmem:[#allocation2 + $0x598] sm:$0xff]
  %v6831 = vld [vmem:[#allocation2 + $0x680] sm:$0xff]
  %v6832 = vld [vmem:[#allocation2 + $0x688] sm:$0xff]
  %v6833 = vld [vmem:[#allocation2 + $0x690] sm:$0xff]
  %v6834 = vld [vmem:[#allocation2 + $0x698] sm:$0xff]
  %v6835 = vld [vmem:[#allocation2 + $0x780] sm:$0xff]
  %v6836 = vld [vmem:[#allocation2 + $0x788] sm:$0xff]
  %v6837 = vld [vmem:[#allocation2 + $0x790] sm:$0xff]
  %v6838 = vld [vmem:[#allocation2 + $0x798] sm:$0xff]
  %v6839 = vld [vmem:[#allocation2 + $0x880] sm:$0xff]
  %v6840 = vld [vmem:[#allocation2 + $0x888] sm:$0xff]
  %v6841 = vld [vmem:[#allocation2 + $0x890] sm:$0xff]
  %v6842 = vld [vmem:[#allocation2 + $0x898] sm:$0xff]
  %v6843 = vld [vmem:[#allocation2 + $0x980] sm:$0xff]
  %v6844 = vld [vmem:[#allocation2 + $0x988] sm:$0xff]
  %v6845 = vld [vmem:[#allocation2 + $0x990] sm:$0xff]
  %v6846 = vld [vmem:[#allocation2 + $0x998] sm:$0xff]
  %v6847 = vld [vmem:[#allocation2 + $0xa80] sm:$0xff]
  %v6848 = vld [vmem:[#allocation2 + $0xa88] sm:$0xff]
  %v6849 = vld [vmem:[#allocation2 + $0xa90] sm:$0xff]
  %v6850 = vld [vmem:[#allocation2 + $0xa98] sm:$0xff]
  %v6851 = vld [vmem:[#allocation2 + $0xb80] sm:$0xff]
  %v6852 = vld [vmem:[#allocation2 + $0xb88] sm:$0xff]
  %v6853 = vld [vmem:[#allocation2 + $0xb90] sm:$0xff]
  %v6854 = vld [vmem:[#allocation2 + $0xb98] sm:$0xff]
  %v6855 = vld [vmem:[#allocation2 + $0xc80] sm:$0xff]
  %v6856 = vld [vmem:[#allocation2 + $0xc88] sm:$0xff]
  %v6857 = vld [vmem:[#allocation2 + $0xc90] sm:$0xff]
  %v6858 = vld [vmem:[#allocation2 + $0xc98] sm:$0xff]
  %v6859 = vld [vmem:[#allocation2 + $0xd80] sm:$0xff]
  %v6860 = vld [vmem:[#allocation2 + $0xd88] sm:$0xff]
  %v6861 = vld [vmem:[#allocation2 + $0xd90] sm:$0xff]
  %v6862 = vld [vmem:[#allocation2 + $0xd98] sm:$0xff]
  %v6863 = vld [vmem:[#allocation2 + $0xe80] sm:$0xff]
  %v6864 = vld [vmem:[#allocation2 + $0xe88] sm:$0xff]
  %v6865 = vld [vmem:[#allocation2 + $0xe90] sm:$0xff]
  %v6866 = vld [vmem:[#allocation2 + $0xe98] sm:$0xff]
  %v6867 = vld [vmem:[#allocation2 + $0xf80] sm:$0xff]
  %v6868 = vld [vmem:[#allocation2 + $0xf88] sm:$0xff]
  %v6869 = vld [vmem:[#allocation2 + $0xf90] sm:$0xff]
  %v6870 = vld [vmem:[#allocation2 + $0xf98] sm:$0xff]
  %6871 = vmatprep.subr.mxu0 %v6776
  %6872 = vmatpush1.msra.mxu0 %v6775
  %6873 = vmatprep.subr.mxu0 %v6780
  %6874 = vmatpush1.msra.mxu0 %v6779
  %6875 = vmatprep.subr.mxu0 %v6784
  %6876 = vmatpush1.msra.mxu0 %v6783
  %6877 = vmatprep.subr.mxu0 %v6788
  %6878 = vmatpush1.msra.mxu0 %v6787
  %6879 = vmatprep.subr.mxu0 0.0
  %6880 = vmatpush1.msra.mxu0 0.0
  %6881 = vmatprep.subr.mxu0 0.0
  %6882 = vmatpush1.msra.mxu0 0.0
  %6883 = vmatprep.subr.mxu0 0.0
  %6884 = vmatpush1.msra.mxu0 0.0
  %6885 = vmatprep.subr.mxu0 0.0
  %6886 = vmatpush1.msra.mxu0 0.0
  %6887 = vmatprep.subr.mxu0 0.0
  %6888 = vmatpush1.msra.mxu0 0.0
  %6889 = vmatprep.subr.mxu0 0.0
  %6890 = vmatpush1.msra.mxu0 0.0
  %6891 = vmatprep.subr.mxu0 0.0
  %6892 = vmatpush1.msra.mxu0 0.0
  %6893 = vmatprep.subr.mxu0 0.0
  %6894 = vmatpush1.msra.mxu0 0.0
  %6895 = vmatprep.subr.mxu0 0.0
  %6896 = vmatpush1.msra.mxu0 0.0
  %6897 = vmatprep.subr.mxu0 0.0
  %6898 = vmatpush1.msra.mxu0 0.0
  %6899 = vmatprep.subr.mxu0 0.0
  %6900 = vmatpush1.msra.mxu0 0.0
  %6901 = vmatprep.subr.mxu0 0.0
  %6902 = vmatpush1.msra.mxu0 0.0
  %6903 = vmatprep.subr.mxu0 0.0
  %6904 = vmatpush1.msra.mxu0 0.0
  %6905 = vmatprep.subr.mxu0 0.0
  %6906 = vmatpush1.msra.mxu0 0.0
  %6907 = vmatprep.subr.mxu0 0.0
  %6908 = vmatpush1.msra.mxu0 0.0
  %6909 = vmatprep.subr.mxu0 0.0
  %6910 = vmatpush1.msra.mxu0 0.0
  %6911 = vmatprep.subr.mxu0 0.0
  %6912 = vmatpush1.msra.mxu0 0.0
  %6913 = vmatprep.subr.mxu0 0.0
  %6914 = vmatpush1.msra.mxu0 0.0
  %6915 = vmatprep.subr.mxu0 0.0
  %6916 = vmatpush1.msra.mxu0 0.0
  %6917 = vmatprep.subr.mxu0 0.0
  %6918 = vmatpush1.msra.mxu0 0.0
  %6919 = vmatprep.subr.mxu0 0.0
  %6920 = vmatpush1.msra.mxu0 0.0
  %6921 = vmatprep.subr.mxu0 0.0
  %6922 = vmatpush1.msra.mxu0 0.0
  %6923 = vmatprep.subr.mxu0 0.0
  %6924 = vmatpush1.msra.mxu0 0.0
  %6925 = vmatprep.subr.mxu0 0.0
  %6926 = vmatpush1.msra.mxu0 0.0
  %6927 = vmatprep.subr.mxu0 0.0
  %6928 = vmatpush1.msra.mxu0 0.0
  %6929 = vmatprep.subr.mxu0 0.0
  %6930 = vmatpush1.msra.mxu0 0.0
  %6931 = vmatprep.subr.mxu0 0.0
  %6932 = vmatpush1.msra.mxu0 0.0
  %6933 = vmatprep.subr.mxu0 0.0
  %6934 = vmatpush1.msra.mxu0 0.0
  %6935 = vmatprep.mubr.f32.mxu0 0.0
  %6936 = vmatmul.mubr.f32.gmra.mrb[0].mxu0 %v3424
  %v6937 = vpop.f32.mrb[0].mxu0
  %v6938 = vadd.f32 0.0, %v6937
  %v6939 = vpop.f32.mrb[0].mxu0
  %v6940 = vadd.f32 0.0, %v6939
  %6941 = vmatprep.mubr.f32.mxu0 0.0
  %6942 = vmatmul.mubr.f32.gmra.mrb[0].mxu0 %v3427
  %v6943 = vpop.f32.mrb[0].mxu0
  %v6944 = vadd.f32 0.0, %v6943
  %v6945 = vpop.f32.mrb[0].mxu0
  %v6946 = vadd.f32 0.0, %v6945
  %6947 = vmatprep.mubr.f32.mxu0 0.0
  %6948 = vmatmul.mubr.f32.gmra.mrb[0].mxu0 %v3430
  %v6949 = vpop.f32.mrb[0].mxu0
  %v6950 = vadd.f32 0.0, %v6949
  %v6951 = vpop.f32.mrb[0].mxu0
  %v6952 = vadd.f32 0.0, %v6951
  %6953 = vmatprep.mubr.f32.mxu0 0.0
  %6954 = vmatmul.mubr.f32.gmra.mrb[0].mxu0 %v3433
  %v6955 = vpop.f32.mrb[0].mxu0
  %v6956 = vadd.f32 0.0, %v6955
  %v6957 = vpop.f32.mrb[0].mxu0
  %v6958 = vadd.f32 0.0, %v6957
  %6959 = vmatprep.mubr.f32.mxu0 0.0
  %6960 = vmatmul.mubr.f32.gmra.mrb[0].mxu0 %v3436
  %v6961 = vpop.f32.mrb[0].mxu0
  %v6962 = vadd.f32 0.0, %v6961
  %v6963 = vpop.f32.mrb[0].mxu0
  %v6964 = vadd.f32 0.0, %v6963
  %6965 = vmatprep.mubr.f32.mxu0 0.0
  %6966 = vmatmul.mubr.f32.gmra.mrb[0].mxu0 %v3439
  %v6967 = vpop.f32.mrb[0].mxu0
  %v6968 = vadd.f32 0.0, %v6967
  %v6969 = vpop.f32.mrb[0].mxu0
  %v6970 = vadd.f32 0.0, %v6969
  %6971 = vmatprep.mubr.f32.mxu0 0.0
  %6972 = vmatmul.mubr.f32.gmra.mrb[0].mxu0 %v3442
  %v6973 = vpop.f32.mrb[0].mxu0
  %v6974 = vadd.f32 0.0, %v6973
  %v6975 = vpop.f32.mrb[0].mxu0
  %v6976 = vadd.f32 0.0, %v6975
  %6977 = vmatprep.mubr.f32.mxu0 0.0
  %6978 = vmatmul.mubr.f32.gmra.mrb[0].mxu0 %v3445
  %v6979 = vpop.f32.mrb[0].mxu0
  %v6980 = vadd.f32 0.0, %v6979
  %v6981 = vpop.f32.mrb[0].mxu0
  %v6982 = vadd.f32 0.0, %v6981
  %6983 = vmatprep.mubr.f32.mxu0 0.0
  %6984 = vmatmul.mubr.f32.gmra.mrb[0].mxu0 %v3448
  %v6985 = vpop.f32.mrb[0].mxu0
  %v6986 = vadd.f32 0.0, %v6985
  %v6987 = vpop.f32.mrb[0].mxu0
  %v6988 = vadd.f32 0.0, %v6987
  %6989 = vmatprep.mubr.f32.mxu0 0.0
  %6990 = vmatmul.mubr.f32.gmra.mrb[0].mxu0 %v3451
  %v6991 = vpop.f32.mrb[0].mxu0
  %v6992 = vadd.f32 0.0, %v6991
  %v6993 = vpop.f32.mrb[0].mxu0
  %v6994 = vadd.f32 0.0, %v6993
  %6995 = vmatprep.mubr.f32.mxu0 0.0
  %6996 = vmatmul.mubr.f32.gmra.mrb[0].mxu0 %v3454
  %v6997 = vpop.f32.mrb[0].mxu0
  %v6998 = vadd.f32 0.0, %v6997
  %v6999 = vpop.f32.mrb[0].mxu0
  %v7000 = vadd.f32 0.0, %v6999
  %7001 = vmatprep.mubr.f32.mxu0 0.0
  %7002 = vmatmul.mubr.f32.gmra.mrb[0].mxu0 %v3457
  %v7003 = vpop.f32.mrb[0].mxu0
  %v7004 = vadd.f32 0.0, %v7003
  %v7005 = vpop.f32.mrb[0].mxu0
  %v7006 = vadd.f32 0.0, %v7005
  %7007 = vmatprep.mubr.f32.mxu0 0.0
  %7008 = vmatmul.mubr.f32.gmra.mrb[0].mxu0 %v3460
  %v7009 = vpop.f32.mrb[0].mxu0
  %v7010 = vadd.f32 0.0, %v7009
  %v7011 = vpop.f32.mrb[0].mxu0
  %v7012 = vadd.f32 0.0, %v7011
  %7013 = vmatprep.mubr.f32.mxu0 0.0
  %7014 = vmatmul.mubr.f32.gmra.mrb[0].mxu0 %v3463
  %v7015 = vpop.f32.mrb[0].mxu0
  %v7016 = vadd.f32 0.0, %v7015
  %v7017 = vpop.f32.mrb[0].mxu0
  %v7018 = vadd.f32 0.0, %v7017
  %7019 = vmatprep.mubr.f32.mxu0 0.0
  %7020 = vmatmul.mubr.f32.gmra.mrb[0].mxu0 %v3466
  %v7021 = vpop.f32.mrb[0].mxu0
  %v7022 = vadd.f32 0.0, %v7021
  %v7023 = vpop.f32.mrb[0].mxu0
  %v7024 = vadd.f32 0.0, %v7023
  %7025 = vmatprep.mubr.f32.mxu0 0.0
  %7026 = vmatmul.mubr.f32.gmra.mrb[0].mxu0 %v3469
  %v7027 = vpop.f32.mrb[0].mxu0
  %v7028 = vadd.f32 0.0, %v7027
  %v7029 = vpop.f32.mrb[0].mxu0
  %v7030 = vadd.f32 0.0, %v7029
  %7031 = vdwg.mxu0
  %7032 = vmatprep.subr.mxu0 %v6778
  %7033 = vmatpush1.msra.mxu0 %v6777
  %7034 = vmatprep.subr.mxu0 %v6782
  %7035 = vmatpush1.msra.mxu0 %v6781
  %7036 = vmatprep.subr.mxu0 %v6786
  %7037 = vmatpush1.msra.mxu0 %v6785
  %7038 = vmatprep.subr.mxu0 %v6790
  %7039 = vmatpush1.msra.mxu0 %v6789
  %7040 = vmatprep.subr.mxu0 0.0
  %7041 = vmatpush1.msra.mxu0 0.0
  %7042 = vmatprep.subr.mxu0 0.0
  %7043 = vmatpush1.msra.mxu0 0.0
  %7044 = vmatprep.subr.mxu0 0.0
  %7045 = vmatpush1.msra.mxu0 0.0
  %7046 = vmatprep.subr.mxu0 0.0
  %7047 = vmatpush1.msra.mxu0 0.0
  %7048 = vmatprep.subr.mxu0 0.0
  %7049 = vmatpush1.msra.mxu0 0.0
  %7050 = vmatprep.subr.mxu0 0.0
  %7051 = vmatpush1.msra.mxu0 0.0
  %7052 = vmatprep.subr.mxu0 0.0
  %7053 = vmatpush1.msra.mxu0 0.0
  %7054 = vmatprep.subr.mxu0 0.0
  %7055 = vmatpush1.msra.mxu0 0.0
  %7056 = vmatprep.subr.mxu0 0.0
  %7057 = vmatpush1.msra.mxu0 0.0
  %7058 = vmatprep.subr.mxu0 0.0
  %7059 = vmatpush1.msra.mxu0 0.0
  %7060 = vmatprep.subr.mxu0 0.0
  %7061 = vmatpush1.msra.mxu0 0.0
  %7062 = vmatprep.subr.mxu0 0.0
  %7063 = vmatpush1.msra.mxu0 0.0
  %7064 = vmatprep.subr.mxu0 0.0
  %7065 = vmatpush1.msra.mxu0 0.0
  %7066 = vmatprep.subr.mxu0 0.0
  %7067 = vmatpush1.msra.mxu0 0.0
  %7068 = vmatprep.subr.mxu0 0.0
  %7069 = vmatpush1.msra.mxu0 0.0
  %7070 = vmatprep.subr.mxu0 0.0
  %7071 = vmatpush1.msra.mxu0 0.0
  %7072 = vmatprep.subr.mxu0 0.0
  %7073 = vmatpush1.msra.mxu0 0.0
  %7074 = vmatprep.subr.mxu0 0.0
  %7075 = vmatpush1.msra.mxu0 0.0
  %7076 = vmatprep.subr.mxu0 0.0
  %7077 = vmatpush1.msra.mxu0 0.0
  %7078 = vmatprep.subr.mxu0 0.0
  %7079 = vmatpush1.msra.mxu0 0.0
  %7080 = vmatprep.subr.mxu0 0.0
  %7081 = vmatpush1.msra.mxu0 0.0
  %7082 = vmatprep.subr.mxu0 0.0
  %7083 = vmatpush1.msra.mxu0 0.0
  %7084 = vmatprep.subr.mxu0 0.0
  %7085 = vmatpush1.msra.mxu0 0.0
  %7086 = vmatprep.subr.mxu0 0.0
  %7087 = vmatpush1.msra.mxu0 0.0
  %7088 = vmatprep.subr.mxu0 0.0
  %7089 = vmatpush1.msra.mxu0 0.0
  %7090 = vmatprep.subr.mxu0 0.0
  %7091 = vmatpush1.msra.mxu0 0.0
  %7092 = vmatprep.subr.mxu0 0.0
  %7093 = vmatpush1.msra.mxu0 0.0
  %7094 = vmatprep.subr.mxu0 0.0
  %7095 = vmatpush1.msra.mxu0 0.0
  %7096 = vmatprep.mubr.f32.mxu0 0.0
  %7097 = vmatmul.mubr.f32.gmra.mrb[0].mxu0 %v3424
  %v7098 = vpop.f32.mrb[0].mxu0
  %v7099 = vadd.f32 0.0, %v7098
  %v7100 = vpop.f32.mrb[0].mxu0
  %v7101 = vadd.f32 0.0, %v7100
  %7102 = vmatprep.mubr.f32.mxu0 0.0
  %7103 = vmatmul.mubr.f32.gmra.mrb[0].mxu0 %v3427
  %v7104 = vpop.f32.mrb[0].mxu0
  %v7105 = vadd.f32 0.0, %v7104
  %v7106 = vpop.f32.mrb[0].mxu0
  %v7107 = vadd.f32 0.0, %v7106
  %7108 = vmatprep.mubr.f32.mxu0 0.0
  %7109 = vmatmul.mubr.f32.gmra.mrb[0].mxu0 %v3430
  %v7110 = vpop.f32.mrb[0].mxu0
  %v7111 = vadd.f32 0.0, %v7110
  %v7112 = vpop.f32.mrb[0].mxu0
  %v7113 = vadd.f32 0.0, %v7112
  %7114 = vmatprep.mubr.f32.mxu0 0.0
  %7115 = vmatmul.mubr.f32.gmra.mrb[0].mxu0 %v3433
  %v7116 = vpop.f32.mrb[0].mxu0
  %v7117 = vadd.f32 0.0, %v7116
  %v7118 = vpop.f32.mrb[0].mxu0
  %v7119 = vadd.f32 0.0, %v7118
  %7120 = vmatprep.mubr.f32.mxu0 0.0
  %7121 = vmatmul.mubr.f32.gmra.mrb[0].mxu0 %v3436
  %v7122 = vpop.f32.mrb[0].mxu0
  %v7123 = vadd.f32 0.0, %v7122
  %v7124 = vpop.f32.mrb[0].mxu0
  %v7125 = vadd.f32 0.0, %v7124
  %7126 = vmatprep.mubr.f32.mxu0 0.0
  %7127 = vmatmul.mubr.f32.gmra.mrb[0].mxu0 %v3439
  %v7128 = vpop.f32.mrb[0].mxu0
  %v7129 = vadd.f32 0.0, %v7128
  %v7130 = vpop.f32.mrb[0].mxu0
  %v7131 = vadd.f32 0.0, %v7130
  %7132 = vmatprep.mubr.f32.mxu0 0.0
  %7133 = vmatmul.mubr.f32.gmra.mrb[0].mxu0 %v3442
  %v7134 = vpop.f32.mrb[0].mxu0
  %v7135 = vadd.f32 0.0, %v7134
  %v7136 = vpop.f32.mrb[0].mxu0
  %v7137 = vadd.f32 0.0, %v7136
  %7138 = vmatprep.mubr.f32.mxu0 0.0
  %7139 = vmatmul.mubr.f32.gmra.mrb[0].mxu0 %v3445
  %v7140 = vpop.f32.mrb[0].mxu0
  %v7141 = vadd.f32 0.0, %v7140
  %v7142 = vpop.f32.mrb[0].mxu0
  %v7143 = vadd.f32 0.0, %v7142
  %7144 = vmatprep.mubr.f32.mxu0 0.0
  %7145 = vmatmul.mubr.f32.gmra.mrb[0].mxu0 %v3448
  %v7146 = vpop.f32.mrb[0].mxu0
  %v7147 = vadd.f32 0.0, %v7146
  %v7148 = vpop.f32.mrb[0].mxu0
  %v7149 = vadd.f32 0.0, %v7148
  %7150 = vmatprep.mubr.f32.mxu0 0.0
  %7151 = vmatmul.mubr.f32.gmra.mrb[0].mxu0 %v3451
  %v7152 = vpop.f32.mrb[0].mxu0
  %v7153 = vadd.f32 0.0, %v7152
  %v7154 = vpop.f32.mrb[0].mxu0
  %v7155 = vadd.f32 0.0, %v7154
  %7156 = vmatprep.mubr.f32.mxu0 0.0
  %7157 = vmatmul.mubr.f32.gmra.mrb[0].mxu0 %v3454
  %v7158 = vpop.f32.mrb[0].mxu0
  %v7159 = vadd.f32 0.0, %v7158
  %v7160 = vpop.f32.mrb[0].mxu0
  %v7161 = vadd.f32 0.0, %v7160
  %7162 = vmatprep.mubr.f32.mxu0 0.0
  %7163 = vmatmul.mubr.f32.gmra.mrb[0].mxu0 %v3457
  %v7164 = vpop.f32.mrb[0].mxu0
  %v7165 = vadd.f32 0.0, %v7164
  %v7166 = vpop.f32.mrb[0].mxu0
  %v7167 = vadd.f32 0.0, %v7166
  %7168 = vmatprep.mubr.f32.mxu0 0.0
  %7169 = vmatmul.mubr.f32.gmra.mrb[0].mxu0 %v3460
  %v7170 = vpop.f32.mrb[0].mxu0
  %v7171 = vadd.f32 0.0, %v7170
  %v7172 = vpop.f32.mrb[0].mxu0
  %v7173 = vadd.f32 0.0, %v7172
  %7174 = vmatprep.mubr.f32.mxu0 0.0
  %7175 = vmatmul.mubr.f32.gmra.mrb[0].mxu0 %v3463
  %v7176 = vpop.f32.mrb[0].mxu0
  %v7177 = vadd.f32 0.0, %v7176
  %v7178 = vpop.f32.mrb[0].mxu0
  %v7179 = vadd.f32 0.0, %v7178
  %7180 = vmatprep.mubr.f32.mxu0 0.0
  %7181 = vmatmul.mubr.f32.gmra.mrb[0].mxu0 %v3466
  %v7182 = vpop.f32.mrb[0].mxu0
  %v7183 = vadd.f32 0.0, %v7182
  %v7184 = vpop.f32.mrb[0].mxu0
  %v7185 = vadd.f32 0.0, %v7184
  %7186 = vmatprep.mubr.f32.mxu0 0.0
  %7187 = vmatmul.mubr.f32.gmra.mrb[0].mxu0 %v3469
  %v7188 = vpop.f32.mrb[0].mxu0
  %v7189 = vadd.f32 0.0, %v7188
  %v7190 = vpop.f32.mrb[0].mxu0
  %v7191 = vadd.f32 0.0, %v7190
  %7192 = vdwg.mxu0
  %v7193 = vadd.f32 %v6807, %v6938
  %v7194 = vadd.f32 %v6808, %v6940
  %v7195 = vadd.f32 %v6809, %v7099
  %v7196 = vadd.f32 %v6810, %v7101
  %v7197 = vadd.f32 %v6811, %v6944
  %v7198 = vadd.f32 %v6812, %v6946
  %v7199 = vadd.f32 %v6813, %v7105
  %v7200 = vadd.f32 %v6814, %v7107
  %v7201 = vadd.f32 %v6815, %v6950
  %v7202 = vadd.f32 %v6816, %v6952
  %v7203 = vadd.f32 %v6817, %v7111
  %v7204 = vadd.f32 %v6818, %v7113
  %v7205 = vadd.f32 %v6819, %v6956
  %v7206 = vadd.f32 %v6820, %v6958
  %v7207 = vadd.f32 %v6821, %v7117
  %v7208 = vadd.f32 %v6822, %v7119
  %v7209 = vadd.f32 %v6823, %v6962
  %v7210 = vadd.f32 %v6824, %v6964
  %v7211 = vadd.f32 %v6825, %v7123
  %v7212 = vadd.f32 %v6826, %v7125
  %v7213 = vadd.f32 %v6827, %v6968
  %v7214 = vadd.f32 %v6828, %v6970
  %v7215 = vadd.f32 %v6829, %v7129
  %v7216 = vadd.f32 %v6830, %v7131
  %v7217 = vadd.f32 %v6831, %v6974
  %v7218 = vadd.f32 %v6832, %v6976
  %v7219 = vadd.f32 %v6833, %v7135
  %v7220 = vadd.f32 %v6834, %v7137
  %v7221 = vadd.f32 %v6835, %v6980
  %v7222 = vadd.f32 %v6836, %v6982
  %v7223 = vadd.f32 %v6837, %v7141
  %v7224 = vadd.f32 %v6838, %v7143
  %v7225 = vadd.f32 %v6839, %v6986
  %v7226 = vadd.f32 %v6840, %v6988
  %v7227 = vadd.f32 %v6841, %v7147
  %v7228 = vadd.f32 %v6842, %v7149
  %v7229 = vadd.f32 %v6843, %v6992
  %v7230 = vadd.f32 %v6844, %v6994
  %v7231 = vadd.f32 %v6845, %v7153
  %v7232 = vadd.f32 %v6846, %v7155
  %v7233 = vadd.f32 %v6847, %v6998
  %v7234 = vadd.f32 %v6848, %v7000
  %v7235 = vadd.f32 %v6849, %v7159
  %v7236 = vadd.f32 %v6850, %v7161
  %v7237 = vadd.f32 %v6851, %v7004
  %v7238 = vadd.f32 %v6852, %v7006
  %v7239 = vadd.f32 %v6853, %v7165
  %v7240 = vadd.f32 %v6854, %v7167
  %v7241 = vadd.f32 %v6855, %v7010
  %v7242 = vadd.f32 %v6856, %v7012
  %v7243 = vadd.f32 %v6857, %v7171
  %v7244 = vadd.f32 %v6858, %v7173
  %v7245 = vadd.f32 %v6859, %v7016
  %v7246 = vadd.f32 %v6860, %v7018
  %v7247 = vadd.f32 %v6861, %v7177
  %v7248 = vadd.f32 %v6862, %v7179
  %v7249 = vadd.f32 %v6863, %v7022
  %v7250 = vadd.f32 %v6864, %v7024
  %v7251 = vadd.f32 %v6865, %v7183
  %v7252 = vadd.f32 %v6866, %v7185
  %v7253 = vadd.f32 %v6867, %v7028
  %v7254 = vadd.f32 %v6868, %v7030
  %v7255 = vadd.f32 %v6869, %v7189
  %v7256 = vadd.f32 %v6870, %v7191
  %v7257 = vxor.u32 %v7193, 2147483648
  %v7258 = vxor.u32 %v7194, 2147483648
  %v7259 = vxor.u32 %v7195, 2147483648
  %v7260 = vxor.u32 %v7196, 2147483648
  %v7261 = vxor.u32 %v7197, 2147483648
  %v7262 = vxor.u32 %v7198, 2147483648
  %v7263 = vxor.u32 %v7199, 2147483648
  %v7264 = vxor.u32 %v7200, 2147483648
  %v7265 = vxor.u32 %v7201, 2147483648
  %v7266 = vxor.u32 %v7202, 2147483648
  %v7267 = vxor.u32 %v7203, 2147483648
  %v7268 = vxor.u32 %v7204, 2147483648
  %v7269 = vxor.u32 %v7205, 2147483648
  %v7270 = vxor.u32 %v7206, 2147483648
  %v7271 = vxor.u32 %v7207, 2147483648
  %v7272 = vxor.u32 %v7208, 2147483648
  %v7273 = vxor.u32 %v7209, 2147483648
  %v7274 = vxor.u32 %v7210, 2147483648
  %v7275 = vxor.u32 %v7211, 2147483648
  %v7276 = vxor.u32 %v7212, 2147483648
  %v7277 = vxor.u32 %v7213, 2147483648
  %v7278 = vxor.u32 %v7214, 2147483648
  %v7279 = vxor.u32 %v7215, 2147483648
  %v7280 = vxor.u32 %v7216, 2147483648
  %v7281 = vxor.u32 %v7217, 2147483648
  %v7282 = vxor.u32 %v7218, 2147483648
  %v7283 = vxor.u32 %v7219, 2147483648
  %v7284 = vxor.u32 %v7220, 2147483648
  %v7285 = vxor.u32 %v7221, 2147483648
  %v7286 = vxor.u32 %v7222, 2147483648
  %v7287 = vxor.u32 %v7223, 2147483648
  %v7288 = vxor.u32 %v7224, 2147483648
  %v7289 = vxor.u32 %v7225, 2147483648
  %v7290 = vxor.u32 %v7226, 2147483648
  %v7291 = vxor.u32 %v7227, 2147483648
  %v7292 = vxor.u32 %v7228, 2147483648
  %v7293 = vxor.u32 %v7229, 2147483648
  %v7294 = vxor.u32 %v7230, 2147483648
  %v7295 = vxor.u32 %v7231, 2147483648
  %v7296 = vxor.u32 %v7232, 2147483648
  %v7297 = vxor.u32 %v7233, 2147483648
  %v7298 = vxor.u32 %v7234, 2147483648
  %v7299 = vxor.u32 %v7235, 2147483648
  %v7300 = vxor.u32 %v7236, 2147483648
  %v7301 = vxor.u32 %v7237, 2147483648
  %v7302 = vxor.u32 %v7238, 2147483648
  %v7303 = vxor.u32 %v7239, 2147483648
  %v7304 = vxor.u32 %v7240, 2147483648
  %v7305 = vmul.f32 %v7257, 1.442695
  %v7306 = vpow.pop %v7305
  %v7307 = vmul.f32 %v7258, 1.442695
  %v7308 = vpow.pop %v7307
  %v7309 = vmul.f32 %v7259, 1.442695
  %v7310 = vpow.pop %v7309
  %v7311 = vmul.f32 %v7260, 1.442695
  %v7312 = vpow.pop %v7311
  %v7313 = vmul.f32 %v7261, 1.442695
  %v7314 = vpow.pop %v7313
  %v7315 = vmul.f32 %v7262, 1.442695
  %v7316 = vpow.pop %v7315
  %v7317 = vmul.f32 %v7263, 1.442695
  %v7318 = vpow.pop %v7317
  %v7319 = vmul.f32 %v7264, 1.442695
  %v7320 = vpow.pop %v7319
  %v7321 = vmul.f32 %v7265, 1.442695
  %v7322 = vpow.pop %v7321
  %v7323 = vmul.f32 %v7266, 1.442695
  %v7324 = vpow.pop %v7323
  %v7325 = vmul.f32 %v7267, 1.442695
  %v7326 = vpow.pop %v7325
  %v7327 = vmul.f32 %v7268, 1.442695
  %v7328 = vpow.pop %v7327
  %v7329 = vmul.f32 %v7269, 1.442695
  %v7330 = vpow.pop %v7329
  %v7331 = vmul.f32 %v7270, 1.442695
  %v7332 = vpow.pop %v7331
  %v7333 = vmul.f32 %v7271, 1.442695
  %v7334 = vpow.pop %v7333
  %v7335 = vmul.f32 %v7272, 1.442695
  %v7336 = vpow.pop %v7335
  %v7337 = vmul.f32 %v7273, 1.442695
  %v7338 = vpow.pop %v7337
  %v7339 = vmul.f32 %v7274, 1.442695
  %v7340 = vpow.pop %v7339
  %v7341 = vmul.f32 %v7275, 1.442695
  %v7342 = vpow.pop %v7341
  %v7343 = vmul.f32 %v7276, 1.442695
  %v7344 = vpow.pop %v7343
  %v7345 = vmul.f32 %v7277, 1.442695
  %v7346 = vpow.pop %v7345
  %v7347 = vmul.f32 %v7278, 1.442695
  %v7348 = vpow.pop %v7347
  %v7349 = vmul.f32 %v7279, 1.442695
  %v7350 = vpow.pop %v7349
  %v7351 = vmul.f32 %v7280, 1.442695
  %v7352 = vpow.pop %v7351
  %v7353 = vmul.f32 %v7281, 1.442695
  %v7354 = vpow.pop %v7353
  %v7355 = vmul.f32 %v7282, 1.442695
  %v7356 = vpow.pop %v7355
  %v7357 = vmul.f32 %v7283, 1.442695
  %v7358 = vpow.pop %v7357
  %v7359 = vmul.f32 %v7284, 1.442695
  %v7360 = vpow.pop %v7359
  %v7361 = vmul.f32 %v7285, 1.442695
  %v7362 = vpow.pop %v7361
  %v7363 = vmul.f32 %v7286, 1.442695
  %v7364 = vpow.pop %v7363
  %v7365 = vmul.f32 %v7287, 1.442695
  %v7366 = vpow.pop %v7365
  %v7367 = vmul.f32 %v7288, 1.442695
  %v7368 = vpow.pop %v7367
  %v7369 = vmul.f32 %v7289, 1.442695
  %v7370 = vpow.pop %v7369
  %v7371 = vmul.f32 %v7290, 1.442695
  %v7372 = vpow.pop %v7371
  %v7373 = vmul.f32 %v7291, 1.442695
  %v7374 = vpow.pop %v7373
  %v7375 = vmul.f32 %v7292, 1.442695
  %v7376 = vpow.pop %v7375
  %v7377 = vmul.f32 %v7293, 1.442695
  %v7378 = vpow.pop %v7377
  %v7379 = vmul.f32 %v7294, 1.442695
  %v7380 = vpow.pop %v7379
  %v7381 = vmul.f32 %v7295, 1.442695
  %v7382 = vpow.pop %v7381
  %v7383 = vmul.f32 %v7296, 1.442695
  %v7384 = vpow.pop %v7383
  %v7385 = vmul.f32 %v7297, 1.442695
  %v7386 = vpow.pop %v7385
  %v7387 = vmul.f32 %v7298, 1.442695
  %v7388 = vpow.pop %v7387
  %v7389 = vmul.f32 %v7299, 1.442695
  %v7390 = vpow.pop %v7389
  %v7391 = vmul.f32 %v7300, 1.442695
  %v7392 = vpow.pop %v7391
  %v7393 = vmul.f32 %v7301, 1.442695
  %v7394 = vpow.pop %v7393
  %v7395 = vmul.f32 %v7302, 1.442695
  %v7396 = vpow.pop %v7395
  %v7397 = vmul.f32 %v7303, 1.442695
  %v7398 = vpow.pop %v7397
  %v7399 = vmul.f32 %v7304, 1.442695
  %v7400 = vpow.pop %v7399
  %v7401 = vadd.f32 %v7306, 1.0
  %v7402 = vadd.f32 %v7308, 1.0
  %v7403 = vadd.f32 %v7310, 1.0
  %v7404 = vadd.f32 %v7312, 1.0
  %v7405 = vadd.f32 %v7314, 1.0
  %v7406 = vadd.f32 %v7316, 1.0
  %v7407 = vadd.f32 %v7318, 1.0
  %v7408 = vadd.f32 %v7320, 1.0
  %v7409 = vadd.f32 %v7322, 1.0
  %v7410 = vadd.f32 %v7324, 1.0
  %v7411 = vadd.f32 %v7326, 1.0
  %v7412 = vadd.f32 %v7328, 1.0
  %v7413 = vadd.f32 %v7330, 1.0
  %v7414 = vadd.f32 %v7332, 1.0
  %v7415 = vadd.f32 %v7334, 1.0
  %v7416 = vadd.f32 %v7336, 1.0
  %v7417 = vadd.f32 %v7338, 1.0
  %v7418 = vadd.f32 %v7340, 1.0
  %v7419 = vadd.f32 %v7342, 1.0
  %v7420 = vadd.f32 %v7344, 1.0
  %v7421 = vadd.f32 %v7346, 1.0
  %v7422 = vadd.f32 %v7348, 1.0
  %v7423 = vadd.f32 %v7350, 1.0
  %v7424 = vadd.f32 %v7352, 1.0
  %v7425 = vadd.f32 %v7354, 1.0
  %v7426 = vadd.f32 %v7356, 1.0
  %v7427 = vadd.f32 %v7358, 1.0
  %v7428 = vadd.f32 %v7360, 1.0
  %v7429 = vadd.f32 %v7362, 1.0
  %v7430 = vadd.f32 %v7364, 1.0
  %v7431 = vadd.f32 %v7366, 1.0
  %v7432 = vadd.f32 %v7368, 1.0
  %v7433 = vadd.f32 %v7370, 1.0
  %v7434 = vadd.f32 %v7372, 1.0
  %v7435 = vadd.f32 %v7374, 1.0
  %v7436 = vadd.f32 %v7376, 1.0
  %v7437 = vadd.f32 %v7378, 1.0
  %v7438 = vadd.f32 %v7380, 1.0
  %v7439 = vadd.f32 %v7382, 1.0
  %v7440 = vadd.f32 %v7384, 1.0
  %v7441 = vadd.f32 %v7386, 1.0
  %v7442 = vadd.f32 %v7388, 1.0
  %v7443 = vadd.f32 %v7390, 1.0
  %v7444 = vadd.f32 %v7392, 1.0
  %v7445 = vadd.f32 %v7394, 1.0
  %v7446 = vadd.f32 %v7396, 1.0
  %v7447 = vadd.f32 %v7398, 1.0
  %v7448 = vadd.f32 %v7400, 1.0
  %v7449 = vrcp.pop %v7401
  %v7450 = vmul.f32 1.0, %v7449
  %v7451 = vrcp.pop %v7402
  %v7452 = vmul.f32 1.0, %v7451
  %v7453 = vrcp.pop %v7403
  %v7454 = vmul.f32 1.0, %v7453
  %v7455 = vrcp.pop %v7404
  %v7456 = vmul.f32 1.0, %v7455
  %v7457 = vrcp.pop %v7405
  %v7458 = vmul.f32 1.0, %v7457
  %v7459 = vrcp.pop %v7406
  %v7460 = vmul.f32 1.0, %v7459
  %v7461 = vrcp.pop %v7407
  %v7462 = vmul.f32 1.0, %v7461
  %v7463 = vrcp.pop %v7408
  %v7464 = vmul.f32 1.0, %v7463
  %v7465 = vrcp.pop %v7409
  %v7466 = vmul.f32 1.0, %v7465
  %v7467 = vrcp.pop %v7410
  %v7468 = vmul.f32 1.0, %v7467
  %v7469 = vrcp.pop %v7411
  %v7470 = vmul.f32 1.0, %v7469
  %v7471 = vrcp.pop %v7412
  %v7472 = vmul.f32 1.0, %v7471
  %v7473 = vrcp.pop %v7413
  %v7474 = vmul.f32 1.0, %v7473
  %v7475 = vrcp.pop %v7414
  %v7476 = vmul.f32 1.0, %v7475
  %v7477 = vrcp.pop %v7415
  %v7478 = vmul.f32 1.0, %v7477
  %v7479 = vrcp.pop %v7416
  %v7480 = vmul.f32 1.0, %v7479
  %v7481 = vrcp.pop %v7417
  %v7482 = vmul.f32 1.0, %v7481
  %v7483 = vrcp.pop %v7418
  %v7484 = vmul.f32 1.0, %v7483
  %v7485 = vrcp.pop %v7419
  %v7486 = vmul.f32 1.0, %v7485
  %v7487 = vrcp.pop %v7420
  %v7488 = vmul.f32 1.0, %v7487
  %v7489 = vrcp.pop %v7421
  %v7490 = vmul.f32 1.0, %v7489
  %v7491 = vrcp.pop %v7422
  %v7492 = vmul.f32 1.0, %v7491
  %v7493 = vrcp.pop %v7423
  %v7494 = vmul.f32 1.0, %v7493
  %v7495 = vrcp.pop %v7424
  %v7496 = vmul.f32 1.0, %v7495
  %v7497 = vrcp.pop %v7425
  %v7498 = vmul.f32 1.0, %v7497
  %v7499 = vrcp.pop %v7426
  %v7500 = vmul.f32 1.0, %v7499
  %v7501 = vrcp.pop %v7427
  %v7502 = vmul.f32 1.0, %v7501
  %v7503 = vrcp.pop %v7428
  %v7504 = vmul.f32 1.0, %v7503
  %v7505 = vrcp.pop %v7429
  %v7506 = vmul.f32 1.0, %v7505
  %v7507 = vrcp.pop %v7430
  %v7508 = vmul.f32 1.0, %v7507
  %v7509 = vrcp.pop %v7431
  %v7510 = vmul.f32 1.0, %v7509
  %v7511 = vrcp.pop %v7432
  %v7512 = vmul.f32 1.0, %v7511
  %v7513 = vrcp.pop %v7433
  %v7514 = vmul.f32 1.0, %v7513
  %v7515 = vrcp.pop %v7434
  %v7516 = vmul.f32 1.0, %v7515
  %v7517 = vrcp.pop %v7435
  %v7518 = vmul.f32 1.0, %v7517
  %v7519 = vrcp.pop %v7436
  %v7520 = vmul.f32 1.0, %v7519
  %v7521 = vrcp.pop %v7437
  %v7522 = vmul.f32 1.0, %v7521
  %v7523 = vrcp.pop %v7438
  %v7524 = vmul.f32 1.0, %v7523
  %v7525 = vrcp.pop %v7439
  %v7526 = vmul.f32 1.0, %v7525
  %v7527 = vrcp.pop %v7440
  %v7528 = vmul.f32 1.0, %v7527
  %v7529 = vrcp.pop %v7441
  %v7530 = vmul.f32 1.0, %v7529
  %v7531 = vrcp.pop %v7442
  %v7532 = vmul.f32 1.0, %v7531
  %v7533 = vrcp.pop %v7443
  %v7534 = vmul.f32 1.0, %v7533
  %v7535 = vrcp.pop %v7444
  %v7536 = vmul.f32 1.0, %v7535
  %v7537 = vrcp.pop %v7445
  %v7538 = vmul.f32 1.0, %v7537
  %v7539 = vrcp.pop %v7446
  %v7540 = vmul.f32 1.0, %v7539
  %v7541 = vrcp.pop %v7447
  %v7542 = vmul.f32 1.0, %v7541
  %v7543 = vrcp.pop %v7448
  %v7544 = vmul.f32 1.0, %v7543
  %v7545 = vtanh.pop %v7241
  %v7546 = vtanh.pop %v7242
  %v7547 = vtanh.pop %v7243
  %v7548 = vtanh.pop %v7244
  %v7549 = vtanh.pop %v7245
  %v7550 = vtanh.pop %v7246
  %v7551 = vtanh.pop %v7247
  %v7552 = vtanh.pop %v7248
  %v7553 = vtanh.pop %v7249
  %v7554 = vtanh.pop %v7250
  %v7555 = vtanh.pop %v7251
  %v7556 = vtanh.pop %v7252
  %v7557 = vtanh.pop %v7253
  %v7558 = vtanh.pop %v7254
  %v7559 = vtanh.pop %v7255
  %v7560 = vtanh.pop %v7256
  %v7561 = vmul.f32 %v7482, %v6743
  %v7562 = vmul.f32 %v7484, %v6744
  %v7563 = vmul.f32 %v7486, %v6745
  %v7564 = vmul.f32 %v7488, %v6746
  %v7565 = vmul.f32 %v7490, %v6747
  %v7566 = vmul.f32 %v7492, %v6748
  %v7567 = vmul.f32 %v7494, %v6749
  %v7568 = vmul.f32 %v7496, %v6750
  %v7569 = vmul.f32 %v7498, %v6751
  %v7570 = vmul.f32 %v7500, %v6752
  %v7571 = vmul.f32 %v7502, %v6753
  %v7572 = vmul.f32 %v7504, %v6754
  %v7573 = vmul.f32 %v7506, %v6755
  %v7574 = vmul.f32 %v7508, %v6756
  %v7575 = vmul.f32 %v7510, %v6757
  %v7576 = vmul.f32 %v7512, %v6758
  %v7577 = vmul.f32 %v7450, %v7545
  %v7578 = vmul.f32 %v7452, %v7546
  %v7579 = vmul.f32 %v7454, %v7547
  %v7580 = vmul.f32 %v7456, %v7548
  %v7581 = vmul.f32 %v7458, %v7549
  %v7582 = vmul.f32 %v7460, %v7550
  %v7583 = vmul.f32 %v7462, %v7551
  %v7584 = vmul.f32 %v7464, %v7552
  %v7585 = vmul.f32 %v7466, %v7553
  %v7586 = vmul.f32 %v7468, %v7554
  %v7587 = vmul.f32 %v7470, %v7555
  %v7588 = vmul.f32 %v7472, %v7556
  %v7589 = vmul.f32 %v7474, %v7557
  %v7590 = vmul.f32 %v7476, %v7558
  %v7591 = vmul.f32 %v7478, %v7559
  %v7592 = vmul.f32 %v7480, %v7560
  %v7593 = vadd.f32 %v7561, %v7577
  %v7594 = vadd.f32 %v7562, %v7578
  %v7595 = vadd.f32 %v7563, %v7579
  %v7596 = vadd.f32 %v7564, %v7580
  %v7597 = vadd.f32 %v7565, %v7581
  %v7598 = vadd.f32 %v7566, %v7582
  %v7599 = vadd.f32 %v7567, %v7583
  %v7600 = vadd.f32 %v7568, %v7584
  %v7601 = vadd.f32 %v7569, %v7585
  %v7602 = vadd.f32 %v7570, %v7586
  %v7603 = vadd.f32 %v7571, %v7587
  %v7604 = vadd.f32 %v7572, %v7588
  %v7605 = vadd.f32 %v7573, %v7589
  %v7606 = vadd.f32 %v7574, %v7590
  %v7607 = vadd.f32 %v7575, %v7591
  %v7608 = vadd.f32 %v7576, %v7592
  %v7609 = vtanh.pop %v7593
  %v7610 = vtanh.pop %v7594
  %v7611 = vtanh.pop %v7595
  %v7612 = vtanh.pop %v7596
  %v7613 = vtanh.pop %v7597
  %v7614 = vtanh.pop %v7598
  %v7615 = vtanh.pop %v7599
  %v7616 = vtanh.pop %v7600
  %v7617 = vtanh.pop %v7601
  %v7618 = vtanh.pop %v7602
  %v7619 = vtanh.pop %v7603
  %v7620 = vtanh.pop %v7604
  %v7621 = vtanh.pop %v7605
  %v7622 = vtanh.pop %v7606
  %v7623 = vtanh.pop %v7607
  %v7624 = vtanh.pop %v7608
  %v7625 = vmul.f32 %v7514, %v7609
  %v7626 = vmul.f32 %v7516, %v7610
  %v7627 = vmul.f32 %v7518, %v7611
  %v7628 = vmul.f32 %v7520, %v7612
  %v7629 = vmul.f32 %v7522, %v7613
  %v7630 = vmul.f32 %v7524, %v7614
  %v7631 = vmul.f32 %v7526, %v7615
  %v7632 = vmul.f32 %v7528, %v7616
  %v7633 = vmul.f32 %v7530, %v7617
  %v7634 = vmul.f32 %v7532, %v7618
  %v7635 = vmul.f32 %v7534, %v7619
  %v7636 = vmul.f32 %v7536, %v7620
  %v7637 = vmul.f32 %v7538, %v7621
  %v7638 = vmul.f32 %v7540, %v7622
  %v7639 = vmul.f32 %v7542, %v7623
  %v7640 = vmul.f32 %v7544, %v7624
  %7641 = vst [vmem:[#allocation3 + $0x200] sm:$0xff] %v7625
  %7642 = vst [vmem:[#allocation3 + $0x208] sm:$0xff] %v7626
  %7643 = vst [vmem:[#allocation3 + $0x210] sm:$0xff] %v7627
  %7644 = vst [vmem:[#allocation3 + $0x218] sm:$0xff] %v7628
  %7645 = vst [vmem:[#allocation3 + $0x220] sm:$0xff] %v7629
  %7646 = vst [vmem:[#allocation3 + $0x228] sm:$0xff] %v7630
  %7647 = vst [vmem:[#allocation3 + $0x230] sm:$0xff] %v7631
  %7648 = vst [vmem:[#allocation3 + $0x238] sm:$0xff] %v7632
  %7649 = vst [vmem:[#allocation3 + $0x240] sm:$0xff] %v7633
  %7650 = vst [vmem:[#allocation3 + $0x248] sm:$0xff] %v7634
  %7651 = vst [vmem:[#allocation3 + $0x250] sm:$0xff] %v7635
  %7652 = vst [vmem:[#allocation3 + $0x258] sm:$0xff] %v7636
  %7653 = vst [vmem:[#allocation3 + $0x260] sm:$0xff] %v7637
  %7654 = vst [vmem:[#allocation3 + $0x268] sm:$0xff] %v7638
  %7655 = vst [vmem:[#allocation3 + $0x270] sm:$0xff] %v7639
  %7656 = vst [vmem:[#allocation3 + $0x278] sm:$0xff] %v7640
  %v7657 = vld [vmem:[#allocation2 + $0xa0] sm:$0xff]
  %v7658 = vld [vmem:[#allocation2 + $0xa8] sm:$0xff]
  %v7659 = vld [vmem:[#allocation2 + $0xb0] sm:$0xff]
  %v7660 = vld [vmem:[#allocation2 + $0xb8] sm:$0xff]
  %v7661 = vld [vmem:[#allocation2 + $0x1a0] sm:$0xff]
  %v7662 = vld [vmem:[#allocation2 + $0x1a8] sm:$0xff]
  %v7663 = vld [vmem:[#allocation2 + $0x1b0] sm:$0xff]
  %v7664 = vld [vmem:[#allocation2 + $0x1b8] sm:$0xff]
  %v7665 = vld [vmem:[#allocation2 + $0x2a0] sm:$0xff]
  %v7666 = vld [vmem:[#allocation2 + $0x2a8] sm:$0xff]
  %v7667 = vld [vmem:[#allocation2 + $0x2b0] sm:$0xff]
  %v7668 = vld [vmem:[#allocation2 + $0x2b8] sm:$0xff]
  %v7669 = vld [vmem:[#allocation2 + $0x3a0] sm:$0xff]
  %v7670 = vld [vmem:[#allocation2 + $0x3a8] sm:$0xff]
  %v7671 = vld [vmem:[#allocation2 + $0x3b0] sm:$0xff]
  %v7672 = vld [vmem:[#allocation2 + $0x3b8] sm:$0xff]
  %v7673 = vld [vmem:[#allocation2 + $0x4a0] sm:$0xff]
  %v7674 = vld [vmem:[#allocation2 + $0x4a8] sm:$0xff]
  %v7675 = vld [vmem:[#allocation2 + $0x4b0] sm:$0xff]
  %v7676 = vld [vmem:[#allocation2 + $0x4b8] sm:$0xff]
  %v7677 = vld [vmem:[#allocation2 + $0x5a0] sm:$0xff]
  %v7678 = vld [vmem:[#allocation2 + $0x5a8] sm:$0xff]
  %v7679 = vld [vmem:[#allocation2 + $0x5b0] sm:$0xff]
  %v7680 = vld [vmem:[#allocation2 + $0x5b8] sm:$0xff]
  %v7681 = vld [vmem:[#allocation2 + $0x6a0] sm:$0xff]
  %v7682 = vld [vmem:[#allocation2 + $0x6a8] sm:$0xff]
  %v7683 = vld [vmem:[#allocation2 + $0x6b0] sm:$0xff]
  %v7684 = vld [vmem:[#allocation2 + $0x6b8] sm:$0xff]
  %v7685 = vld [vmem:[#allocation2 + $0x7a0] sm:$0xff]
  %v7686 = vld [vmem:[#allocation2 + $0x7a8] sm:$0xff]
  %v7687 = vld [vmem:[#allocation2 + $0x7b0] sm:$0xff]
  %v7688 = vld [vmem:[#allocation2 + $0x7b8] sm:$0xff]
  %v7689 = vld [vmem:[#allocation2 + $0x8a0] sm:$0xff]
  %v7690 = vld [vmem:[#allocation2 + $0x8a8] sm:$0xff]
  %v7691 = vld [vmem:[#allocation2 + $0x8b0] sm:$0xff]
  %v7692 = vld [vmem:[#allocation2 + $0x8b8] sm:$0xff]
  %v7693 = vld [vmem:[#allocation2 + $0x9a0] sm:$0xff]
  %v7694 = vld [vmem:[#allocation2 + $0x9a8] sm:$0xff]
  %v7695 = vld [vmem:[#allocation2 + $0x9b0] sm:$0xff]
  %v7696 = vld [vmem:[#allocation2 + $0x9b8] sm:$0xff]
  %v7697 = vld [vmem:[#allocation2 + $0xaa0] sm:$0xff]
  %v7698 = vld [vmem:[#allocation2 + $0xaa8] sm:$0xff]
  %v7699 = vld [vmem:[#allocation2 + $0xab0] sm:$0xff]
  %v7700 = vld [vmem:[#allocation2 + $0xab8] sm:$0xff]
  %v7701 = vld [vmem:[#allocation2 + $0xba0] sm:$0xff]
  %v7702 = vld [vmem:[#allocation2 + $0xba8] sm:$0xff]
  %v7703 = vld [vmem:[#allocation2 + $0xbb0] sm:$0xff]
  %v7704 = vld [vmem:[#allocation2 + $0xbb8] sm:$0xff]
  %v7705 = vld [vmem:[#allocation2 + $0xca0] sm:$0xff]
  %v7706 = vld [vmem:[#allocation2 + $0xca8] sm:$0xff]
  %v7707 = vld [vmem:[#allocation2 + $0xcb0] sm:$0xff]
  %v7708 = vld [vmem:[#allocation2 + $0xcb8] sm:$0xff]
  %v7709 = vld [vmem:[#allocation2 + $0xda0] sm:$0xff]
  %v7710 = vld [vmem:[#allocation2 + $0xda8] sm:$0xff]
  %v7711 = vld [vmem:[#allocation2 + $0xdb0] sm:$0xff]
  %v7712 = vld [vmem:[#allocation2 + $0xdb8] sm:$0xff]
  %v7713 = vld [vmem:[#allocation2 + $0xea0] sm:$0xff]
  %v7714 = vld [vmem:[#allocation2 + $0xea8] sm:$0xff]
  %v7715 = vld [vmem:[#allocation2 + $0xeb0] sm:$0xff]
  %v7716 = vld [vmem:[#allocation2 + $0xeb8] sm:$0xff]
  %v7717 = vld [vmem:[#allocation2 + $0xfa0] sm:$0xff]
  %v7718 = vld [vmem:[#allocation2 + $0xfa8] sm:$0xff]
  %v7719 = vld [vmem:[#allocation2 + $0xfb0] sm:$0xff]
  %v7720 = vld [vmem:[#allocation2 + $0xfb8] sm:$0xff]
  %7721 = vmatprep.subr.mxu0 %v7626
  %7722 = vmatpush1.msra.mxu0 %v7625
  %7723 = vmatprep.subr.mxu0 %v7630
  %7724 = vmatpush1.msra.mxu0 %v7629
  %7725 = vmatprep.subr.mxu0 %v7634
  %7726 = vmatpush1.msra.mxu0 %v7633
  %7727 = vmatprep.subr.mxu0 %v7638
  %7728 = vmatpush1.msra.mxu0 %v7637
  %7729 = vmatprep.subr.mxu0 0.0
  %7730 = vmatpush1.msra.mxu0 0.0
  %7731 = vmatprep.subr.mxu0 0.0
  %7732 = vmatpush1.msra.mxu0 0.0
  %7733 = vmatprep.subr.mxu0 0.0
  %7734 = vmatpush1.msra.mxu0 0.0
  %7735 = vmatprep.subr.mxu0 0.0
  %7736 = vmatpush1.msra.mxu0 0.0
  %7737 = vmatprep.subr.mxu0 0.0
  %7738 = vmatpush1.msra.mxu0 0.0
  %7739 = vmatprep.subr.mxu0 0.0
  %7740 = vmatpush1.msra.mxu0 0.0
  %7741 = vmatprep.subr.mxu0 0.0
  %7742 = vmatpush1.msra.mxu0 0.0
  %7743 = vmatprep.subr.mxu0 0.0
  %7744 = vmatpush1.msra.mxu0 0.0
  %7745 = vmatprep.subr.mxu0 0.0
  %7746 = vmatpush1.msra.mxu0 0.0
  %7747 = vmatprep.subr.mxu0 0.0
  %7748 = vmatpush1.msra.mxu0 0.0
  %7749 = vmatprep.subr.mxu0 0.0
  %7750 = vmatpush1.msra.mxu0 0.0
  %7751 = vmatprep.subr.mxu0 0.0
  %7752 = vmatpush1.msra.mxu0 0.0
  %7753 = vmatprep.subr.mxu0 0.0
  %7754 = vmatpush1.msra.mxu0 0.0
  %7755 = vmatprep.subr.mxu0 0.0
  %7756 = vmatpush1.msra.mxu0 0.0
  %7757 = vmatprep.subr.mxu0 0.0
  %7758 = vmatpush1.msra.mxu0 0.0
  %7759 = vmatprep.subr.mxu0 0.0
  %7760 = vmatpush1.msra.mxu0 0.0
  %7761 = vmatprep.subr.mxu0 0.0
  %7762 = vmatpush1.msra.mxu0 0.0
  %7763 = vmatprep.subr.mxu0 0.0
  %7764 = vmatpush1.msra.mxu0 0.0
  %7765 = vmatprep.subr.mxu0 0.0
  %7766 = vmatpush1.msra.mxu0 0.0
  %7767 = vmatprep.subr.mxu0 0.0
  %7768 = vmatpush1.msra.mxu0 0.0
  %7769 = vmatprep.subr.mxu0 0.0
  %7770 = vmatpush1.msra.mxu0 0.0
  %7771 = vmatprep.subr.mxu0 0.0
  %7772 = vmatpush1.msra.mxu0 0.0
  %7773 = vmatprep.subr.mxu0 0.0
  %7774 = vmatpush1.msra.mxu0 0.0
  %7775 = vmatprep.subr.mxu0 0.0
  %7776 = vmatpush1.msra.mxu0 0.0
  %7777 = vmatprep.subr.mxu0 0.0
  %7778 = vmatpush1.msra.mxu0 0.0
  %7779 = vmatprep.subr.mxu0 0.0
  %7780 = vmatpush1.msra.mxu0 0.0
  %7781 = vmatprep.subr.mxu0 0.0
  %7782 = vmatpush1.msra.mxu0 0.0
  %7783 = vmatprep.subr.mxu0 0.0
  %7784 = vmatpush1.msra.mxu0 0.0
  %7785 = vmatprep.mubr.f32.mxu0 0.0
  %7786 = vmatmul.mubr.f32.gmra.mrb[0].mxu0 %v3424
  %v7787 = vpop.f32.mrb[0].mxu0
  %v7788 = vadd.f32 0.0, %v7787
  %v7789 = vpop.f32.mrb[0].mxu0
  %v7790 = vadd.f32 0.0, %v7789
  %7791 = vmatprep.mubr.f32.mxu0 0.0
  %7792 = vmatmul.mubr.f32.gmra.mrb[0].mxu0 %v3427
  %v7793 = vpop.f32.mrb[0].mxu0
  %v7794 = vadd.f32 0.0, %v7793
  %v7795 = vpop.f32.mrb[0].mxu0
  %v7796 = vadd.f32 0.0, %v7795
  %7797 = vmatprep.mubr.f32.mxu0 0.0
  %7798 = vmatmul.mubr.f32.gmra.mrb[0].mxu0 %v3430
  %v7799 = vpop.f32.mrb[0].mxu0
  %v7800 = vadd.f32 0.0, %v7799
  %v7801 = vpop.f32.mrb[0].mxu0
  %v7802 = vadd.f32 0.0, %v7801
  %7803 = vmatprep.mubr.f32.mxu0 0.0
  %7804 = vmatmul.mubr.f32.gmra.mrb[0].mxu0 %v3433
  %v7805 = vpop.f32.mrb[0].mxu0
  %v7806 = vadd.f32 0.0, %v7805
  %v7807 = vpop.f32.mrb[0].mxu0
  %v7808 = vadd.f32 0.0, %v7807
  %7809 = vmatprep.mubr.f32.mxu0 0.0
  %7810 = vmatmul.mubr.f32.gmra.mrb[0].mxu0 %v3436
  %v7811 = vpop.f32.mrb[0].mxu0
  %v7812 = vadd.f32 0.0, %v7811
  %v7813 = vpop.f32.mrb[0].mxu0
  %v7814 = vadd.f32 0.0, %v7813
  %7815 = vmatprep.mubr.f32.mxu0 0.0
  %7816 = vmatmul.mubr.f32.gmra.mrb[0].mxu0 %v3439
  %v7817 = vpop.f32.mrb[0].mxu0
  %v7818 = vadd.f32 0.0, %v7817
  %v7819 = vpop.f32.mrb[0].mxu0
  %v7820 = vadd.f32 0.0, %v7819
  %7821 = vmatprep.mubr.f32.mxu0 0.0
  %7822 = vmatmul.mubr.f32.gmra.mrb[0].mxu0 %v3442
  %v7823 = vpop.f32.mrb[0].mxu0
  %v7824 = vadd.f32 0.0, %v7823
  %v7825 = vpop.f32.mrb[0].mxu0
  %v7826 = vadd.f32 0.0, %v7825
  %7827 = vmatprep.mubr.f32.mxu0 0.0
  %7828 = vmatmul.mubr.f32.gmra.mrb[0].mxu0 %v3445
  %v7829 = vpop.f32.mrb[0].mxu0
  %v7830 = vadd.f32 0.0, %v7829
  %v7831 = vpop.f32.mrb[0].mxu0
  %v7832 = vadd.f32 0.0, %v7831
  %7833 = vmatprep.mubr.f32.mxu0 0.0
  %7834 = vmatmul.mubr.f32.gmra.mrb[0].mxu0 %v3448
  %v7835 = vpop.f32.mrb[0].mxu0
  %v7836 = vadd.f32 0.0, %v7835
  %v7837 = vpop.f32.mrb[0].mxu0
  %v7838 = vadd.f32 0.0, %v7837
  %7839 = vmatprep.mubr.f32.mxu0 0.0
  %7840 = vmatmul.mubr.f32.gmra.mrb[0].mxu0 %v3451
  %v7841 = vpop.f32.mrb[0].mxu0
  %v7842 = vadd.f32 0.0, %v7841
  %v7843 = vpop.f32.mrb[0].mxu0
  %v7844 = vadd.f32 0.0, %v7843
  %7845 = vmatprep.mubr.f32.mxu0 0.0
  %7846 = vmatmul.mubr.f32.gmra.mrb[0].mxu0 %v3454
  %v7847 = vpop.f32.mrb[0].mxu0
  %v7848 = vadd.f32 0.0, %v7847
  %v7849 = vpop.f32.mrb[0].mxu0
  %v7850 = vadd.f32 0.0, %v7849
  %7851 = vmatprep.mubr.f32.mxu0 0.0
  %7852 = vmatmul.mubr.f32.gmra.mrb[0].mxu0 %v3457
  %v7853 = vpop.f32.mrb[0].mxu0
  %v7854 = vadd.f32 0.0, %v7853
  %v7855 = vpop.f32.mrb[0].mxu0
  %v7856 = vadd.f32 0.0, %v7855
  %7857 = vmatprep.mubr.f32.mxu0 0.0
  %7858 = vmatmul.mubr.f32.gmra.mrb[0].mxu0 %v3460
  %v7859 = vpop.f32.mrb[0].mxu0
  %v7860 = vadd.f32 0.0, %v7859
  %v7861 = vpop.f32.mrb[0].mxu0
  %v7862 = vadd.f32 0.0, %v7861
  %7863 = vmatprep.mubr.f32.mxu0 0.0
  %7864 = vmatmul.mubr.f32.gmra.mrb[0].mxu0 %v3463
  %v7865 = vpop.f32.mrb[0].mxu0
  %v7866 = vadd.f32 0.0, %v7865
  %v7867 = vpop.f32.mrb[0].mxu0
  %v7868 = vadd.f32 0.0, %v7867
  %7869 = vmatprep.mubr.f32.mxu0 0.0
  %7870 = vmatmul.mubr.f32.gmra.mrb[0].mxu0 %v3466
  %v7871 = vpop.f32.mrb[0].mxu0
  %v7872 = vadd.f32 0.0, %v7871
  %v7873 = vpop.f32.mrb[0].mxu0
  %v7874 = vadd.f32 0.0, %v7873
  %7875 = vmatprep.mubr.f32.mxu0 0.0
  %7876 = vmatmul.mubr.f32.gmra.mrb[0].mxu0 %v3469
  %v7877 = vpop.f32.mrb[0].mxu0
  %v7878 = vadd.f32 0.0, %v7877
  %v7879 = vpop.f32.mrb[0].mxu0
  %v7880 = vadd.f32 0.0, %v7879
  %7881 = vdwg.mxu0
  %7882 = vmatprep.subr.mxu0 %v7628
  %7883 = vmatpush1.msra.mxu0 %v7627
  %7884 = vmatprep.subr.mxu0 %v7632
  %7885 = vmatpush1.msra.mxu0 %v7631
  %7886 = vmatprep.subr.mxu0 %v7636
  %7887 = vmatpush1.msra.mxu0 %v7635
  %7888 = vmatprep.subr.mxu0 %v7640
  %7889 = vmatpush1.msra.mxu0 %v7639
  %7890 = vmatprep.subr.mxu0 0.0
  %7891 = vmatpush1.msra.mxu0 0.0
  %7892 = vmatprep.subr.mxu0 0.0
  %7893 = vmatpush1.msra.mxu0 0.0
  %7894 = vmatprep.subr.mxu0 0.0
  %7895 = vmatpush1.msra.mxu0 0.0
  %7896 = vmatprep.subr.mxu0 0.0
  %7897 = vmatpush1.msra.mxu0 0.0
  %7898 = vmatprep.subr.mxu0 0.0
  %7899 = vmatpush1.msra.mxu0 0.0
  %7900 = vmatprep.subr.mxu0 0.0
  %7901 = vmatpush1.msra.mxu0 0.0
  %7902 = vmatprep.subr.mxu0 0.0
  %7903 = vmatpush1.msra.mxu0 0.0
  %7904 = vmatprep.subr.mxu0 0.0
  %7905 = vmatpush1.msra.mxu0 0.0
  %7906 = vmatprep.subr.mxu0 0.0
  %7907 = vmatpush1.msra.mxu0 0.0
  %7908 = vmatprep.subr.mxu0 0.0
  %7909 = vmatpush1.msra.mxu0 0.0
  %7910 = vmatprep.subr.mxu0 0.0
  %7911 = vmatpush1.msra.mxu0 0.0
  %7912 = vmatprep.subr.mxu0 0.0
  %7913 = vmatpush1.msra.mxu0 0.0
  %7914 = vmatprep.subr.mxu0 0.0
  %7915 = vmatpush1.msra.mxu0 0.0
  %7916 = vmatprep.subr.mxu0 0.0
  %7917 = vmatpush1.msra.mxu0 0.0
  %7918 = vmatprep.subr.mxu0 0.0
  %7919 = vmatpush1.msra.mxu0 0.0
  %7920 = vmatprep.subr.mxu0 0.0
  %7921 = vmatpush1.msra.mxu0 0.0
  %7922 = vmatprep.subr.mxu0 0.0
  %7923 = vmatpush1.msra.mxu0 0.0
  %7924 = vmatprep.subr.mxu0 0.0
  %7925 = vmatpush1.msra.mxu0 0.0
  %7926 = vmatprep.subr.mxu0 0.0
  %7927 = vmatpush1.msra.mxu0 0.0
  %7928 = vmatprep.subr.mxu0 0.0
  %7929 = vmatpush1.msra.mxu0 0.0
  %7930 = vmatprep.subr.mxu0 0.0
  %7931 = vmatpush1.msra.mxu0 0.0
  %7932 = vmatprep.subr.mxu0 0.0
  %7933 = vmatpush1.msra.mxu0 0.0
  %7934 = vmatprep.subr.mxu0 0.0
  %7935 = vmatpush1.msra.mxu0 0.0
  %7936 = vmatprep.subr.mxu0 0.0
  %7937 = vmatpush1.msra.mxu0 0.0
  %7938 = vmatprep.subr.mxu0 0.0
  %7939 = vmatpush1.msra.mxu0 0.0
  %7940 = vmatprep.subr.mxu0 0.0
  %7941 = vmatpush1.msra.mxu0 0.0
  %7942 = vmatprep.subr.mxu0 0.0
  %7943 = vmatpush1.msra.mxu0 0.0
  %7944 = vmatprep.subr.mxu0 0.0
  %7945 = vmatpush1.msra.mxu0 0.0
  %7946 = vmatprep.mubr.f32.mxu0 0.0
  %7947 = vmatmul.mubr.f32.gmra.mrb[0].mxu0 %v3424
  %v7948 = vpop.f32.mrb[0].mxu0
  %v7949 = vadd.f32 0.0, %v7948
  %v7950 = vpop.f32.mrb[0].mxu0
  %v7951 = vadd.f32 0.0, %v7950
  %7952 = vmatprep.mubr.f32.mxu0 0.0
  %7953 = vmatmul.mubr.f32.gmra.mrb[0].mxu0 %v3427
  %v7954 = vpop.f32.mrb[0].mxu0
  %v7955 = vadd.f32 0.0, %v7954
  %v7956 = vpop.f32.mrb[0].mxu0
  %v7957 = vadd.f32 0.0, %v7956
  %7958 = vmatprep.mubr.f32.mxu0 0.0
  %7959 = vmatmul.mubr.f32.gmra.mrb[0].mxu0 %v3430
  %v7960 = vpop.f32.mrb[0].mxu0
  %v7961 = vadd.f32 0.0, %v7960
  %v7962 = vpop.f32.mrb[0].mxu0
  %v7963 = vadd.f32 0.0, %v7962
  %7964 = vmatprep.mubr.f32.mxu0 0.0
  %7965 = vmatmul.mubr.f32.gmra.mrb[0].mxu0 %v3433
  %v7966 = vpop.f32.mrb[0].mxu0
  %v7967 = vadd.f32 0.0, %v7966
  %v7968 = vpop.f32.mrb[0].mxu0
  %v7969 = vadd.f32 0.0, %v7968
  %7970 = vmatprep.mubr.f32.mxu0 0.0
  %7971 = vmatmul.mubr.f32.gmra.mrb[0].mxu0 %v3436
  %v7972 = vpop.f32.mrb[0].mxu0
  %v7973 = vadd.f32 0.0, %v7972
  %v7974 = vpop.f32.mrb[0].mxu0
  %v7975 = vadd.f32 0.0, %v7974
  %7976 = vmatprep.mubr.f32.mxu0 0.0
  %7977 = vmatmul.mubr.f32.gmra.mrb[0].mxu0 %v3439
  %v7978 = vpop.f32.mrb[0].mxu0
  %v7979 = vadd.f32 0.0, %v7978
  %v7980 = vpop.f32.mrb[0].mxu0
  %v7981 = vadd.f32 0.0, %v7980
  %7982 = vmatprep.mubr.f32.mxu0 0.0
  %7983 = vmatmul.mubr.f32.gmra.mrb[0].mxu0 %v3442
  %v7984 = vpop.f32.mrb[0].mxu0
  %v7985 = vadd.f32 0.0, %v7984
  %v7986 = vpop.f32.mrb[0].mxu0
  %v7987 = vadd.f32 0.0, %v7986
  %7988 = vmatprep.mubr.f32.mxu0 0.0
  %7989 = vmatmul.mubr.f32.gmra.mrb[0].mxu0 %v3445
  %v7990 = vpop.f32.mrb[0].mxu0
  %v7991 = vadd.f32 0.0, %v7990
  %v7992 = vpop.f32.mrb[0].mxu0
  %v7993 = vadd.f32 0.0, %v7992
  %7994 = vmatprep.mubr.f32.mxu0 0.0
  %7995 = vmatmul.mubr.f32.gmra.mrb[0].mxu0 %v3448
  %v7996 = vpop.f32.mrb[0].mxu0
  %v7997 = vadd.f32 0.0, %v7996
  %v7998 = vpop.f32.mrb[0].mxu0
  %v7999 = vadd.f32 0.0, %v7998
  %8000 = vmatprep.mubr.f32.mxu0 0.0
  %8001 = vmatmul.mubr.f32.gmra.mrb[0].mxu0 %v3451
  %v8002 = vpop.f32.mrb[0].mxu0
  %v8003 = vadd.f32 0.0, %v8002
  %v8004 = vpop.f32.mrb[0].mxu0
  %v8005 = vadd.f32 0.0, %v8004
  %8006 = vmatprep.mubr.f32.mxu0 0.0
  %8007 = vmatmul.mubr.f32.gmra.mrb[0].mxu0 %v3454
  %v8008 = vpop.f32.mrb[0].mxu0
  %v8009 = vadd.f32 0.0, %v8008
  %v8010 = vpop.f32.mrb[0].mxu0
  %v8011 = vadd.f32 0.0, %v8010
  %8012 = vmatprep.mubr.f32.mxu0 0.0
  %8013 = vmatmul.mubr.f32.gmra.mrb[0].mxu0 %v3457
  %v8014 = vpop.f32.mrb[0].mxu0
  %v8015 = vadd.f32 0.0, %v8014
  %v8016 = vpop.f32.mrb[0].mxu0
  %v8017 = vadd.f32 0.0, %v8016
  %8018 = vmatprep.mubr.f32.mxu0 0.0
  %8019 = vmatmul.mubr.f32.gmra.mrb[0].mxu0 %v3460
  %v8020 = vpop.f32.mrb[0].mxu0
  %v8021 = vadd.f32 0.0, %v8020
  %v8022 = vpop.f32.mrb[0].mxu0
  %v8023 = vadd.f32 0.0, %v8022
  %8024 = vmatprep.mubr.f32.mxu0 0.0
  %8025 = vmatmul.mubr.f32.gmra.mrb[0].mxu0 %v3463
  %v8026 = vpop.f32.mrb[0].mxu0
  %v8027 = vadd.f32 0.0, %v8026
  %v8028 = vpop.f32.mrb[0].mxu0
  %v8029 = vadd.f32 0.0, %v8028
  %8030 = vmatprep.mubr.f32.mxu0 0.0
  %8031 = vmatmul.mubr.f32.gmra.mrb[0].mxu0 %v3466
  %v8032 = vpop.f32.mrb[0].mxu0
  %v8033 = vadd.f32 0.0, %v8032
  %v8034 = vpop.f32.mrb[0].mxu0
  %v8035 = vadd.f32 0.0, %v8034
  %8036 = vmatprep.mubr.f32.mxu0 0.0
  %8037 = vmatmul.mubr.f32.gmra.mrb[0].mxu0 %v3469
  %v8038 = vpop.f32.mrb[0].mxu0
  %v8039 = vadd.f32 0.0, %v8038
  %v8040 = vpop.f32.mrb[0].mxu0
  %v8041 = vadd.f32 0.0, %v8040
  %8042 = vdwg.mxu0
  %v8043 = vadd.f32 %v7657, %v7788
  %v8044 = vadd.f32 %v7658, %v7790
  %v8045 = vadd.f32 %v7659, %v7949
  %v8046 = vadd.f32 %v7660, %v7951
  %v8047 = vadd.f32 %v7661, %v7794
  %v8048 = vadd.f32 %v7662, %v7796
  %v8049 = vadd.f32 %v7663, %v7955
  %v8050 = vadd.f32 %v7664, %v7957
  %v8051 = vadd.f32 %v7665, %v7800
  %v8052 = vadd.f32 %v7666, %v7802
  %v8053 = vadd.f32 %v7667, %v7961
  %v8054 = vadd.f32 %v7668, %v7963
  %v8055 = vadd.f32 %v7669, %v7806
  %v8056 = vadd.f32 %v7670, %v7808
  %v8057 = vadd.f32 %v7671, %v7967
  %v8058 = vadd.f32 %v7672, %v7969
  %v8059 = vadd.f32 %v7673, %v7812
  %v8060 = vadd.f32 %v7674, %v7814
  %v8061 = vadd.f32 %v7675, %v7973
  %v8062 = vadd.f32 %v7676, %v7975
  %v8063 = vadd.f32 %v7677, %v7818
  %v8064 = vadd.f32 %v7678, %v7820
  %v8065 = vadd.f32 %v7679, %v7979
  %v8066 = vadd.f32 %v7680, %v7981
  %v8067 = vadd.f32 %v7681, %v7824
  %v8068 = vadd.f32 %v7682, %v7826
  %v8069 = vadd.f32 %v7683, %v7985
  %v8070 = vadd.f32 %v7684, %v7987
  %v8071 = vadd.f32 %v7685, %v7830
  %v8072 = vadd.f32 %v7686, %v7832
  %v8073 = vadd.f32 %v7687, %v7991
  %v8074 = vadd.f32 %v7688, %v7993
  %v8075 = vadd.f32 %v7689, %v7836
  %v8076 = vadd.f32 %v7690, %v7838
  %v8077 = vadd.f32 %v7691, %v7997
  %v8078 = vadd.f32 %v7692, %v7999
  %v8079 = vadd.f32 %v7693, %v7842
  %v8080 = vadd.f32 %v7694, %v7844
  %v8081 = vadd.f32 %v7695, %v8003
  %v8082 = vadd.f32 %v7696, %v8005
  %v8083 = vadd.f32 %v7697, %v7848
  %v8084 = vadd.f32 %v7698, %v7850
  %v8085 = vadd.f32 %v7699, %v8009
  %v8086 = vadd.f32 %v7700, %v8011
  %v8087 = vadd.f32 %v7701, %v7854
  %v8088 = vadd.f32 %v7702, %v7856
  %v8089 = vadd.f32 %v7703, %v8015
  %v8090 = vadd.f32 %v7704, %v8017
  %v8091 = vadd.f32 %v7705, %v7860
  %v8092 = vadd.f32 %v7706, %v7862
  %v8093 = vadd.f32 %v7707, %v8021
  %v8094 = vadd.f32 %v7708, %v8023
  %v8095 = vadd.f32 %v7709, %v7866
  %v8096 = vadd.f32 %v7710, %v7868
  %v8097 = vadd.f32 %v7711, %v8027
  %v8098 = vadd.f32 %v7712, %v8029
  %v8099 = vadd.f32 %v7713, %v7872
  %v8100 = vadd.f32 %v7714, %v7874
  %v8101 = vadd.f32 %v7715, %v8033
  %v8102 = vadd.f32 %v7716, %v8035
  %v8103 = vadd.f32 %v7717, %v7878
  %v8104 = vadd.f32 %v7718, %v7880
  %v8105 = vadd.f32 %v7719, %v8039
  %v8106 = vadd.f32 %v7720, %v8041
  %v8107 = vxor.u32 %v8043, 2147483648
  %v8108 = vxor.u32 %v8044, 2147483648
  %v8109 = vxor.u32 %v8045, 2147483648
  %v8110 = vxor.u32 %v8046, 2147483648
  %v8111 = vxor.u32 %v8047, 2147483648
  %v8112 = vxor.u32 %v8048, 2147483648
  %v8113 = vxor.u32 %v8049, 2147483648
  %v8114 = vxor.u32 %v8050, 2147483648
  %v8115 = vxor.u32 %v8051, 2147483648
  %v8116 = vxor.u32 %v8052, 2147483648
  %v8117 = vxor.u32 %v8053, 2147483648
  %v8118 = vxor.u32 %v8054, 2147483648
  %v8119 = vxor.u32 %v8055, 2147483648
  %v8120 = vxor.u32 %v8056, 2147483648
  %v8121 = vxor.u32 %v8057, 2147483648
  %v8122 = vxor.u32 %v8058, 2147483648
  %v8123 = vxor.u32 %v8059, 2147483648
  %v8124 = vxor.u32 %v8060, 2147483648
  %v8125 = vxor.u32 %v8061, 2147483648
  %v8126 = vxor.u32 %v8062, 2147483648
  %v8127 = vxor.u32 %v8063, 2147483648
  %v8128 = vxor.u32 %v8064, 2147483648
  %v8129 = vxor.u32 %v8065, 2147483648
  %v8130 = vxor.u32 %v8066, 2147483648
  %v8131 = vxor.u32 %v8067, 2147483648
  %v8132 = vxor.u32 %v8068, 2147483648
  %v8133 = vxor.u32 %v8069, 2147483648
  %v8134 = vxor.u32 %v8070, 2147483648
  %v8135 = vxor.u32 %v8071, 2147483648
  %v8136 = vxor.u32 %v8072, 2147483648
  %v8137 = vxor.u32 %v8073, 2147483648
  %v8138 = vxor.u32 %v8074, 2147483648
  %v8139 = vxor.u32 %v8075, 2147483648
  %v8140 = vxor.u32 %v8076, 2147483648
  %v8141 = vxor.u32 %v8077, 2147483648
  %v8142 = vxor.u32 %v8078, 2147483648
  %v8143 = vxor.u32 %v8079, 2147483648
  %v8144 = vxor.u32 %v8080, 2147483648
  %v8145 = vxor.u32 %v8081, 2147483648
  %v8146 = vxor.u32 %v8082, 2147483648
  %v8147 = vxor.u32 %v8083, 2147483648
  %v8148 = vxor.u32 %v8084, 2147483648
  %v8149 = vxor.u32 %v8085, 2147483648
  %v8150 = vxor.u32 %v8086, 2147483648
  %v8151 = vxor.u32 %v8087, 2147483648
  %v8152 = vxor.u32 %v8088, 2147483648
  %v8153 = vxor.u32 %v8089, 2147483648
  %v8154 = vxor.u32 %v8090, 2147483648
  %v8155 = vmul.f32 %v8107, 1.442695
  %v8156 = vpow.pop %v8155
  %v8157 = vmul.f32 %v8108, 1.442695
  %v8158 = vpow.pop %v8157
  %v8159 = vmul.f32 %v8109, 1.442695
  %v8160 = vpow.pop %v8159
  %v8161 = vmul.f32 %v8110, 1.442695
  %v8162 = vpow.pop %v8161
  %v8163 = vmul.f32 %v8111, 1.442695
  %v8164 = vpow.pop %v8163
  %v8165 = vmul.f32 %v8112, 1.442695
  %v8166 = vpow.pop %v8165
  %v8167 = vmul.f32 %v8113, 1.442695
  %v8168 = vpow.pop %v8167
  %v8169 = vmul.f32 %v8114, 1.442695
  %v8170 = vpow.pop %v8169
  %v8171 = vmul.f32 %v8115, 1.442695
  %v8172 = vpow.pop %v8171
  %v8173 = vmul.f32 %v8116, 1.442695
  %v8174 = vpow.pop %v8173
  %v8175 = vmul.f32 %v8117, 1.442695
  %v8176 = vpow.pop %v8175
  %v8177 = vmul.f32 %v8118, 1.442695
  %v8178 = vpow.pop %v8177
  %v8179 = vmul.f32 %v8119, 1.442695
  %v8180 = vpow.pop %v8179
  %v8181 = vmul.f32 %v8120, 1.442695
  %v8182 = vpow.pop %v8181
  %v8183 = vmul.f32 %v8121, 1.442695
  %v8184 = vpow.pop %v8183
  %v8185 = vmul.f32 %v8122, 1.442695
  %v8186 = vpow.pop %v8185
  %v8187 = vmul.f32 %v8123, 1.442695
  %v8188 = vpow.pop %v8187
  %v8189 = vmul.f32 %v8124, 1.442695
  %v8190 = vpow.pop %v8189
  %v8191 = vmul.f32 %v8125, 1.442695
  %v8192 = vpow.pop %v8191
  %v8193 = vmul.f32 %v8126, 1.442695
  %v8194 = vpow.pop %v8193
  %v8195 = vmul.f32 %v8127, 1.442695
  %v8196 = vpow.pop %v8195
  %v8197 = vmul.f32 %v8128, 1.442695
  %v8198 = vpow.pop %v8197
  %v8199 = vmul.f32 %v8129, 1.442695
  %v8200 = vpow.pop %v8199
  %v8201 = vmul.f32 %v8130, 1.442695
  %v8202 = vpow.pop %v8201
  %v8203 = vmul.f32 %v8131, 1.442695
  %v8204 = vpow.pop %v8203
  %v8205 = vmul.f32 %v8132, 1.442695
  %v8206 = vpow.pop %v8205
  %v8207 = vmul.f32 %v8133, 1.442695
  %v8208 = vpow.pop %v8207
  %v8209 = vmul.f32 %v8134, 1.442695
  %v8210 = vpow.pop %v8209
  %v8211 = vmul.f32 %v8135, 1.442695
  %v8212 = vpow.pop %v8211
  %v8213 = vmul.f32 %v8136, 1.442695
  %v8214 = vpow.pop %v8213
  %v8215 = vmul.f32 %v8137, 1.442695
  %v8216 = vpow.pop %v8215
  %v8217 = vmul.f32 %v8138, 1.442695
  %v8218 = vpow.pop %v8217
  %v8219 = vmul.f32 %v8139, 1.442695
  %v8220 = vpow.pop %v8219
  %v8221 = vmul.f32 %v8140, 1.442695
  %v8222 = vpow.pop %v8221
  %v8223 = vmul.f32 %v8141, 1.442695
  %v8224 = vpow.pop %v8223
  %v8225 = vmul.f32 %v8142, 1.442695
  %v8226 = vpow.pop %v8225
  %v8227 = vmul.f32 %v8143, 1.442695
  %v8228 = vpow.pop %v8227
  %v8229 = vmul.f32 %v8144, 1.442695
  %v8230 = vpow.pop %v8229
  %v8231 = vmul.f32 %v8145, 1.442695
  %v8232 = vpow.pop %v8231
  %v8233 = vmul.f32 %v8146, 1.442695
  %v8234 = vpow.pop %v8233
  %v8235 = vmul.f32 %v8147, 1.442695
  %v8236 = vpow.pop %v8235
  %v8237 = vmul.f32 %v8148, 1.442695
  %v8238 = vpow.pop %v8237
  %v8239 = vmul.f32 %v8149, 1.442695
  %v8240 = vpow.pop %v8239
  %v8241 = vmul.f32 %v8150, 1.442695
  %v8242 = vpow.pop %v8241
  %v8243 = vmul.f32 %v8151, 1.442695
  %v8244 = vpow.pop %v8243
  %v8245 = vmul.f32 %v8152, 1.442695
  %v8246 = vpow.pop %v8245
  %v8247 = vmul.f32 %v8153, 1.442695
  %v8248 = vpow.pop %v8247
  %v8249 = vmul.f32 %v8154, 1.442695
  %v8250 = vpow.pop %v8249
  %v8251 = vadd.f32 %v8156, 1.0
  %v8252 = vadd.f32 %v8158, 1.0
  %v8253 = vadd.f32 %v8160, 1.0
  %v8254 = vadd.f32 %v8162, 1.0
  %v8255 = vadd.f32 %v8164, 1.0
  %v8256 = vadd.f32 %v8166, 1.0
  %v8257 = vadd.f32 %v8168, 1.0
  %v8258 = vadd.f32 %v8170, 1.0
  %v8259 = vadd.f32 %v8172, 1.0
  %v8260 = vadd.f32 %v8174, 1.0
  %v8261 = vadd.f32 %v8176, 1.0
  %v8262 = vadd.f32 %v8178, 1.0
  %v8263 = vadd.f32 %v8180, 1.0
  %v8264 = vadd.f32 %v8182, 1.0
  %v8265 = vadd.f32 %v8184, 1.0
  %v8266 = vadd.f32 %v8186, 1.0
  %v8267 = vadd.f32 %v8188, 1.0
  %v8268 = vadd.f32 %v8190, 1.0
  %v8269 = vadd.f32 %v8192, 1.0
  %v8270 = vadd.f32 %v8194, 1.0
  %v8271 = vadd.f32 %v8196, 1.0
  %v8272 = vadd.f32 %v8198, 1.0
  %v8273 = vadd.f32 %v8200, 1.0
  %v8274 = vadd.f32 %v8202, 1.0
  %v8275 = vadd.f32 %v8204, 1.0
  %v8276 = vadd.f32 %v8206, 1.0
  %v8277 = vadd.f32 %v8208, 1.0
  %v8278 = vadd.f32 %v8210, 1.0
  %v8279 = vadd.f32 %v8212, 1.0
  %v8280 = vadd.f32 %v8214, 1.0
  %v8281 = vadd.f32 %v8216, 1.0
  %v8282 = vadd.f32 %v8218, 1.0
  %v8283 = vadd.f32 %v8220, 1.0
  %v8284 = vadd.f32 %v8222, 1.0
  %v8285 = vadd.f32 %v8224, 1.0
  %v8286 = vadd.f32 %v8226, 1.0
  %v8287 = vadd.f32 %v8228, 1.0
  %v8288 = vadd.f32 %v8230, 1.0
  %v8289 = vadd.f32 %v8232, 1.0
  %v8290 = vadd.f32 %v8234, 1.0
  %v8291 = vadd.f32 %v8236, 1.0
  %v8292 = vadd.f32 %v8238, 1.0
  %v8293 = vadd.f32 %v8240, 1.0
  %v8294 = vadd.f32 %v8242, 1.0
  %v8295 = vadd.f32 %v8244, 1.0
  %v8296 = vadd.f32 %v8246, 1.0
  %v8297 = vadd.f32 %v8248, 1.0
  %v8298 = vadd.f32 %v8250, 1.0
  %v8299 = vrcp.pop %v8251
  %v8300 = vmul.f32 1.0, %v8299
  %v8301 = vrcp.pop %v8252
  %v8302 = vmul.f32 1.0, %v8301
  %v8303 = vrcp.pop %v8253
  %v8304 = vmul.f32 1.0, %v8303
  %v8305 = vrcp.pop %v8254
  %v8306 = vmul.f32 1.0, %v8305
  %v8307 = vrcp.pop %v8255
  %v8308 = vmul.f32 1.0, %v8307
  %v8309 = vrcp.pop %v8256
  %v8310 = vmul.f32 1.0, %v8309
  %v8311 = vrcp.pop %v8257
  %v8312 = vmul.f32 1.0, %v8311
  %v8313 = vrcp.pop %v8258
  %v8314 = vmul.f32 1.0, %v8313
  %v8315 = vrcp.pop %v8259
  %v8316 = vmul.f32 1.0, %v8315
  %v8317 = vrcp.pop %v8260
  %v8318 = vmul.f32 1.0, %v8317
  %v8319 = vrcp.pop %v8261
  %v8320 = vmul.f32 1.0, %v8319
  %v8321 = vrcp.pop %v8262
  %v8322 = vmul.f32 1.0, %v8321
  %v8323 = vrcp.pop %v8263
  %v8324 = vmul.f32 1.0, %v8323
  %v8325 = vrcp.pop %v8264
  %v8326 = vmul.f32 1.0, %v8325
  %v8327 = vrcp.pop %v8265
  %v8328 = vmul.f32 1.0, %v8327
  %v8329 = vrcp.pop %v8266
  %v8330 = vmul.f32 1.0, %v8329
  %v8331 = vrcp.pop %v8267
  %v8332 = vmul.f32 1.0, %v8331
  %v8333 = vrcp.pop %v8268
  %v8334 = vmul.f32 1.0, %v8333
  %v8335 = vrcp.pop %v8269
  %v8336 = vmul.f32 1.0, %v8335
  %v8337 = vrcp.pop %v8270
  %v8338 = vmul.f32 1.0, %v8337
  %v8339 = vrcp.pop %v8271
  %v8340 = vmul.f32 1.0, %v8339
  %v8341 = vrcp.pop %v8272
  %v8342 = vmul.f32 1.0, %v8341
  %v8343 = vrcp.pop %v8273
  %v8344 = vmul.f32 1.0, %v8343
  %v8345 = vrcp.pop %v8274
  %v8346 = vmul.f32 1.0, %v8345
  %v8347 = vrcp.pop %v8275
  %v8348 = vmul.f32 1.0, %v8347
  %v8349 = vrcp.pop %v8276
  %v8350 = vmul.f32 1.0, %v8349
  %v8351 = vrcp.pop %v8277
  %v8352 = vmul.f32 1.0, %v8351
  %v8353 = vrcp.pop %v8278
  %v8354 = vmul.f32 1.0, %v8353
  %v8355 = vrcp.pop %v8279
  %v8356 = vmul.f32 1.0, %v8355
  %v8357 = vrcp.pop %v8280
  %v8358 = vmul.f32 1.0, %v8357
  %v8359 = vrcp.pop %v8281
  %v8360 = vmul.f32 1.0, %v8359
  %v8361 = vrcp.pop %v8282
  %v8362 = vmul.f32 1.0, %v8361
  %v8363 = vrcp.pop %v8283
  %v8364 = vmul.f32 1.0, %v8363
  %v8365 = vrcp.pop %v8284
  %v8366 = vmul.f32 1.0, %v8365
  %v8367 = vrcp.pop %v8285
  %v8368 = vmul.f32 1.0, %v8367
  %v8369 = vrcp.pop %v8286
  %v8370 = vmul.f32 1.0, %v8369
  %v8371 = vrcp.pop %v8287
  %v8372 = vmul.f32 1.0, %v8371
  %v8373 = vrcp.pop %v8288
  %v8374 = vmul.f32 1.0, %v8373
  %v8375 = vrcp.pop %v8289
  %v8376 = vmul.f32 1.0, %v8375
  %v8377 = vrcp.pop %v8290
  %v8378 = vmul.f32 1.0, %v8377
  %v8379 = vrcp.pop %v8291
  %v8380 = vmul.f32 1.0, %v8379
  %v8381 = vrcp.pop %v8292
  %v8382 = vmul.f32 1.0, %v8381
  %v8383 = vrcp.pop %v8293
  %v8384 = vmul.f32 1.0, %v8383
  %v8385 = vrcp.pop %v8294
  %v8386 = vmul.f32 1.0, %v8385
  %v8387 = vrcp.pop %v8295
  %v8388 = vmul.f32 1.0, %v8387
  %v8389 = vrcp.pop %v8296
  %v8390 = vmul.f32 1.0, %v8389
  %v8391 = vrcp.pop %v8297
  %v8392 = vmul.f32 1.0, %v8391
  %v8393 = vrcp.pop %v8298
  %v8394 = vmul.f32 1.0, %v8393
  %v8395 = vtanh.pop %v8091
  %v8396 = vtanh.pop %v8092
  %v8397 = vtanh.pop %v8093
  %v8398 = vtanh.pop %v8094
  %v8399 = vtanh.pop %v8095
  %v8400 = vtanh.pop %v8096
  %v8401 = vtanh.pop %v8097
  %v8402 = vtanh.pop %v8098
  %v8403 = vtanh.pop %v8099
  %v8404 = vtanh.pop %v8100
  %v8405 = vtanh.pop %v8101
  %v8406 = vtanh.pop %v8102
  %v8407 = vtanh.pop %v8103
  %v8408 = vtanh.pop %v8104
  %v8409 = vtanh.pop %v8105
  %v8410 = vtanh.pop %v8106
  %v8411 = vmul.f32 %v8332, %v7593
  %v8412 = vmul.f32 %v8334, %v7594
  %v8413 = vmul.f32 %v8336, %v7595
  %v8414 = vmul.f32 %v8338, %v7596
  %v8415 = vmul.f32 %v8340, %v7597
  %v8416 = vmul.f32 %v8342, %v7598
  %v8417 = vmul.f32 %v8344, %v7599
  %v8418 = vmul.f32 %v8346, %v7600
  %v8419 = vmul.f32 %v8348, %v7601
  %v8420 = vmul.f32 %v8350, %v7602
  %v8421 = vmul.f32 %v8352, %v7603
  %v8422 = vmul.f32 %v8354, %v7604
  %v8423 = vmul.f32 %v8356, %v7605
  %v8424 = vmul.f32 %v8358, %v7606
  %v8425 = vmul.f32 %v8360, %v7607
  %v8426 = vmul.f32 %v8362, %v7608
  %v8427 = vmul.f32 %v8300, %v8395
  %v8428 = vmul.f32 %v8302, %v8396
  %v8429 = vmul.f32 %v8304, %v8397
  %v8430 = vmul.f32 %v8306, %v8398
  %v8431 = vmul.f32 %v8308, %v8399
  %v8432 = vmul.f32 %v8310, %v8400
  %v8433 = vmul.f32 %v8312, %v8401
  %v8434 = vmul.f32 %v8314, %v8402
  %v8435 = vmul.f32 %v8316, %v8403
  %v8436 = vmul.f32 %v8318, %v8404
  %v8437 = vmul.f32 %v8320, %v8405
  %v8438 = vmul.f32 %v8322, %v8406
  %v8439 = vmul.f32 %v8324, %v8407
  %v8440 = vmul.f32 %v8326, %v8408
  %v8441 = vmul.f32 %v8328, %v8409
  %v8442 = vmul.f32 %v8330, %v8410
  %v8443 = vadd.f32 %v8411, %v8427
  %v8444 = vadd.f32 %v8412, %v8428
  %v8445 = vadd.f32 %v8413, %v8429
  %v8446 = vadd.f32 %v8414, %v8430
  %v8447 = vadd.f32 %v8415, %v8431
  %v8448 = vadd.f32 %v8416, %v8432
  %v8449 = vadd.f32 %v8417, %v8433
  %v8450 = vadd.f32 %v8418, %v8434
  %v8451 = vadd.f32 %v8419, %v8435
  %v8452 = vadd.f32 %v8420, %v8436
  %v8453 = vadd.f32 %v8421, %v8437
  %v8454 = vadd.f32 %v8422, %v8438
  %v8455 = vadd.f32 %v8423, %v8439
  %v8456 = vadd.f32 %v8424, %v8440
  %v8457 = vadd.f32 %v8425, %v8441
  %v8458 = vadd.f32 %v8426, %v8442
  %v8459 = vtanh.pop %v8443
  %v8460 = vtanh.pop %v8444
  %v8461 = vtanh.pop %v8445
  %v8462 = vtanh.pop %v8446
  %v8463 = vtanh.pop %v8447
  %v8464 = vtanh.pop %v8448
  %v8465 = vtanh.pop %v8449
  %v8466 = vtanh.pop %v8450
  %v8467 = vtanh.pop %v8451
  %v8468 = vtanh.pop %v8452
  %v8469 = vtanh.pop %v8453
  %v8470 = vtanh.pop %v8454
  %v8471 = vtanh.pop %v8455
  %v8472 = vtanh.pop %v8456
  %v8473 = vtanh.pop %v8457
  %v8474 = vtanh.pop %v8458
  %v8475 = vmul.f32 %v8364, %v8459
  %v8476 = vmul.f32 %v8366, %v8460
  %v8477 = vmul.f32 %v8368, %v8461
  %v8478 = vmul.f32 %v8370, %v8462
  %v8479 = vmul.f32 %v8372, %v8463
  %v8480 = vmul.f32 %v8374, %v8464
  %v8481 = vmul.f32 %v8376, %v8465
  %v8482 = vmul.f32 %v8378, %v8466
  %v8483 = vmul.f32 %v8380, %v8467
  %v8484 = vmul.f32 %v8382, %v8468
  %v8485 = vmul.f32 %v8384, %v8469
  %v8486 = vmul.f32 %v8386, %v8470
  %v8487 = vmul.f32 %v8388, %v8471
  %v8488 = vmul.f32 %v8390, %v8472
  %v8489 = vmul.f32 %v8392, %v8473
  %v8490 = vmul.f32 %v8394, %v8474
  %8491 = vst [vmem:[#allocation3 + $0x280] sm:$0xff] %v8475
  %8492 = vst [vmem:[#allocation3 + $0x288] sm:$0xff] %v8476
  %8493 = vst [vmem:[#allocation3 + $0x290] sm:$0xff] %v8477
  %8494 = vst [vmem:[#allocation3 + $0x298] sm:$0xff] %v8478
  %8495 = vst [vmem:[#allocation3 + $0x2a0] sm:$0xff] %v8479
  %8496 = vst [vmem:[#allocation3 + $0x2a8] sm:$0xff] %v8480
  %8497 = vst [vmem:[#allocation3 + $0x2b0] sm:$0xff] %v8481
  %8498 = vst [vmem:[#allocation3 + $0x2b8] sm:$0xff] %v8482
  %8499 = vst [vmem:[#allocation3 + $0x2c0] sm:$0xff] %v8483
  %8500 = vst [vmem:[#allocation3 + $0x2c8] sm:$0xff] %v8484
  %8501 = vst [vmem:[#allocation3 + $0x2d0] sm:$0xff] %v8485
  %8502 = vst [vmem:[#allocation3 + $0x2d8] sm:$0xff] %v8486
  %8503 = vst [vmem:[#allocation3 + $0x2e0] sm:$0xff] %v8487
  %8504 = vst [vmem:[#allocation3 + $0x2e8] sm:$0xff] %v8488
  %8505 = vst [vmem:[#allocation3 + $0x2f0] sm:$0xff] %v8489
  %8506 = vst [vmem:[#allocation3 + $0x2f8] sm:$0xff] %v8490
  %v8507 = vld [vmem:[#allocation2 + $0xc0] sm:$0xff]
  %v8508 = vld [vmem:[#allocation2 + $0xc8] sm:$0xff]
  %v8509 = vld [vmem:[#allocation2 + $0xd0] sm:$0xff]
  %v8510 = vld [vmem:[#allocation2 + $0xd8] sm:$0xff]
  %v8511 = vld [vmem:[#allocation2 + $0x1c0] sm:$0xff]
  %v8512 = vld [vmem:[#allocation2 + $0x1c8] sm:$0xff]
  %v8513 = vld [vmem:[#allocation2 + $0x1d0] sm:$0xff]
  %v8514 = vld [vmem:[#allocation2 + $0x1d8] sm:$0xff]
  %v8515 = vld [vmem:[#allocation2 + $0x2c0] sm:$0xff]
  %v8516 = vld [vmem:[#allocation2 + $0x2c8] sm:$0xff]
  %v8517 = vld [vmem:[#allocation2 + $0x2d0] sm:$0xff]
  %v8518 = vld [vmem:[#allocation2 + $0x2d8] sm:$0xff]
  %v8519 = vld [vmem:[#allocation2 + $0x3c0] sm:$0xff]
  %v8520 = vld [vmem:[#allocation2 + $0x3c8] sm:$0xff]
  %v8521 = vld [vmem:[#allocation2 + $0x3d0] sm:$0xff]
  %v8522 = vld [vmem:[#allocation2 + $0x3d8] sm:$0xff]
  %v8523 = vld [vmem:[#allocation2 + $0x4c0] sm:$0xff]
  %v8524 = vld [vmem:[#allocation2 + $0x4c8] sm:$0xff]
  %v8525 = vld [vmem:[#allocation2 + $0x4d0] sm:$0xff]
  %v8526 = vld [vmem:[#allocation2 + $0x4d8] sm:$0xff]
  %v8527 = vld [vmem:[#allocation2 + $0x5c0] sm:$0xff]
  %v8528 = vld [vmem:[#allocation2 + $0x5c8] sm:$0xff]
  %v8529 = vld [vmem:[#allocation2 + $0x5d0] sm:$0xff]
  %v8530 = vld [vmem:[#allocation2 + $0x5d8] sm:$0xff]
  %v8531 = vld [vmem:[#allocation2 + $0x6c0] sm:$0xff]
  %v8532 = vld [vmem:[#allocation2 + $0x6c8] sm:$0xff]
  %v8533 = vld [vmem:[#allocation2 + $0x6d0] sm:$0xff]
  %v8534 = vld [vmem:[#allocation2 + $0x6d8] sm:$0xff]
  %v8535 = vld [vmem:[#allocation2 + $0x7c0] sm:$0xff]
  %v8536 = vld [vmem:[#allocation2 + $0x7c8] sm:$0xff]
  %v8537 = vld [vmem:[#allocation2 + $0x7d0] sm:$0xff]
  %v8538 = vld [vmem:[#allocation2 + $0x7d8] sm:$0xff]
  %v8539 = vld [vmem:[#allocation2 + $0x8c0] sm:$0xff]
  %v8540 = vld [vmem:[#allocation2 + $0x8c8] sm:$0xff]
  %v8541 = vld [vmem:[#allocation2 + $0x8d0] sm:$0xff]
  %v8542 = vld [vmem:[#allocation2 + $0x8d8] sm:$0xff]
  %v8543 = vld [vmem:[#allocation2 + $0x9c0] sm:$0xff]
  %v8544 = vld [vmem:[#allocation2 + $0x9c8] sm:$0xff]
  %v8545 = vld [vmem:[#allocation2 + $0x9d0] sm:$0xff]
  %v8546 = vld [vmem:[#allocation2 + $0x9d8] sm:$0xff]
  %v8547 = vld [vmem:[#allocation2 + $0xac0] sm:$0xff]
  %v8548 = vld [vmem:[#allocation2 + $0xac8] sm:$0xff]
  %v8549 = vld [vmem:[#allocation2 + $0xad0] sm:$0xff]
  %v8550 = vld [vmem:[#allocation2 + $0xad8] sm:$0xff]
  %v8551 = vld [vmem:[#allocation2 + $0xbc0] sm:$0xff]
  %v8552 = vld [vmem:[#allocation2 + $0xbc8] sm:$0xff]
  %v8553 = vld [vmem:[#allocation2 + $0xbd0] sm:$0xff]
  %v8554 = vld [vmem:[#allocation2 + $0xbd8] sm:$0xff]
  %v8555 = vld [vmem:[#allocation2 + $0xcc0] sm:$0xff]
  %v8556 = vld [vmem:[#allocation2 + $0xcc8] sm:$0xff]
  %v8557 = vld [vmem:[#allocation2 + $0xcd0] sm:$0xff]
  %v8558 = vld [vmem:[#allocation2 + $0xcd8] sm:$0xff]
  %v8559 = vld [vmem:[#allocation2 + $0xdc0] sm:$0xff]
  %v8560 = vld [vmem:[#allocation2 + $0xdc8] sm:$0xff]
  %v8561 = vld [vmem:[#allocation2 + $0xdd0] sm:$0xff]
  %v8562 = vld [vmem:[#allocation2 + $0xdd8] sm:$0xff]
  %v8563 = vld [vmem:[#allocation2 + $0xec0] sm:$0xff]
  %v8564 = vld [vmem:[#allocation2 + $0xec8] sm:$0xff]
  %v8565 = vld [vmem:[#allocation2 + $0xed0] sm:$0xff]
  %v8566 = vld [vmem:[#allocation2 + $0xed8] sm:$0xff]
  %v8567 = vld [vmem:[#allocation2 + $0xfc0] sm:$0xff]
  %v8568 = vld [vmem:[#allocation2 + $0xfc8] sm:$0xff]
  %v8569 = vld [vmem:[#allocation2 + $0xfd0] sm:$0xff]
  %v8570 = vld [vmem:[#allocation2 + $0xfd8] sm:$0xff]
  %8571 = vmatprep.subr.mxu0 %v8476
  %8572 = vmatpush1.msra.mxu0 %v8475
  %8573 = vmatprep.subr.mxu0 %v8480
  %8574 = vmatpush1.msra.mxu0 %v8479
  %8575 = vmatprep.subr.mxu0 %v8484
  %8576 = vmatpush1.msra.mxu0 %v8483
  %8577 = vmatprep.subr.mxu0 %v8488
  %8578 = vmatpush1.msra.mxu0 %v8487
  %8579 = vmatprep.subr.mxu0 0.0
  %8580 = vmatpush1.msra.mxu0 0.0
  %8581 = vmatprep.subr.mxu0 0.0
  %8582 = vmatpush1.msra.mxu0 0.0
  %8583 = vmatprep.subr.mxu0 0.0
  %8584 = vmatpush1.msra.mxu0 0.0
  %8585 = vmatprep.subr.mxu0 0.0
  %8586 = vmatpush1.msra.mxu0 0.0
  %8587 = vmatprep.subr.mxu0 0.0
  %8588 = vmatpush1.msra.mxu0 0.0
  %8589 = vmatprep.subr.mxu0 0.0
  %8590 = vmatpush1.msra.mxu0 0.0
  %8591 = vmatprep.subr.mxu0 0.0
  %8592 = vmatpush1.msra.mxu0 0.0
  %8593 = vmatprep.subr.mxu0 0.0
  %8594 = vmatpush1.msra.mxu0 0.0
  %8595 = vmatprep.subr.mxu0 0.0
  %8596 = vmatpush1.msra.mxu0 0.0
  %8597 = vmatprep.subr.mxu0 0.0
  %8598 = vmatpush1.msra.mxu0 0.0
  %8599 = vmatprep.subr.mxu0 0.0
  %8600 = vmatpush1.msra.mxu0 0.0
  %8601 = vmatprep.subr.mxu0 0.0
  %8602 = vmatpush1.msra.mxu0 0.0
  %8603 = vmatprep.subr.mxu0 0.0
  %8604 = vmatpush1.msra.mxu0 0.0
  %8605 = vmatprep.subr.mxu0 0.0
  %8606 = vmatpush1.msra.mxu0 0.0
  %8607 = vmatprep.subr.mxu0 0.0
  %8608 = vmatpush1.msra.mxu0 0.0
  %8609 = vmatprep.subr.mxu0 0.0
  %8610 = vmatpush1.msra.mxu0 0.0
  %8611 = vmatprep.subr.mxu0 0.0
  %8612 = vmatpush1.msra.mxu0 0.0
  %8613 = vmatprep.subr.mxu0 0.0
  %8614 = vmatpush1.msra.mxu0 0.0
  %8615 = vmatprep.subr.mxu0 0.0
  %8616 = vmatpush1.msra.mxu0 0.0
  %8617 = vmatprep.subr.mxu0 0.0
  %8618 = vmatpush1.msra.mxu0 0.0
  %8619 = vmatprep.subr.mxu0 0.0
  %8620 = vmatpush1.msra.mxu0 0.0
  %8621 = vmatprep.subr.mxu0 0.0
  %8622 = vmatpush1.msra.mxu0 0.0
  %8623 = vmatprep.subr.mxu0 0.0
  %8624 = vmatpush1.msra.mxu0 0.0
  %8625 = vmatprep.subr.mxu0 0.0
  %8626 = vmatpush1.msra.mxu0 0.0
  %8627 = vmatprep.subr.mxu0 0.0
  %8628 = vmatpush1.msra.mxu0 0.0
  %8629 = vmatprep.subr.mxu0 0.0
  %8630 = vmatpush1.msra.mxu0 0.0
  %8631 = vmatprep.subr.mxu0 0.0
  %8632 = vmatpush1.msra.mxu0 0.0
  %8633 = vmatprep.subr.mxu0 0.0
  %8634 = vmatpush1.msra.mxu0 0.0
  %8635 = vmatprep.mubr.f32.mxu0 0.0
  %8636 = vmatmul.mubr.f32.gmra.mrb[0].mxu0 %v3424
  %v8637 = vpop.f32.mrb[0].mxu0
  %v8638 = vadd.f32 0.0, %v8637
  %v8639 = vpop.f32.mrb[0].mxu0
  %v8640 = vadd.f32 0.0, %v8639
  %8641 = vmatprep.mubr.f32.mxu0 0.0
  %8642 = vmatmul.mubr.f32.gmra.mrb[0].mxu0 %v3427
  %v8643 = vpop.f32.mrb[0].mxu0
  %v8644 = vadd.f32 0.0, %v8643
  %v8645 = vpop.f32.mrb[0].mxu0
  %v8646 = vadd.f32 0.0, %v8645
  %8647 = vmatprep.mubr.f32.mxu0 0.0
  %8648 = vmatmul.mubr.f32.gmra.mrb[0].mxu0 %v3430
  %v8649 = vpop.f32.mrb[0].mxu0
  %v8650 = vadd.f32 0.0, %v8649
  %v8651 = vpop.f32.mrb[0].mxu0
  %v8652 = vadd.f32 0.0, %v8651
  %8653 = vmatprep.mubr.f32.mxu0 0.0
  %8654 = vmatmul.mubr.f32.gmra.mrb[0].mxu0 %v3433
  %v8655 = vpop.f32.mrb[0].mxu0
  %v8656 = vadd.f32 0.0, %v8655
  %v8657 = vpop.f32.mrb[0].mxu0
  %v8658 = vadd.f32 0.0, %v8657
  %8659 = vmatprep.mubr.f32.mxu0 0.0
  %8660 = vmatmul.mubr.f32.gmra.mrb[0].mxu0 %v3436
  %v8661 = vpop.f32.mrb[0].mxu0
  %v8662 = vadd.f32 0.0, %v8661
  %v8663 = vpop.f32.mrb[0].mxu0
  %v8664 = vadd.f32 0.0, %v8663
  %8665 = vmatprep.mubr.f32.mxu0 0.0
  %8666 = vmatmul.mubr.f32.gmra.mrb[0].mxu0 %v3439
  %v8667 = vpop.f32.mrb[0].mxu0
  %v8668 = vadd.f32 0.0, %v8667
  %v8669 = vpop.f32.mrb[0].mxu0
  %v8670 = vadd.f32 0.0, %v8669
  %8671 = vmatprep.mubr.f32.mxu0 0.0
  %8672 = vmatmul.mubr.f32.gmra.mrb[0].mxu0 %v3442
  %v8673 = vpop.f32.mrb[0].mxu0
  %v8674 = vadd.f32 0.0, %v8673
  %v8675 = vpop.f32.mrb[0].mxu0
  %v8676 = vadd.f32 0.0, %v8675
  %8677 = vmatprep.mubr.f32.mxu0 0.0
  %8678 = vmatmul.mubr.f32.gmra.mrb[0].mxu0 %v3445
  %v8679 = vpop.f32.mrb[0].mxu0
  %v8680 = vadd.f32 0.0, %v8679
  %v8681 = vpop.f32.mrb[0].mxu0
  %v8682 = vadd.f32 0.0, %v8681
  %8683 = vmatprep.mubr.f32.mxu0 0.0
  %8684 = vmatmul.mubr.f32.gmra.mrb[0].mxu0 %v3448
  %v8685 = vpop.f32.mrb[0].mxu0
  %v8686 = vadd.f32 0.0, %v8685
  %v8687 = vpop.f32.mrb[0].mxu0
  %v8688 = vadd.f32 0.0, %v8687
  %8689 = vmatprep.mubr.f32.mxu0 0.0
  %8690 = vmatmul.mubr.f32.gmra.mrb[0].mxu0 %v3451
  %v8691 = vpop.f32.mrb[0].mxu0
  %v8692 = vadd.f32 0.0, %v8691
  %v8693 = vpop.f32.mrb[0].mxu0
  %v8694 = vadd.f32 0.0, %v8693
  %8695 = vmatprep.mubr.f32.mxu0 0.0
  %8696 = vmatmul.mubr.f32.gmra.mrb[0].mxu0 %v3454
  %v8697 = vpop.f32.mrb[0].mxu0
  %v8698 = vadd.f32 0.0, %v8697
  %v8699 = vpop.f32.mrb[0].mxu0
  %v8700 = vadd.f32 0.0, %v8699
  %8701 = vmatprep.mubr.f32.mxu0 0.0
  %8702 = vmatmul.mubr.f32.gmra.mrb[0].mxu0 %v3457
  %v8703 = vpop.f32.mrb[0].mxu0
  %v8704 = vadd.f32 0.0, %v8703
  %v8705 = vpop.f32.mrb[0].mxu0
  %v8706 = vadd.f32 0.0, %v8705
  %8707 = vmatprep.mubr.f32.mxu0 0.0
  %8708 = vmatmul.mubr.f32.gmra.mrb[0].mxu0 %v3460
  %v8709 = vpop.f32.mrb[0].mxu0
  %v8710 = vadd.f32 0.0, %v8709
  %v8711 = vpop.f32.mrb[0].mxu0
  %v8712 = vadd.f32 0.0, %v8711
  %8713 = vmatprep.mubr.f32.mxu0 0.0
  %8714 = vmatmul.mubr.f32.gmra.mrb[0].mxu0 %v3463
  %v8715 = vpop.f32.mrb[0].mxu0
  %v8716 = vadd.f32 0.0, %v8715
  %v8717 = vpop.f32.mrb[0].mxu0
  %v8718 = vadd.f32 0.0, %v8717
  %8719 = vmatprep.mubr.f32.mxu0 0.0
  %8720 = vmatmul.mubr.f32.gmra.mrb[0].mxu0 %v3466
  %v8721 = vpop.f32.mrb[0].mxu0
  %v8722 = vadd.f32 0.0, %v8721
  %v8723 = vpop.f32.mrb[0].mxu0
  %v8724 = vadd.f32 0.0, %v8723
  %8725 = vmatprep.mubr.f32.mxu0 0.0
  %8726 = vmatmul.mubr.f32.gmra.mrb[0].mxu0 %v3469
  %v8727 = vpop.f32.mrb[0].mxu0
  %v8728 = vadd.f32 0.0, %v8727
  %v8729 = vpop.f32.mrb[0].mxu0
  %v8730 = vadd.f32 0.0, %v8729
  %8731 = vdwg.mxu0
  %8732 = vmatprep.subr.mxu0 %v8478
  %8733 = vmatpush1.msra.mxu0 %v8477
  %8734 = vmatprep.subr.mxu0 %v8482
  %8735 = vmatpush1.msra.mxu0 %v8481
  %8736 = vmatprep.subr.mxu0 %v8486
  %8737 = vmatpush1.msra.mxu0 %v8485
  %8738 = vmatprep.subr.mxu0 %v8490
  %8739 = vmatpush1.msra.mxu0 %v8489
  %8740 = vmatprep.subr.mxu0 0.0
  %8741 = vmatpush1.msra.mxu0 0.0
  %8742 = vmatprep.subr.mxu0 0.0
  %8743 = vmatpush1.msra.mxu0 0.0
  %8744 = vmatprep.subr.mxu0 0.0
  %8745 = vmatpush1.msra.mxu0 0.0
  %8746 = vmatprep.subr.mxu0 0.0
  %8747 = vmatpush1.msra.mxu0 0.0
  %8748 = vmatprep.subr.mxu0 0.0
  %8749 = vmatpush1.msra.mxu0 0.0
  %8750 = vmatprep.subr.mxu0 0.0
  %8751 = vmatpush1.msra.mxu0 0.0
  %8752 = vmatprep.subr.mxu0 0.0
  %8753 = vmatpush1.msra.mxu0 0.0
  %8754 = vmatprep.subr.mxu0 0.0
  %8755 = vmatpush1.msra.mxu0 0.0
  %8756 = vmatprep.subr.mxu0 0.0
  %8757 = vmatpush1.msra.mxu0 0.0
  %8758 = vmatprep.subr.mxu0 0.0
  %8759 = vmatpush1.msra.mxu0 0.0
  %8760 = vmatprep.subr.mxu0 0.0
  %8761 = vmatpush1.msra.mxu0 0.0
  %8762 = vmatprep.subr.mxu0 0.0
  %8763 = vmatpush1.msra.mxu0 0.0
  %8764 = vmatprep.subr.mxu0 0.0
  %8765 = vmatpush1.msra.mxu0 0.0
  %8766 = vmatprep.subr.mxu0 0.0
  %8767 = vmatpush1.msra.mxu0 0.0
  %8768 = vmatprep.subr.mxu0 0.0
  %8769 = vmatpush1.msra.mxu0 0.0
  %8770 = vmatprep.subr.mxu0 0.0
  %8771 = vmatpush1.msra.mxu0 0.0
  %8772 = vmatprep.subr.mxu0 0.0
  %8773 = vmatpush1.msra.mxu0 0.0
  %8774 = vmatprep.subr.mxu0 0.0
  %8775 = vmatpush1.msra.mxu0 0.0
  %8776 = vmatprep.subr.mxu0 0.0
  %8777 = vmatpush1.msra.mxu0 0.0
  %8778 = vmatprep.subr.mxu0 0.0
  %8779 = vmatpush1.msra.mxu0 0.0
  %8780 = vmatprep.subr.mxu0 0.0
  %8781 = vmatpush1.msra.mxu0 0.0
  %8782 = vmatprep.subr.mxu0 0.0
  %8783 = vmatpush1.msra.mxu0 0.0
  %8784 = vmatprep.subr.mxu0 0.0
  %8785 = vmatpush1.msra.mxu0 0.0
  %8786 = vmatprep.subr.mxu0 0.0
  %8787 = vmatpush1.msra.mxu0 0.0
  %8788 = vmatprep.subr.mxu0 0.0
  %8789 = vmatpush1.msra.mxu0 0.0
  %8790 = vmatprep.subr.mxu0 0.0
  %8791 = vmatpush1.msra.mxu0 0.0
  %8792 = vmatprep.subr.mxu0 0.0
  %8793 = vmatpush1.msra.mxu0 0.0
  %8794 = vmatprep.subr.mxu0 0.0
  %8795 = vmatpush1.msra.mxu0 0.0
  %8796 = vmatprep.mubr.f32.mxu0 0.0
  %8797 = vmatmul.mubr.f32.gmra.mrb[0].mxu0 %v3424
  %v8798 = vpop.f32.mrb[0].mxu0
  %v8799 = vadd.f32 0.0, %v8798
  %v8800 = vpop.f32.mrb[0].mxu0
  %v8801 = vadd.f32 0.0, %v8800
  %8802 = vmatprep.mubr.f32.mxu0 0.0
  %8803 = vmatmul.mubr.f32.gmra.mrb[0].mxu0 %v3427
  %v8804 = vpop.f32.mrb[0].mxu0
  %v8805 = vadd.f32 0.0, %v8804
  %v8806 = vpop.f32.mrb[0].mxu0
  %v8807 = vadd.f32 0.0, %v8806
  %8808 = vmatprep.mubr.f32.mxu0 0.0
  %8809 = vmatmul.mubr.f32.gmra.mrb[0].mxu0 %v3430
  %v8810 = vpop.f32.mrb[0].mxu0
  %v8811 = vadd.f32 0.0, %v8810
  %v8812 = vpop.f32.mrb[0].mxu0
  %v8813 = vadd.f32 0.0, %v8812
  %8814 = vmatprep.mubr.f32.mxu0 0.0
  %8815 = vmatmul.mubr.f32.gmra.mrb[0].mxu0 %v3433
  %v8816 = vpop.f32.mrb[0].mxu0
  %v8817 = vadd.f32 0.0, %v8816
  %v8818 = vpop.f32.mrb[0].mxu0
  %v8819 = vadd.f32 0.0, %v8818
  %8820 = vmatprep.mubr.f32.mxu0 0.0
  %8821 = vmatmul.mubr.f32.gmra.mrb[0].mxu0 %v3436
  %v8822 = vpop.f32.mrb[0].mxu0
  %v8823 = vadd.f32 0.0, %v8822
  %v8824 = vpop.f32.mrb[0].mxu0
  %v8825 = vadd.f32 0.0, %v8824
  %8826 = vmatprep.mubr.f32.mxu0 0.0
  %8827 = vmatmul.mubr.f32.gmra.mrb[0].mxu0 %v3439
  %v8828 = vpop.f32.mrb[0].mxu0
  %v8829 = vadd.f32 0.0, %v8828
  %v8830 = vpop.f32.mrb[0].mxu0
  %v8831 = vadd.f32 0.0, %v8830
  %8832 = vmatprep.mubr.f32.mxu0 0.0
  %8833 = vmatmul.mubr.f32.gmra.mrb[0].mxu0 %v3442
  %v8834 = vpop.f32.mrb[0].mxu0
  %v8835 = vadd.f32 0.0, %v8834
  %v8836 = vpop.f32.mrb[0].mxu0
  %v8837 = vadd.f32 0.0, %v8836
  %8838 = vmatprep.mubr.f32.mxu0 0.0
  %8839 = vmatmul.mubr.f32.gmra.mrb[0].mxu0 %v3445
  %v8840 = vpop.f32.mrb[0].mxu0
  %v8841 = vadd.f32 0.0, %v8840
  %v8842 = vpop.f32.mrb[0].mxu0
  %v8843 = vadd.f32 0.0, %v8842
  %8844 = vmatprep.mubr.f32.mxu0 0.0
  %8845 = vmatmul.mubr.f32.gmra.mrb[0].mxu0 %v3448
  %v8846 = vpop.f32.mrb[0].mxu0
  %v8847 = vadd.f32 0.0, %v8846
  %v8848 = vpop.f32.mrb[0].mxu0
  %v8849 = vadd.f32 0.0, %v8848
  %8850 = vmatprep.mubr.f32.mxu0 0.0
  %8851 = vmatmul.mubr.f32.gmra.mrb[0].mxu0 %v3451
  %v8852 = vpop.f32.mrb[0].mxu0
  %v8853 = vadd.f32 0.0, %v8852
  %v8854 = vpop.f32.mrb[0].mxu0
  %v8855 = vadd.f32 0.0, %v8854
  %8856 = vmatprep.mubr.f32.mxu0 0.0
  %8857 = vmatmul.mubr.f32.gmra.mrb[0].mxu0 %v3454
  %v8858 = vpop.f32.mrb[0].mxu0
  %v8859 = vadd.f32 0.0, %v8858
  %v8860 = vpop.f32.mrb[0].mxu0
  %v8861 = vadd.f32 0.0, %v8860
  %8862 = vmatprep.mubr.f32.mxu0 0.0
  %8863 = vmatmul.mubr.f32.gmra.mrb[0].mxu0 %v3457
  %v8864 = vpop.f32.mrb[0].mxu0
  %v8865 = vadd.f32 0.0, %v8864
  %v8866 = vpop.f32.mrb[0].mxu0
  %v8867 = vadd.f32 0.0, %v8866
  %8868 = vmatprep.mubr.f32.mxu0 0.0
  %8869 = vmatmul.mubr.f32.gmra.mrb[0].mxu0 %v3460
  %v8870 = vpop.f32.mrb[0].mxu0
  %v8871 = vadd.f32 0.0, %v8870
  %v8872 = vpop.f32.mrb[0].mxu0
  %v8873 = vadd.f32 0.0, %v8872
  %8874 = vmatprep.mubr.f32.mxu0 0.0
  %8875 = vmatmul.mubr.f32.gmra.mrb[0].mxu0 %v3463
  %v8876 = vpop.f32.mrb[0].mxu0
  %v8877 = vadd.f32 0.0, %v8876
  %v8878 = vpop.f32.mrb[0].mxu0
  %v8879 = vadd.f32 0.0, %v8878
  %8880 = vmatprep.mubr.f32.mxu0 0.0
  %8881 = vmatmul.mubr.f32.gmra.mrb[0].mxu0 %v3466
  %v8882 = vpop.f32.mrb[0].mxu0
  %v8883 = vadd.f32 0.0, %v8882
  %v8884 = vpop.f32.mrb[0].mxu0
  %v8885 = vadd.f32 0.0, %v8884
  %8886 = vmatprep.mubr.f32.mxu0 0.0
  %8887 = vmatmul.mubr.f32.gmra.mrb[0].mxu0 %v3469
  %v8888 = vpop.f32.mrb[0].mxu0
  %v8889 = vadd.f32 0.0, %v8888
  %v8890 = vpop.f32.mrb[0].mxu0
  %v8891 = vadd.f32 0.0, %v8890
  %8892 = vdwg.mxu0
  %v8893 = vadd.f32 %v8507, %v8638
  %v8894 = vadd.f32 %v8508, %v8640
  %v8895 = vadd.f32 %v8509, %v8799
  %v8896 = vadd.f32 %v8510, %v8801
  %v8897 = vadd.f32 %v8511, %v8644
  %v8898 = vadd.f32 %v8512, %v8646
  %v8899 = vadd.f32 %v8513, %v8805
  %v8900 = vadd.f32 %v8514, %v8807
  %v8901 = vadd.f32 %v8515, %v8650
  %v8902 = vadd.f32 %v8516, %v8652
  %v8903 = vadd.f32 %v8517, %v8811
  %v8904 = vadd.f32 %v8518, %v8813
  %v8905 = vadd.f32 %v8519, %v8656
  %v8906 = vadd.f32 %v8520, %v8658
  %v8907 = vadd.f32 %v8521, %v8817
  %v8908 = vadd.f32 %v8522, %v8819
  %v8909 = vadd.f32 %v8523, %v8662
  %v8910 = vadd.f32 %v8524, %v8664
  %v8911 = vadd.f32 %v8525, %v8823
  %v8912 = vadd.f32 %v8526, %v8825
  %v8913 = vadd.f32 %v8527, %v8668
  %v8914 = vadd.f32 %v8528, %v8670
  %v8915 = vadd.f32 %v8529, %v8829
  %v8916 = vadd.f32 %v8530, %v8831
  %v8917 = vadd.f32 %v8531, %v8674
  %v8918 = vadd.f32 %v8532, %v8676
  %v8919 = vadd.f32 %v8533, %v8835
  %v8920 = vadd.f32 %v8534, %v8837
  %v8921 = vadd.f32 %v8535, %v8680
  %v8922 = vadd.f32 %v8536, %v8682
  %v8923 = vadd.f32 %v8537, %v8841
  %v8924 = vadd.f32 %v8538, %v8843
  %v8925 = vadd.f32 %v8539, %v8686
  %v8926 = vadd.f32 %v8540, %v8688
  %v8927 = vadd.f32 %v8541, %v8847
  %v8928 = vadd.f32 %v8542, %v8849
  %v8929 = vadd.f32 %v8543, %v8692
  %v8930 = vadd.f32 %v8544, %v8694
  %v8931 = vadd.f32 %v8545, %v8853
  %v8932 = vadd.f32 %v8546, %v8855
  %v8933 = vadd.f32 %v8547, %v8698
  %v8934 = vadd.f32 %v8548, %v8700
  %v8935 = vadd.f32 %v8549, %v8859
  %v8936 = vadd.f32 %v8550, %v8861
  %v8937 = vadd.f32 %v8551, %v8704
  %v8938 = vadd.f32 %v8552, %v8706
  %v8939 = vadd.f32 %v8553, %v8865
  %v8940 = vadd.f32 %v8554, %v8867
  %v8941 = vadd.f32 %v8555, %v8710
  %v8942 = vadd.f32 %v8556, %v8712
  %v8943 = vadd.f32 %v8557, %v8871
  %v8944 = vadd.f32 %v8558, %v8873
  %v8945 = vadd.f32 %v8559, %v8716
  %v8946 = vadd.f32 %v8560, %v8718
  %v8947 = vadd.f32 %v8561, %v8877
  %v8948 = vadd.f32 %v8562, %v8879
  %v8949 = vadd.f32 %v8563, %v8722
  %v8950 = vadd.f32 %v8564, %v8724
  %v8951 = vadd.f32 %v8565, %v8883
  %v8952 = vadd.f32 %v8566, %v8885
  %v8953 = vadd.f32 %v8567, %v8728
  %v8954 = vadd.f32 %v8568, %v8730
  %v8955 = vadd.f32 %v8569, %v8889
  %v8956 = vadd.f32 %v8570, %v8891
  %v8957 = vxor.u32 %v8893, 2147483648
  %v8958 = vxor.u32 %v8894, 2147483648
  %v8959 = vxor.u32 %v8895, 2147483648
  %v8960 = vxor.u32 %v8896, 2147483648
  %v8961 = vxor.u32 %v8897, 2147483648
  %v8962 = vxor.u32 %v8898, 2147483648
  %v8963 = vxor.u32 %v8899, 2147483648
  %v8964 = vxor.u32 %v8900, 2147483648
  %v8965 = vxor.u32 %v8901, 2147483648
  %v8966 = vxor.u32 %v8902, 2147483648
  %v8967 = vxor.u32 %v8903, 2147483648
  %v8968 = vxor.u32 %v8904, 2147483648
  %v8969 = vxor.u32 %v8905, 2147483648
  %v8970 = vxor.u32 %v8906, 2147483648
  %v8971 = vxor.u32 %v8907, 2147483648
  %v8972 = vxor.u32 %v8908, 2147483648
  %v8973 = vxor.u32 %v8909, 2147483648
  %v8974 = vxor.u32 %v8910, 2147483648
  %v8975 = vxor.u32 %v8911, 2147483648
  %v8976 = vxor.u32 %v8912, 2147483648
  %v8977 = vxor.u32 %v8913, 2147483648
  %v8978 = vxor.u32 %v8914, 2147483648
  %v8979 = vxor.u32 %v8915, 2147483648
  %v8980 = vxor.u32 %v8916, 2147483648
  %v8981 = vxor.u32 %v8917, 2147483648
  %v8982 = vxor.u32 %v8918, 2147483648
  %v8983 = vxor.u32 %v8919, 2147483648
  %v8984 = vxor.u32 %v8920, 2147483648
  %v8985 = vxor.u32 %v8921, 2147483648
  %v8986 = vxor.u32 %v8922, 2147483648
  %v8987 = vxor.u32 %v8923, 2147483648
  %v8988 = vxor.u32 %v8924, 2147483648
  %v8989 = vxor.u32 %v8925, 2147483648
  %v8990 = vxor.u32 %v8926, 2147483648
  %v8991 = vxor.u32 %v8927, 2147483648
  %v8992 = vxor.u32 %v8928, 2147483648
  %v8993 = vxor.u32 %v8929, 2147483648
  %v8994 = vxor.u32 %v8930, 2147483648
  %v8995 = vxor.u32 %v8931, 2147483648
  %v8996 = vxor.u32 %v8932, 2147483648
  %v8997 = vxor.u32 %v8933, 2147483648
  %v8998 = vxor.u32 %v8934, 2147483648
  %v8999 = vxor.u32 %v8935, 2147483648
  %v9000 = vxor.u32 %v8936, 2147483648
  %v9001 = vxor.u32 %v8937, 2147483648
  %v9002 = vxor.u32 %v8938, 2147483648
  %v9003 = vxor.u32 %v8939, 2147483648
  %v9004 = vxor.u32 %v8940, 2147483648
  %v9005 = vmul.f32 %v8957, 1.442695
  %v9006 = vpow.pop %v9005
  %v9007 = vmul.f32 %v8958, 1.442695
  %v9008 = vpow.pop %v9007
  %v9009 = vmul.f32 %v8959, 1.442695
  %v9010 = vpow.pop %v9009
  %v9011 = vmul.f32 %v8960, 1.442695
  %v9012 = vpow.pop %v9011
  %v9013 = vmul.f32 %v8961, 1.442695
  %v9014 = vpow.pop %v9013
  %v9015 = vmul.f32 %v8962, 1.442695
  %v9016 = vpow.pop %v9015
  %v9017 = vmul.f32 %v8963, 1.442695
  %v9018 = vpow.pop %v9017
  %v9019 = vmul.f32 %v8964, 1.442695
  %v9020 = vpow.pop %v9019
  %v9021 = vmul.f32 %v8965, 1.442695
  %v9022 = vpow.pop %v9021
  %v9023 = vmul.f32 %v8966, 1.442695
  %v9024 = vpow.pop %v9023
  %v9025 = vmul.f32 %v8967, 1.442695
  %v9026 = vpow.pop %v9025
  %v9027 = vmul.f32 %v8968, 1.442695
  %v9028 = vpow.pop %v9027
  %v9029 = vmul.f32 %v8969, 1.442695
  %v9030 = vpow.pop %v9029
  %v9031 = vmul.f32 %v8970, 1.442695
  %v9032 = vpow.pop %v9031
  %v9033 = vmul.f32 %v8971, 1.442695
  %v9034 = vpow.pop %v9033
  %v9035 = vmul.f32 %v8972, 1.442695
  %v9036 = vpow.pop %v9035
  %v9037 = vmul.f32 %v8973, 1.442695
  %v9038 = vpow.pop %v9037
  %v9039 = vmul.f32 %v8974, 1.442695
  %v9040 = vpow.pop %v9039
  %v9041 = vmul.f32 %v8975, 1.442695
  %v9042 = vpow.pop %v9041
  %v9043 = vmul.f32 %v8976, 1.442695
  %v9044 = vpow.pop %v9043
  %v9045 = vmul.f32 %v8977, 1.442695
  %v9046 = vpow.pop %v9045
  %v9047 = vmul.f32 %v8978, 1.442695
  %v9048 = vpow.pop %v9047
  %v9049 = vmul.f32 %v8979, 1.442695
  %v9050 = vpow.pop %v9049
  %v9051 = vmul.f32 %v8980, 1.442695
  %v9052 = vpow.pop %v9051
  %v9053 = vmul.f32 %v8981, 1.442695
  %v9054 = vpow.pop %v9053
  %v9055 = vmul.f32 %v8982, 1.442695
  %v9056 = vpow.pop %v9055
  %v9057 = vmul.f32 %v8983, 1.442695
  %v9058 = vpow.pop %v9057
  %v9059 = vmul.f32 %v8984, 1.442695
  %v9060 = vpow.pop %v9059
  %v9061 = vmul.f32 %v8985, 1.442695
  %v9062 = vpow.pop %v9061
  %v9063 = vmul.f32 %v8986, 1.442695
  %v9064 = vpow.pop %v9063
  %v9065 = vmul.f32 %v8987, 1.442695
  %v9066 = vpow.pop %v9065
  %v9067 = vmul.f32 %v8988, 1.442695
  %v9068 = vpow.pop %v9067
  %v9069 = vmul.f32 %v8989, 1.442695
  %v9070 = vpow.pop %v9069
  %v9071 = vmul.f32 %v8990, 1.442695
  %v9072 = vpow.pop %v9071
  %v9073 = vmul.f32 %v8991, 1.442695
  %v9074 = vpow.pop %v9073
  %v9075 = vmul.f32 %v8992, 1.442695
  %v9076 = vpow.pop %v9075
  %v9077 = vmul.f32 %v8993, 1.442695
  %v9078 = vpow.pop %v9077
  %v9079 = vmul.f32 %v8994, 1.442695
  %v9080 = vpow.pop %v9079
  %v9081 = vmul.f32 %v8995, 1.442695
  %v9082 = vpow.pop %v9081
  %v9083 = vmul.f32 %v8996, 1.442695
  %v9084 = vpow.pop %v9083
  %v9085 = vmul.f32 %v8997, 1.442695
  %v9086 = vpow.pop %v9085
  %v9087 = vmul.f32 %v8998, 1.442695
  %v9088 = vpow.pop %v9087
  %v9089 = vmul.f32 %v8999, 1.442695
  %v9090 = vpow.pop %v9089
  %v9091 = vmul.f32 %v9000, 1.442695
  %v9092 = vpow.pop %v9091
  %v9093 = vmul.f32 %v9001, 1.442695
  %v9094 = vpow.pop %v9093
  %v9095 = vmul.f32 %v9002, 1.442695
  %v9096 = vpow.pop %v9095
  %v9097 = vmul.f32 %v9003, 1.442695
  %v9098 = vpow.pop %v9097
  %v9099 = vmul.f32 %v9004, 1.442695
  %v9100 = vpow.pop %v9099
  %v9101 = vadd.f32 %v9006, 1.0
  %v9102 = vadd.f32 %v9008, 1.0
  %v9103 = vadd.f32 %v9010, 1.0
  %v9104 = vadd.f32 %v9012, 1.0
  %v9105 = vadd.f32 %v9014, 1.0
  %v9106 = vadd.f32 %v9016, 1.0
  %v9107 = vadd.f32 %v9018, 1.0
  %v9108 = vadd.f32 %v9020, 1.0
  %v9109 = vadd.f32 %v9022, 1.0
  %v9110 = vadd.f32 %v9024, 1.0
  %v9111 = vadd.f32 %v9026, 1.0
  %v9112 = vadd.f32 %v9028, 1.0
  %v9113 = vadd.f32 %v9030, 1.0
  %v9114 = vadd.f32 %v9032, 1.0
  %v9115 = vadd.f32 %v9034, 1.0
  %v9116 = vadd.f32 %v9036, 1.0
  %v9117 = vadd.f32 %v9038, 1.0
  %v9118 = vadd.f32 %v9040, 1.0
  %v9119 = vadd.f32 %v9042, 1.0
  %v9120 = vadd.f32 %v9044, 1.0
  %v9121 = vadd.f32 %v9046, 1.0
  %v9122 = vadd.f32 %v9048, 1.0
  %v9123 = vadd.f32 %v9050, 1.0
  %v9124 = vadd.f32 %v9052, 1.0
  %v9125 = vadd.f32 %v9054, 1.0
  %v9126 = vadd.f32 %v9056, 1.0
  %v9127 = vadd.f32 %v9058, 1.0
  %v9128 = vadd.f32 %v9060, 1.0
  %v9129 = vadd.f32 %v9062, 1.0
  %v9130 = vadd.f32 %v9064, 1.0
  %v9131 = vadd.f32 %v9066, 1.0
  %v9132 = vadd.f32 %v9068, 1.0
  %v9133 = vadd.f32 %v9070, 1.0
  %v9134 = vadd.f32 %v9072, 1.0
  %v9135 = vadd.f32 %v9074, 1.0
  %v9136 = vadd.f32 %v9076, 1.0
  %v9137 = vadd.f32 %v9078, 1.0
  %v9138 = vadd.f32 %v9080, 1.0
  %v9139 = vadd.f32 %v9082, 1.0
  %v9140 = vadd.f32 %v9084, 1.0
  %v9141 = vadd.f32 %v9086, 1.0
  %v9142 = vadd.f32 %v9088, 1.0
  %v9143 = vadd.f32 %v9090, 1.0
  %v9144 = vadd.f32 %v9092, 1.0
  %v9145 = vadd.f32 %v9094, 1.0
  %v9146 = vadd.f32 %v9096, 1.0
  %v9147 = vadd.f32 %v9098, 1.0
  %v9148 = vadd.f32 %v9100, 1.0
  %v9149 = vrcp.pop %v9101
  %v9150 = vmul.f32 1.0, %v9149
  %v9151 = vrcp.pop %v9102
  %v9152 = vmul.f32 1.0, %v9151
  %v9153 = vrcp.pop %v9103
  %v9154 = vmul.f32 1.0, %v9153
  %v9155 = vrcp.pop %v9104
  %v9156 = vmul.f32 1.0, %v9155
  %v9157 = vrcp.pop %v9105
  %v9158 = vmul.f32 1.0, %v9157
  %v9159 = vrcp.pop %v9106
  %v9160 = vmul.f32 1.0, %v9159
  %v9161 = vrcp.pop %v9107
  %v9162 = vmul.f32 1.0, %v9161
  %v9163 = vrcp.pop %v9108
  %v9164 = vmul.f32 1.0, %v9163
  %v9165 = vrcp.pop %v9109
  %v9166 = vmul.f32 1.0, %v9165
  %v9167 = vrcp.pop %v9110
  %v9168 = vmul.f32 1.0, %v9167
  %v9169 = vrcp.pop %v9111
  %v9170 = vmul.f32 1.0, %v9169
  %v9171 = vrcp.pop %v9112
  %v9172 = vmul.f32 1.0, %v9171
  %v9173 = vrcp.pop %v9113
  %v9174 = vmul.f32 1.0, %v9173
  %v9175 = vrcp.pop %v9114
  %v9176 = vmul.f32 1.0, %v9175
  %v9177 = vrcp.pop %v9115
  %v9178 = vmul.f32 1.0, %v9177
  %v9179 = vrcp.pop %v9116
  %v9180 = vmul.f32 1.0, %v9179
  %v9181 = vrcp.pop %v9117
  %v9182 = vmul.f32 1.0, %v9181
  %v9183 = vrcp.pop %v9118
  %v9184 = vmul.f32 1.0, %v9183
  %v9185 = vrcp.pop %v9119
  %v9186 = vmul.f32 1.0, %v9185
  %v9187 = vrcp.pop %v9120
  %v9188 = vmul.f32 1.0, %v9187
  %v9189 = vrcp.pop %v9121
  %v9190 = vmul.f32 1.0, %v9189
  %v9191 = vrcp.pop %v9122
  %v9192 = vmul.f32 1.0, %v9191
  %v9193 = vrcp.pop %v9123
  %v9194 = vmul.f32 1.0, %v9193
  %v9195 = vrcp.pop %v9124
  %v9196 = vmul.f32 1.0, %v9195
  %v9197 = vrcp.pop %v9125
  %v9198 = vmul.f32 1.0, %v9197
  %v9199 = vrcp.pop %v9126
  %v9200 = vmul.f32 1.0, %v9199
  %v9201 = vrcp.pop %v9127
  %v9202 = vmul.f32 1.0, %v9201
  %v9203 = vrcp.pop %v9128
  %v9204 = vmul.f32 1.0, %v9203
  %v9205 = vrcp.pop %v9129
  %v9206 = vmul.f32 1.0, %v9205
  %v9207 = vrcp.pop %v9130
  %v9208 = vmul.f32 1.0, %v9207
  %v9209 = vrcp.pop %v9131
  %v9210 = vmul.f32 1.0, %v9209
  %v9211 = vrcp.pop %v9132
  %v9212 = vmul.f32 1.0, %v9211
  %v9213 = vrcp.pop %v9133
  %v9214 = vmul.f32 1.0, %v9213
  %v9215 = vrcp.pop %v9134
  %v9216 = vmul.f32 1.0, %v9215
  %v9217 = vrcp.pop %v9135
  %v9218 = vmul.f32 1.0, %v9217
  %v9219 = vrcp.pop %v9136
  %v9220 = vmul.f32 1.0, %v9219
  %v9221 = vrcp.pop %v9137
  %v9222 = vmul.f32 1.0, %v9221
  %v9223 = vrcp.pop %v9138
  %v9224 = vmul.f32 1.0, %v9223
  %v9225 = vrcp.pop %v9139
  %v9226 = vmul.f32 1.0, %v9225
  %v9227 = vrcp.pop %v9140
  %v9228 = vmul.f32 1.0, %v9227
  %v9229 = vrcp.pop %v9141
  %v9230 = vmul.f32 1.0, %v9229
  %v9231 = vrcp.pop %v9142
  %v9232 = vmul.f32 1.0, %v9231
  %v9233 = vrcp.pop %v9143
  %v9234 = vmul.f32 1.0, %v9233
  %v9235 = vrcp.pop %v9144
  %v9236 = vmul.f32 1.0, %v9235
  %v9237 = vrcp.pop %v9145
  %v9238 = vmul.f32 1.0, %v9237
  %v9239 = vrcp.pop %v9146
  %v9240 = vmul.f32 1.0, %v9239
  %v9241 = vrcp.pop %v9147
  %v9242 = vmul.f32 1.0, %v9241
  %v9243 = vrcp.pop %v9148
  %v9244 = vmul.f32 1.0, %v9243
  %v9245 = vtanh.pop %v8941
  %v9246 = vtanh.pop %v8942
  %v9247 = vtanh.pop %v8943
  %v9248 = vtanh.pop %v8944
  %v9249 = vtanh.pop %v8945
  %v9250 = vtanh.pop %v8946
  %v9251 = vtanh.pop %v8947
  %v9252 = vtanh.pop %v8948
  %v9253 = vtanh.pop %v8949
  %v9254 = vtanh.pop %v8950
  %v9255 = vtanh.pop %v8951
  %v9256 = vtanh.pop %v8952
  %v9257 = vtanh.pop %v8953
  %v9258 = vtanh.pop %v8954
  %v9259 = vtanh.pop %v8955
  %v9260 = vtanh.pop %v8956
  %v9261 = vmul.f32 %v9182, %v8443
  %v9262 = vmul.f32 %v9184, %v8444
  %v9263 = vmul.f32 %v9186, %v8445
  %v9264 = vmul.f32 %v9188, %v8446
  %v9265 = vmul.f32 %v9190, %v8447
  %v9266 = vmul.f32 %v9192, %v8448
  %v9267 = vmul.f32 %v9194, %v8449
  %v9268 = vmul.f32 %v9196, %v8450
  %v9269 = vmul.f32 %v9198, %v8451
  %v9270 = vmul.f32 %v9200, %v8452
  %v9271 = vmul.f32 %v9202, %v8453
  %v9272 = vmul.f32 %v9204, %v8454
  %v9273 = vmul.f32 %v9206, %v8455
  %v9274 = vmul.f32 %v9208, %v8456
  %v9275 = vmul.f32 %v9210, %v8457
  %v9276 = vmul.f32 %v9212, %v8458
  %v9277 = vmul.f32 %v9150, %v9245
  %v9278 = vmul.f32 %v9152, %v9246
  %v9279 = vmul.f32 %v9154, %v9247
  %v9280 = vmul.f32 %v9156, %v9248
  %v9281 = vmul.f32 %v9158, %v9249
  %v9282 = vmul.f32 %v9160, %v9250
  %v9283 = vmul.f32 %v9162, %v9251
  %v9284 = vmul.f32 %v9164, %v9252
  %v9285 = vmul.f32 %v9166, %v9253
  %v9286 = vmul.f32 %v9168, %v9254
  %v9287 = vmul.f32 %v9170, %v9255
  %v9288 = vmul.f32 %v9172, %v9256
  %v9289 = vmul.f32 %v9174, %v9257
  %v9290 = vmul.f32 %v9176, %v9258
  %v9291 = vmul.f32 %v9178, %v9259
  %v9292 = vmul.f32 %v9180, %v9260
  %v9293 = vadd.f32 %v9261, %v9277
  %v9294 = vadd.f32 %v9262, %v9278
  %v9295 = vadd.f32 %v9263, %v9279
  %v9296 = vadd.f32 %v9264, %v9280
  %v9297 = vadd.f32 %v9265, %v9281
  %v9298 = vadd.f32 %v9266, %v9282
  %v9299 = vadd.f32 %v9267, %v9283
  %v9300 = vadd.f32 %v9268, %v9284
  %v9301 = vadd.f32 %v9269, %v9285
  %v9302 = vadd.f32 %v9270, %v9286
  %v9303 = vadd.f32 %v9271, %v9287
  %v9304 = vadd.f32 %v9272, %v9288
  %v9305 = vadd.f32 %v9273, %v9289
  %v9306 = vadd.f32 %v9274, %v9290
  %v9307 = vadd.f32 %v9275, %v9291
  %v9308 = vadd.f32 %v9276, %v9292
  %v9309 = vtanh.pop %v9293
  %v9310 = vtanh.pop %v9294
  %v9311 = vtanh.pop %v9295
  %v9312 = vtanh.pop %v9296
  %v9313 = vtanh.pop %v9297
  %v9314 = vtanh.pop %v9298
  %v9315 = vtanh.pop %v9299
  %v9316 = vtanh.pop %v9300
  %v9317 = vtanh.pop %v9301
  %v9318 = vtanh.pop %v9302
  %v9319 = vtanh.pop %v9303
  %v9320 = vtanh.pop %v9304
  %v9321 = vtanh.pop %v9305
  %v9322 = vtanh.pop %v9306
  %v9323 = vtanh.pop %v9307
  %v9324 = vtanh.pop %v9308
  %v9325 = vmul.f32 %v9214, %v9309
  %v9326 = vmul.f32 %v9216, %v9310
  %v9327 = vmul.f32 %v9218, %v9311
  %v9328 = vmul.f32 %v9220, %v9312
  %v9329 = vmul.f32 %v9222, %v9313
  %v9330 = vmul.f32 %v9224, %v9314
  %v9331 = vmul.f32 %v9226, %v9315
  %v9332 = vmul.f32 %v9228, %v9316
  %v9333 = vmul.f32 %v9230, %v9317
  %v9334 = vmul.f32 %v9232, %v9318
  %v9335 = vmul.f32 %v9234, %v9319
  %v9336 = vmul.f32 %v9236, %v9320
  %v9337 = vmul.f32 %v9238, %v9321
  %v9338 = vmul.f32 %v9240, %v9322
  %v9339 = vmul.f32 %v9242, %v9323
  %v9340 = vmul.f32 %v9244, %v9324
  %9341 = vst [vmem:[#allocation3 + $0x300] sm:$0xff] %v9325
  %9342 = vst [vmem:[#allocation3 + $0x308] sm:$0xff] %v9326
  %9343 = vst [vmem:[#allocation3 + $0x310] sm:$0xff] %v9327
  %9344 = vst [vmem:[#allocation3 + $0x318] sm:$0xff] %v9328
  %9345 = vst [vmem:[#allocation3 + $0x320] sm:$0xff] %v9329
  %9346 = vst [vmem:[#allocation3 + $0x328] sm:$0xff] %v9330
  %9347 = vst [vmem:[#allocation3 + $0x330] sm:$0xff] %v9331
  %9348 = vst [vmem:[#allocation3 + $0x338] sm:$0xff] %v9332
  %9349 = vst [vmem:[#allocation3 + $0x340] sm:$0xff] %v9333
  %9350 = vst [vmem:[#allocation3 + $0x348] sm:$0xff] %v9334
  %9351 = vst [vmem:[#allocation3 + $0x350] sm:$0xff] %v9335
  %9352 = vst [vmem:[#allocation3 + $0x358] sm:$0xff] %v9336
  %9353 = vst [vmem:[#allocation3 + $0x360] sm:$0xff] %v9337
  %9354 = vst [vmem:[#allocation3 + $0x368] sm:$0xff] %v9338
  %9355 = vst [vmem:[#allocation3 + $0x370] sm:$0xff] %v9339
  %9356 = vst [vmem:[#allocation3 + $0x378] sm:$0xff] %v9340
  %v9357 = vld [vmem:[#allocation2 + $0xe0] sm:$0xff]
  %v9358 = vld [vmem:[#allocation2 + $0xe8] sm:$0xff]
  %v9359 = vld [vmem:[#allocation2 + $0xf0] sm:$0xff]
  %v9360 = vld [vmem:[#allocation2 + $0xf8] sm:$0xff]
  %v9361 = vld [vmem:[#allocation2 + $0x1e0] sm:$0xff]
  %v9362 = vld [vmem:[#allocation2 + $0x1e8] sm:$0xff]
  %v9363 = vld [vmem:[#allocation2 + $0x1f0] sm:$0xff]
  %v9364 = vld [vmem:[#allocation2 + $0x1f8] sm:$0xff]
  %v9365 = vld [vmem:[#allocation2 + $0x2e0] sm:$0xff]
  %v9366 = vld [vmem:[#allocation2 + $0x2e8] sm:$0xff]
  %v9367 = vld [vmem:[#allocation2 + $0x2f0] sm:$0xff]
  %v9368 = vld [vmem:[#allocation2 + $0x2f8] sm:$0xff]
  %v9369 = vld [vmem:[#allocation2 + $0x3e0] sm:$0xff]
  %v9370 = vld [vmem:[#allocation2 + $0x3e8] sm:$0xff]
  %v9371 = vld [vmem:[#allocation2 + $0x3f0] sm:$0xff]
  %v9372 = vld [vmem:[#allocation2 + $0x3f8] sm:$0xff]
  %v9373 = vld [vmem:[#allocation2 + $0x4e0] sm:$0xff]
  %v9374 = vld [vmem:[#allocation2 + $0x4e8] sm:$0xff]
  %v9375 = vld [vmem:[#allocation2 + $0x4f0] sm:$0xff]
  %v9376 = vld [vmem:[#allocation2 + $0x4f8] sm:$0xff]
  %v9377 = vld [vmem:[#allocation2 + $0x5e0] sm:$0xff]
  %v9378 = vld [vmem:[#allocation2 + $0x5e8] sm:$0xff]
  %v9379 = vld [vmem:[#allocation2 + $0x5f0] sm:$0xff]
  %v9380 = vld [vmem:[#allocation2 + $0x5f8] sm:$0xff]
  %v9381 = vld [vmem:[#allocation2 + $0x6e0] sm:$0xff]
  %v9382 = vld [vmem:[#allocation2 + $0x6e8] sm:$0xff]
  %v9383 = vld [vmem:[#allocation2 + $0x6f0] sm:$0xff]
  %v9384 = vld [vmem:[#allocation2 + $0x6f8] sm:$0xff]
  %v9385 = vld [vmem:[#allocation2 + $0x7e0] sm:$0xff]
  %v9386 = vld [vmem:[#allocation2 + $0x7e8] sm:$0xff]
  %v9387 = vld [vmem:[#allocation2 + $0x7f0] sm:$0xff]
  %v9388 = vld [vmem:[#allocation2 + $0x7f8] sm:$0xff]
  %v9389 = vld [vmem:[#allocation2 + $0x8e0] sm:$0xff]
  %v9390 = vld [vmem:[#allocation2 + $0x8e8] sm:$0xff]
  %v9391 = vld [vmem:[#allocation2 + $0x8f0] sm:$0xff]
  %v9392 = vld [vmem:[#allocation2 + $0x8f8] sm:$0xff]
  %v9393 = vld [vmem:[#allocation2 + $0x9e0] sm:$0xff]
  %v9394 = vld [vmem:[#allocation2 + $0x9e8] sm:$0xff]
  %v9395 = vld [vmem:[#allocation2 + $0x9f0] sm:$0xff]
  %v9396 = vld [vmem:[#allocation2 + $0x9f8] sm:$0xff]
  %v9397 = vld [vmem:[#allocation2 + $0xae0] sm:$0xff]
  %v9398 = vld [vmem:[#allocation2 + $0xae8] sm:$0xff]
  %v9399 = vld [vmem:[#allocation2 + $0xaf0] sm:$0xff]
  %v9400 = vld [vmem:[#allocation2 + $0xaf8] sm:$0xff]
  %v9401 = vld [vmem:[#allocation2 + $0xbe0] sm:$0xff]
  %v9402 = vld [vmem:[#allocation2 + $0xbe8] sm:$0xff]
  %v9403 = vld [vmem:[#allocation2 + $0xbf0] sm:$0xff]
  %v9404 = vld [vmem:[#allocation2 + $0xbf8] sm:$0xff]
  %v9405 = vld [vmem:[#allocation2 + $0xce0] sm:$0xff]
  %v9406 = vld [vmem:[#allocation2 + $0xce8] sm:$0xff]
  %v9407 = vld [vmem:[#allocation2 + $0xcf0] sm:$0xff]
  %v9408 = vld [vmem:[#allocation2 + $0xcf8] sm:$0xff]
  %v9409 = vld [vmem:[#allocation2 + $0xde0] sm:$0xff]
  %v9410 = vld [vmem:[#allocation2 + $0xde8] sm:$0xff]
  %v9411 = vld [vmem:[#allocation2 + $0xdf0] sm:$0xff]
  %v9412 = vld [vmem:[#allocation2 + $0xdf8] sm:$0xff]
  %v9413 = vld [vmem:[#allocation2 + $0xee0] sm:$0xff]
  %v9414 = vld [vmem:[#allocation2 + $0xee8] sm:$0xff]
  %v9415 = vld [vmem:[#allocation2 + $0xef0] sm:$0xff]
  %v9416 = vld [vmem:[#allocation2 + $0xef8] sm:$0xff]
  %v9417 = vld [vmem:[#allocation2 + $0xfe0] sm:$0xff]
  %v9418 = vld [vmem:[#allocation2 + $0xfe8] sm:$0xff]
  %v9419 = vld [vmem:[#allocation2 + $0xff0] sm:$0xff]
  %v9420 = vld [vmem:[#allocation2 + $0xff8] sm:$0xff]
  %9421 = vmatprep.subr.mxu0 %v9326
  %9422 = vmatpush1.msra.mxu0 %v9325
  %9423 = vmatprep.subr.mxu0 %v9330
  %9424 = vmatpush1.msra.mxu0 %v9329
  %9425 = vmatprep.subr.mxu0 %v9334
  %9426 = vmatpush1.msra.mxu0 %v9333
  %9427 = vmatprep.subr.mxu0 %v9338
  %9428 = vmatpush1.msra.mxu0 %v9337
  %9429 = vmatprep.subr.mxu0 0.0
  %9430 = vmatpush1.msra.mxu0 0.0
  %9431 = vmatprep.subr.mxu0 0.0
  %9432 = vmatpush1.msra.mxu0 0.0
  %9433 = vmatprep.subr.mxu0 0.0
  %9434 = vmatpush1.msra.mxu0 0.0
  %9435 = vmatprep.subr.mxu0 0.0
  %9436 = vmatpush1.msra.mxu0 0.0
  %9437 = vmatprep.subr.mxu0 0.0
  %9438 = vmatpush1.msra.mxu0 0.0
  %9439 = vmatprep.subr.mxu0 0.0
  %9440 = vmatpush1.msra.mxu0 0.0
  %9441 = vmatprep.subr.mxu0 0.0
  %9442 = vmatpush1.msra.mxu0 0.0
  %9443 = vmatprep.subr.mxu0 0.0
  %9444 = vmatpush1.msra.mxu0 0.0
  %9445 = vmatprep.subr.mxu0 0.0
  %9446 = vmatpush1.msra.mxu0 0.0
  %9447 = vmatprep.subr.mxu0 0.0
  %9448 = vmatpush1.msra.mxu0 0.0
  %9449 = vmatprep.subr.mxu0 0.0
  %9450 = vmatpush1.msra.mxu0 0.0
  %9451 = vmatprep.subr.mxu0 0.0
  %9452 = vmatpush1.msra.mxu0 0.0
  %9453 = vmatprep.subr.mxu0 0.0
  %9454 = vmatpush1.msra.mxu0 0.0
  %9455 = vmatprep.subr.mxu0 0.0
  %9456 = vmatpush1.msra.mxu0 0.0
  %9457 = vmatprep.subr.mxu0 0.0
  %9458 = vmatpush1.msra.mxu0 0.0
  %9459 = vmatprep.subr.mxu0 0.0
  %9460 = vmatpush1.msra.mxu0 0.0
  %9461 = vmatprep.subr.mxu0 0.0
  %9462 = vmatpush1.msra.mxu0 0.0
  %9463 = vmatprep.subr.mxu0 0.0
  %9464 = vmatpush1.msra.mxu0 0.0
  %9465 = vmatprep.subr.mxu0 0.0
  %9466 = vmatpush1.msra.mxu0 0.0
  %9467 = vmatprep.subr.mxu0 0.0
  %9468 = vmatpush1.msra.mxu0 0.0
  %9469 = vmatprep.subr.mxu0 0.0
  %9470 = vmatpush1.msra.mxu0 0.0
  %9471 = vmatprep.subr.mxu0 0.0
  %9472 = vmatpush1.msra.mxu0 0.0
  %9473 = vmatprep.subr.mxu0 0.0
  %9474 = vmatpush1.msra.mxu0 0.0
  %9475 = vmatprep.subr.mxu0 0.0
  %9476 = vmatpush1.msra.mxu0 0.0
  %9477 = vmatprep.subr.mxu0 0.0
  %9478 = vmatpush1.msra.mxu0 0.0
  %9479 = vmatprep.subr.mxu0 0.0
  %9480 = vmatpush1.msra.mxu0 0.0
  %9481 = vmatprep.subr.mxu0 0.0
  %9482 = vmatpush1.msra.mxu0 0.0
  %9483 = vmatprep.subr.mxu0 0.0
  %9484 = vmatpush1.msra.mxu0 0.0
  %9485 = vmatprep.mubr.f32.mxu0 0.0
  %9486 = vmatmul.mubr.f32.gmra.mrb[0].mxu0 %v3424
  %v9487 = vpop.f32.mrb[0].mxu0
  %v9488 = vadd.f32 0.0, %v9487
  %v9489 = vpop.f32.mrb[0].mxu0
  %v9490 = vadd.f32 0.0, %v9489
  %9491 = vmatprep.mubr.f32.mxu0 0.0
  %9492 = vmatmul.mubr.f32.gmra.mrb[0].mxu0 %v3427
  %v9493 = vpop.f32.mrb[0].mxu0
  %v9494 = vadd.f32 0.0, %v9493
  %v9495 = vpop.f32.mrb[0].mxu0
  %v9496 = vadd.f32 0.0, %v9495
  %9497 = vmatprep.mubr.f32.mxu0 0.0
  %9498 = vmatmul.mubr.f32.gmra.mrb[0].mxu0 %v3430
  %v9499 = vpop.f32.mrb[0].mxu0
  %v9500 = vadd.f32 0.0, %v9499
  %v9501 = vpop.f32.mrb[0].mxu0
  %v9502 = vadd.f32 0.0, %v9501
  %9503 = vmatprep.mubr.f32.mxu0 0.0
  %9504 = vmatmul.mubr.f32.gmra.mrb[0].mxu0 %v3433
  %v9505 = vpop.f32.mrb[0].mxu0
  %v9506 = vadd.f32 0.0, %v9505
  %v9507 = vpop.f32.mrb[0].mxu0
  %v9508 = vadd.f32 0.0, %v9507
  %9509 = vmatprep.mubr.f32.mxu0 0.0
  %9510 = vmatmul.mubr.f32.gmra.mrb[0].mxu0 %v3436
  %v9511 = vpop.f32.mrb[0].mxu0
  %v9512 = vadd.f32 0.0, %v9511
  %v9513 = vpop.f32.mrb[0].mxu0
  %v9514 = vadd.f32 0.0, %v9513
  %9515 = vmatprep.mubr.f32.mxu0 0.0
  %9516 = vmatmul.mubr.f32.gmra.mrb[0].mxu0 %v3439
  %v9517 = vpop.f32.mrb[0].mxu0
  %v9518 = vadd.f32 0.0, %v9517
  %v9519 = vpop.f32.mrb[0].mxu0
  %v9520 = vadd.f32 0.0, %v9519
  %9521 = vmatprep.mubr.f32.mxu0 0.0
  %9522 = vmatmul.mubr.f32.gmra.mrb[0].mxu0 %v3442
  %v9523 = vpop.f32.mrb[0].mxu0
  %v9524 = vadd.f32 0.0, %v9523
  %v9525 = vpop.f32.mrb[0].mxu0
  %v9526 = vadd.f32 0.0, %v9525
  %9527 = vmatprep.mubr.f32.mxu0 0.0
  %9528 = vmatmul.mubr.f32.gmra.mrb[0].mxu0 %v3445
  %v9529 = vpop.f32.mrb[0].mxu0
  %v9530 = vadd.f32 0.0, %v9529
  %v9531 = vpop.f32.mrb[0].mxu0
  %v9532 = vadd.f32 0.0, %v9531
  %9533 = vmatprep.mubr.f32.mxu0 0.0
  %9534 = vmatmul.mubr.f32.gmra.mrb[0].mxu0 %v3448
  %v9535 = vpop.f32.mrb[0].mxu0
  %v9536 = vadd.f32 0.0, %v9535
  %v9537 = vpop.f32.mrb[0].mxu0
  %v9538 = vadd.f32 0.0, %v9537
  %9539 = vmatprep.mubr.f32.mxu0 0.0
  %9540 = vmatmul.mubr.f32.gmra.mrb[0].mxu0 %v3451
  %v9541 = vpop.f32.mrb[0].mxu0
  %v9542 = vadd.f32 0.0, %v9541
  %v9543 = vpop.f32.mrb[0].mxu0
  %v9544 = vadd.f32 0.0, %v9543
  %9545 = vmatprep.mubr.f32.mxu0 0.0
  %9546 = vmatmul.mubr.f32.gmra.mrb[0].mxu0 %v3454
  %v9547 = vpop.f32.mrb[0].mxu0
  %v9548 = vadd.f32 0.0, %v9547
  %v9549 = vpop.f32.mrb[0].mxu0
  %v9550 = vadd.f32 0.0, %v9549
  %9551 = vmatprep.mubr.f32.mxu0 0.0
  %9552 = vmatmul.mubr.f32.gmra.mrb[0].mxu0 %v3457
  %v9553 = vpop.f32.mrb[0].mxu0
  %v9554 = vadd.f32 0.0, %v9553
  %v9555 = vpop.f32.mrb[0].mxu0
  %v9556 = vadd.f32 0.0, %v9555
  %9557 = vmatprep.mubr.f32.mxu0 0.0
  %9558 = vmatmul.mubr.f32.gmra.mrb[0].mxu0 %v3460
  %v9559 = vpop.f32.mrb[0].mxu0
  %v9560 = vadd.f32 0.0, %v9559
  %v9561 = vpop.f32.mrb[0].mxu0
  %v9562 = vadd.f32 0.0, %v9561
  %9563 = vmatprep.mubr.f32.mxu0 0.0
  %9564 = vmatmul.mubr.f32.gmra.mrb[0].mxu0 %v3463
  %v9565 = vpop.f32.mrb[0].mxu0
  %v9566 = vadd.f32 0.0, %v9565
  %v9567 = vpop.f32.mrb[0].mxu0
  %v9568 = vadd.f32 0.0, %v9567
  %9569 = vmatprep.mubr.f32.mxu0 0.0
  %9570 = vmatmul.mubr.f32.gmra.mrb[0].mxu0 %v3466
  %v9571 = vpop.f32.mrb[0].mxu0
  %v9572 = vadd.f32 0.0, %v9571
  %v9573 = vpop.f32.mrb[0].mxu0
  %v9574 = vadd.f32 0.0, %v9573
  %9575 = vmatprep.mubr.f32.mxu0 0.0
  %9576 = vmatmul.mubr.f32.gmra.mrb[0].mxu0 %v3469
  %v9577 = vpop.f32.mrb[0].mxu0
  %v9578 = vadd.f32 0.0, %v9577
  %v9579 = vpop.f32.mrb[0].mxu0
  %v9580 = vadd.f32 0.0, %v9579
  %9581 = vdwg.mxu0
  %9582 = vmatprep.subr.mxu0 %v9328
  %9583 = vmatpush1.msra.mxu0 %v9327
  %9584 = vmatprep.subr.mxu0 %v9332
  %9585 = vmatpush1.msra.mxu0 %v9331
  %9586 = vmatprep.subr.mxu0 %v9336
  %9587 = vmatpush1.msra.mxu0 %v9335
  %9588 = vmatprep.subr.mxu0 %v9340
  %9589 = vmatpush1.msra.mxu0 %v9339
  %9590 = vmatprep.subr.mxu0 0.0
  %9591 = vmatpush1.msra.mxu0 0.0
  %9592 = vmatprep.subr.mxu0 0.0
  %9593 = vmatpush1.msra.mxu0 0.0
  %9594 = vmatprep.subr.mxu0 0.0
  %9595 = vmatpush1.msra.mxu0 0.0
  %9596 = vmatprep.subr.mxu0 0.0
  %9597 = vmatpush1.msra.mxu0 0.0
  %9598 = vmatprep.subr.mxu0 0.0
  %9599 = vmatpush1.msra.mxu0 0.0
  %9600 = vmatprep.subr.mxu0 0.0
  %9601 = vmatpush1.msra.mxu0 0.0
  %9602 = vmatprep.subr.mxu0 0.0
  %9603 = vmatpush1.msra.mxu0 0.0
  %9604 = vmatprep.subr.mxu0 0.0
  %9605 = vmatpush1.msra.mxu0 0.0
  %9606 = vmatprep.subr.mxu0 0.0
  %9607 = vmatpush1.msra.mxu0 0.0
  %9608 = vmatprep.subr.mxu0 0.0
  %9609 = vmatpush1.msra.mxu0 0.0
  %9610 = vmatprep.subr.mxu0 0.0
  %9611 = vmatpush1.msra.mxu0 0.0
  %9612 = vmatprep.subr.mxu0 0.0
  %9613 = vmatpush1.msra.mxu0 0.0
  %9614 = vmatprep.subr.mxu0 0.0
  %9615 = vmatpush1.msra.mxu0 0.0
  %9616 = vmatprep.subr.mxu0 0.0
  %9617 = vmatpush1.msra.mxu0 0.0
  %9618 = vmatprep.subr.mxu0 0.0
  %9619 = vmatpush1.msra.mxu0 0.0
  %9620 = vmatprep.subr.mxu0 0.0
  %9621 = vmatpush1.msra.mxu0 0.0
  %9622 = vmatprep.subr.mxu0 0.0
  %9623 = vmatpush1.msra.mxu0 0.0
  %9624 = vmatprep.subr.mxu0 0.0
  %9625 = vmatpush1.msra.mxu0 0.0
  %9626 = vmatprep.subr.mxu0 0.0
  %9627 = vmatpush1.msra.mxu0 0.0
  %9628 = vmatprep.subr.mxu0 0.0
  %9629 = vmatpush1.msra.mxu0 0.0
  %9630 = vmatprep.subr.mxu0 0.0
  %9631 = vmatpush1.msra.mxu0 0.0
  %9632 = vmatprep.subr.mxu0 0.0
  %9633 = vmatpush1.msra.mxu0 0.0
  %9634 = vmatprep.subr.mxu0 0.0
  %9635 = vmatpush1.msra.mxu0 0.0
  %9636 = vmatprep.subr.mxu0 0.0
  %9637 = vmatpush1.msra.mxu0 0.0
  %9638 = vmatprep.subr.mxu0 0.0
  %9639 = vmatpush1.msra.mxu0 0.0
  %9640 = vmatprep.subr.mxu0 0.0
  %9641 = vmatpush1.msra.mxu0 0.0
  %9642 = vmatprep.subr.mxu0 0.0
  %9643 = vmatpush1.msra.mxu0 0.0
  %9644 = vmatprep.subr.mxu0 0.0
  %9645 = vmatpush1.msra.mxu0 0.0
  %9646 = vmatprep.mubr.f32.mxu0 0.0
  %9647 = vmatmul.mubr.f32.gmra.mrb[0].mxu0 %v3424
  %v9648 = vpop.f32.mrb[0].mxu0
  %v9649 = vadd.f32 0.0, %v9648
  %v9650 = vpop.f32.mrb[0].mxu0
  %v9651 = vadd.f32 0.0, %v9650
  %9652 = vmatprep.mubr.f32.mxu0 0.0
  %9653 = vmatmul.mubr.f32.gmra.mrb[0].mxu0 %v3427
  %v9654 = vpop.f32.mrb[0].mxu0
  %v9655 = vadd.f32 0.0, %v9654
  %v9656 = vpop.f32.mrb[0].mxu0
  %v9657 = vadd.f32 0.0, %v9656
  %9658 = vmatprep.mubr.f32.mxu0 0.0
  %9659 = vmatmul.mubr.f32.gmra.mrb[0].mxu0 %v3430
  %v9660 = vpop.f32.mrb[0].mxu0
  %v9661 = vadd.f32 0.0, %v9660
  %v9662 = vpop.f32.mrb[0].mxu0
  %v9663 = vadd.f32 0.0, %v9662
  %9664 = vmatprep.mubr.f32.mxu0 0.0
  %9665 = vmatmul.mubr.f32.gmra.mrb[0].mxu0 %v3433
  %v9666 = vpop.f32.mrb[0].mxu0
  %v9667 = vadd.f32 0.0, %v9666
  %v9668 = vpop.f32.mrb[0].mxu0
  %v9669 = vadd.f32 0.0, %v9668
  %9670 = vmatprep.mubr.f32.mxu0 0.0
  %9671 = vmatmul.mubr.f32.gmra.mrb[0].mxu0 %v3436
  %v9672 = vpop.f32.mrb[0].mxu0
  %v9673 = vadd.f32 0.0, %v9672
  %v9674 = vpop.f32.mrb[0].mxu0
  %v9675 = vadd.f32 0.0, %v9674
  %9676 = vmatprep.mubr.f32.mxu0 0.0
  %9677 = vmatmul.mubr.f32.gmra.mrb[0].mxu0 %v3439
  %v9678 = vpop.f32.mrb[0].mxu0
  %v9679 = vadd.f32 0.0, %v9678
  %v9680 = vpop.f32.mrb[0].mxu0
  %v9681 = vadd.f32 0.0, %v9680
  %9682 = vmatprep.mubr.f32.mxu0 0.0
  %9683 = vmatmul.mubr.f32.gmra.mrb[0].mxu0 %v3442
  %v9684 = vpop.f32.mrb[0].mxu0
  %v9685 = vadd.f32 0.0, %v9684
  %v9686 = vpop.f32.mrb[0].mxu0
  %v9687 = vadd.f32 0.0, %v9686
  %9688 = vmatprep.mubr.f32.mxu0 0.0
  %9689 = vmatmul.mubr.f32.gmra.mrb[0].mxu0 %v3445
  %v9690 = vpop.f32.mrb[0].mxu0
  %v9691 = vadd.f32 0.0, %v9690
  %v9692 = vpop.f32.mrb[0].mxu0
  %v9693 = vadd.f32 0.0, %v9692
  %9694 = vmatprep.mubr.f32.mxu0 0.0
  %9695 = vmatmul.mubr.f32.gmra.mrb[0].mxu0 %v3448
  %v9696 = vpop.f32.mrb[0].mxu0
  %v9697 = vadd.f32 0.0, %v9696
  %v9698 = vpop.f32.mrb[0].mxu0
  %v9699 = vadd.f32 0.0, %v9698
  %9700 = vmatprep.mubr.f32.mxu0 0.0
  %9701 = vmatmul.mubr.f32.gmra.mrb[0].mxu0 %v3451
  %v9702 = vpop.f32.mrb[0].mxu0
  %v9703 = vadd.f32 0.0, %v9702
  %v9704 = vpop.f32.mrb[0].mxu0
  %v9705 = vadd.f32 0.0, %v9704
  %9706 = vmatprep.mubr.f32.mxu0 0.0
  %9707 = vmatmul.mubr.f32.gmra.mrb[0].mxu0 %v3454
  %v9708 = vpop.f32.mrb[0].mxu0
  %v9709 = vadd.f32 0.0, %v9708
  %v9710 = vpop.f32.mrb[0].mxu0
  %v9711 = vadd.f32 0.0, %v9710
  %9712 = vmatprep.mubr.f32.mxu0 0.0
  %9713 = vmatmul.mubr.f32.gmra.mrb[0].mxu0 %v3457
  %v9714 = vpop.f32.mrb[0].mxu0
  %v9715 = vadd.f32 0.0, %v9714
  %v9716 = vpop.f32.mrb[0].mxu0
  %v9717 = vadd.f32 0.0, %v9716
  %9718 = vmatprep.mubr.f32.mxu0 0.0
  %9719 = vmatmul.mubr.f32.gmra.mrb[0].mxu0 %v3460
  %v9720 = vpop.f32.mrb[0].mxu0
  %v9721 = vadd.f32 0.0, %v9720
  %v9722 = vpop.f32.mrb[0].mxu0
  %v9723 = vadd.f32 0.0, %v9722
  %9724 = vmatprep.mubr.f32.mxu0 0.0
  %9725 = vmatmul.mubr.f32.gmra.mrb[0].mxu0 %v3463
  %v9726 = vpop.f32.mrb[0].mxu0
  %v9727 = vadd.f32 0.0, %v9726
  %v9728 = vpop.f32.mrb[0].mxu0
  %v9729 = vadd.f32 0.0, %v9728
  %9730 = vmatprep.mubr.f32.mxu0 0.0
  %9731 = vmatmul.mubr.f32.gmra.mrb[0].mxu0 %v3466
  %v9732 = vpop.f32.mrb[0].mxu0
  %v9733 = vadd.f32 0.0, %v9732
  %v9734 = vpop.f32.mrb[0].mxu0
  %v9735 = vadd.f32 0.0, %v9734
  %9736 = vmatprep.mubr.f32.mxu0 0.0
  %9737 = vmatmul.mubr.f32.gmra.mrb[0].mxu0 %v3469
  %v9738 = vpop.f32.mrb[0].mxu0
  %v9739 = vadd.f32 0.0, %v9738
  %v9740 = vpop.f32.mrb[0].mxu0
  %v9741 = vadd.f32 0.0, %v9740
  %9742 = vdwg.mxu0
  %v9743 = vadd.f32 %v9357, %v9488
  %v9744 = vadd.f32 %v9358, %v9490
  %v9745 = vadd.f32 %v9359, %v9649
  %v9746 = vadd.f32 %v9360, %v9651
  %v9747 = vadd.f32 %v9361, %v9494
  %v9748 = vadd.f32 %v9362, %v9496
  %v9749 = vadd.f32 %v9363, %v9655
  %v9750 = vadd.f32 %v9364, %v9657
  %v9751 = vadd.f32 %v9365, %v9500
  %v9752 = vadd.f32 %v9366, %v9502
  %v9753 = vadd.f32 %v9367, %v9661
  %v9754 = vadd.f32 %v9368, %v9663
  %v9755 = vadd.f32 %v9369, %v9506
  %v9756 = vadd.f32 %v9370, %v9508
  %v9757 = vadd.f32 %v9371, %v9667
  %v9758 = vadd.f32 %v9372, %v9669
  %v9759 = vadd.f32 %v9373, %v9512
  %v9760 = vadd.f32 %v9374, %v9514
  %v9761 = vadd.f32 %v9375, %v9673
  %v9762 = vadd.f32 %v9376, %v9675
  %v9763 = vadd.f32 %v9377, %v9518
  %v9764 = vadd.f32 %v9378, %v9520
  %v9765 = vadd.f32 %v9379, %v9679
  %v9766 = vadd.f32 %v9380, %v9681
  %v9767 = vadd.f32 %v9381, %v9524
  %v9768 = vadd.f32 %v9382, %v9526
  %v9769 = vadd.f32 %v9383, %v9685
  %v9770 = vadd.f32 %v9384, %v9687
  %v9771 = vadd.f32 %v9385, %v9530
  %v9772 = vadd.f32 %v9386, %v9532
  %v9773 = vadd.f32 %v9387, %v9691
  %v9774 = vadd.f32 %v9388, %v9693
  %v9775 = vadd.f32 %v9389, %v9536
  %v9776 = vadd.f32 %v9390, %v9538
  %v9777 = vadd.f32 %v9391, %v9697
  %v9778 = vadd.f32 %v9392, %v9699
  %v9779 = vadd.f32 %v9393, %v9542
  %v9780 = vadd.f32 %v9394, %v9544
  %v9781 = vadd.f32 %v9395, %v9703
  %v9782 = vadd.f32 %v9396, %v9705
  %v9783 = vadd.f32 %v9397, %v9548
  %v9784 = vadd.f32 %v9398, %v9550
  %v9785 = vadd.f32 %v9399, %v9709
  %v9786 = vadd.f32 %v9400, %v9711
  %v9787 = vadd.f32 %v9401, %v9554
  %v9788 = vadd.f32 %v9402, %v9556
  %v9789 = vadd.f32 %v9403, %v9715
  %v9790 = vadd.f32 %v9404, %v9717
  %v9791 = vadd.f32 %v9405, %v9560
  %v9792 = vadd.f32 %v9406, %v9562
  %v9793 = vadd.f32 %v9407, %v9721
  %v9794 = vadd.f32 %v9408, %v9723
  %v9795 = vadd.f32 %v9409, %v9566
  %v9796 = vadd.f32 %v9410, %v9568
  %v9797 = vadd.f32 %v9411, %v9727
  %v9798 = vadd.f32 %v9412, %v9729
  %v9799 = vadd.f32 %v9413, %v9572
  %v9800 = vadd.f32 %v9414, %v9574
  %v9801 = vadd.f32 %v9415, %v9733
  %v9802 = vadd.f32 %v9416, %v9735
  %v9803 = vadd.f32 %v9417, %v9578
  %v9804 = vadd.f32 %v9418, %v9580
  %v9805 = vadd.f32 %v9419, %v9739
  %v9806 = vadd.f32 %v9420, %v9741
  %v9807 = vxor.u32 %v9743, 2147483648
  %v9808 = vxor.u32 %v9744, 2147483648
  %v9809 = vxor.u32 %v9745, 2147483648
  %v9810 = vxor.u32 %v9746, 2147483648
  %v9811 = vxor.u32 %v9747, 2147483648
  %v9812 = vxor.u32 %v9748, 2147483648
  %v9813 = vxor.u32 %v9749, 2147483648
  %v9814 = vxor.u32 %v9750, 2147483648
  %v9815 = vxor.u32 %v9751, 2147483648
  %v9816 = vxor.u32 %v9752, 2147483648
  %v9817 = vxor.u32 %v9753, 2147483648
  %v9818 = vxor.u32 %v9754, 2147483648
  %v9819 = vxor.u32 %v9755, 2147483648
  %v9820 = vxor.u32 %v9756, 2147483648
  %v9821 = vxor.u32 %v9757, 2147483648
  %v9822 = vxor.u32 %v9758, 2147483648
  %v9823 = vxor.u32 %v9759, 2147483648
  %v9824 = vxor.u32 %v9760, 2147483648
  %v9825 = vxor.u32 %v9761, 2147483648
  %v9826 = vxor.u32 %v9762, 2147483648
  %v9827 = vxor.u32 %v9763, 2147483648
  %v9828 = vxor.u32 %v9764, 2147483648
  %v9829 = vxor.u32 %v9765, 2147483648
  %v9830 = vxor.u32 %v9766, 2147483648
  %v9831 = vxor.u32 %v9767, 2147483648
  %v9832 = vxor.u32 %v9768, 2147483648
  %v9833 = vxor.u32 %v9769, 2147483648
  %v9834 = vxor.u32 %v9770, 2147483648
  %v9835 = vxor.u32 %v9771, 2147483648
  %v9836 = vxor.u32 %v9772, 2147483648
  %v9837 = vxor.u32 %v9773, 2147483648
  %v9838 = vxor.u32 %v9774, 2147483648
  %v9839 = vxor.u32 %v9775, 2147483648
  %v9840 = vxor.u32 %v9776, 2147483648
  %v9841 = vxor.u32 %v9777, 2147483648
  %v9842 = vxor.u32 %v9778, 2147483648
  %v9843 = vxor.u32 %v9779, 2147483648
  %v9844 = vxor.u32 %v9780, 2147483648
  %v9845 = vxor.u32 %v9781, 2147483648
  %v9846 = vxor.u32 %v9782, 2147483648
  %v9847 = vxor.u32 %v9783, 2147483648
  %v9848 = vxor.u32 %v9784, 2147483648
  %v9849 = vxor.u32 %v9785, 2147483648
  %v9850 = vxor.u32 %v9786, 2147483648
  %v9851 = vxor.u32 %v9787, 2147483648
  %v9852 = vxor.u32 %v9788, 2147483648
  %v9853 = vxor.u32 %v9789, 2147483648
  %v9854 = vxor.u32 %v9790, 2147483648
  %v9855 = vmul.f32 %v9807, 1.442695
  %v9856 = vpow.pop %v9855
  %v9857 = vmul.f32 %v9808, 1.442695
  %v9858 = vpow.pop %v9857
  %v9859 = vmul.f32 %v9809, 1.442695
  %v9860 = vpow.pop %v9859
  %v9861 = vmul.f32 %v9810, 1.442695
  %v9862 = vpow.pop %v9861
  %v9863 = vmul.f32 %v9811, 1.442695
  %v9864 = vpow.pop %v9863
  %v9865 = vmul.f32 %v9812, 1.442695
  %v9866 = vpow.pop %v9865
  %v9867 = vmul.f32 %v9813, 1.442695
  %v9868 = vpow.pop %v9867
  %v9869 = vmul.f32 %v9814, 1.442695
  %v9870 = vpow.pop %v9869
  %v9871 = vmul.f32 %v9815, 1.442695
  %v9872 = vpow.pop %v9871
  %v9873 = vmul.f32 %v9816, 1.442695
  %v9874 = vpow.pop %v9873
  %v9875 = vmul.f32 %v9817, 1.442695
  %v9876 = vpow.pop %v9875
  %v9877 = vmul.f32 %v9818, 1.442695
  %v9878 = vpow.pop %v9877
  %v9879 = vmul.f32 %v9819, 1.442695
  %v9880 = vpow.pop %v9879
  %v9881 = vmul.f32 %v9820, 1.442695
  %v9882 = vpow.pop %v9881
  %v9883 = vmul.f32 %v9821, 1.442695
  %v9884 = vpow.pop %v9883
  %v9885 = vmul.f32 %v9822, 1.442695
  %v9886 = vpow.pop %v9885
  %v9887 = vmul.f32 %v9823, 1.442695
  %v9888 = vpow.pop %v9887
  %v9889 = vmul.f32 %v9824, 1.442695
  %v9890 = vpow.pop %v9889
  %v9891 = vmul.f32 %v9825, 1.442695
  %v9892 = vpow.pop %v9891
  %v9893 = vmul.f32 %v9826, 1.442695
  %v9894 = vpow.pop %v9893
  %v9895 = vmul.f32 %v9827, 1.442695
  %v9896 = vpow.pop %v9895
  %v9897 = vmul.f32 %v9828, 1.442695
  %v9898 = vpow.pop %v9897
  %v9899 = vmul.f32 %v9829, 1.442695
  %v9900 = vpow.pop %v9899
  %v9901 = vmul.f32 %v9830, 1.442695
  %v9902 = vpow.pop %v9901
  %v9903 = vmul.f32 %v9831, 1.442695
  %v9904 = vpow.pop %v9903
  %v9905 = vmul.f32 %v9832, 1.442695
  %v9906 = vpow.pop %v9905
  %v9907 = vmul.f32 %v9833, 1.442695
  %v9908 = vpow.pop %v9907
  %v9909 = vmul.f32 %v9834, 1.442695
  %v9910 = vpow.pop %v9909
  %v9911 = vmul.f32 %v9835, 1.442695
  %v9912 = vpow.pop %v9911
  %v9913 = vmul.f32 %v9836, 1.442695
  %v9914 = vpow.pop %v9913
  %v9915 = vmul.f32 %v9837, 1.442695
  %v9916 = vpow.pop %v9915
  %v9917 = vmul.f32 %v9838, 1.442695
  %v9918 = vpow.pop %v9917
  %v9919 = vmul.f32 %v9839, 1.442695
  %v9920 = vpow.pop %v9919
  %v9921 = vmul.f32 %v9840, 1.442695
  %v9922 = vpow.pop %v9921
  %v9923 = vmul.f32 %v9841, 1.442695
  %v9924 = vpow.pop %v9923
  %v9925 = vmul.f32 %v9842, 1.442695
  %v9926 = vpow.pop %v9925
  %v9927 = vmul.f32 %v9843, 1.442695
  %v9928 = vpow.pop %v9927
  %v9929 = vmul.f32 %v9844, 1.442695
  %v9930 = vpow.pop %v9929
  %v9931 = vmul.f32 %v9845, 1.442695
  %v9932 = vpow.pop %v9931
  %v9933 = vmul.f32 %v9846, 1.442695
  %v9934 = vpow.pop %v9933
  %v9935 = vmul.f32 %v9847, 1.442695
  %v9936 = vpow.pop %v9935
  %v9937 = vmul.f32 %v9848, 1.442695
  %v9938 = vpow.pop %v9937
  %v9939 = vmul.f32 %v9849, 1.442695
  %v9940 = vpow.pop %v9939
  %v9941 = vmul.f32 %v9850, 1.442695
  %v9942 = vpow.pop %v9941
  %v9943 = vmul.f32 %v9851, 1.442695
  %v9944 = vpow.pop %v9943
  %v9945 = vmul.f32 %v9852, 1.442695
  %v9946 = vpow.pop %v9945
  %v9947 = vmul.f32 %v9853, 1.442695
  %v9948 = vpow.pop %v9947
  %v9949 = vmul.f32 %v9854, 1.442695
  %v9950 = vpow.pop %v9949
  %v9951 = vadd.f32 %v9856, 1.0
  %v9952 = vadd.f32 %v9858, 1.0
  %v9953 = vadd.f32 %v9860, 1.0
  %v9954 = vadd.f32 %v9862, 1.0
  %v9955 = vadd.f32 %v9864, 1.0
  %v9956 = vadd.f32 %v9866, 1.0
  %v9957 = vadd.f32 %v9868, 1.0
  %v9958 = vadd.f32 %v9870, 1.0
  %v9959 = vadd.f32 %v9872, 1.0
  %v9960 = vadd.f32 %v9874, 1.0
  %v9961 = vadd.f32 %v9876, 1.0
  %v9962 = vadd.f32 %v9878, 1.0
  %v9963 = vadd.f32 %v9880, 1.0
  %v9964 = vadd.f32 %v9882, 1.0
  %v9965 = vadd.f32 %v9884, 1.0
  %v9966 = vadd.f32 %v9886, 1.0
  %v9967 = vadd.f32 %v9888, 1.0
  %v9968 = vadd.f32 %v9890, 1.0
  %v9969 = vadd.f32 %v9892, 1.0
  %v9970 = vadd.f32 %v9894, 1.0
  %v9971 = vadd.f32 %v9896, 1.0
  %v9972 = vadd.f32 %v9898, 1.0
  %v9973 = vadd.f32 %v9900, 1.0
  %v9974 = vadd.f32 %v9902, 1.0
  %v9975 = vadd.f32 %v9904, 1.0
  %v9976 = vadd.f32 %v9906, 1.0
  %v9977 = vadd.f32 %v9908, 1.0
  %v9978 = vadd.f32 %v9910, 1.0
  %v9979 = vadd.f32 %v9912, 1.0
  %v9980 = vadd.f32 %v9914, 1.0
  %v9981 = vadd.f32 %v9916, 1.0
  %v9982 = vadd.f32 %v9918, 1.0
  %v9983 = vadd.f32 %v9920, 1.0
  %v9984 = vadd.f32 %v9922, 1.0
  %v9985 = vadd.f32 %v9924, 1.0
  %v9986 = vadd.f32 %v9926, 1.0
  %v9987 = vadd.f32 %v9928, 1.0
  %v9988 = vadd.f32 %v9930, 1.0
  %v9989 = vadd.f32 %v9932, 1.0
  %v9990 = vadd.f32 %v9934, 1.0
  %v9991 = vadd.f32 %v9936, 1.0
  %v9992 = vadd.f32 %v9938, 1.0
  %v9993 = vadd.f32 %v9940, 1.0
  %v9994 = vadd.f32 %v9942, 1.0
  %v9995 = vadd.f32 %v9944, 1.0
  %v9996 = vadd.f32 %v9946, 1.0
  %v9997 = vadd.f32 %v9948, 1.0
  %v9998 = vadd.f32 %v9950, 1.0
  %v9999 = vrcp.pop %v9951
  %v10000 = vmul.f32 1.0, %v9999
  %v10001 = vrcp.pop %v9952
  %v10002 = vmul.f32 1.0, %v10001
  %v10003 = vrcp.pop %v9953
  %v10004 = vmul.f32 1.0, %v10003
  %v10005 = vrcp.pop %v9954
  %v10006 = vmul.f32 1.0, %v10005
  %v10007 = vrcp.pop %v9955
  %v10008 = vmul.f32 1.0, %v10007
  %v10009 = vrcp.pop %v9956
  %v10010 = vmul.f32 1.0, %v10009
  %v10011 = vrcp.pop %v9957
  %v10012 = vmul.f32 1.0, %v10011
  %v10013 = vrcp.pop %v9958
  %v10014 = vmul.f32 1.0, %v10013
  %v10015 = vrcp.pop %v9959
  %v10016 = vmul.f32 1.0, %v10015
  %v10017 = vrcp.pop %v9960
  %v10018 = vmul.f32 1.0, %v10017
  %v10019 = vrcp.pop %v9961
  %v10020 = vmul.f32 1.0, %v10019
  %v10021 = vrcp.pop %v9962
  %v10022 = vmul.f32 1.0, %v10021
  %v10023 = vrcp.pop %v9963
  %v10024 = vmul.f32 1.0, %v10023
  %v10025 = vrcp.pop %v9964
  %v10026 = vmul.f32 1.0, %v10025
  %v10027 = vrcp.pop %v9965
  %v10028 = vmul.f32 1.0, %v10027
  %v10029 = vrcp.pop %v9966
  %v10030 = vmul.f32 1.0, %v10029
  %v10031 = vrcp.pop %v9967
  %v10032 = vmul.f32 1.0, %v10031
  %v10033 = vrcp.pop %v9968
  %v10034 = vmul.f32 1.0, %v10033
  %v10035 = vrcp.pop %v9969
  %v10036 = vmul.f32 1.0, %v10035
  %v10037 = vrcp.pop %v9970
  %v10038 = vmul.f32 1.0, %v10037
  %v10039 = vrcp.pop %v9971
  %v10040 = vmul.f32 1.0, %v10039
  %v10041 = vrcp.pop %v9972
  %v10042 = vmul.f32 1.0, %v10041
  %v10043 = vrcp.pop %v9973
  %v10044 = vmul.f32 1.0, %v10043
  %v10045 = vrcp.pop %v9974
  %v10046 = vmul.f32 1.0, %v10045
  %v10047 = vrcp.pop %v9975
  %v10048 = vmul.f32 1.0, %v10047
  %v10049 = vrcp.pop %v9976
  %v10050 = vmul.f32 1.0, %v10049
  %v10051 = vrcp.pop %v9977
  %v10052 = vmul.f32 1.0, %v10051
  %v10053 = vrcp.pop %v9978
  %v10054 = vmul.f32 1.0, %v10053
  %v10055 = vrcp.pop %v9979
  %v10056 = vmul.f32 1.0, %v10055
  %v10057 = vrcp.pop %v9980
  %v10058 = vmul.f32 1.0, %v10057
  %v10059 = vrcp.pop %v9981
  %v10060 = vmul.f32 1.0, %v10059
  %v10061 = vrcp.pop %v9982
  %v10062 = vmul.f32 1.0, %v10061
  %v10063 = vrcp.pop %v9983
  %v10064 = vmul.f32 1.0, %v10063
  %v10065 = vrcp.pop %v9984
  %v10066 = vmul.f32 1.0, %v10065
  %v10067 = vrcp.pop %v9985
  %v10068 = vmul.f32 1.0, %v10067
  %v10069 = vrcp.pop %v9986
  %v10070 = vmul.f32 1.0, %v10069
  %v10071 = vrcp.pop %v9987
  %v10072 = vmul.f32 1.0, %v10071
  %v10073 = vrcp.pop %v9988
  %v10074 = vmul.f32 1.0, %v10073
  %v10075 = vrcp.pop %v9989
  %v10076 = vmul.f32 1.0, %v10075
  %v10077 = vrcp.pop %v9990
  %v10078 = vmul.f32 1.0, %v10077
  %v10079 = vrcp.pop %v9991
  %v10080 = vmul.f32 1.0, %v10079
  %v10081 = vrcp.pop %v9992
  %v10082 = vmul.f32 1.0, %v10081
  %v10083 = vrcp.pop %v9993
  %v10084 = vmul.f32 1.0, %v10083
  %v10085 = vrcp.pop %v9994
  %v10086 = vmul.f32 1.0, %v10085
  %v10087 = vrcp.pop %v9995
  %v10088 = vmul.f32 1.0, %v10087
  %v10089 = vrcp.pop %v9996
  %v10090 = vmul.f32 1.0, %v10089
  %v10091 = vrcp.pop %v9997
  %v10092 = vmul.f32 1.0, %v10091
  %v10093 = vrcp.pop %v9998
  %v10094 = vmul.f32 1.0, %v10093
  %v10095 = vtanh.pop %v9791
  %v10096 = vtanh.pop %v9792
  %v10097 = vtanh.pop %v9793
  %v10098 = vtanh.pop %v9794
  %v10099 = vtanh.pop %v9795
  %v10100 = vtanh.pop %v9796
  %v10101 = vtanh.pop %v9797
  %v10102 = vtanh.pop %v9798
  %v10103 = vtanh.pop %v9799
  %v10104 = vtanh.pop %v9800
  %v10105 = vtanh.pop %v9801
  %v10106 = vtanh.pop %v9802
  %v10107 = vtanh.pop %v9803
  %v10108 = vtanh.pop %v9804
  %v10109 = vtanh.pop %v9805
  %v10110 = vtanh.pop %v9806
  %v10111 = vmul.f32 %v10032, %v9293
  %v10112 = vmul.f32 %v10034, %v9294
  %v10113 = vmul.f32 %v10036, %v9295
  %v10114 = vmul.f32 %v10038, %v9296
  %v10115 = vmul.f32 %v10040, %v9297
  %v10116 = vmul.f32 %v10042, %v9298
  %v10117 = vmul.f32 %v10044, %v9299
  %v10118 = vmul.f32 %v10046, %v9300
  %v10119 = vmul.f32 %v10048, %v9301
  %v10120 = vmul.f32 %v10050, %v9302
  %v10121 = vmul.f32 %v10052, %v9303
  %v10122 = vmul.f32 %v10054, %v9304
  %v10123 = vmul.f32 %v10056, %v9305
  %v10124 = vmul.f32 %v10058, %v9306
  %v10125 = vmul.f32 %v10060, %v9307
  %v10126 = vmul.f32 %v10062, %v9308
  %v10127 = vmul.f32 %v10000, %v10095
  %v10128 = vmul.f32 %v10002, %v10096
  %v10129 = vmul.f32 %v10004, %v10097
  %v10130 = vmul.f32 %v10006, %v10098
  %v10131 = vmul.f32 %v10008, %v10099
  %v10132 = vmul.f32 %v10010, %v10100
  %v10133 = vmul.f32 %v10012, %v10101
  %v10134 = vmul.f32 %v10014, %v10102
  %v10135 = vmul.f32 %v10016, %v10103
  %v10136 = vmul.f32 %v10018, %v10104
  %v10137 = vmul.f32 %v10020, %v10105
  %v10138 = vmul.f32 %v10022, %v10106
  %v10139 = vmul.f32 %v10024, %v10107
  %v10140 = vmul.f32 %v10026, %v10108
  %v10141 = vmul.f32 %v10028, %v10109
  %v10142 = vmul.f32 %v10030, %v10110
  %v10143 = vadd.f32 %v10111, %v10127
  %v10144 = vadd.f32 %v10112, %v10128
  %v10145 = vadd.f32 %v10113, %v10129
  %v10146 = vadd.f32 %v10114, %v10130
  %v10147 = vadd.f32 %v10115, %v10131
  %v10148 = vadd.f32 %v10116, %v10132
  %v10149 = vadd.f32 %v10117, %v10133
  %v10150 = vadd.f32 %v10118, %v10134
  %v10151 = vadd.f32 %v10119, %v10135
  %v10152 = vadd.f32 %v10120, %v10136
  %v10153 = vadd.f32 %v10121, %v10137
  %v10154 = vadd.f32 %v10122, %v10138
  %v10155 = vadd.f32 %v10123, %v10139
  %v10156 = vadd.f32 %v10124, %v10140
  %v10157 = vadd.f32 %v10125, %v10141
  %v10158 = vadd.f32 %v10126, %v10142
  %v10159 = vtanh.pop %v10143
  %v10160 = vtanh.pop %v10144
  %v10161 = vtanh.pop %v10145
  %v10162 = vtanh.pop %v10146
  %v10163 = vtanh.pop %v10147
  %v10164 = vtanh.pop %v10148
  %v10165 = vtanh.pop %v10149
  %v10166 = vtanh.pop %v10150
  %v10167 = vtanh.pop %v10151
  %v10168 = vtanh.pop %v10152
  %v10169 = vtanh.pop %v10153
  %v10170 = vtanh.pop %v10154
  %v10171 = vtanh.pop %v10155
  %v10172 = vtanh.pop %v10156
  %v10173 = vtanh.pop %v10157
  %v10174 = vtanh.pop %v10158
  %v10175 = vmul.f32 %v10064, %v10159
  %v10176 = vmul.f32 %v10066, %v10160
  %v10177 = vmul.f32 %v10068, %v10161
  %v10178 = vmul.f32 %v10070, %v10162
  %v10179 = vmul.f32 %v10072, %v10163
  %v10180 = vmul.f32 %v10074, %v10164
  %v10181 = vmul.f32 %v10076, %v10165
  %v10182 = vmul.f32 %v10078, %v10166
  %v10183 = vmul.f32 %v10080, %v10167
  %v10184 = vmul.f32 %v10082, %v10168
  %v10185 = vmul.f32 %v10084, %v10169
  %v10186 = vmul.f32 %v10086, %v10170
  %v10187 = vmul.f32 %v10088, %v10171
  %v10188 = vmul.f32 %v10090, %v10172
  %v10189 = vmul.f32 %v10092, %v10173
  %v10190 = vmul.f32 %v10094, %v10174
  %10191 = vst [vmem:[#allocation3 + $0x380] sm:$0xff] %v10175
  %10192 = vst [vmem:[#allocation3 + $0x388] sm:$0xff] %v10176
  %10193 = vst [vmem:[#allocation3 + $0x390] sm:$0xff] %v10177
  %10194 = vst [vmem:[#allocation3 + $0x398] sm:$0xff] %v10178
  %10195 = vst [vmem:[#allocation3 + $0x3a0] sm:$0xff] %v10179
  %10196 = vst [vmem:[#allocation3 + $0x3a8] sm:$0xff] %v10180
  %10197 = vst [vmem:[#allocation3 + $0x3b0] sm:$0xff] %v10181
  %10198 = vst [vmem:[#allocation3 + $0x3b8] sm:$0xff] %v10182
  %10199 = vst [vmem:[#allocation3 + $0x3c0] sm:$0xff] %v10183
  %10200 = vst [vmem:[#allocation3 + $0x3c8] sm:$0xff] %v10184
  %10201 = vst [vmem:[#allocation3 + $0x3d0] sm:$0xff] %v10185
  %10202 = vst [vmem:[#allocation3 + $0x3d8] sm:$0xff] %v10186
  %10203 = vst [vmem:[#allocation3 + $0x3e0] sm:$0xff] %v10187
  %10204 = vst [vmem:[#allocation3 + $0x3e8] sm:$0xff] %v10188
  %10205 = vst [vmem:[#allocation3 + $0x3f0] sm:$0xff] %v10189
  %10206 = vst [vmem:[#allocation3 + $0x3f8] sm:$0xff] %v10190
  %v10207 = vld [vmem:[%s6] sm:$0xff]
  %v10208 = vld [vmem:[%s6 + $0x8] sm:$0xff]
  %v10209 = vld [vmem:[%s6 + $0x10] sm:$0xff]
  %v10210 = vld [vmem:[%s6 + $0x18] sm:$0xff]
  %v10211 = vld [vmem:[%s6 + $0x20] sm:$0xff]
  %v10212 = vld [vmem:[%s6 + $0x28] sm:$0xff]
  %v10213 = vld [vmem:[%s6 + $0x30] sm:$0xff]
  %v10214 = vld [vmem:[%s6 + $0x38] sm:$0xff]
  %v10215 = vld [vmem:[#allocation3] sm:$0xff]
  %v10216 = vld [vmem:[#allocation3 + $0x8] sm:$0xff]
  %v10217 = vld [vmem:[#allocation3 + $0x10] sm:$0xff]
  %v10218 = vld [vmem:[#allocation3 + $0x18] sm:$0xff]
  %v10219 = vld [vmem:[#allocation3 + $0x20] sm:$0xff]
  %v10220 = vld [vmem:[#allocation3 + $0x28] sm:$0xff]
  %v10221 = vld [vmem:[#allocation3 + $0x30] sm:$0xff]
  %v10222 = vld [vmem:[#allocation3 + $0x38] sm:$0xff]
  %v10223 = vld [vmem:[#allocation3 + $0x40] sm:$0xff]
  %v10224 = vld [vmem:[#allocation3 + $0x48] sm:$0xff]
  %v10225 = vld [vmem:[#allocation3 + $0x50] sm:$0xff]
  %v10226 = vld [vmem:[#allocation3 + $0x58] sm:$0xff]
  %v10227 = vld [vmem:[#allocation3 + $0x60] sm:$0xff]
  %v10228 = vld [vmem:[#allocation3 + $0x68] sm:$0xff]
  %v10229 = vld [vmem:[#allocation3 + $0x70] sm:$0xff]
  %v10230 = vld [vmem:[#allocation3 + $0x78] sm:$0xff]
  %v10231 = vld [vmem:[#allocation3 + $0x80] sm:$0xff]
  %v10232 = vld [vmem:[#allocation3 + $0x88] sm:$0xff]
  %v10233 = vld [vmem:[#allocation3 + $0x90] sm:$0xff]
  %v10234 = vld [vmem:[#allocation3 + $0x98] sm:$0xff]
  %v10235 = vld [vmem:[#allocation3 + $0xa0] sm:$0xff]
  %v10236 = vld [vmem:[#allocation3 + $0xa8] sm:$0xff]
  %v10237 = vld [vmem:[#allocation3 + $0xb0] sm:$0xff]
  %v10238 = vld [vmem:[#allocation3 + $0xb8] sm:$0xff]
  %v10239 = vld [vmem:[#allocation3 + $0xc0] sm:$0xff]
  %v10240 = vld [vmem:[#allocation3 + $0xc8] sm:$0xff]
  %v10241 = vld [vmem:[#allocation3 + $0xd0] sm:$0xff]
  %v10242 = vld [vmem:[#allocation3 + $0xd8] sm:$0xff]
  %v10243 = vld [vmem:[#allocation3 + $0xe0] sm:$0xff]
  %v10244 = vld [vmem:[#allocation3 + $0xe8] sm:$0xff]
  %v10245 = vld [vmem:[#allocation3 + $0xf0] sm:$0xff]
  %v10246 = vld [vmem:[#allocation3 + $0xf8] sm:$0xff]
  %v10247 = vld [vmem:[#allocation3 + $0x100] sm:$0xff]
  %v10248 = vld [vmem:[#allocation3 + $0x108] sm:$0xff]
  %v10249 = vld [vmem:[#allocation3 + $0x110] sm:$0xff]
  %v10250 = vld [vmem:[#allocation3 + $0x118] sm:$0xff]
  %v10251 = vld [vmem:[#allocation3 + $0x120] sm:$0xff]
  %v10252 = vld [vmem:[#allocation3 + $0x128] sm:$0xff]
  %v10253 = vld [vmem:[#allocation3 + $0x130] sm:$0xff]
  %v10254 = vld [vmem:[#allocation3 + $0x138] sm:$0xff]
  %v10255 = vld [vmem:[#allocation3 + $0x140] sm:$0xff]
  %v10256 = vld [vmem:[#allocation3 + $0x148] sm:$0xff]
  %v10257 = vld [vmem:[#allocation3 + $0x150] sm:$0xff]
  %v10258 = vld [vmem:[#allocation3 + $0x158] sm:$0xff]
  %v10259 = vld [vmem:[#allocation3 + $0x160] sm:$0xff]
  %v10260 = vld [vmem:[#allocation3 + $0x168] sm:$0xff]
  %v10261 = vld [vmem:[#allocation3 + $0x170] sm:$0xff]
  %v10262 = vld [vmem:[#allocation3 + $0x178] sm:$0xff]
  %v10263 = vld [vmem:[#allocation3 + $0x180] sm:$0xff]
  %v10264 = vld [vmem:[#allocation3 + $0x188] sm:$0xff]
  %v10265 = vld [vmem:[#allocation3 + $0x190] sm:$0xff]
  %v10266 = vld [vmem:[#allocation3 + $0x198] sm:$0xff]
  %v10267 = vld [vmem:[#allocation3 + $0x1a0] sm:$0xff]
  %v10268 = vld [vmem:[#allocation3 + $0x1a8] sm:$0xff]
  %v10269 = vld [vmem:[#allocation3 + $0x1b0] sm:$0xff]
  %v10270 = vld [vmem:[#allocation3 + $0x1b8] sm:$0xff]
  %v10271 = vld [vmem:[#allocation3 + $0x1c0] sm:$0xff]
  %v10272 = vld [vmem:[#allocation3 + $0x1c8] sm:$0xff]
  %v10273 = vld [vmem:[#allocation3 + $0x1d0] sm:$0xff]
  %v10274 = vld [vmem:[#allocation3 + $0x1d8] sm:$0xff]
  %v10275 = vld [vmem:[#allocation3 + $0x1e0] sm:$0xff]
  %v10276 = vld [vmem:[#allocation3 + $0x1e8] sm:$0xff]
  %v10277 = vld [vmem:[#allocation3 + $0x1f0] sm:$0xff]
  %v10278 = vld [vmem:[#allocation3 + $0x1f8] sm:$0xff]
  %v10279 = vld [vmem:[#allocation3 + $0x200] sm:$0xff]
  %v10280 = vld [vmem:[#allocation3 + $0x208] sm:$0xff]
  %v10281 = vld [vmem:[#allocation3 + $0x210] sm:$0xff]
  %v10282 = vld [vmem:[#allocation3 + $0x218] sm:$0xff]
  %v10283 = vld [vmem:[#allocation3 + $0x220] sm:$0xff]
  %v10284 = vld [vmem:[#allocation3 + $0x228] sm:$0xff]
  %v10285 = vld [vmem:[#allocation3 + $0x230] sm:$0xff]
  %v10286 = vld [vmem:[#allocation3 + $0x238] sm:$0xff]
  %v10287 = vld [vmem:[#allocation3 + $0x240] sm:$0xff]
  %v10288 = vld [vmem:[#allocation3 + $0x248] sm:$0xff]
  %v10289 = vld [vmem:[#allocation3 + $0x250] sm:$0xff]
  %v10290 = vld [vmem:[#allocation3 + $0x258] sm:$0xff]
  %v10291 = vld [vmem:[#allocation3 + $0x260] sm:$0xff]
  %v10292 = vld [vmem:[#allocation3 + $0x268] sm:$0xff]
  %v10293 = vld [vmem:[#allocation3 + $0x270] sm:$0xff]
  %v10294 = vld [vmem:[#allocation3 + $0x278] sm:$0xff]
  %v10295 = vld [vmem:[#allocation3 + $0x280] sm:$0xff]
  %v10296 = vld [vmem:[#allocation3 + $0x288] sm:$0xff]
  %v10297 = vld [vmem:[#allocation3 + $0x290] sm:$0xff]
  %v10298 = vld [vmem:[#allocation3 + $0x298] sm:$0xff]
  %v10299 = vld [vmem:[#allocation3 + $0x2a0] sm:$0xff]
  %v10300 = vld [vmem:[#allocation3 + $0x2a8] sm:$0xff]
  %v10301 = vld [vmem:[#allocation3 + $0x2b0] sm:$0xff]
  %v10302 = vld [vmem:[#allocation3 + $0x2b8] sm:$0xff]
  %v10303 = vld [vmem:[#allocation3 + $0x2c0] sm:$0xff]
  %v10304 = vld [vmem:[#allocation3 + $0x2c8] sm:$0xff]
  %v10305 = vld [vmem:[#allocation3 + $0x2d0] sm:$0xff]
  %v10306 = vld [vmem:[#allocation3 + $0x2d8] sm:$0xff]
  %v10307 = vld [vmem:[#allocation3 + $0x2e0] sm:$0xff]
  %v10308 = vld [vmem:[#allocation3 + $0x2e8] sm:$0xff]
  %v10309 = vld [vmem:[#allocation3 + $0x2f0] sm:$0xff]
  %v10310 = vld [vmem:[#allocation3 + $0x2f8] sm:$0xff]
  %v10311 = vld [vmem:[#allocation3 + $0x300] sm:$0xff]
  %v10312 = vld [vmem:[#allocation3 + $0x308] sm:$0xff]
  %v10313 = vld [vmem:[#allocation3 + $0x310] sm:$0xff]
  %v10314 = vld [vmem:[#allocation3 + $0x318] sm:$0xff]
  %v10315 = vld [vmem:[#allocation3 + $0x320] sm:$0xff]
  %v10316 = vld [vmem:[#allocation3 + $0x328] sm:$0xff]
  %v10317 = vld [vmem:[#allocation3 + $0x330] sm:$0xff]
  %v10318 = vld [vmem:[#allocation3 + $0x338] sm:$0xff]
  %v10319 = vld [vmem:[#allocation3 + $0x340] sm:$0xff]
  %v10320 = vld [vmem:[#allocation3 + $0x348] sm:$0xff]
  %v10321 = vld [vmem:[#allocation3 + $0x350] sm:$0xff]
  %v10322 = vld [vmem:[#allocation3 + $0x358] sm:$0xff]
  %v10323 = vld [vmem:[#allocation3 + $0x360] sm:$0xff]
  %v10324 = vld [vmem:[#allocation3 + $0x368] sm:$0xff]
  %v10325 = vld [vmem:[#allocation3 + $0x370] sm:$0xff]
  %v10326 = vld [vmem:[#allocation3 + $0x378] sm:$0xff]
  %v10327 = vld [vmem:[#allocation3 + $0x380] sm:$0xff]
  %v10328 = vld [vmem:[#allocation3 + $0x388] sm:$0xff]
  %v10329 = vld [vmem:[#allocation3 + $0x390] sm:$0xff]
  %v10330 = vld [vmem:[#allocation3 + $0x398] sm:$0xff]
  %v10331 = vld [vmem:[#allocation3 + $0x3a0] sm:$0xff]
  %v10332 = vld [vmem:[#allocation3 + $0x3a8] sm:$0xff]
  %v10333 = vld [vmem:[#allocation3 + $0x3b0] sm:$0xff]
  %v10334 = vld [vmem:[#allocation3 + $0x3b8] sm:$0xff]
  %v10335 = vld [vmem:[#allocation3 + $0x3c0] sm:$0xff]
  %v10336 = vld [vmem:[#allocation3 + $0x3c8] sm:$0xff]
  %v10337 = vld [vmem:[#allocation3 + $0x3d0] sm:$0xff]
  %v10338 = vld [vmem:[#allocation3 + $0x3d8] sm:$0xff]
  %v10339 = vld [vmem:[#allocation3 + $0x3e0] sm:$0xff]
  %v10340 = vld [vmem:[#allocation3 + $0x3e8] sm:$0xff]
  %v10341 = vld [vmem:[#allocation3 + $0x3f0] sm:$0xff]
  %v10342 = vld [vmem:[#allocation3 + $0x3f8] sm:$0xff]
  %v10343 = vld [vmem:[%s7] sm:$0xff]
  %v10344 = vld [vmem:[%s7 + $0x8] sm:$0xff]
  %v10345 = vld [vmem:[%s7 + $0x10] sm:$0xff]
  %v10346 = vld [vmem:[%s7 + $0x18] sm:$0xff]
  %10348 = vset.pattern.permute.xlu0 0
  %10349 = vperm.xlu0 %10348, %v10343
  %v10350 = vpop.permute.xlu0 %10349
  %10353 = vset.pattern.permute.xlu0 0
  %10354 = vperm.xlu0 %10353, %v10344
  %v10355 = vpop.permute.xlu0 %10354
  %10358 = vset.pattern.permute.xlu0 0
  %10359 = vperm.xlu0 %10358, %v10345
  %v10360 = vpop.permute.xlu0 %10359
  %10363 = vset.pattern.permute.xlu0 0
  %10364 = vperm.xlu0 %10363, %v10346
  %v10365 = vpop.permute.xlu0 %10364
  %10367 = vmatprep.subr.mxu0 %v10216
  %10368 = vmatpush1.msra.mxu0 %v10215
  %10369 = vmatprep.subr.mxu0 %v10220
  %10370 = vmatpush1.msra.mxu0 %v10219
  %10371 = vmatprep.subr.mxu0 %v10224
  %10372 = vmatpush1.msra.mxu0 %v10223
  %10373 = vmatprep.subr.mxu0 %v10228
  %10374 = vmatpush1.msra.mxu0 %v10227
  %10375 = vmatprep.subr.mxu0 %v10232
  %10376 = vmatpush1.msra.mxu0 %v10231
  %10377 = vmatprep.subr.mxu0 %v10236
  %10378 = vmatpush1.msra.mxu0 %v10235
  %10379 = vmatprep.subr.mxu0 %v10240
  %10380 = vmatpush1.msra.mxu0 %v10239
  %10381 = vmatprep.subr.mxu0 %v10244
  %10382 = vmatpush1.msra.mxu0 %v10243
  %10383 = vmatprep.subr.mxu0 %v10248
  %10384 = vmatpush1.msra.mxu0 %v10247
  %10385 = vmatprep.subr.mxu0 %v10252
  %10386 = vmatpush1.msra.mxu0 %v10251
  %10387 = vmatprep.subr.mxu0 %v10256
  %10388 = vmatpush1.msra.mxu0 %v10255
  %10389 = vmatprep.subr.mxu0 %v10260
  %10390 = vmatpush1.msra.mxu0 %v10259
  %10391 = vmatprep.subr.mxu0 %v10264
  %10392 = vmatpush1.msra.mxu0 %v10263
  %10393 = vmatprep.subr.mxu0 %v10268
  %10394 = vmatpush1.msra.mxu0 %v10267
  %10395 = vmatprep.subr.mxu0 %v10272
  %10396 = vmatpush1.msra.mxu0 %v10271
  %10397 = vmatprep.subr.mxu0 %v10276
  %10398 = vmatpush1.msra.mxu0 %v10275
  %10399 = vmatprep.subr.mxu0 %v10280
  %10400 = vmatpush1.msra.mxu0 %v10279
  %10401 = vmatprep.subr.mxu0 %v10284
  %10402 = vmatpush1.msra.mxu0 %v10283
  %10403 = vmatprep.subr.mxu0 %v10288
  %10404 = vmatpush1.msra.mxu0 %v10287
  %10405 = vmatprep.subr.mxu0 %v10292
  %10406 = vmatpush1.msra.mxu0 %v10291
  %10407 = vmatprep.subr.mxu0 %v10296
  %10408 = vmatpush1.msra.mxu0 %v10295
  %10409 = vmatprep.subr.mxu0 %v10300
  %10410 = vmatpush1.msra.mxu0 %v10299
  %10411 = vmatprep.subr.mxu0 %v10304
  %10412 = vmatpush1.msra.mxu0 %v10303
  %10413 = vmatprep.subr.mxu0 %v10308
  %10414 = vmatpush1.msra.mxu0 %v10307
  %10415 = vmatprep.subr.mxu0 %v10312
  %10416 = vmatpush1.msra.mxu0 %v10311
  %10417 = vmatprep.subr.mxu0 %v10316
  %10418 = vmatpush1.msra.mxu0 %v10315
  %10419 = vmatprep.subr.mxu0 %v10320
  %10420 = vmatpush1.msra.mxu0 %v10319
  %10421 = vmatprep.subr.mxu0 %v10324
  %10422 = vmatpush1.msra.mxu0 %v10323
  %10423 = vmatprep.subr.mxu0 %v10328
  %10424 = vmatpush1.msra.mxu0 %v10327
  %10425 = vmatprep.subr.mxu0 %v10332
  %10426 = vmatpush1.msra.mxu0 %v10331
  %10427 = vmatprep.subr.mxu0 %v10336
  %10428 = vmatpush1.msra.mxu0 %v10335
  %10429 = vmatprep.subr.mxu0 %v10340
  %10430 = vmatpush1.msra.mxu0 %v10339
  %10431 = vmatprep.mubr.f32.mxu0 %v10208
  %10432 = vmatmul.mubr.f32.gmra.mrb[0].mxu0 %v10207
  %v10433 = vpop.f32.mrb[0].mxu0
  %v10434 = vadd.f32 %v10350, %v10433
  %v10435 = vpop.f32.mrb[0].mxu0
  %v10436 = vadd.f32 %v10350, %v10435
  %10437 = vmatprep.mubr.f32.mxu0 %v10210
  %10438 = vmatmul.mubr.f32.gmra.mrb[0].mxu0 %v10209
  %v10439 = vpop.f32.mrb[0].mxu0
  %v10440 = vadd.f32 %v10355, %v10439
  %v10441 = vpop.f32.mrb[0].mxu0
  %v10442 = vadd.f32 %v10355, %v10441
  %10443 = vmatprep.mubr.f32.mxu0 %v10212
  %10444 = vmatmul.mubr.f32.gmra.mrb[0].mxu0 %v10211
  %v10445 = vpop.f32.mrb[0].mxu0
  %v10446 = vadd.f32 %v10360, %v10445
  %v10447 = vpop.f32.mrb[0].mxu0
  %v10448 = vadd.f32 %v10360, %v10447
  %10449 = vmatprep.mubr.f32.mxu0 %v10214
  %10450 = vmatmul.mubr.f32.gmra.mrb[0].mxu0 %v10213
  %v10451 = vpop.f32.mrb[0].mxu0
  %v10452 = vadd.f32 %v10365, %v10451
  %v10453 = vpop.f32.mrb[0].mxu0
  %v10454 = vadd.f32 %v10365, %v10453
  %10455 = vdwg.mxu0
  %10456 = vmatprep.subr.mxu0 %v10218
  %10457 = vmatpush1.msra.mxu0 %v10217
  %10458 = vmatprep.subr.mxu0 %v10222
  %10459 = vmatpush1.msra.mxu0 %v10221
  %10460 = vmatprep.subr.mxu0 %v10226
  %10461 = vmatpush1.msra.mxu0 %v10225
  %10462 = vmatprep.subr.mxu0 %v10230
  %10463 = vmatpush1.msra.mxu0 %v10229
  %10464 = vmatprep.subr.mxu0 %v10234
  %10465 = vmatpush1.msra.mxu0 %v10233
  %10466 = vmatprep.subr.mxu0 %v10238
  %10467 = vmatpush1.msra.mxu0 %v10237
  %10468 = vmatprep.subr.mxu0 %v10242
  %10469 = vmatpush1.msra.mxu0 %v10241
  %10470 = vmatprep.subr.mxu0 %v10246
  %10471 = vmatpush1.msra.mxu0 %v10245
  %10472 = vmatprep.subr.mxu0 %v10250
  %10473 = vmatpush1.msra.mxu0 %v10249
  %10474 = vmatprep.subr.mxu0 %v10254
  %10475 = vmatpush1.msra.mxu0 %v10253
  %10476 = vmatprep.subr.mxu0 %v10258
  %10477 = vmatpush1.msra.mxu0 %v10257
  %10478 = vmatprep.subr.mxu0 %v10262
  %10479 = vmatpush1.msra.mxu0 %v10261
  %10480 = vmatprep.subr.mxu0 %v10266
  %10481 = vmatpush1.msra.mxu0 %v10265
  %10482 = vmatprep.subr.mxu0 %v10270
  %10483 = vmatpush1.msra.mxu0 %v10269
  %10484 = vmatprep.subr.mxu0 %v10274
  %10485 = vmatpush1.msra.mxu0 %v10273
  %10486 = vmatprep.subr.mxu0 %v10278
  %10487 = vmatpush1.msra.mxu0 %v10277
  %10488 = vmatprep.subr.mxu0 %v10282
  %10489 = vmatpush1.msra.mxu0 %v10281
  %10490 = vmatprep.subr.mxu0 %v10286
  %10491 = vmatpush1.msra.mxu0 %v10285
  %10492 = vmatprep.subr.mxu0 %v10290
  %10493 = vmatpush1.msra.mxu0 %v10289
  %10494 = vmatprep.subr.mxu0 %v10294
  %10495 = vmatpush1.msra.mxu0 %v10293
  %10496 = vmatprep.subr.mxu0 %v10298
  %10497 = vmatpush1.msra.mxu0 %v10297
  %10498 = vmatprep.subr.mxu0 %v10302
  %10499 = vmatpush1.msra.mxu0 %v10301
  %10500 = vmatprep.subr.mxu0 %v10306
  %10501 = vmatpush1.msra.mxu0 %v10305
  %10502 = vmatprep.subr.mxu0 %v10310
  %10503 = vmatpush1.msra.mxu0 %v10309
  %10504 = vmatprep.subr.mxu0 %v10314
  %10505 = vmatpush1.msra.mxu0 %v10313
  %10506 = vmatprep.subr.mxu0 %v10318
  %10507 = vmatpush1.msra.mxu0 %v10317
  %10508 = vmatprep.subr.mxu0 %v10322
  %10509 = vmatpush1.msra.mxu0 %v10321
  %10510 = vmatprep.subr.mxu0 %v10326
  %10511 = vmatpush1.msra.mxu0 %v10325
  %10512 = vmatprep.subr.mxu0 %v10330
  %10513 = vmatpush1.msra.mxu0 %v10329
  %10514 = vmatprep.subr.mxu0 %v10334
  %10515 = vmatpush1.msra.mxu0 %v10333
  %10516 = vmatprep.subr.mxu0 %v10338
  %10517 = vmatpush1.msra.mxu0 %v10337
  %10518 = vmatprep.subr.mxu0 %v10342
  %10519 = vmatpush1.msra.mxu0 %v10341
  %10520 = vmatprep.mubr.f32.mxu0 %v10208
  %10521 = vmatmul.mubr.f32.gmra.mrb[0].mxu0 %v10207
  %v10522 = vpop.f32.mrb[0].mxu0
  %v10523 = vadd.f32 %v10350, %v10522
  %v10524 = vpop.f32.mrb[0].mxu0
  %v10525 = vadd.f32 %v10350, %v10524
  %10526 = vmatprep.mubr.f32.mxu0 %v10210
  %10527 = vmatmul.mubr.f32.gmra.mrb[0].mxu0 %v10209
  %v10528 = vpop.f32.mrb[0].mxu0
  %v10529 = vadd.f32 %v10355, %v10528
  %v10530 = vpop.f32.mrb[0].mxu0
  %v10531 = vadd.f32 %v10355, %v10530
  %10532 = vmatprep.mubr.f32.mxu0 %v10212
  %10533 = vmatmul.mubr.f32.gmra.mrb[0].mxu0 %v10211
  %v10534 = vpop.f32.mrb[0].mxu0
  %v10535 = vadd.f32 %v10360, %v10534
  %v10536 = vpop.f32.mrb[0].mxu0
  %v10537 = vadd.f32 %v10360, %v10536
  %10538 = vmatprep.mubr.f32.mxu0 %v10214
  %10539 = vmatmul.mubr.f32.gmra.mrb[0].mxu0 %v10213
  %v10540 = vpop.f32.mrb[0].mxu0
  %v10541 = vadd.f32 %v10365, %v10540
  %v10542 = vpop.f32.mrb[0].mxu0
  %v10543 = vadd.f32 %v10365, %v10542
  %10544 = vdwg.mxu0
  %v10545 = vtanh.pop %v10434
  %v10546 = vtanh.pop %v10436
  %v10547 = vtanh.pop %v10523
  %v10548 = vtanh.pop %v10525
  %v10549 = vtanh.pop %v10440
  %v10550 = vtanh.pop %v10442
  %v10551 = vtanh.pop %v10529
  %v10552 = vtanh.pop %v10531
  %v10553 = vtanh.pop %v10446
  %v10554 = vtanh.pop %v10448
  %v10555 = vtanh.pop %v10535
  %v10556 = vtanh.pop %v10537
  %v10557 = vtanh.pop %v10452
  %v10558 = vtanh.pop %v10454
  %v10559 = vtanh.pop %v10541
  %v10560 = vtanh.pop %v10543
  %10561 = vst [vmem:[%s8] sm:$0xff] %v10545
  %10562 = vst [vmem:[%s8 + $0x8] sm:$0xff] %v10546
  %10563 = vst [vmem:[%s8 + $0x10] sm:$0xff] %v10547
  %10564 = vst [vmem:[%s8 + $0x18] sm:$0xff] %v10548
  %10565 = vst [vmem:[%s8 + $0x20] sm:$0xff] %v10549
  %10566 = vst [vmem:[%s8 + $0x28] sm:$0xff] %v10550
  %10567 = vst [vmem:[%s8 + $0x30] sm:$0xff] %v10551
  %10568 = vst [vmem:[%s8 + $0x38] sm:$0xff] %v10552
  %10569 = vst [vmem:[%s8 + $0x40] sm:$0xff] %v10553
  %10570 = vst [vmem:[%s8 + $0x48] sm:$0xff] %v10554
  %10571 = vst [vmem:[%s8 + $0x50] sm:$0xff] %v10555
  %10572 = vst [vmem:[%s8 + $0x58] sm:$0xff] %v10556
  %10573 = vst [vmem:[%s8 + $0x60] sm:$0xff] %v10557
  %10574 = vst [vmem:[%s8 + $0x68] sm:$0xff] %v10558
  %10575 = vst [vmem:[%s8 + $0x70] sm:$0xff] %v10559
  %10576 = vst [vmem:[%s8 + $0x78] sm:$0xff] %v10560
  // Predicated region
  $region34: #{ganeraid_generator_forward.1} parent=0 // pred_check
    _
  $region35: #{ganeraid_generator_forward.1} parent=0 // pred_check_branch
    %10578 = sbr.rel (0) target = $region37
  $region36: #{ganeraid_generator_forward.1} parent=0 // pred_region
    _
  $region37: #{ganeraid_generator_forward.1} parent=0 // pred_fallthru
    _
  // Predicated region
  $region38: #{ganeraid_generator_forward.1} parent=0 // pred_check
    _
  $region39: #{ganeraid_generator_forward.1} parent=0 // pred_check_branch
    %10580 = sbr.rel (0) target = $region41
  $region40: #{ganeraid_generator_forward.1} parent=0 // pred_region
    _
  $region41: #{ganeraid_generator_forward.1} parent=0 // pred_fallthru
    _

</llo_original>
